<compile_context>
chip_gen: v5e
topology: v5e:2x2
jax: 0.10.0
libtpu: 0.0.40
codegen_flags: <defaults>
</compile_context>

<pallas_src>
import functools

import jax
import jax.numpy as jnp
from jax.experimental import pallas as pl
from jax.experimental.pallas import tpu as pltpu

INPUT_DIM = 32    # self.input_dim
HIDDEN = 256      # affine / scoring hidden width (fixed at 256 in the module)
NEG_FILL = -1000.0

_TR = 8                 # rows processed per inner chunk (one f32 sublane tile)
_USE_TANH_GELU = False  # True => cheaper tanh-form GELU (slight numerics change)


def _round_up(x, m):
    return (x + m - 1) // m * m


# ----------------------------------------------------------------------------
# Exact (erf-based) GELU, matching torch.nn.GELU().  Abramowitz & Stegun 7.1.26
# polynomial erf (|err| ~ 1.5e-7 ~= f32 eps).  The divide is routed to the EUP.
# ----------------------------------------------------------------------------
def _erf(x):
    z = jnp.abs(x)
    t = pl.reciprocal(1.0 + 0.3275911 * z, approx=True)
    poly = t * (0.254829592
                + t * (-0.284496736
                       + t * (1.421413741
                              + t * (-1.453152027 + t * 1.061405429))))
    y = 1.0 - poly * jnp.exp(-z * z)
    return jnp.where(x < 0.0, -y, y)


def _gelu(x):
    if _USE_TANH_GELU:
        c = 0.7978845608028654  # sqrt(2/pi)
        return 0.5 * x * (1.0 + jnp.tanh(c * (x + 0.044715 * x * x * x)))
    return 0.5 * x * (1.0 + _erf(x * 0.7071067811865475))


# ----------------------------------------------------------------------------
# Pallas kernel: one (batch, row-tile, col-tile) score tile per grid step.
#   a_ref    : (1, TE, H)  end-position features  (W1 applied, b1 folded in)
#   c_ref    : (1, TQ, H)  start-position features (W1 applied, no bias)
#   mask_ref : (1, TQ, 1)  float {0,1} row (start-position) sequence mask
#   w2_ref   : (1, H)      final projection weights
#   b2_ref   : (1, 1)      final projection bias (SMEM scalar)
#   out_ref  : (1, TQ, TE) masked span-score tile
# ----------------------------------------------------------------------------
def _pair_score_kernel(a_ref, c_ref, mask_ref, w2_ref, b2_ref, out_ref, *, tq, te):
    qt = pl.program_id(1)
    et = pl.program_id(2)

    a_tile = a_ref[0]                    # (TE, H), reused by every row chunk
    w2b = w2_ref[...][None]              # (1, 1, H)  -- hoisted out of the loop
    b2 = b2_ref[0, 0]

    # Column / row index helpers (hoisted: only the scalar row offset varies).
    col_ids = et * te + jax.lax.broadcasted_iota(jnp.int32, (_TR, te), 1)
    row_iota = jax.lax.broadcasted_iota(jnp.int32, (_TR, te), 0)
    row_base = qt * tq

    def chunk(i, carry):
        r = pl.multiple_of(i * _TR, _TR)
        c_chunk = c_ref[0, pl.ds(r, _TR), :]        # (TR, H)
        m_chunk = mask_ref[0, pl.ds(r, _TR), :]     # (TR, 1)

        # Pairwise slab for this chunk only: (TR, TE, H) ~ 1 MiB in f32.
        hidden = a_tile[None, :, :] - c_chunk[:, None, :]
        g = _gelu(hidden)

        # w2 contraction (VPU mul + lane reduce; ~10% of the GELU cost here).
        scores = jnp.sum(g * w2b, axis=-1) + b2     # (TR, TE)

        # Masking: merged column j is kept iff j >= row (this reproduces the
        # reference code's triu/null-column behaviour exactly: col S is always
        # kept, col 0 only for row 0), AND-ed with the start-position mask.
        rows = row_base + r + row_iota
        keep = (col_ids >= rows) & (m_chunk > 0.0)
        out_ref[0, pl.ds(r, _TR), :] = jnp.where(keep, scores, NEG_FILL)
        return carry

    jax.lax.fori_loop(0, tq // _TR, chunk, 0)


# ----------------------------------------------------------------------------
# Wrapper: per-position features in XLA (small GEMMs, M = B*S), pairwise
# scoring in the Pallas kernel, padded lane-dense output sliced back.
# ----------------------------------------------------------------------------
def span_scores(params, sequence_tensor, sequence_mask):
    B, S, D = sequence_tensor.shape
    H = params["start_w"].shape[0]

    # Tile sizes: 64 rows (or 8-rounded S if smaller), 128 lane-dense columns.
    tq = min(64, _round_up(S, _TR))
    te = 128
    sp = _round_up(S, tq)
    s1p = _round_up(S + 1, te)

    x = sequence_tensor.astype(jnp.float32)

    # input_dropout(p=0.1) is identity in eval mode (inference forward).
    # Start / end affines (torch Linear: y = x @ W^T + b).
    s_feat = jnp.einsum("bsd,hd->bsh", x, params["start_w"]) + params["start_b"]
    e_feat = jnp.einsum("bsd,hd->bsh", x, params["end_w"]) + params["end_b"]
    e_null = params["null_embed"].reshape(1, D) @ params["end_w"].T + params["end_b"]

    # First scoring Linear is linear in (end - start): fold b1 into end features.
    c_all = jnp.einsum("bsh,gh->bsg", s_feat, params["score_w1"])                       # (B,S,H)
    a_tok = jnp.einsum("bsh,gh->bsg", e_feat, params["score_w1"]) + params["score_b1"]  # (B,S,H)
    a_null = e_null @ params["score_w1"].T + params["score_b1"]                          # (1,H)
    a_all = jnp.concatenate(
        [jnp.broadcast_to(a_null[None, :, :], (B, 1, H)), a_tok], axis=1)                # (B,S+1,H)

    # Pad to tile-aligned, lane-dense shapes (padded rows get mask 0, padded
    # columns are sliced off after the call).
    a_p = jnp.pad(a_all, ((0, 0), (0, s1p - (S + 1)), (0, 0)))
    c_p = jnp.pad(c_all, ((0, 0), (0, sp - S), (0, 0)))
    mask_p = jnp.pad(sequence_mask.astype(jnp.float32).reshape(B, S, 1),
                     ((0, 0), (0, sp - S), (0, 0)))
    w2 = params["score_w2"].reshape(1, H)
    b2 = params["score_b2"].reshape(1, 1)

    kernel = functools.partial(_pair_score_kernel, tq=tq, te=te)
    cost = pl.CostEstimate(
        flops=int(14 * B * sp * s1p * H),
        transcendentals=int(2 * B * sp * s1p * H),
        bytes_accessed=int(4 * (a_p.size + c_p.size + mask_p.size + B * sp * s1p)),
    )

    scores_p = pl.pallas_call(
        kernel,
        out_shape=jax.ShapeDtypeStruct((B, sp, s1p), jnp.float32),
        grid_spec=pltpu.PrefetchScalarGridSpec(
            num_scalar_prefetch=0,
            grid=(B, sp // tq, s1p // te),
            in_specs=[
                pl.BlockSpec((1, te, H), lambda b, q, e: (b, e, 0)),   # end feats (cols)
                pl.BlockSpec((1, tq, H), lambda b, q, e: (b, q, 0)),   # start feats (rows)
                pl.BlockSpec((1, tq, 1), lambda b, q, e: (b, q, 0)),   # row mask
                pl.BlockSpec((1, H), lambda b, q, e: (0, 0)),          # w2
                pl.BlockSpec(memory_space=pltpu.SMEM),                 # b2 scalar
            ],
            out_specs=pl.BlockSpec((1, tq, te), lambda b, q, e: (b, q, e)),
        ),
        compiler_params=pltpu.CompilerParams(
            dimension_semantics=("parallel", "parallel", "arbitrary")),
        cost_estimate=cost,
    )(a_p, c_p, mask_p, w2, b2)

    return scores_p[:, :S, :S + 1]


@jax.jit
def _forward_core(params, sequence_tensor, sequence_mask,
                  gold_span_indices, gold_span_indices_mask):
    B, S, _ = sequence_tensor.shape
    scores = span_scores(params, sequence_tensor, sequence_mask)          # (B, S, S+1)

    end_index = jnp.argmax(scores, axis=2).astype(jnp.int32)[..., None]   # (B, S, 1)
    start_index = jnp.broadcast_to(
        jnp.arange(1, S + 1, dtype=jnp.int32)[None, :, None], (B, S, 1))
    span_indices = jnp.concatenate([start_index, end_index], axis=2) - 1  # (B, S, 2)
    valid_span = start_index <= end_index                                 # (B, S, 1)
    valid_span_indices = jnp.where(valid_span, span_indices, 0)
    num_valid_spans = valid_span[..., 0].astype(jnp.int32).sum(axis=1)

    # CrossEntropyLoss(reduction='none') over flattened (B*S, S+1), masked mean.
    flat_scores = scores.reshape(-1, S + 1)
    flat_gold = gold_span_indices.reshape(-1)
    lse = jax.nn.logsumexp(flat_scores, axis=-1)
    picked = jnp.take_along_axis(flat_scores, flat_gold[:, None], axis=1)[:, 0]
    unreduced = lse - picked
    flat_mask = gold_span_indices_mask.reshape(-1)
    loss = jnp.where(flat_mask, unreduced, 0.0).sum() / flat_mask.sum()

    return scores, valid_span_indices, num_valid_spans, loss


def predictive_span_finder_forward(params, sequence_tensor, sequence_mask,
                                   gold_span_indices=None,
                                   gold_span_indices_mask=None):
    if gold_span_indices is None:
        gold_span_indices = jnp.zeros(sequence_mask.shape, jnp.int32)
        gold_span_indices_mask = jnp.zeros(sequence_mask.shape, bool)
        has_gold = False
    else:
        has_gold = True

    scores, valid_span_indices, num_valid_spans, loss = _forward_core(
        params, sequence_tensor, sequence_mask,
        gold_span_indices, gold_span_indices_mask)

    # Host-side Python list construction, mirroring the PyTorch code exactly.
    ret = {
        "span_indices": [
            list(filter(lambda t: t[0] == 0 and t[1] == 0, spans))
            for spans in valid_span_indices.tolist()
        ],
        "num_valid_spans": num_valid_spans.tolist(),
        "scores": scores,
    }
    if has_gold:
        ret["loss"] = loss
    return ret


def make_params(key, input_dim=INPUT_DIM, hidden=HIDDEN):
    # Deterministic re-implementation of __init__/_init_weights:
    #   weights ~ N(0, 0.02), biases zero, null_embed ~ N(0, 0.02).
    ks = jax.random.split(key, 5)
    std = 0.02
    return {
        "null_embed": jax.random.normal(ks[0], (1, 1, input_dim), jnp.float32) * std,
        "start_w": jax.random.normal(ks[1], (hidden, input_dim), jnp.float32) * std,
        "start_b": jnp.zeros((hidden,), jnp.float32),
        "end_w": jax.random.normal(ks[2], (hidden, input_dim), jnp.float32) * std,
        "end_b": jnp.zeros((hidden,), jnp.float32),
        "score_w1": jax.random.normal(ks[3], (hidden, hidden), jnp.float32) * std,
        "score_b1": jnp.zeros((hidden,), jnp.float32),
        "score_w2": jax.random.normal(ks[4], (1, hidden), jnp.float32) * std,
        "score_b2": jnp.zeros((1,), jnp.float32),
    }


if __name__ == "__main__":
    key = jax.random.PRNGKey(0)
    pkey, xkey, gkey = jax.random.split(key, 3)

    B, S, D = 2, 8, INPUT_DIM
    params = make_params(pkey, D)

    sequence_tensor = jax.random.normal(xkey, (B, S, D), jnp.float32)
    sequence_mask = jnp.array(
        [[1, 1, 1, 1, 1, 1, 1, 1],
         [1, 1, 1, 1, 1, 1, 0, 0]], dtype=bool)
    gold_span_indices = jax.random.randint(gkey, (B, S), 0, S + 1)
    gold_span_indices_mask = sequence_mask

    out = predictive_span_finder_forward(
        params, sequence_tensor, sequence_mask,
        gold_span_indices, gold_span_indices_mask)

    jax.block_until_ready(out["scores"])
    jax.block_until_ready(out["loss"])
    print("KERNEL_OK")
</pallas_src>

<mosaic_0001>
module attributes {stable_mosaic.version = 11 : i64} {
  func.func @_pair_score_kernel(%arg0: i32, %arg1: i32, %arg2: i32, %arg3: memref<1x128x256xf32, #tpu.memory_space<vmem>>, %arg4: memref<1x8x256xf32, #tpu.memory_space<vmem>>, %arg5: memref<1x8x1xf32, #tpu.memory_space<vmem>>, %arg6: memref<1x256xf32, #tpu.memory_space<vmem>>, %arg7: memref<1x1xf32, #tpu.memory_space<smem>>, %arg8: memref<1x8x128xf32, #tpu.memory_space<vmem>>) attributes {dimension_semantics = [#tpu.dimension_semantics<parallel>, #tpu.dimension_semantics<parallel>, #tpu.dimension_semantics<arbitrary>], iteration_bounds = array<i64: 2, 1, 1>, scalar_prefetch = 0 : i64, scratch_operands = 0 : i64, tpu.core_type = #tpu.core_type<tc>, window_params = [{transform_indices = @transform_0, window_bounds = array<i64: 1, 128, 256>}, {transform_indices = @transform_1, window_bounds = array<i64: 1, 8, 256>}, {transform_indices = @transform_2, window_bounds = array<i64: 1, 8, 1>}, {pipeline_mode = #tpu.pipeline_mode<synchronous>, transform_indices = @transform_3, window_bounds = array<i64: 1, 256>}, {transform_indices = @transform_4, window_bounds = array<i64: 1, 1>}, {transform_indices = @transform_5, window_bounds = array<i64: 1, 8, 128>}]} {
    %c0 = arith.constant 0 : index
    %c0_0 = arith.constant 0 : index
    %c0_1 = arith.constant 0 : index
    %0 = vector.load %arg3[%c0, %c0_0, %c0_1] : memref<1x128x256xf32, #tpu.memory_space<vmem>>, vector<1x128x256xf32>
    %1 = vector.shape_cast %0 : vector<1x128x256xf32> to vector<128x256xf32>
    %c0_2 = arith.constant 0 : index
    %c0_3 = arith.constant 0 : index
    %2 = vector.load %arg6[%c0_2, %c0_3] : memref<1x256xf32, #tpu.memory_space<vmem>>, vector<1x256xf32>
    %3 = vector.shape_cast %2 : vector<1x256xf32> to vector<1x1x256xf32>
    %c0_4 = arith.constant 0 : index
    %c0_5 = arith.constant 0 : index
    %4 = memref.load %arg7[%c0_4, %c0_5] : memref<1x1xf32, #tpu.memory_space<smem>>
    %c128_i32 = arith.constant 128 : i32
    %5 = arith.muli %arg2, %c128_i32 : i32
    %6 = tpu.iota {dimensions = array<i32: 1>} : vector<8x128xi32>
    %7 = vector.broadcast %5 : i32 to vector<8x128xi32>
    %8 = arith.addi %7, %6 : vector<8x128xi32>
    %9 = tpu.iota {dimensions = array<i32: 0>} : vector<8x128xi32>
    %c8_i32 = arith.constant 8 : i32
    %10 = arith.muli %arg1, %c8_i32 : i32
    %c0_i32 = arith.constant 0 : i32
    %c8_i32_6 = arith.constant 8 : i32
    %11 = arith.muli %c0_i32, %c8_i32_6 : i32
    %12 = tpu.assume_multiple %11, 8 : i32
    %c0_7 = arith.constant 0 : index
    %13 = arith.index_cast %12 : i32 to index
    %c0_8 = arith.constant 0 : index
    %14 = vector.load %arg4[%c0_7, %13, %c0_8] : memref<1x8x256xf32, #tpu.memory_space<vmem>>, vector<1x8x256xf32>
    %15 = vector.shape_cast %14 : vector<1x8x256xf32> to vector<8x256xf32>
    %c0_9 = arith.constant 0 : index
    %16 = arith.index_cast %12 : i32 to index
    %c0_10 = arith.constant 0 : index
    %17 = vector.load %arg5[%c0_9, %16, %c0_10] : memref<1x8x1xf32, #tpu.memory_space<vmem>>, vector<1x8x1xf32>
    %18 = vector.shape_cast %17 : vector<1x8x1xf32> to vector<8x1xf32>
    %19 = vector.shape_cast %1 : vector<128x256xf32> to vector<1x128x256xf32>
    %20 = vector.shape_cast %15 : vector<8x256xf32> to vector<8x1x256xf32>
    %21 = vector.broadcast %19 : vector<1x128x256xf32> to vector<8x128x256xf32>
    %22 = vector.broadcast %20 : vector<8x1x256xf32> to vector<8x128x256xf32>
    %23 = arith.subf %21, %22 : vector<8x128x256xf32>
    %cst = arith.constant 5.000000e-01 : f32
    %24 = vector.broadcast %cst : f32 to vector<8x128x256xf32>
    %25 = arith.mulf %24, %23 : vector<8x128x256xf32>
    %cst_11 = arith.constant 0.707106769 : f32
    %26 = vector.broadcast %cst_11 : f32 to vector<8x128x256xf32>
    %27 = arith.mulf %23, %26 : vector<8x128x256xf32>
    %28 = math.absf %27 : vector<8x128x256xf32>
    %cst_12 = arith.constant 0.327591091 : f32
    %29 = vector.broadcast %cst_12 : f32 to vector<8x128x256xf32>
    %30 = arith.mulf %29, %28 : vector<8x128x256xf32>
    %cst_13 = arith.constant 1.000000e+00 : f32
    %31 = vector.broadcast %cst_13 : f32 to vector<8x128x256xf32>
    %32 = arith.addf %31, %30 : vector<8x128x256xf32>
    %33 = tpu.reciprocal %32 {approx = true} : vector<8x128x256xf32> -> vector<8x128x256xf32>
    %cst_14 = arith.constant 1.06140542 : f32
    %34 = vector.broadcast %cst_14 : f32 to vector<8x128x256xf32>
    %35 = arith.mulf %33, %34 : vector<8x128x256xf32>
    %cst_15 = arith.constant -1.45315206 : f32
    %36 = vector.broadcast %cst_15 : f32 to vector<8x128x256xf32>
    %37 = arith.addf %36, %35 : vector<8x128x256xf32>
    %38 = arith.mulf %33, %37 : vector<8x128x256xf32>
    %cst_16 = arith.constant 1.42141378 : f32
    %39 = vector.broadcast %cst_16 : f32 to vector<8x128x256xf32>
    %40 = arith.addf %39, %38 : vector<8x128x256xf32>
    %41 = arith.mulf %33, %40 : vector<8x128x256xf32>
    %cst_17 = arith.constant -0.284496725 : f32
    %42 = vector.broadcast %cst_17 : f32 to vector<8x128x256xf32>
    %43 = arith.addf %42, %41 : vector<8x128x256xf32>
    %44 = arith.mulf %33, %43 : vector<8x128x256xf32>
    %cst_18 = arith.constant 0.254829586 : f32
    %45 = vector.broadcast %cst_18 : f32 to vector<8x128x256xf32>
    %46 = arith.addf %45, %44 : vector<8x128x256xf32>
    %47 = arith.mulf %33, %46 : vector<8x128x256xf32>
    %cst_19 = arith.constant 0.000000e+00 : f32
    %48 = vector.broadcast %cst_19 : f32 to vector<8x128x256xf32>
    %49 = arith.subf %48, %28 : vector<8x128x256xf32>
    %50 = arith.mulf %49, %28 : vector<8x128x256xf32>
    %51 = math.exp %50 : vector<8x128x256xf32>
    %52 = arith.mulf %47, %51 : vector<8x128x256xf32>
    %cst_20 = arith.constant 1.000000e+00 : f32
    %53 = vector.broadcast %cst_20 : f32 to vector<8x128x256xf32>
    %54 = arith.subf %53, %52 : vector<8x128x256xf32>
    %cst_21 = arith.constant 0.000000e+00 : f32
    %55 = vector.broadcast %cst_21 : f32 to vector<8x128x256xf32>
    %56 = arith.cmpf olt, %27, %55 : vector<8x128x256xf32>
    %cst_22 = arith.constant 0.000000e+00 : f32
    %57 = vector.broadcast %cst_22 : f32 to vector<8x128x256xf32>
    %58 = arith.subf %57, %54 : vector<8x128x256xf32>
    %59 = arith.select %56, %58, %54 : vector<8x128x256xi1>, vector<8x128x256xf32>
    %cst_23 = arith.constant 1.000000e+00 : f32
    %60 = vector.broadcast %cst_23 : f32 to vector<8x128x256xf32>
    %61 = arith.addf %60, %59 : vector<8x128x256xf32>
    %62 = arith.mulf %25, %61 : vector<8x128x256xf32>
    %63 = vector.broadcast %3 : vector<1x1x256xf32> to vector<8x128x256xf32>
    %64 = arith.mulf %62, %63 : vector<8x128x256xf32>
    %cst_24 = arith.constant dense<0.000000e+00> : vector<8x128xf32>
    %65 = vector.multi_reduction <add>, %64, %cst_24 [2] : vector<8x128x256xf32> to vector<8x128xf32>
    %66 = vector.broadcast %4 : f32 to vector<8x128xf32>
    %67 = arith.addf %65, %66 : vector<8x128xf32>
    %68 = arith.addi %10, %12 : i32
    %69 = vector.broadcast %68 : i32 to vector<8x128xi32>
    %70 = arith.addi %69, %9 : vector<8x128xi32>
    %71 = arith.cmpi sge, %8, %70 : vector<8x128xi32>
    %cst_25 = arith.constant 0.000000e+00 : f32
    %72 = vector.broadcast %cst_25 : f32 to vector<8x1xf32>
    %73 = arith.cmpf ogt, %18, %72 : vector<8x1xf32>
    %74 = vector.broadcast %73 : vector<8x1xi1> to vector<8x128xi1>
    %75 = arith.andi %71, %74 : vector<8x128xi1>
    %cst_26 = arith.constant -1.000000e+03 : f32
    %76 = vector.broadcast %cst_26 : f32 to vector<8x128xf32>
    %77 = arith.select %75, %67, %76 : vector<8x128xi1>, vector<8x128xf32>
    %c0_27 = arith.constant 0 : index
    %78 = arith.index_cast %12 : i32 to index
    %c0_28 = arith.constant 0 : index
    %79 = vector.load %arg8[%c0_27, %78, %c0_28] : memref<1x8x128xf32, #tpu.memory_space<vmem>>, vector<1x8x128xf32>
    %80 = vector.shape_cast %79 : vector<1x8x128xf32> to vector<8x128xf32>
    %81 = vector.shape_cast %77 : vector<8x128xf32> to vector<1x8x128xf32>
    tpu.vector_store %arg8[%c0_27, %78, %c0_28], %81 {strides = array<i32>} : memref<1x8x128xf32, #tpu.memory_space<vmem>>, vector<1x8x128xf32>,
    %c1_i32 = arith.constant 1 : i32
    return
  }
  func.func @transform_0(%arg0: i32, %arg1: i32, %arg2: i32) -> (i32, i32, i32) {
    %c0_i32 = arith.constant 0 : i32
    %c0_i32_0 = arith.constant 0 : i32
    return %arg0, %arg2, %c0_i32 : i32, i32, i32
  }
  func.func @transform_1(%arg0: i32, %arg1: i32, %arg2: i32) -> (i32, i32, i32) {
    %c0_i32 = arith.constant 0 : i32
    %c0_i32_0 = arith.constant 0 : i32
    return %arg0, %arg1, %c0_i32 : i32, i32, i32
  }
  func.func @transform_2(%arg0: i32, %arg1: i32, %arg2: i32) -> (i32, i32, i32) {
    %c0_i32 = arith.constant 0 : i32
    %c0_i32_0 = arith.constant 0 : i32
    return %arg0, %arg1, %c0_i32 : i32, i32, i32
  }
  func.func @transform_3(%arg0: i32, %arg1: i32, %arg2: i32) -> (i32, i32) {
    %c0_i32 = arith.constant 0 : i32
    %c0_i32_0 = arith.constant 0 : i32
    %c0_i32_1 = arith.constant 0 : i32
    return %c0_i32, %c0_i32_0 : i32, i32
  }
  func.func @transform_4(%arg0: i32, %arg1: i32, %arg2: i32) -> (i32, i32) {
    %c0_i32 = arith.constant 0 : i32
    %c0_i32_0 = arith.constant 0 : i32
    %c0_i32_1 = arith.constant 0 : i32
    return %c0_i32, %c0_i32_0 : i32, i32
  }
  func.func @transform_5(%arg0: i32, %arg1: i32, %arg2: i32) -> (i32, i32, i32) {
    %c0_i32 = arith.constant 0 : i32
    return %arg0, %arg1, %arg2 : i32, i32, i32
  }
}

</mosaic_0001>

<llo_original>
// kernel: _forward_core.1
$region0: #{_forward_core.1}
  #allocation0 [shape = 'u32[]', space=smem, size = 0x4, offset = 0x4, fixed_abs, tag = 'smem constant byte address 0x4 - core index']
  #allocation1 [shape = 'u32[72,128]{1,0:T(1,128)}', space=vmem, size = 0x9000, scoped, tag = 'internal scratch']
  #allocation2 [shape = 'f32[1,1]{1,0:T(1,128)S(6)}', space=smem, size = 0x200, scoped, tag = 'scoped memory for _forward_core.1']
  %s0 = inlined_call_operand.vmem [shape: f32[2,128,256], index: 0, kind: input, shape index: {}]
  %s1 = inlined_call_operand.vmem [shape: f32[2,8,256], index: 1, kind: input, shape index: {}]
  %s2 = inlined_call_operand.vmem [shape: f32[2,8,1], index: 2, kind: input, shape index: {}]
  %s3 = inlined_call_operand.vmem [shape: f32[1,256], index: 3, kind: input, shape index: {}]
  %s4 = inlined_call_operand.<no memory space> [shape: f32[1,1], index: 4, kind: input, shape index: {}]
  %s5 = inlined_call_operand.vmem [shape: f32[2,8,128], index: 5, kind: output, shape index: {}]
  %s6 = sld [smem:[#allocation0]]
  $region53: #{_forward_core.1} parent=0
    _
  %s8 = ssub.s32 1, %s6
  %s9 = scalar_select 0, %s8, %s6
  %10 = sst [smem:[#allocation2]] %s4
  loop: start=0, step=1, limit=4
  $region2: #{_forward_core.1} parent=0 // loop_pre_header
    _
  $region3: #{_forward_core.1} parent=0 // loop_header
    %s12 = sphi 0, %s16
    %p13 = scmp.ge.s32.totalorder %s12, 4
    %s19 = sphi 0, %s38
    %s20 = sphi 0, %s34
    %s21 = sphi 0, %s30
    %s22 = sphi 0, %s19
    %s23 = sphi 0, %s20
    %s24 = sphi 0, %s21
    %s25 = sphi 0, %s22
    %s26 = sphi 0, %s23
    %s27 = sphi 0, %s24
    %s43 = sphi 0, %s45
    %s46 = sphi 0, %s43
    %s47 = sphi 0, %s46
    %s63 = sphi 0, %s47
    %s71 = sphi 0, %s73
    %s74 = sphi 0, %s71
    %s75 = sphi 0, %s74
    %s91 = sphi 0, %s75
    %s99 = sphi 0, %s101
    %s102 = sphi 0, %s99
    %s103 = sphi 0, %s102
    %s119 = sphi 0, %s103
    %s123 = sphi 0, %s123
    %s125 = sphi 0, %s123
    %s126 = sphi 0, %s125
    %s140 = sphi 0, %s126
    %s144 = sphi 0, %s144
    %s146 = sphi 0, %s144
    %s147 = sphi 0, %s146
    %s161 = sphi 0, %s147
    %s171 = sphi 0, %s173
    %s174 = sphi 0, %s171
    %s175 = sphi 0, %s174
    %s191 = sphi 0, %s175
  $region4: #{_forward_core.1} parent=0 // loop_header_branch
    %15 = sbr.rel (%p13) target = $region8
  $region5: #{_forward_core.1} parent=0 // loop_body
    %s17 = ssub.s32 %s12, 1
    %s18 = ssub.s32 %s12, 2
    %s28 = sadd.s32 1, %s21
    %p29 = scmp.ge.s32.totalorder %s28, 1
    %s30 = scalar_select %p29, 0, %s28
    %s31 = sadd.s32 1, %s20
    %s32 = scalar_select %p29, %s31, %s20
    %p33 = scmp.ge.s32.totalorder %s32, 1
    %s34 = scalar_select %p33, 0, %s32
    %s35 = sadd.s32 1, %s19
    %s36 = scalar_select %p33, %s35, %s19
    %p37 = scmp.ge.s32.totalorder %s36, 2
    %s38 = scalar_select %p37, 0, %s36
    %s39 = ssub.s32 %s19, %s38
    %s40 = ssub.s32 %s21, %s30
    %s41 = sor.u32 %s39, %s40
    %p42 = scmp.eq.s32.totalorder %s41, 0
    %s44 = sadd.s32 %s43, 1
    %s45 = scalar_select %p42, %s43, %s44
    %p48 = pneg %p42
    %p49 = scmp.eq.s32.totalorder %s12, 1
    %p50 = por %p48, %p49
    %p51 = scmp.ne.s32.totalorder %s43, %s46
    %p52 = scmp.eq.s32.totalorder %s12, 0
    %p53 = por %p51, %p52
    %p54 = scmp.ne.s32.totalorder %s43, %s46
    %p55 = scmp.eq.s32.totalorder %s17, 1
    %p56 = por %p54, %p55
    %p57 = scmp.ne.s32.totalorder %s46, %s47
    %p58 = scmp.eq.s32.totalorder %s17, 0
    %p59 = por %p57, %p58
    %p60 = scmp.ne.s32.totalorder %s46, %s47
    %p61 = scmp.eq.s32.totalorder %s18, 1
    %p62 = por %p60, %p61
    %p64 = scmp.ne.s32.totalorder %s47, %s63
    %p65 = scmp.eq.s32.totalorder %s18, 0
    %p66 = por %p64, %p65
    %s67 = ssub.s32 %s19, %s38
    %s68 = ssub.s32 %s20, %s34
    %s69 = sor.u32 %s67, %s68
    %p70 = scmp.eq.s32.totalorder %s69, 0
    %s72 = sadd.s32 %s71, 1
    %s73 = scalar_select %p70, %s71, %s72
    %p76 = pneg %p70
    %p77 = scmp.eq.s32.totalorder %s12, 1
    %p78 = por %p76, %p77
    %p79 = scmp.ne.s32.totalorder %s71, %s74
    %p80 = scmp.eq.s32.totalorder %s12, 0
    %p81 = por %p79, %p80
    %p82 = scmp.ne.s32.totalorder %s71, %s74
    %p83 = scmp.eq.s32.totalorder %s17, 1
    %p84 = por %p82, %p83
    %p85 = scmp.ne.s32.totalorder %s74, %s75
    %p86 = scmp.eq.s32.totalorder %s17, 0
    %p87 = por %p85, %p86
    %p88 = scmp.ne.s32.totalorder %s74, %s75
    %p89 = scmp.eq.s32.totalorder %s18, 1
    %p90 = por %p88, %p89
    %p92 = scmp.ne.s32.totalorder %s75, %s91
    %p93 = scmp.eq.s32.totalorder %s18, 0
    %p94 = por %p92, %p93
    %s95 = ssub.s32 %s19, %s38
    %s96 = ssub.s32 %s20, %s34
    %s97 = sor.u32 %s95, %s96
    %p98 = scmp.eq.s32.totalorder %s97, 0
    %s100 = sadd.s32 %s99, 1
    %s101 = scalar_select %p98, %s99, %s100
    %p104 = pneg %p98
    %p105 = scmp.eq.s32.totalorder %s12, 1
    %p106 = por %p104, %p105
    %p107 = scmp.ne.s32.totalorder %s99, %s102
    %p108 = scmp.eq.s32.totalorder %s12, 0
    %p109 = por %p107, %p108
    %p110 = scmp.ne.s32.totalorder %s99, %s102
    %p111 = scmp.eq.s32.totalorder %s17, 1
    %p112 = por %p110, %p111
    %p113 = scmp.ne.s32.totalorder %s102, %s103
    %p114 = scmp.eq.s32.totalorder %s17, 0
    %p115 = por %p113, %p114
    %p116 = scmp.ne.s32.totalorder %s102, %s103
    %p117 = scmp.eq.s32.totalorder %s18, 1
    %p118 = por %p116, %p117
    %p120 = scmp.ne.s32.totalorder %s103, %s119
    %p121 = scmp.eq.s32.totalorder %s18, 0
    %p122 = por %p120, %p121
    %s124 = sadd.s32 %s123, 1
    %p127 = scmp.eq.s32.totalorder %s12, 1
    %p128 = scmp.ne.s32.totalorder %s123, %s125
    %p129 = scmp.eq.s32.totalorder %s12, 0
    %p130 = por %p128, %p129
    %p131 = scmp.ne.s32.totalorder %s123, %s125
    %p132 = scmp.eq.s32.totalorder %s17, 1
    %p133 = por %p131, %p132
    %p134 = scmp.ne.s32.totalorder %s125, %s126
    %p135 = scmp.eq.s32.totalorder %s17, 0
    %p136 = por %p134, %p135
    %p137 = scmp.ne.s32.totalorder %s125, %s126
    %p138 = scmp.eq.s32.totalorder %s18, 1
    %p139 = por %p137, %p138
    %p141 = scmp.ne.s32.totalorder %s126, %s140
    %p142 = scmp.eq.s32.totalorder %s18, 0
    %p143 = por %p141, %p142
    %s145 = sadd.s32 %s144, 1
    %p148 = scmp.eq.s32.totalorder %s12, 1
    %p149 = scmp.ne.s32.totalorder %s144, %s146
    %p150 = scmp.eq.s32.totalorder %s12, 0
    %p151 = por %p149, %p150
    %p152 = scmp.ne.s32.totalorder %s144, %s146
    %p153 = scmp.eq.s32.totalorder %s17, 1
    %p154 = por %p152, %p153
    %p155 = scmp.ne.s32.totalorder %s146, %s147
    %p156 = scmp.eq.s32.totalorder %s17, 0
    %p157 = por %p155, %p156
    %p158 = scmp.ne.s32.totalorder %s146, %s147
    %p159 = scmp.eq.s32.totalorder %s18, 1
    %p160 = por %p158, %p159
    %p162 = scmp.ne.s32.totalorder %s147, %s161
    %p163 = scmp.eq.s32.totalorder %s18, 0
    %p164 = por %p162, %p163
    %s165 = ssub.s32 %s19, %s38
    %s166 = ssub.s32 %s20, %s34
    %s167 = sor.u32 %s165, %s166
    %s168 = ssub.s32 %s21, %s30
    %s169 = sor.u32 %s167, %s168
    %p170 = scmp.eq.s32.totalorder %s169, 0
    %s172 = sadd.s32 %s171, 1
    %s173 = scalar_select %p170, %s171, %s172
    %p176 = pneg %p170
    %p177 = scmp.eq.s32.totalorder %s12, 1
    %p178 = por %p176, %p177
    %p179 = scmp.ne.s32.totalorder %s171, %s174
    %p180 = scmp.eq.s32.totalorder %s12, 0
    %p181 = por %p179, %p180
    %p182 = scmp.ne.s32.totalorder %s171, %s174
    %p183 = scmp.eq.s32.totalorder %s17, 1
    %p184 = por %p182, %p183
    %p185 = scmp.ne.s32.totalorder %s174, %s175
    %p186 = scmp.eq.s32.totalorder %s17, 0
    %p187 = por %p185, %p186
    %p188 = scmp.ne.s32.totalorder %s174, %s175
    %p189 = scmp.eq.s32.totalorder %s18, 1
    %p190 = por %p188, %p189
    %p192 = scmp.ne.s32.totalorder %s175, %s191
    %p193 = scmp.eq.s32.totalorder %s18, 0
    %p194 = por %p192, %p193
    %p195 = scmp.le.s32.totalorder 1, %s12
    %p196 = scmp.lt.s32.totalorder %s12, 3
    %p197 = pnand %p195, %p196
    %p198 = pneg %p197
    // Predicated region
    $region9: #{_forward_core.1} parent=5 // pred_check
      _
    $region10: #{_forward_core.1} parent=5 // pred_check_branch
      %200 = sbr.rel (%p197) target = $region12
    $region11: #{_forward_core.1} parent=5 // pred_region
      %s201 = ssub.s32 %s12, 1
      // Predicated region
      $region13: #{_forward_core.1} parent=11 // pred_check
        %p202 = pneg %p136
      $region14: #{_forward_core.1} parent=11 // pred_check_branch
        %204 = sbr.rel (%p202) target = $region16
      $region15: #{_forward_core.1} parent=11 // pred_region
        _
      $region16: #{_forward_core.1} parent=11 // pred_fallthru
        _
      // Predicated region
      $region17: #{_forward_core.1} parent=11 // pred_check
        %p205 = pneg %p157
      $region18: #{_forward_core.1} parent=11 // pred_check_branch
        %207 = sbr.rel (%p205) target = $region20
      $region19: #{_forward_core.1} parent=11 // pred_region
        _
      $region20: #{_forward_core.1} parent=11 // pred_fallthru
        _
    $region12: #{_forward_core.1} parent=5 // pred_fallthru
      _
    %p208 = scmp.lt.s32.totalorder %s12, 2
    // Predicated region
    $region21: #{_forward_core.1} parent=5 // pred_check
      %p209 = pneg %p208
    $region22: #{_forward_core.1} parent=5 // pred_check_branch
      %211 = sbr.rel (%p209) target = $region24
    $region23: #{_forward_core.1} parent=5 // pred_region
      // Predicated region
      $region25: #{_forward_core.1} parent=23 // pred_check
        %p212 = pneg %p53
      $region26: #{_forward_core.1} parent=23 // pred_check_branch
        %214 = sbr.rel (%p212) target = $region28
      $region27: #{_forward_core.1} parent=23 // pred_region
        %s215 = smul.u32 16, %s21
        %p216 = scmp.lt.s32.totalorder %s19, 1
        %s217 = scalar_select %p216, %s19, 1
        %p218 = scmp.lt.s32.totalorder %s215, 15
        %s219 = scalar_select %p218, %s215, 15
        %s220 = smul.addr %s219, 2
        %s221 = smul.addr %s217, 32
        %s222 = sadd.s32 %s220, %s221
        %s223 = smul.addr %s222, 8
        %s224 = scalar_lea.vmem %s0, %s223
        %s225 = smul.u32 16, %s21
      $region28: #{_forward_core.1} parent=23 // pred_fallthru
        _
      // Predicated region
      $region29: #{_forward_core.1} parent=23 // pred_check
        %p226 = pneg %p81
      $region30: #{_forward_core.1} parent=23 // pred_check_branch
        %228 = sbr.rel (%p226) target = $region32
      $region31: #{_forward_core.1} parent=23 // pred_region
        %p229 = scmp.lt.s32.totalorder %s19, 1
        %s230 = scalar_select %p229, %s19, 1
        %p231 = scmp.lt.s32.totalorder %s20, 0
        %s232 = scalar_select %p231, %s20, 0
        %s233 = smul.addr %s232, 2
        %s234 = smul.addr %s230, 2
        %s235 = sadd.s32 %s233, %s234
        %s236 = smul.addr %s235, 8
        %s237 = scalar_lea.vmem %s1, %s236
      $region32: #{_forward_core.1} parent=23 // pred_fallthru
        _
      // Predicated region
      $region33: #{_forward_core.1} parent=23 // pred_check
        %p238 = pneg %p109
      $region34: #{_forward_core.1} parent=23 // pred_check_branch
        %240 = sbr.rel (%p238) target = $region36
      $region35: #{_forward_core.1} parent=23 // pred_region
        %p241 = scmp.lt.s32.totalorder %s19, 1
        %s242 = scalar_select %p241, %s19, 1
        %p243 = scmp.lt.s32.totalorder %s20, 0
        %s244 = scalar_select %p243, %s20, 0
        %s245 = sadd.s32 %s244, %s242
        %s246 = smul.addr %s245, 8
        %s247 = scalar_lea.vmem %s2, %s246
      $region36: #{_forward_core.1} parent=23 // pred_fallthru
        _
    $region24: #{_forward_core.1} parent=5 // pred_fallthru
      _
    %p248 = scmp.le.s32.totalorder 1, %s12
    %p249 = scmp.lt.s32.totalorder %s12, 3
    %p250 = pnand %p248, %p249
    %p251 = pneg %p250
    // Predicated region
    $region37: #{_forward_core.1} parent=5 // pred_check
      _
    $region38: #{_forward_core.1} parent=5 // pred_check_branch
      %253 = sbr.rel (%p250) target = $region40
    $region39: #{_forward_core.1} parent=5 // pred_region
      %s254 = ssub.s32 %s12, 1
      %s255 = smul.u32 16, %s24
      %p256 = scmp.lt.s32.totalorder %s22, 1
      %s257 = scalar_select %p256, %s22, 1
      %p258 = scmp.lt.s32.totalorder %s255, 15
      %s259 = scalar_select %p258, %s255, 15
      %s260 = smul.addr %s259, 2
      %s261 = smul.addr %s257, 32
      %s262 = sadd.s32 %s260, %s261
      %s263 = smul.addr %s262, 8
      %s264 = scalar_lea.vmem %s0, %s263
      %p265 = pneg %p59
      %p266 = pneg %p56
      %p267 = scmp.lt.s32.totalorder %s22, 1
      %s268 = scalar_select %p267, %s22, 1
      %p269 = scmp.lt.s32.totalorder %s23, 0
      %s270 = scalar_select %p269, %s23, 0
      %s271 = smul.addr %s270, 2
      %s272 = smul.addr %s268, 2
      %s273 = sadd.s32 %s271, %s272
      %s274 = smul.addr %s273, 8
      %s275 = scalar_lea.vmem %s1, %s274
      %p276 = pneg %p87
      %p277 = pneg %p84
      %p278 = scmp.lt.s32.totalorder %s22, 1
      %s279 = scalar_select %p278, %s22, 1
      %p280 = scmp.lt.s32.totalorder %s23, 0
      %s281 = scalar_select %p280, %s23, 0
      %s282 = sadd.s32 %s281, %s279
      %s283 = smul.addr %s282, 8
      %s284 = scalar_lea.vmem %s2, %s283
      %p285 = pneg %p115
      %p286 = pneg %p112
      %p287 = pneg %p136
      %p288 = pneg %p133
      %p289 = pneg %p157
      %p290 = pneg %p154
      %p291 = pneg %p187
      %p292 = pneg %p184
      %p293 = scmp.lt.s32.totalorder %s22, 1
      %s294 = scalar_select %p293, %s22, 1
      %p295 = scmp.lt.s32.totalorder %s23, 0
      %s296 = scalar_select %p295, %s23, 0
      %p297 = scmp.lt.s32.totalorder %s24, 0
      %s298 = scalar_select %p297, %s24, 0
      %s299 = sadd.s32 %s298, %s296
      %s300 = sadd.s32 %s299, %s294
      %s301 = smul.addr %s300, 8
      %s302 = scalar_lea.vmem %s5, %s301
      %s303 = smul.u32 16, %s24
      %p304 = scmp.lt.s32.totalorder %s22, 1
      %s305 = scalar_select %p304, %s22, 1
      %p306 = scmp.lt.s32.totalorder %s303, 15
      %s307 = scalar_select %p306, %s303, 15
      %s308 = smul.addr %s307, 2
      %s309 = smul.addr %s305, 32
      %s310 = sadd.s32 %s308, %s309
      %s311 = smul.addr %s310, 8
      %s312 = scalar_lea.vmem %s0, %s311
      %s313 = smul.u32 16, %s24
      %p314 = scmp.lt.s32.totalorder %s22, 1
      %s315 = scalar_select %p314, %s22, 1
      %p316 = scmp.lt.s32.totalorder %s23, 0
      %s317 = scalar_select %p316, %s23, 0
      %s318 = smul.addr %s317, 2
      %s319 = smul.addr %s315, 2
      %s320 = sadd.s32 %s318, %s319
      %s321 = smul.addr %s320, 8
      %s322 = scalar_lea.vmem %s1, %s321
      %p323 = scmp.lt.s32.totalorder %s22, 1
      %s324 = scalar_select %p323, %s22, 1
      %p325 = scmp.lt.s32.totalorder %s23, 0
      %s326 = scalar_select %p325, %s23, 0
      %s327 = sadd.s32 %s326, %s324
      %s328 = smul.addr %s327, 8
      %s329 = scalar_lea.vmem %s2, %s328
      %p330 = scmp.lt.s32.totalorder %s22, 1
      %s331 = scalar_select %p330, %s22, 1
      %p332 = scmp.lt.s32.totalorder %s23, 0
      %s333 = scalar_select %p332, %s23, 0
      %p334 = scmp.lt.s32.totalorder %s24, 0
      %s335 = scalar_select %p334, %s24, 0
      %s336 = sadd.s32 %s335, %s333
      %s337 = sadd.s32 %s336, %s331
      %s338 = smul.addr %s337, 8
      %s339 = scalar_lea.vmem %s5, %s338
      %v340 = vld [vmem:[%s312] sm:$0xff]
      %v341 = vld [vmem:[%s312 + $0x8] sm:$0xff]
      %v342 = vld [vmem:[%s312 + $0x10] sm:$0xff]
      %v343 = vld [vmem:[%s312 + $0x18] sm:$0xff]
      %v344 = vld [vmem:[%s312 + $0x20] sm:$0xff]
      %v345 = vld [vmem:[%s312 + $0x28] sm:$0xff]
      %v346 = vld [vmem:[%s312 + $0x30] sm:$0xff]
      %v347 = vld [vmem:[%s312 + $0x38] sm:$0xff]
      %v348 = vld [vmem:[%s312 + $0x40] sm:$0xff]
      %v349 = vld [vmem:[%s312 + $0x48] sm:$0xff]
      %v350 = vld [vmem:[%s312 + $0x50] sm:$0xff]
      %v351 = vld [vmem:[%s312 + $0x58] sm:$0xff]
      %v352 = vld [vmem:[%s312 + $0x60] sm:$0xff]
      %v353 = vld [vmem:[%s312 + $0x68] sm:$0xff]
      %v354 = vld [vmem:[%s312 + $0x70] sm:$0xff]
      %v355 = vld [vmem:[%s312 + $0x78] sm:$0xff]
      %v356 = vld [vmem:[%s312 + $0x80] sm:$0xff]
      %v357 = vld [vmem:[%s312 + $0x88] sm:$0xff]
      %v358 = vld [vmem:[%s312 + $0x90] sm:$0xff]
      %v359 = vld [vmem:[%s312 + $0x98] sm:$0xff]
      %v360 = vld [vmem:[%s312 + $0xa0] sm:$0xff]
      %v361 = vld [vmem:[%s312 + $0xa8] sm:$0xff]
      %v362 = vld [vmem:[%s312 + $0xb0] sm:$0xff]
      %v363 = vld [vmem:[%s312 + $0xb8] sm:$0xff]
      %v364 = vld [vmem:[%s312 + $0xc0] sm:$0xff]
      %v365 = vld [vmem:[%s312 + $0xc8] sm:$0xff]
      %v366 = vld [vmem:[%s312 + $0xd0] sm:$0xff]
      %v367 = vld [vmem:[%s312 + $0xd8] sm:$0xff]
      %v368 = vld [vmem:[%s312 + $0xe0] sm:$0xff]
      %v369 = vld [vmem:[%s312 + $0xe8] sm:$0xff]
      %v370 = vld [vmem:[%s312 + $0xf0] sm:$0xff]
      %v371 = vld [vmem:[%s312 + $0xf8] sm:$0xff]
      %v372 = vld [vmem:[%s3] sm:$0x3]
      %s373 = sld [smem:[#allocation2]]
      %s374 = smul.u32 %s24, 128
      %v375 = vlaneseq
      %v376 = vand.u32 %v375, 127
      %v377 = vstv %s374
      %v378 = vadd.s32 %v377, %v376
      %v379 = vlaneseq
      %v380 = vshrl.u32 %v379, 7
      %s381 = smul.u32 %s23, 8
      %s382 = smul.u32 0, 2
      %s383 = smul.addr %s382, 8
      %s384 = scalar_lea.vmem %s322, %s383
      %v385 = vld [vmem:[%s384] sm:$0xff]
      %v386 = vld [vmem:[%s384 + $0x8] sm:$0xff]
      %v387 = vld [vmem:[%s329] sm:$0xff]
      %v390 = vrot.slane %v386, 7
      %vm391 = vcmask 1040384
      %v392 = vsel %vm391, %v385, %v390
      %vm393 = vcmask 1041409
      %v394 = vsel %vm393, %v385, %v390
      %v395 = vrot.slane %v394, 1
      %vm396 = vcmask 1042434
      %v397 = vsel %vm396, %v385, %v390
      %v398 = vrot.slane %v397, 2
      %vm399 = vcmask 1043459
      %v400 = vsel %vm399, %v385, %v390
      %v401 = vrot.slane %v400, 3
      %vm402 = vcmask 1044484
      %v403 = vsel %vm402, %v385, %v390
      %v404 = vrot.slane %v403, 4
      %vm405 = vcmask 1045509
      %v406 = vsel %vm405, %v385, %v390
      %v407 = vrot.slane %v406, 5
      %vm408 = vcmask 1046534
      %v409 = vsel %vm408, %v385, %v390
      %v410 = vrot.slane %v409, 6
      %vm411 = vcmask 1046528
      %v412 = vsel %vm411, %v390, %v385
      %v413 = vrot.slane %v412, 7
      %v414 = vperm.slane %v392, 0
      %v415 = vperm.slane %v392, 1
      %v416 = vperm.slane %v395, 0
      %v417 = vperm.slane %v395, 1
      %v418 = vperm.slane %v398, 0
      %v419 = vperm.slane %v398, 1
      %v420 = vperm.slane %v401, 0
      %v421 = vperm.slane %v401, 1
      %v422 = vperm.slane %v404, 0
      %v423 = vperm.slane %v404, 1
      %v424 = vperm.slane %v407, 0
      %v425 = vperm.slane %v407, 1
      %v426 = vperm.slane %v410, 0
      %v427 = vperm.slane %v410, 1
      %v428 = vperm.slane %v413, 0
      %v429 = vperm.slane %v413, 1
      %v446 = vsub.f32 %v340, %v414
      %v447 = vsub.f32 %v341, %v415
      %v448 = vsub.f32 %v342, %v414
      %v449 = vsub.f32 %v343, %v415
      %v450 = vsub.f32 %v344, %v414
      %v451 = vsub.f32 %v345, %v415
      %v452 = vsub.f32 %v346, %v414
      %v453 = vsub.f32 %v347, %v415
      %v454 = vsub.f32 %v348, %v414
      %v455 = vsub.f32 %v349, %v415
      %v456 = vsub.f32 %v350, %v414
      %v457 = vsub.f32 %v351, %v415
      %v458 = vsub.f32 %v352, %v414
      %v459 = vsub.f32 %v353, %v415
      %v460 = vsub.f32 %v354, %v414
      %v461 = vsub.f32 %v355, %v415
      %v462 = vsub.f32 %v356, %v414
      %v463 = vsub.f32 %v357, %v415
      %v464 = vsub.f32 %v358, %v414
      %v465 = vsub.f32 %v359, %v415
      %v466 = vsub.f32 %v360, %v414
      %v467 = vsub.f32 %v361, %v415
      %v468 = vsub.f32 %v362, %v414
      %v469 = vsub.f32 %v363, %v415
      %v470 = vsub.f32 %v364, %v414
      %v471 = vsub.f32 %v365, %v415
      %v472 = vsub.f32 %v366, %v414
      %v473 = vsub.f32 %v367, %v415
      %v474 = vsub.f32 %v368, %v414
      %v475 = vsub.f32 %v369, %v415
      %v476 = vsub.f32 %v370, %v414
      %v477 = vsub.f32 %v371, %v415
      %v478 = vsub.f32 %v340, %v416
      %v479 = vsub.f32 %v341, %v417
      %v480 = vsub.f32 %v342, %v416
      %v481 = vsub.f32 %v343, %v417
      %v482 = vsub.f32 %v344, %v416
      %v483 = vsub.f32 %v345, %v417
      %v484 = vsub.f32 %v346, %v416
      %v485 = vsub.f32 %v347, %v417
      %v486 = vsub.f32 %v348, %v416
      %v487 = vsub.f32 %v349, %v417
      %v488 = vsub.f32 %v350, %v416
      %v489 = vsub.f32 %v351, %v417
      %v490 = vsub.f32 %v352, %v416
      %v491 = vsub.f32 %v353, %v417
      %v492 = vsub.f32 %v354, %v416
      %v493 = vsub.f32 %v355, %v417
      %v494 = vsub.f32 %v356, %v416
      %v495 = vsub.f32 %v357, %v417
      %v496 = vsub.f32 %v358, %v416
      %v497 = vsub.f32 %v359, %v417
      %v498 = vsub.f32 %v360, %v416
      %v499 = vsub.f32 %v361, %v417
      %v500 = vsub.f32 %v362, %v416
      %v501 = vsub.f32 %v363, %v417
      %v502 = vsub.f32 %v364, %v416
      %v503 = vsub.f32 %v365, %v417
      %v504 = vsub.f32 %v366, %v416
      %v505 = vsub.f32 %v367, %v417
      %v506 = vsub.f32 %v368, %v416
      %v507 = vsub.f32 %v369, %v417
      %v508 = vsub.f32 %v370, %v416
      %v509 = vsub.f32 %v371, %v417
      %v510 = vsub.f32 %v340, %v418
      %v511 = vsub.f32 %v341, %v419
      %v512 = vsub.f32 %v342, %v418
      %v513 = vsub.f32 %v343, %v419
      %v514 = vsub.f32 %v344, %v418
      %v515 = vsub.f32 %v345, %v419
      %v516 = vsub.f32 %v346, %v418
      %v517 = vsub.f32 %v347, %v419
      %v518 = vsub.f32 %v348, %v418
      %v519 = vsub.f32 %v349, %v419
      %v520 = vsub.f32 %v350, %v418
      %v521 = vsub.f32 %v351, %v419
      %v522 = vsub.f32 %v352, %v418
      %v523 = vsub.f32 %v353, %v419
      %v524 = vsub.f32 %v354, %v418
      %v525 = vsub.f32 %v355, %v419
      %v526 = vsub.f32 %v356, %v418
      %v527 = vsub.f32 %v357, %v419
      %v528 = vsub.f32 %v358, %v418
      %v529 = vsub.f32 %v359, %v419
      %v530 = vsub.f32 %v360, %v418
      %v531 = vsub.f32 %v361, %v419
      %v532 = vsub.f32 %v362, %v418
      %v533 = vsub.f32 %v363, %v419
      %v534 = vsub.f32 %v364, %v418
      %v535 = vsub.f32 %v365, %v419
      %v536 = vsub.f32 %v366, %v418
      %v537 = vsub.f32 %v367, %v419
      %v538 = vsub.f32 %v368, %v418
      %v539 = vsub.f32 %v369, %v419
      %v540 = vsub.f32 %v370, %v418
      %v541 = vsub.f32 %v371, %v419
      %v542 = vsub.f32 %v340, %v420
      %v543 = vsub.f32 %v341, %v421
      %v544 = vsub.f32 %v342, %v420
      %v545 = vsub.f32 %v343, %v421
      %v546 = vsub.f32 %v344, %v420
      %v547 = vsub.f32 %v345, %v421
      %v548 = vsub.f32 %v346, %v420
      %v549 = vsub.f32 %v347, %v421
      %v550 = vsub.f32 %v348, %v420
      %v551 = vsub.f32 %v349, %v421
      %v552 = vsub.f32 %v350, %v420
      %v553 = vsub.f32 %v351, %v421
      %v554 = vsub.f32 %v352, %v420
      %v555 = vsub.f32 %v353, %v421
      %v556 = vsub.f32 %v354, %v420
      %v557 = vsub.f32 %v355, %v421
      %v558 = vsub.f32 %v356, %v420
      %v559 = vsub.f32 %v357, %v421
      %v560 = vsub.f32 %v358, %v420
      %v561 = vsub.f32 %v359, %v421
      %v562 = vsub.f32 %v360, %v420
      %v563 = vsub.f32 %v361, %v421
      %v564 = vsub.f32 %v362, %v420
      %v565 = vsub.f32 %v363, %v421
      %v566 = vsub.f32 %v364, %v420
      %v567 = vsub.f32 %v365, %v421
      %v568 = vsub.f32 %v366, %v420
      %v569 = vsub.f32 %v367, %v421
      %v570 = vsub.f32 %v368, %v420
      %v571 = vsub.f32 %v369, %v421
      %v572 = vsub.f32 %v370, %v420
      %v573 = vsub.f32 %v371, %v421
      %v574 = vsub.f32 %v340, %v422
      %v575 = vsub.f32 %v341, %v423
      %v576 = vsub.f32 %v342, %v422
      %v577 = vsub.f32 %v343, %v423
      %v578 = vsub.f32 %v344, %v422
      %v579 = vsub.f32 %v345, %v423
      %v580 = vsub.f32 %v346, %v422
      %v581 = vsub.f32 %v347, %v423
      %v582 = vsub.f32 %v348, %v422
      %v583 = vsub.f32 %v349, %v423
      %v584 = vsub.f32 %v350, %v422
      %v585 = vsub.f32 %v351, %v423
      %v586 = vsub.f32 %v352, %v422
      %v587 = vsub.f32 %v353, %v423
      %v588 = vsub.f32 %v354, %v422
      %v589 = vsub.f32 %v355, %v423
      %v590 = vsub.f32 %v356, %v422
      %v591 = vsub.f32 %v357, %v423
      %v592 = vsub.f32 %v358, %v422
      %v593 = vsub.f32 %v359, %v423
      %v594 = vsub.f32 %v360, %v422
      %v595 = vsub.f32 %v361, %v423
      %v596 = vsub.f32 %v362, %v422
      %v597 = vsub.f32 %v363, %v423
      %v598 = vsub.f32 %v364, %v422
      %v599 = vsub.f32 %v365, %v423
      %v600 = vsub.f32 %v366, %v422
      %v601 = vsub.f32 %v367, %v423
      %v602 = vsub.f32 %v368, %v422
      %v603 = vsub.f32 %v369, %v423
      %v604 = vsub.f32 %v370, %v422
      %v605 = vsub.f32 %v371, %v423
      %v606 = vsub.f32 %v340, %v424
      %v607 = vsub.f32 %v341, %v425
      %v608 = vsub.f32 %v342, %v424
      %v609 = vsub.f32 %v343, %v425
      %v610 = vsub.f32 %v344, %v424
      %v611 = vsub.f32 %v345, %v425
      %v612 = vsub.f32 %v346, %v424
      %v613 = vsub.f32 %v347, %v425
      %v614 = vsub.f32 %v348, %v424
      %v615 = vsub.f32 %v349, %v425
      %v616 = vsub.f32 %v350, %v424
      %v617 = vsub.f32 %v351, %v425
      %v618 = vsub.f32 %v352, %v424
      %v619 = vsub.f32 %v353, %v425
      %v620 = vsub.f32 %v354, %v424
      %v621 = vsub.f32 %v355, %v425
      %v622 = vsub.f32 %v356, %v424
      %v623 = vsub.f32 %v357, %v425
      %v624 = vsub.f32 %v358, %v424
      %v625 = vsub.f32 %v359, %v425
      %v626 = vsub.f32 %v360, %v424
      %v627 = vsub.f32 %v361, %v425
      %v628 = vsub.f32 %v362, %v424
      %v629 = vsub.f32 %v363, %v425
      %v630 = vsub.f32 %v364, %v424
      %v631 = vsub.f32 %v365, %v425
      %v632 = vsub.f32 %v366, %v424
      %v633 = vsub.f32 %v367, %v425
      %v634 = vsub.f32 %v368, %v424
      %v635 = vsub.f32 %v369, %v425
      %v636 = vsub.f32 %v370, %v424
      %v637 = vsub.f32 %v371, %v425
      %v638 = vsub.f32 %v340, %v426
      %v639 = vsub.f32 %v341, %v427
      %v640 = vsub.f32 %v342, %v426
      %v641 = vsub.f32 %v343, %v427
      %v642 = vsub.f32 %v344, %v426
      %v643 = vsub.f32 %v345, %v427
      %v644 = vsub.f32 %v346, %v426
      %v645 = vsub.f32 %v347, %v427
      %v646 = vsub.f32 %v348, %v426
      %v647 = vsub.f32 %v349, %v427
      %v648 = vsub.f32 %v350, %v426
      %v649 = vsub.f32 %v351, %v427
      %v650 = vsub.f32 %v352, %v426
      %v651 = vsub.f32 %v353, %v427
      %v652 = vsub.f32 %v354, %v426
      %v653 = vsub.f32 %v355, %v427
      %v654 = vsub.f32 %v356, %v426
      %v655 = vsub.f32 %v357, %v427
      %v656 = vsub.f32 %v358, %v426
      %v657 = vsub.f32 %v359, %v427
      %v658 = vsub.f32 %v360, %v426
      %v659 = vsub.f32 %v361, %v427
      %v660 = vsub.f32 %v362, %v426
      %v661 = vsub.f32 %v363, %v427
      %v662 = vsub.f32 %v364, %v426
      %v663 = vsub.f32 %v365, %v427
      %v664 = vsub.f32 %v366, %v426
      %v665 = vsub.f32 %v367, %v427
      %v666 = vsub.f32 %v368, %v426
      %v667 = vsub.f32 %v369, %v427
      %v668 = vsub.f32 %v370, %v426
      %v669 = vsub.f32 %v371, %v427
      %v670 = vsub.f32 %v340, %v428
      %v671 = vsub.f32 %v341, %v429
      %v672 = vsub.f32 %v342, %v428
      %v673 = vsub.f32 %v343, %v429
      %v674 = vsub.f32 %v344, %v428
      %v675 = vsub.f32 %v345, %v429
      %v676 = vsub.f32 %v346, %v428
      %v677 = vsub.f32 %v347, %v429
      %v678 = vsub.f32 %v348, %v428
      %v679 = vsub.f32 %v349, %v429
      %v680 = vsub.f32 %v350, %v428
      %v681 = vsub.f32 %v351, %v429
      %v682 = vsub.f32 %v352, %v428
      %v683 = vsub.f32 %v353, %v429
      %v684 = vsub.f32 %v354, %v428
      %v685 = vsub.f32 %v355, %v429
      %v686 = vsub.f32 %v356, %v428
      %v687 = vsub.f32 %v357, %v429
      %v688 = vsub.f32 %v358, %v428
      %v689 = vsub.f32 %v359, %v429
      %v690 = vsub.f32 %v360, %v428
      %v691 = vsub.f32 %v361, %v429
      %v692 = vsub.f32 %v362, %v428
      %v693 = vsub.f32 %v363, %v429
      %v694 = vsub.f32 %v364, %v428
      %v695 = vsub.f32 %v365, %v429
      %v696 = vsub.f32 %v366, %v428
      %v697 = vsub.f32 %v367, %v429
      %v698 = vsub.f32 %v368, %v428
      %v699 = vsub.f32 %v369, %v429
      %v700 = vsub.f32 %v370, %v428
      %v701 = vsub.f32 %v371, %v429
      %v702 = vmul.f32 %v446, 0.5
      %v703 = vmul.f32 %v447, 0.5
      %v704 = vmul.f32 %v448, 0.5
      %v705 = vmul.f32 %v449, 0.5
      %v706 = vmul.f32 %v450, 0.5
      %v707 = vmul.f32 %v451, 0.5
      %v708 = vmul.f32 %v452, 0.5
      %v709 = vmul.f32 %v453, 0.5
      %v710 = vmul.f32 %v454, 0.5
      %v711 = vmul.f32 %v455, 0.5
      %v712 = vmul.f32 %v456, 0.5
      %v713 = vmul.f32 %v457, 0.5
      %v714 = vmul.f32 %v458, 0.5
      %v715 = vmul.f32 %v459, 0.5
      %v716 = vmul.f32 %v460, 0.5
      %v717 = vmul.f32 %v461, 0.5
      %v718 = vmul.f32 %v462, 0.5
      %v719 = vmul.f32 %v463, 0.5
      %v720 = vmul.f32 %v464, 0.5
      %v721 = vmul.f32 %v465, 0.5
      %v722 = vmul.f32 %v466, 0.5
      %v723 = vmul.f32 %v467, 0.5
      %v724 = vmul.f32 %v468, 0.5
      %v725 = vmul.f32 %v469, 0.5
      %v726 = vmul.f32 %v470, 0.5
      %v727 = vmul.f32 %v471, 0.5
      %v728 = vmul.f32 %v472, 0.5
      %v729 = vmul.f32 %v473, 0.5
      %v730 = vmul.f32 %v474, 0.5
      %v731 = vmul.f32 %v475, 0.5
      %v732 = vmul.f32 %v476, 0.5
      %v733 = vmul.f32 %v477, 0.5
      %v734 = vmul.f32 %v478, 0.5
      %v735 = vmul.f32 %v479, 0.5
      %v736 = vmul.f32 %v480, 0.5
      %v737 = vmul.f32 %v481, 0.5
      %v738 = vmul.f32 %v482, 0.5
      %v739 = vmul.f32 %v483, 0.5
      %v740 = vmul.f32 %v484, 0.5
      %v741 = vmul.f32 %v485, 0.5
      %v742 = vmul.f32 %v486, 0.5
      %v743 = vmul.f32 %v487, 0.5
      %v744 = vmul.f32 %v488, 0.5
      %v745 = vmul.f32 %v489, 0.5
      %v746 = vmul.f32 %v490, 0.5
      %v747 = vmul.f32 %v491, 0.5
      %v748 = vmul.f32 %v492, 0.5
      %v749 = vmul.f32 %v493, 0.5
      %v750 = vmul.f32 %v494, 0.5
      %v751 = vmul.f32 %v495, 0.5
      %v752 = vmul.f32 %v496, 0.5
      %v753 = vmul.f32 %v497, 0.5
      %v754 = vmul.f32 %v498, 0.5
      %v755 = vmul.f32 %v499, 0.5
      %v756 = vmul.f32 %v500, 0.5
      %v757 = vmul.f32 %v501, 0.5
      %v758 = vmul.f32 %v502, 0.5
      %v759 = vmul.f32 %v503, 0.5
      %v760 = vmul.f32 %v504, 0.5
      %v761 = vmul.f32 %v505, 0.5
      %v762 = vmul.f32 %v506, 0.5
      %v763 = vmul.f32 %v507, 0.5
      %v764 = vmul.f32 %v508, 0.5
      %v765 = vmul.f32 %v509, 0.5
      %v766 = vmul.f32 %v510, 0.5
      %v767 = vmul.f32 %v511, 0.5
      %v768 = vmul.f32 %v512, 0.5
      %v769 = vmul.f32 %v513, 0.5
      %v770 = vmul.f32 %v514, 0.5
      %v771 = vmul.f32 %v515, 0.5
      %v772 = vmul.f32 %v516, 0.5
      %v773 = vmul.f32 %v517, 0.5
      %v774 = vmul.f32 %v518, 0.5
      %v775 = vmul.f32 %v519, 0.5
      %v776 = vmul.f32 %v520, 0.5
      %v777 = vmul.f32 %v521, 0.5
      %v778 = vmul.f32 %v522, 0.5
      %v779 = vmul.f32 %v523, 0.5
      %v780 = vmul.f32 %v524, 0.5
      %v781 = vmul.f32 %v525, 0.5
      %v782 = vmul.f32 %v526, 0.5
      %v783 = vmul.f32 %v527, 0.5
      %v784 = vmul.f32 %v528, 0.5
      %v785 = vmul.f32 %v529, 0.5
      %v786 = vmul.f32 %v530, 0.5
      %v787 = vmul.f32 %v531, 0.5
      %v788 = vmul.f32 %v532, 0.5
      %v789 = vmul.f32 %v533, 0.5
      %v790 = vmul.f32 %v534, 0.5
      %v791 = vmul.f32 %v535, 0.5
      %v792 = vmul.f32 %v536, 0.5
      %v793 = vmul.f32 %v537, 0.5
      %v794 = vmul.f32 %v538, 0.5
      %v795 = vmul.f32 %v539, 0.5
      %v796 = vmul.f32 %v540, 0.5
      %v797 = vmul.f32 %v541, 0.5
      %v798 = vmul.f32 %v542, 0.5
      %v799 = vmul.f32 %v543, 0.5
      %v800 = vmul.f32 %v544, 0.5
      %v801 = vmul.f32 %v545, 0.5
      %v802 = vmul.f32 %v546, 0.5
      %v803 = vmul.f32 %v547, 0.5
      %v804 = vmul.f32 %v548, 0.5
      %v805 = vmul.f32 %v549, 0.5
      %v806 = vmul.f32 %v550, 0.5
      %v807 = vmul.f32 %v551, 0.5
      %v808 = vmul.f32 %v552, 0.5
      %v809 = vmul.f32 %v553, 0.5
      %v810 = vmul.f32 %v554, 0.5
      %v811 = vmul.f32 %v555, 0.5
      %v812 = vmul.f32 %v556, 0.5
      %v813 = vmul.f32 %v557, 0.5
      %v814 = vmul.f32 %v558, 0.5
      %v815 = vmul.f32 %v559, 0.5
      %v816 = vmul.f32 %v560, 0.5
      %v817 = vmul.f32 %v561, 0.5
      %v818 = vmul.f32 %v562, 0.5
      %v819 = vmul.f32 %v563, 0.5
      %v820 = vmul.f32 %v564, 0.5
      %v821 = vmul.f32 %v565, 0.5
      %v822 = vmul.f32 %v566, 0.5
      %v823 = vmul.f32 %v567, 0.5
      %v824 = vmul.f32 %v568, 0.5
      %v825 = vmul.f32 %v569, 0.5
      %v826 = vmul.f32 %v570, 0.5
      %v827 = vmul.f32 %v571, 0.5
      %v828 = vmul.f32 %v572, 0.5
      %v829 = vmul.f32 %v573, 0.5
      %v830 = vmul.f32 %v574, 0.5
      %v831 = vmul.f32 %v575, 0.5
      %v832 = vmul.f32 %v576, 0.5
      %v833 = vmul.f32 %v577, 0.5
      %v834 = vmul.f32 %v578, 0.5
      %v835 = vmul.f32 %v579, 0.5
      %v836 = vmul.f32 %v580, 0.5
      %v837 = vmul.f32 %v581, 0.5
      %v838 = vmul.f32 %v582, 0.5
      %v839 = vmul.f32 %v583, 0.5
      %v840 = vmul.f32 %v584, 0.5
      %v841 = vmul.f32 %v585, 0.5
      %v842 = vmul.f32 %v586, 0.5
      %v843 = vmul.f32 %v587, 0.5
      %v844 = vmul.f32 %v588, 0.5
      %v845 = vmul.f32 %v589, 0.5
      %v846 = vmul.f32 %v590, 0.5
      %v847 = vmul.f32 %v591, 0.5
      %v848 = vmul.f32 %v592, 0.5
      %v849 = vmul.f32 %v593, 0.5
      %v850 = vmul.f32 %v594, 0.5
      %v851 = vmul.f32 %v595, 0.5
      %v852 = vmul.f32 %v596, 0.5
      %v853 = vmul.f32 %v597, 0.5
      %v854 = vmul.f32 %v598, 0.5
      %v855 = vmul.f32 %v599, 0.5
      %v856 = vmul.f32 %v600, 0.5
      %v857 = vmul.f32 %v601, 0.5
      %v858 = vmul.f32 %v602, 0.5
      %v859 = vmul.f32 %v603, 0.5
      %v860 = vmul.f32 %v604, 0.5
      %v861 = vmul.f32 %v605, 0.5
      %v862 = vmul.f32 %v606, 0.5
      %v863 = vmul.f32 %v607, 0.5
      %v864 = vmul.f32 %v608, 0.5
      %v865 = vmul.f32 %v609, 0.5
      %v866 = vmul.f32 %v610, 0.5
      %v867 = vmul.f32 %v611, 0.5
      %v868 = vmul.f32 %v612, 0.5
      %v869 = vmul.f32 %v613, 0.5
      %v870 = vmul.f32 %v614, 0.5
      %v871 = vmul.f32 %v615, 0.5
      %v872 = vmul.f32 %v616, 0.5
      %v873 = vmul.f32 %v617, 0.5
      %v874 = vmul.f32 %v618, 0.5
      %v875 = vmul.f32 %v619, 0.5
      %v876 = vmul.f32 %v620, 0.5
      %v877 = vmul.f32 %v621, 0.5
      %v878 = vmul.f32 %v622, 0.5
      %v879 = vmul.f32 %v623, 0.5
      %v880 = vmul.f32 %v624, 0.5
      %v881 = vmul.f32 %v625, 0.5
      %v882 = vmul.f32 %v626, 0.5
      %v883 = vmul.f32 %v627, 0.5
      %v884 = vmul.f32 %v628, 0.5
      %v885 = vmul.f32 %v629, 0.5
      %v886 = vmul.f32 %v630, 0.5
      %v887 = vmul.f32 %v631, 0.5
      %v888 = vmul.f32 %v632, 0.5
      %v889 = vmul.f32 %v633, 0.5
      %v890 = vmul.f32 %v634, 0.5
      %v891 = vmul.f32 %v635, 0.5
      %v892 = vmul.f32 %v636, 0.5
      %v893 = vmul.f32 %v637, 0.5
      %v894 = vmul.f32 %v638, 0.5
      %v895 = vmul.f32 %v639, 0.5
      %v896 = vmul.f32 %v640, 0.5
      %v897 = vmul.f32 %v641, 0.5
      %v898 = vmul.f32 %v642, 0.5
      %v899 = vmul.f32 %v643, 0.5
      %v900 = vmul.f32 %v644, 0.5
      %v901 = vmul.f32 %v645, 0.5
      %v902 = vmul.f32 %v646, 0.5
      %v903 = vmul.f32 %v647, 0.5
      %v904 = vmul.f32 %v648, 0.5
      %v905 = vmul.f32 %v649, 0.5
      %v906 = vmul.f32 %v650, 0.5
      %v907 = vmul.f32 %v651, 0.5
      %v908 = vmul.f32 %v652, 0.5
      %v909 = vmul.f32 %v653, 0.5
      %v910 = vmul.f32 %v654, 0.5
      %v911 = vmul.f32 %v655, 0.5
      %v912 = vmul.f32 %v656, 0.5
      %v913 = vmul.f32 %v657, 0.5
      %v914 = vmul.f32 %v658, 0.5
      %v915 = vmul.f32 %v659, 0.5
      %v916 = vmul.f32 %v660, 0.5
      %v917 = vmul.f32 %v661, 0.5
      %v918 = vmul.f32 %v662, 0.5
      %v919 = vmul.f32 %v663, 0.5
      %v920 = vmul.f32 %v664, 0.5
      %v921 = vmul.f32 %v665, 0.5
      %v922 = vmul.f32 %v666, 0.5
      %v923 = vmul.f32 %v667, 0.5
      %v924 = vmul.f32 %v668, 0.5
      %v925 = vmul.f32 %v669, 0.5
      %v926 = vmul.f32 %v670, 0.5
      %v927 = vmul.f32 %v671, 0.5
      %v928 = vmul.f32 %v672, 0.5
      %v929 = vmul.f32 %v673, 0.5
      %v930 = vmul.f32 %v674, 0.5
      %v931 = vmul.f32 %v675, 0.5
      %v932 = vmul.f32 %v676, 0.5
      %v933 = vmul.f32 %v677, 0.5
      %v934 = vmul.f32 %v678, 0.5
      %v935 = vmul.f32 %v679, 0.5
      %v936 = vmul.f32 %v680, 0.5
      %v937 = vmul.f32 %v681, 0.5
      %v938 = vmul.f32 %v682, 0.5
      %v939 = vmul.f32 %v683, 0.5
      %v940 = vmul.f32 %v684, 0.5
      %v941 = vmul.f32 %v685, 0.5
      %v942 = vmul.f32 %v686, 0.5
      %v943 = vmul.f32 %v687, 0.5
      %v944 = vmul.f32 %v688, 0.5
      %v945 = vmul.f32 %v689, 0.5
      %v946 = vmul.f32 %v690, 0.5
      %v947 = vmul.f32 %v691, 0.5
      %v948 = vmul.f32 %v692, 0.5
      %v949 = vmul.f32 %v693, 0.5
      %v950 = vmul.f32 %v694, 0.5
      %v951 = vmul.f32 %v695, 0.5
      %v952 = vmul.f32 %v696, 0.5
      %v953 = vmul.f32 %v697, 0.5
      %v954 = vmul.f32 %v698, 0.5
      %v955 = vmul.f32 %v699, 0.5
      %v956 = vmul.f32 %v700, 0.5
      %v957 = vmul.f32 %v701, 0.5
      %v958 = vmul.f32 %v446, 0.70710677
      %v959 = vmul.f32 %v447, 0.70710677
      %v960 = vmul.f32 %v448, 0.70710677
      %v961 = vmul.f32 %v449, 0.70710677
      %v962 = vmul.f32 %v450, 0.70710677
      %v963 = vmul.f32 %v451, 0.70710677
      %v964 = vmul.f32 %v452, 0.70710677
      %v965 = vmul.f32 %v453, 0.70710677
      %v966 = vmul.f32 %v454, 0.70710677
      %v967 = vmul.f32 %v455, 0.70710677
      %v968 = vmul.f32 %v456, 0.70710677
      %v969 = vmul.f32 %v457, 0.70710677
      %v970 = vmul.f32 %v458, 0.70710677
      %v971 = vmul.f32 %v459, 0.70710677
      %v972 = vmul.f32 %v460, 0.70710677
      %v973 = vmul.f32 %v461, 0.70710677
      %v974 = vmul.f32 %v462, 0.70710677
      %v975 = vmul.f32 %v463, 0.70710677
      %v976 = vmul.f32 %v464, 0.70710677
      %v977 = vmul.f32 %v465, 0.70710677
      %v978 = vmul.f32 %v466, 0.70710677
      %v979 = vmul.f32 %v467, 0.70710677
      %v980 = vmul.f32 %v468, 0.70710677
      %v981 = vmul.f32 %v469, 0.70710677
      %v982 = vmul.f32 %v470, 0.70710677
      %v983 = vmul.f32 %v471, 0.70710677
      %v984 = vmul.f32 %v472, 0.70710677
      %v985 = vmul.f32 %v473, 0.70710677
      %v986 = vmul.f32 %v474, 0.70710677
      %v987 = vmul.f32 %v475, 0.70710677
      %v988 = vmul.f32 %v476, 0.70710677
      %v989 = vmul.f32 %v477, 0.70710677
      %v990 = vmul.f32 %v478, 0.70710677
      %v991 = vmul.f32 %v479, 0.70710677
      %v992 = vmul.f32 %v480, 0.70710677
      %v993 = vmul.f32 %v481, 0.70710677
      %v994 = vmul.f32 %v482, 0.70710677
      %v995 = vmul.f32 %v483, 0.70710677
      %v996 = vmul.f32 %v484, 0.70710677
      %v997 = vmul.f32 %v485, 0.70710677
      %v998 = vmul.f32 %v486, 0.70710677
      %v999 = vmul.f32 %v487, 0.70710677
      %v1000 = vmul.f32 %v488, 0.70710677
      %v1001 = vmul.f32 %v489, 0.70710677
      %v1002 = vmul.f32 %v490, 0.70710677
      %v1003 = vmul.f32 %v491, 0.70710677
      %v1004 = vmul.f32 %v492, 0.70710677
      %v1005 = vmul.f32 %v493, 0.70710677
      %v1006 = vmul.f32 %v494, 0.70710677
      %v1007 = vmul.f32 %v495, 0.70710677
      %v1008 = vmul.f32 %v496, 0.70710677
      %v1009 = vmul.f32 %v497, 0.70710677
      %v1010 = vmul.f32 %v498, 0.70710677
      %v1011 = vmul.f32 %v499, 0.70710677
      %v1012 = vmul.f32 %v500, 0.70710677
      %v1013 = vmul.f32 %v501, 0.70710677
      %v1014 = vmul.f32 %v502, 0.70710677
      %v1015 = vmul.f32 %v503, 0.70710677
      %v1016 = vmul.f32 %v504, 0.70710677
      %v1017 = vmul.f32 %v505, 0.70710677
      %v1018 = vmul.f32 %v506, 0.70710677
      %v1019 = vmul.f32 %v507, 0.70710677
      %v1020 = vmul.f32 %v508, 0.70710677
      %v1021 = vmul.f32 %v509, 0.70710677
      %v1022 = vmul.f32 %v510, 0.70710677
      %v1023 = vmul.f32 %v511, 0.70710677
      %v1024 = vmul.f32 %v512, 0.70710677
      %v1025 = vmul.f32 %v513, 0.70710677
      %v1026 = vmul.f32 %v514, 0.70710677
      %v1027 = vmul.f32 %v515, 0.70710677
      %v1028 = vmul.f32 %v516, 0.70710677
      %v1029 = vmul.f32 %v517, 0.70710677
      %v1030 = vmul.f32 %v518, 0.70710677
      %v1031 = vmul.f32 %v519, 0.70710677
      %v1032 = vmul.f32 %v520, 0.70710677
      %v1033 = vmul.f32 %v521, 0.70710677
      %v1034 = vmul.f32 %v522, 0.70710677
      %v1035 = vmul.f32 %v523, 0.70710677
      %v1036 = vmul.f32 %v524, 0.70710677
      %v1037 = vmul.f32 %v525, 0.70710677
      %v1038 = vmul.f32 %v526, 0.70710677
      %v1039 = vmul.f32 %v527, 0.70710677
      %v1040 = vmul.f32 %v528, 0.70710677
      %v1041 = vmul.f32 %v529, 0.70710677
      %v1042 = vmul.f32 %v530, 0.70710677
      %v1043 = vmul.f32 %v531, 0.70710677
      %v1044 = vmul.f32 %v532, 0.70710677
      %v1045 = vmul.f32 %v533, 0.70710677
      %v1046 = vmul.f32 %v534, 0.70710677
      %v1047 = vmul.f32 %v535, 0.70710677
      %v1048 = vmul.f32 %v536, 0.70710677
      %v1049 = vmul.f32 %v537, 0.70710677
      %v1050 = vmul.f32 %v538, 0.70710677
      %v1051 = vmul.f32 %v539, 0.70710677
      %v1052 = vmul.f32 %v540, 0.70710677
      %v1053 = vmul.f32 %v541, 0.70710677
      %v1054 = vmul.f32 %v542, 0.70710677
      %v1055 = vmul.f32 %v543, 0.70710677
      %v1056 = vmul.f32 %v544, 0.70710677
      %v1057 = vmul.f32 %v545, 0.70710677
      %v1058 = vmul.f32 %v546, 0.70710677
      %v1059 = vmul.f32 %v547, 0.70710677
      %v1060 = vmul.f32 %v548, 0.70710677
      %v1061 = vmul.f32 %v549, 0.70710677
      %v1062 = vmul.f32 %v550, 0.70710677
      %v1063 = vmul.f32 %v551, 0.70710677
      %v1064 = vmul.f32 %v552, 0.70710677
      %v1065 = vmul.f32 %v553, 0.70710677
      %v1066 = vmul.f32 %v554, 0.70710677
      %v1067 = vmul.f32 %v555, 0.70710677
      %v1068 = vmul.f32 %v556, 0.70710677
      %v1069 = vmul.f32 %v557, 0.70710677
      %v1070 = vmul.f32 %v558, 0.70710677
      %v1071 = vmul.f32 %v559, 0.70710677
      %v1072 = vmul.f32 %v560, 0.70710677
      %v1073 = vmul.f32 %v561, 0.70710677
      %v1074 = vmul.f32 %v562, 0.70710677
      %v1075 = vmul.f32 %v563, 0.70710677
      %v1076 = vmul.f32 %v564, 0.70710677
      %v1077 = vmul.f32 %v565, 0.70710677
      %v1078 = vmul.f32 %v566, 0.70710677
      %v1079 = vmul.f32 %v567, 0.70710677
      %v1080 = vmul.f32 %v568, 0.70710677
      %v1081 = vmul.f32 %v569, 0.70710677
      %v1082 = vmul.f32 %v570, 0.70710677
      %v1083 = vmul.f32 %v571, 0.70710677
      %v1084 = vmul.f32 %v572, 0.70710677
      %v1085 = vmul.f32 %v573, 0.70710677
      %v1086 = vmul.f32 %v574, 0.70710677
      %v1087 = vmul.f32 %v575, 0.70710677
      %v1088 = vmul.f32 %v576, 0.70710677
      %v1089 = vmul.f32 %v577, 0.70710677
      %v1090 = vmul.f32 %v578, 0.70710677
      %v1091 = vmul.f32 %v579, 0.70710677
      %v1092 = vmul.f32 %v580, 0.70710677
      %v1093 = vmul.f32 %v581, 0.70710677
      %v1094 = vmul.f32 %v582, 0.70710677
      %v1095 = vmul.f32 %v583, 0.70710677
      %v1096 = vmul.f32 %v584, 0.70710677
      %v1097 = vmul.f32 %v585, 0.70710677
      %v1098 = vmul.f32 %v586, 0.70710677
      %v1099 = vmul.f32 %v587, 0.70710677
      %v1100 = vmul.f32 %v588, 0.70710677
      %v1101 = vmul.f32 %v589, 0.70710677
      %v1102 = vmul.f32 %v590, 0.70710677
      %v1103 = vmul.f32 %v591, 0.70710677
      %v1104 = vmul.f32 %v592, 0.70710677
      %v1105 = vmul.f32 %v593, 0.70710677
      %v1106 = vmul.f32 %v594, 0.70710677
      %v1107 = vmul.f32 %v595, 0.70710677
      %v1108 = vmul.f32 %v596, 0.70710677
      %v1109 = vmul.f32 %v597, 0.70710677
      %v1110 = vmul.f32 %v598, 0.70710677
      %v1111 = vmul.f32 %v599, 0.70710677
      %v1112 = vmul.f32 %v600, 0.70710677
      %v1113 = vmul.f32 %v601, 0.70710677
      %v1114 = vmul.f32 %v602, 0.70710677
      %v1115 = vmul.f32 %v603, 0.70710677
      %v1116 = vmul.f32 %v604, 0.70710677
      %v1117 = vmul.f32 %v605, 0.70710677
      %v1118 = vmul.f32 %v606, 0.70710677
      %v1119 = vmul.f32 %v607, 0.70710677
      %v1120 = vmul.f32 %v608, 0.70710677
      %v1121 = vmul.f32 %v609, 0.70710677
      %v1122 = vmul.f32 %v610, 0.70710677
      %v1123 = vmul.f32 %v611, 0.70710677
      %v1124 = vmul.f32 %v612, 0.70710677
      %v1125 = vmul.f32 %v613, 0.70710677
      %v1126 = vmul.f32 %v614, 0.70710677
      %v1127 = vmul.f32 %v615, 0.70710677
      %v1128 = vmul.f32 %v616, 0.70710677
      %v1129 = vmul.f32 %v617, 0.70710677
      %v1130 = vmul.f32 %v618, 0.70710677
      %v1131 = vmul.f32 %v619, 0.70710677
      %v1132 = vmul.f32 %v620, 0.70710677
      %v1133 = vmul.f32 %v621, 0.70710677
      %v1134 = vmul.f32 %v622, 0.70710677
      %v1135 = vmul.f32 %v623, 0.70710677
      %v1136 = vmul.f32 %v624, 0.70710677
      %v1137 = vmul.f32 %v625, 0.70710677
      %v1138 = vmul.f32 %v626, 0.70710677
      %v1139 = vmul.f32 %v627, 0.70710677
      %v1140 = vmul.f32 %v628, 0.70710677
      %v1141 = vmul.f32 %v629, 0.70710677
      %v1142 = vmul.f32 %v630, 0.70710677
      %v1143 = vmul.f32 %v631, 0.70710677
      %v1144 = vmul.f32 %v632, 0.70710677
      %v1145 = vmul.f32 %v633, 0.70710677
      %v1146 = vmul.f32 %v634, 0.70710677
      %v1147 = vmul.f32 %v635, 0.70710677
      %v1148 = vmul.f32 %v636, 0.70710677
      %v1149 = vmul.f32 %v637, 0.70710677
      %v1150 = vmul.f32 %v638, 0.70710677
      %v1151 = vmul.f32 %v639, 0.70710677
      %v1152 = vmul.f32 %v640, 0.70710677
      %v1153 = vmul.f32 %v641, 0.70710677
      %v1154 = vmul.f32 %v642, 0.70710677
      %v1155 = vmul.f32 %v643, 0.70710677
      %v1156 = vmul.f32 %v644, 0.70710677
      %v1157 = vmul.f32 %v645, 0.70710677
      %v1158 = vmul.f32 %v646, 0.70710677
      %v1159 = vmul.f32 %v647, 0.70710677
      %v1160 = vmul.f32 %v648, 0.70710677
      %v1161 = vmul.f32 %v649, 0.70710677
      %v1162 = vmul.f32 %v650, 0.70710677
      %v1163 = vmul.f32 %v651, 0.70710677
      %v1164 = vmul.f32 %v652, 0.70710677
      %v1165 = vmul.f32 %v653, 0.70710677
      %v1166 = vmul.f32 %v654, 0.70710677
      %v1167 = vmul.f32 %v655, 0.70710677
      %v1168 = vmul.f32 %v656, 0.70710677
      %v1169 = vmul.f32 %v657, 0.70710677
      %v1170 = vmul.f32 %v658, 0.70710677
      %v1171 = vmul.f32 %v659, 0.70710677
      %v1172 = vmul.f32 %v660, 0.70710677
      %v1173 = vmul.f32 %v661, 0.70710677
      %v1174 = vmul.f32 %v662, 0.70710677
      %v1175 = vmul.f32 %v663, 0.70710677
      %v1176 = vmul.f32 %v664, 0.70710677
      %v1177 = vmul.f32 %v665, 0.70710677
      %v1178 = vmul.f32 %v666, 0.70710677
      %v1179 = vmul.f32 %v667, 0.70710677
      %v1180 = vmul.f32 %v668, 0.70710677
      %v1181 = vmul.f32 %v669, 0.70710677
      %v1182 = vmul.f32 %v670, 0.70710677
      %v1183 = vmul.f32 %v671, 0.70710677
      %v1184 = vmul.f32 %v672, 0.70710677
      %v1185 = vmul.f32 %v673, 0.70710677
      %v1186 = vmul.f32 %v674, 0.70710677
      %v1187 = vmul.f32 %v675, 0.70710677
      %v1188 = vmul.f32 %v676, 0.70710677
      %v1189 = vmul.f32 %v677, 0.70710677
      %v1190 = vmul.f32 %v678, 0.70710677
      %v1191 = vmul.f32 %v679, 0.70710677
      %v1192 = vmul.f32 %v680, 0.70710677
      %v1193 = vmul.f32 %v681, 0.70710677
      %v1194 = vmul.f32 %v682, 0.70710677
      %v1195 = vmul.f32 %v683, 0.70710677
      %v1196 = vmul.f32 %v684, 0.70710677
      %v1197 = vmul.f32 %v685, 0.70710677
      %v1198 = vmul.f32 %v686, 0.70710677
      %v1199 = vmul.f32 %v687, 0.70710677
      %v1200 = vmul.f32 %v688, 0.70710677
      %v1201 = vmul.f32 %v689, 0.70710677
      %v1202 = vmul.f32 %v690, 0.70710677
      %v1203 = vmul.f32 %v691, 0.70710677
      %v1204 = vmul.f32 %v692, 0.70710677
      %v1205 = vmul.f32 %v693, 0.70710677
      %v1206 = vmul.f32 %v694, 0.70710677
      %v1207 = vmul.f32 %v695, 0.70710677
      %v1208 = vmul.f32 %v696, 0.70710677
      %v1209 = vmul.f32 %v697, 0.70710677
      %v1210 = vmul.f32 %v698, 0.70710677
      %v1211 = vmul.f32 %v699, 0.70710677
      %v1212 = vmul.f32 %v700, 0.70710677
      %v1213 = vmul.f32 %v701, 0.70710677
      %v1214 = vand.u32 2147483647, %v958
      %v1215 = vand.u32 2147483647, %v959
      %v1216 = vand.u32 2147483647, %v960
      %v1217 = vand.u32 2147483647, %v961
      %v1218 = vand.u32 2147483647, %v962
      %v1219 = vand.u32 2147483647, %v963
      %v1220 = vand.u32 2147483647, %v964
      %v1221 = vand.u32 2147483647, %v965
      %v1222 = vand.u32 2147483647, %v966
      %v1223 = vand.u32 2147483647, %v967
      %v1224 = vand.u32 2147483647, %v968
      %v1225 = vand.u32 2147483647, %v969
      %v1226 = vand.u32 2147483647, %v970
      %v1227 = vand.u32 2147483647, %v971
      %v1228 = vand.u32 2147483647, %v972
      %v1229 = vand.u32 2147483647, %v973
      %v1230 = vand.u32 2147483647, %v974
      %v1231 = vand.u32 2147483647, %v975
      %v1232 = vand.u32 2147483647, %v976
      %v1233 = vand.u32 2147483647, %v977
      %v1234 = vand.u32 2147483647, %v978
      %v1235 = vand.u32 2147483647, %v979
      %v1236 = vand.u32 2147483647, %v980
      %v1237 = vand.u32 2147483647, %v981
      %v1238 = vand.u32 2147483647, %v982
      %v1239 = vand.u32 2147483647, %v983
      %v1240 = vand.u32 2147483647, %v984
      %v1241 = vand.u32 2147483647, %v985
      %v1242 = vand.u32 2147483647, %v986
      %v1243 = vand.u32 2147483647, %v987
      %v1244 = vand.u32 2147483647, %v988
      %v1245 = vand.u32 2147483647, %v989
      %v1246 = vand.u32 2147483647, %v990
      %v1247 = vand.u32 2147483647, %v991
      %v1248 = vand.u32 2147483647, %v992
      %v1249 = vand.u32 2147483647, %v993
      %v1250 = vand.u32 2147483647, %v994
      %v1251 = vand.u32 2147483647, %v995
      %v1252 = vand.u32 2147483647, %v996
      %v1253 = vand.u32 2147483647, %v997
      %v1254 = vand.u32 2147483647, %v998
      %v1255 = vand.u32 2147483647, %v999
      %v1256 = vand.u32 2147483647, %v1000
      %v1257 = vand.u32 2147483647, %v1001
      %v1258 = vand.u32 2147483647, %v1002
      %v1259 = vand.u32 2147483647, %v1003
      %v1260 = vand.u32 2147483647, %v1004
      %v1261 = vand.u32 2147483647, %v1005
      %v1262 = vand.u32 2147483647, %v1006
      %v1263 = vand.u32 2147483647, %v1007
      %v1264 = vand.u32 2147483647, %v1008
      %v1265 = vand.u32 2147483647, %v1009
      %v1266 = vand.u32 2147483647, %v1010
      %v1267 = vand.u32 2147483647, %v1011
      %v1268 = vand.u32 2147483647, %v1012
      %v1269 = vand.u32 2147483647, %v1013
      %v1270 = vand.u32 2147483647, %v1014
      %v1271 = vand.u32 2147483647, %v1015
      %v1272 = vand.u32 2147483647, %v1016
      %v1273 = vand.u32 2147483647, %v1017
      %v1274 = vand.u32 2147483647, %v1018
      %v1275 = vand.u32 2147483647, %v1019
      %v1276 = vand.u32 2147483647, %v1020
      %v1277 = vand.u32 2147483647, %v1021
      %v1278 = vand.u32 2147483647, %v1022
      %v1279 = vand.u32 2147483647, %v1023
      %v1280 = vand.u32 2147483647, %v1024
      %v1281 = vand.u32 2147483647, %v1025
      %v1282 = vand.u32 2147483647, %v1026
      %v1283 = vand.u32 2147483647, %v1027
      %v1284 = vand.u32 2147483647, %v1028
      %v1285 = vand.u32 2147483647, %v1029
      %v1286 = vand.u32 2147483647, %v1030
      %v1287 = vand.u32 2147483647, %v1031
      %v1288 = vand.u32 2147483647, %v1032
      %v1289 = vand.u32 2147483647, %v1033
      %v1290 = vand.u32 2147483647, %v1034
      %v1291 = vand.u32 2147483647, %v1035
      %v1292 = vand.u32 2147483647, %v1036
      %v1293 = vand.u32 2147483647, %v1037
      %v1294 = vand.u32 2147483647, %v1038
      %v1295 = vand.u32 2147483647, %v1039
      %v1296 = vand.u32 2147483647, %v1040
      %v1297 = vand.u32 2147483647, %v1041
      %v1298 = vand.u32 2147483647, %v1042
      %v1299 = vand.u32 2147483647, %v1043
      %v1300 = vand.u32 2147483647, %v1044
      %v1301 = vand.u32 2147483647, %v1045
      %v1302 = vand.u32 2147483647, %v1046
      %v1303 = vand.u32 2147483647, %v1047
      %v1304 = vand.u32 2147483647, %v1048
      %v1305 = vand.u32 2147483647, %v1049
      %v1306 = vand.u32 2147483647, %v1050
      %v1307 = vand.u32 2147483647, %v1051
      %v1308 = vand.u32 2147483647, %v1052
      %v1309 = vand.u32 2147483647, %v1053
      %v1310 = vand.u32 2147483647, %v1054
      %v1311 = vand.u32 2147483647, %v1055
      %v1312 = vand.u32 2147483647, %v1056
      %v1313 = vand.u32 2147483647, %v1057
      %v1314 = vand.u32 2147483647, %v1058
      %v1315 = vand.u32 2147483647, %v1059
      %v1316 = vand.u32 2147483647, %v1060
      %v1317 = vand.u32 2147483647, %v1061
      %v1318 = vand.u32 2147483647, %v1062
      %v1319 = vand.u32 2147483647, %v1063
      %v1320 = vand.u32 2147483647, %v1064
      %v1321 = vand.u32 2147483647, %v1065
      %v1322 = vand.u32 2147483647, %v1066
      %v1323 = vand.u32 2147483647, %v1067
      %v1324 = vand.u32 2147483647, %v1068
      %v1325 = vand.u32 2147483647, %v1069
      %v1326 = vand.u32 2147483647, %v1070
      %v1327 = vand.u32 2147483647, %v1071
      %v1328 = vand.u32 2147483647, %v1072
      %v1329 = vand.u32 2147483647, %v1073
      %v1330 = vand.u32 2147483647, %v1074
      %v1331 = vand.u32 2147483647, %v1075
      %v1332 = vand.u32 2147483647, %v1076
      %v1333 = vand.u32 2147483647, %v1077
      %v1334 = vand.u32 2147483647, %v1078
      %v1335 = vand.u32 2147483647, %v1079
      %v1336 = vand.u32 2147483647, %v1080
      %v1337 = vand.u32 2147483647, %v1081
      %v1338 = vand.u32 2147483647, %v1082
      %v1339 = vand.u32 2147483647, %v1083
      %v1340 = vand.u32 2147483647, %v1084
      %v1341 = vand.u32 2147483647, %v1085
      %v1342 = vand.u32 2147483647, %v1086
      %v1343 = vand.u32 2147483647, %v1087
      %v1344 = vand.u32 2147483647, %v1088
      %v1345 = vand.u32 2147483647, %v1089
      %v1346 = vand.u32 2147483647, %v1090
      %v1347 = vand.u32 2147483647, %v1091
      %v1348 = vand.u32 2147483647, %v1092
      %v1349 = vand.u32 2147483647, %v1093
      %v1350 = vand.u32 2147483647, %v1094
      %v1351 = vand.u32 2147483647, %v1095
      %v1352 = vand.u32 2147483647, %v1096
      %v1353 = vand.u32 2147483647, %v1097
      %v1354 = vand.u32 2147483647, %v1098
      %v1355 = vand.u32 2147483647, %v1099
      %v1356 = vand.u32 2147483647, %v1100
      %v1357 = vand.u32 2147483647, %v1101
      %v1358 = vand.u32 2147483647, %v1102
      %v1359 = vand.u32 2147483647, %v1103
      %v1360 = vand.u32 2147483647, %v1104
      %v1361 = vand.u32 2147483647, %v1105
      %v1362 = vand.u32 2147483647, %v1106
      %v1363 = vand.u32 2147483647, %v1107
      %v1364 = vand.u32 2147483647, %v1108
      %v1365 = vand.u32 2147483647, %v1109
      %v1366 = vand.u32 2147483647, %v1110
      %v1367 = vand.u32 2147483647, %v1111
      %v1368 = vand.u32 2147483647, %v1112
      %v1369 = vand.u32 2147483647, %v1113
      %v1370 = vand.u32 2147483647, %v1114
      %v1371 = vand.u32 2147483647, %v1115
      %v1372 = vand.u32 2147483647, %v1116
      %v1373 = vand.u32 2147483647, %v1117
      %v1374 = vand.u32 2147483647, %v1118
      %v1375 = vand.u32 2147483647, %v1119
      %v1376 = vand.u32 2147483647, %v1120
      %v1377 = vand.u32 2147483647, %v1121
      %v1378 = vand.u32 2147483647, %v1122
      %v1379 = vand.u32 2147483647, %v1123
      %v1380 = vand.u32 2147483647, %v1124
      %v1381 = vand.u32 2147483647, %v1125
      %v1382 = vand.u32 2147483647, %v1126
      %v1383 = vand.u32 2147483647, %v1127
      %v1384 = vand.u32 2147483647, %v1128
      %v1385 = vand.u32 2147483647, %v1129
      %v1386 = vand.u32 2147483647, %v1130
      %v1387 = vand.u32 2147483647, %v1131
      %v1388 = vand.u32 2147483647, %v1132
      %v1389 = vand.u32 2147483647, %v1133
      %v1390 = vand.u32 2147483647, %v1134
      %v1391 = vand.u32 2147483647, %v1135
      %v1392 = vand.u32 2147483647, %v1136
      %v1393 = vand.u32 2147483647, %v1137
      %v1394 = vand.u32 2147483647, %v1138
      %v1395 = vand.u32 2147483647, %v1139
      %v1396 = vand.u32 2147483647, %v1140
      %v1397 = vand.u32 2147483647, %v1141
      %v1398 = vand.u32 2147483647, %v1142
      %v1399 = vand.u32 2147483647, %v1143
      %v1400 = vand.u32 2147483647, %v1144
      %v1401 = vand.u32 2147483647, %v1145
      %v1402 = vand.u32 2147483647, %v1146
      %v1403 = vand.u32 2147483647, %v1147
      %v1404 = vand.u32 2147483647, %v1148
      %v1405 = vand.u32 2147483647, %v1149
      %v1406 = vand.u32 2147483647, %v1150
      %v1407 = vand.u32 2147483647, %v1151
      %v1408 = vand.u32 2147483647, %v1152
      %v1409 = vand.u32 2147483647, %v1153
      %v1410 = vand.u32 2147483647, %v1154
      %v1411 = vand.u32 2147483647, %v1155
      %v1412 = vand.u32 2147483647, %v1156
      %v1413 = vand.u32 2147483647, %v1157
      %v1414 = vand.u32 2147483647, %v1158
      %v1415 = vand.u32 2147483647, %v1159
      %v1416 = vand.u32 2147483647, %v1160
      %v1417 = vand.u32 2147483647, %v1161
      %v1418 = vand.u32 2147483647, %v1162
      %v1419 = vand.u32 2147483647, %v1163
      %v1420 = vand.u32 2147483647, %v1164
      %v1421 = vand.u32 2147483647, %v1165
      %v1422 = vand.u32 2147483647, %v1166
      %v1423 = vand.u32 2147483647, %v1167
      %v1424 = vand.u32 2147483647, %v1168
      %v1425 = vand.u32 2147483647, %v1169
      %v1426 = vand.u32 2147483647, %v1170
      %v1427 = vand.u32 2147483647, %v1171
      %v1428 = vand.u32 2147483647, %v1172
      %v1429 = vand.u32 2147483647, %v1173
      %v1430 = vand.u32 2147483647, %v1174
      %v1431 = vand.u32 2147483647, %v1175
      %v1432 = vand.u32 2147483647, %v1176
      %v1433 = vand.u32 2147483647, %v1177
      %v1434 = vand.u32 2147483647, %v1178
      %v1435 = vand.u32 2147483647, %v1179
      %v1436 = vand.u32 2147483647, %v1180
      %v1437 = vand.u32 2147483647, %v1181
      %v1438 = vand.u32 2147483647, %v1182
      %v1439 = vand.u32 2147483647, %v1183
      %v1440 = vand.u32 2147483647, %v1184
      %v1441 = vand.u32 2147483647, %v1185
      %v1442 = vand.u32 2147483647, %v1186
      %v1443 = vand.u32 2147483647, %v1187
      %v1444 = vand.u32 2147483647, %v1188
      %v1445 = vand.u32 2147483647, %v1189
      %v1446 = vand.u32 2147483647, %v1190
      %v1447 = vand.u32 2147483647, %v1191
      %v1448 = vand.u32 2147483647, %v1192
      %v1449 = vand.u32 2147483647, %v1193
      %v1450 = vand.u32 2147483647, %v1194
      %v1451 = vand.u32 2147483647, %v1195
      %v1452 = vand.u32 2147483647, %v1196
      %v1453 = vand.u32 2147483647, %v1197
      %v1454 = vand.u32 2147483647, %v1198
      %v1455 = vand.u32 2147483647, %v1199
      %v1456 = vand.u32 2147483647, %v1200
      %v1457 = vand.u32 2147483647, %v1201
      %v1458 = vand.u32 2147483647, %v1202
      %v1459 = vand.u32 2147483647, %v1203
      %v1460 = vand.u32 2147483647, %v1204
      %v1461 = vand.u32 2147483647, %v1205
      %v1462 = vand.u32 2147483647, %v1206
      %v1463 = vand.u32 2147483647, %v1207
      %v1464 = vand.u32 2147483647, %v1208
      %v1465 = vand.u32 2147483647, %v1209
      %v1466 = vand.u32 2147483647, %v1210
      %v1467 = vand.u32 2147483647, %v1211
      %v1468 = vand.u32 2147483647, %v1212
      %v1469 = vand.u32 2147483647, %v1213
      %v1470 = vmul.f32 %v1214, 0.3275911
      %v1471 = vmul.f32 %v1215, 0.3275911
      %v1472 = vmul.f32 %v1216, 0.3275911
      %v1473 = vmul.f32 %v1217, 0.3275911
      %v1474 = vmul.f32 %v1218, 0.3275911
      %v1475 = vmul.f32 %v1219, 0.3275911
      %v1476 = vmul.f32 %v1220, 0.3275911
      %v1477 = vmul.f32 %v1221, 0.3275911
      %v1478 = vmul.f32 %v1222, 0.3275911
      %v1479 = vmul.f32 %v1223, 0.3275911
      %v1480 = vmul.f32 %v1224, 0.3275911
      %v1481 = vmul.f32 %v1225, 0.3275911
      %v1482 = vmul.f32 %v1226, 0.3275911
      %v1483 = vmul.f32 %v1227, 0.3275911
      %v1484 = vmul.f32 %v1228, 0.3275911
      %v1485 = vmul.f32 %v1229, 0.3275911
      %v1486 = vmul.f32 %v1230, 0.3275911
      %v1487 = vmul.f32 %v1231, 0.3275911
      %v1488 = vmul.f32 %v1232, 0.3275911
      %v1489 = vmul.f32 %v1233, 0.3275911
      %v1490 = vmul.f32 %v1234, 0.3275911
      %v1491 = vmul.f32 %v1235, 0.3275911
      %v1492 = vmul.f32 %v1236, 0.3275911
      %v1493 = vmul.f32 %v1237, 0.3275911
      %v1494 = vmul.f32 %v1238, 0.3275911
      %v1495 = vmul.f32 %v1239, 0.3275911
      %v1496 = vmul.f32 %v1240, 0.3275911
      %v1497 = vmul.f32 %v1241, 0.3275911
      %v1498 = vmul.f32 %v1242, 0.3275911
      %v1499 = vmul.f32 %v1243, 0.3275911
      %v1500 = vmul.f32 %v1244, 0.3275911
      %v1501 = vmul.f32 %v1245, 0.3275911
      %v1502 = vmul.f32 %v1246, 0.3275911
      %v1503 = vmul.f32 %v1247, 0.3275911
      %v1504 = vmul.f32 %v1248, 0.3275911
      %v1505 = vmul.f32 %v1249, 0.3275911
      %v1506 = vmul.f32 %v1250, 0.3275911
      %v1507 = vmul.f32 %v1251, 0.3275911
      %v1508 = vmul.f32 %v1252, 0.3275911
      %v1509 = vmul.f32 %v1253, 0.3275911
      %v1510 = vmul.f32 %v1254, 0.3275911
      %v1511 = vmul.f32 %v1255, 0.3275911
      %v1512 = vmul.f32 %v1256, 0.3275911
      %v1513 = vmul.f32 %v1257, 0.3275911
      %v1514 = vmul.f32 %v1258, 0.3275911
      %v1515 = vmul.f32 %v1259, 0.3275911
      %v1516 = vmul.f32 %v1260, 0.3275911
      %v1517 = vmul.f32 %v1261, 0.3275911
      %v1518 = vmul.f32 %v1262, 0.3275911
      %v1519 = vmul.f32 %v1263, 0.3275911
      %v1520 = vmul.f32 %v1264, 0.3275911
      %v1521 = vmul.f32 %v1265, 0.3275911
      %v1522 = vmul.f32 %v1266, 0.3275911
      %v1523 = vmul.f32 %v1267, 0.3275911
      %v1524 = vmul.f32 %v1268, 0.3275911
      %v1525 = vmul.f32 %v1269, 0.3275911
      %v1526 = vmul.f32 %v1270, 0.3275911
      %v1527 = vmul.f32 %v1271, 0.3275911
      %v1528 = vmul.f32 %v1272, 0.3275911
      %v1529 = vmul.f32 %v1273, 0.3275911
      %v1530 = vmul.f32 %v1274, 0.3275911
      %v1531 = vmul.f32 %v1275, 0.3275911
      %v1532 = vmul.f32 %v1276, 0.3275911
      %v1533 = vmul.f32 %v1277, 0.3275911
      %v1534 = vmul.f32 %v1278, 0.3275911
      %v1535 = vmul.f32 %v1279, 0.3275911
      %v1536 = vmul.f32 %v1280, 0.3275911
      %v1537 = vmul.f32 %v1281, 0.3275911
      %v1538 = vmul.f32 %v1282, 0.3275911
      %v1539 = vmul.f32 %v1283, 0.3275911
      %v1540 = vmul.f32 %v1284, 0.3275911
      %v1541 = vmul.f32 %v1285, 0.3275911
      %v1542 = vmul.f32 %v1286, 0.3275911
      %v1543 = vmul.f32 %v1287, 0.3275911
      %v1544 = vmul.f32 %v1288, 0.3275911
      %v1545 = vmul.f32 %v1289, 0.3275911
      %v1546 = vmul.f32 %v1290, 0.3275911
      %v1547 = vmul.f32 %v1291, 0.3275911
      %v1548 = vmul.f32 %v1292, 0.3275911
      %v1549 = vmul.f32 %v1293, 0.3275911
      %v1550 = vmul.f32 %v1294, 0.3275911
      %v1551 = vmul.f32 %v1295, 0.3275911
      %v1552 = vmul.f32 %v1296, 0.3275911
      %v1553 = vmul.f32 %v1297, 0.3275911
      %v1554 = vmul.f32 %v1298, 0.3275911
      %v1555 = vmul.f32 %v1299, 0.3275911
      %v1556 = vmul.f32 %v1300, 0.3275911
      %v1557 = vmul.f32 %v1301, 0.3275911
      %v1558 = vmul.f32 %v1302, 0.3275911
      %v1559 = vmul.f32 %v1303, 0.3275911
      %v1560 = vmul.f32 %v1304, 0.3275911
      %v1561 = vmul.f32 %v1305, 0.3275911
      %v1562 = vmul.f32 %v1306, 0.3275911
      %v1563 = vmul.f32 %v1307, 0.3275911
      %v1564 = vmul.f32 %v1308, 0.3275911
      %v1565 = vmul.f32 %v1309, 0.3275911
      %v1566 = vmul.f32 %v1310, 0.3275911
      %v1567 = vmul.f32 %v1311, 0.3275911
      %v1568 = vmul.f32 %v1312, 0.3275911
      %v1569 = vmul.f32 %v1313, 0.3275911
      %v1570 = vmul.f32 %v1314, 0.3275911
      %v1571 = vmul.f32 %v1315, 0.3275911
      %v1572 = vmul.f32 %v1316, 0.3275911
      %v1573 = vmul.f32 %v1317, 0.3275911
      %v1574 = vmul.f32 %v1318, 0.3275911
      %v1575 = vmul.f32 %v1319, 0.3275911
      %v1576 = vmul.f32 %v1320, 0.3275911
      %v1577 = vmul.f32 %v1321, 0.3275911
      %v1578 = vmul.f32 %v1322, 0.3275911
      %v1579 = vmul.f32 %v1323, 0.3275911
      %v1580 = vmul.f32 %v1324, 0.3275911
      %v1581 = vmul.f32 %v1325, 0.3275911
      %v1582 = vmul.f32 %v1326, 0.3275911
      %v1583 = vmul.f32 %v1327, 0.3275911
      %v1584 = vmul.f32 %v1328, 0.3275911
      %v1585 = vmul.f32 %v1329, 0.3275911
      %v1586 = vmul.f32 %v1330, 0.3275911
      %v1587 = vmul.f32 %v1331, 0.3275911
      %v1588 = vmul.f32 %v1332, 0.3275911
      %v1589 = vmul.f32 %v1333, 0.3275911
      %v1590 = vmul.f32 %v1334, 0.3275911
      %v1591 = vmul.f32 %v1335, 0.3275911
      %v1592 = vmul.f32 %v1336, 0.3275911
      %v1593 = vmul.f32 %v1337, 0.3275911
      %v1594 = vmul.f32 %v1338, 0.3275911
      %v1595 = vmul.f32 %v1339, 0.3275911
      %v1596 = vmul.f32 %v1340, 0.3275911
      %v1597 = vmul.f32 %v1341, 0.3275911
      %v1598 = vmul.f32 %v1342, 0.3275911
      %v1599 = vmul.f32 %v1343, 0.3275911
      %v1600 = vmul.f32 %v1344, 0.3275911
      %v1601 = vmul.f32 %v1345, 0.3275911
      %v1602 = vmul.f32 %v1346, 0.3275911
      %v1603 = vmul.f32 %v1347, 0.3275911
      %v1604 = vmul.f32 %v1348, 0.3275911
      %v1605 = vmul.f32 %v1349, 0.3275911
      %v1606 = vmul.f32 %v1350, 0.3275911
      %v1607 = vmul.f32 %v1351, 0.3275911
      %v1608 = vmul.f32 %v1352, 0.3275911
      %v1609 = vmul.f32 %v1353, 0.3275911
      %v1610 = vmul.f32 %v1354, 0.3275911
      %v1611 = vmul.f32 %v1355, 0.3275911
      %v1612 = vmul.f32 %v1356, 0.3275911
      %v1613 = vmul.f32 %v1357, 0.3275911
      %v1614 = vmul.f32 %v1358, 0.3275911
      %v1615 = vmul.f32 %v1359, 0.3275911
      %v1616 = vmul.f32 %v1360, 0.3275911
      %v1617 = vmul.f32 %v1361, 0.3275911
      %v1618 = vmul.f32 %v1362, 0.3275911
      %v1619 = vmul.f32 %v1363, 0.3275911
      %v1620 = vmul.f32 %v1364, 0.3275911
      %v1621 = vmul.f32 %v1365, 0.3275911
      %v1622 = vmul.f32 %v1366, 0.3275911
      %v1623 = vmul.f32 %v1367, 0.3275911
      %v1624 = vmul.f32 %v1368, 0.3275911
      %v1625 = vmul.f32 %v1369, 0.3275911
      %v1626 = vmul.f32 %v1370, 0.3275911
      %v1627 = vmul.f32 %v1371, 0.3275911
      %v1628 = vmul.f32 %v1372, 0.3275911
      %v1629 = vmul.f32 %v1373, 0.3275911
      %v1630 = vmul.f32 %v1374, 0.3275911
      %v1631 = vmul.f32 %v1375, 0.3275911
      %v1632 = vmul.f32 %v1376, 0.3275911
      %v1633 = vmul.f32 %v1377, 0.3275911
      %v1634 = vmul.f32 %v1378, 0.3275911
      %v1635 = vmul.f32 %v1379, 0.3275911
      %v1636 = vmul.f32 %v1380, 0.3275911
      %v1637 = vmul.f32 %v1381, 0.3275911
      %v1638 = vmul.f32 %v1382, 0.3275911
      %v1639 = vmul.f32 %v1383, 0.3275911
      %v1640 = vmul.f32 %v1384, 0.3275911
      %v1641 = vmul.f32 %v1385, 0.3275911
      %v1642 = vmul.f32 %v1386, 0.3275911
      %v1643 = vmul.f32 %v1387, 0.3275911
      %v1644 = vmul.f32 %v1388, 0.3275911
      %v1645 = vmul.f32 %v1389, 0.3275911
      %v1646 = vmul.f32 %v1390, 0.3275911
      %v1647 = vmul.f32 %v1391, 0.3275911
      %v1648 = vmul.f32 %v1392, 0.3275911
      %v1649 = vmul.f32 %v1393, 0.3275911
      %v1650 = vmul.f32 %v1394, 0.3275911
      %v1651 = vmul.f32 %v1395, 0.3275911
      %v1652 = vmul.f32 %v1396, 0.3275911
      %v1653 = vmul.f32 %v1397, 0.3275911
      %v1654 = vmul.f32 %v1398, 0.3275911
      %v1655 = vmul.f32 %v1399, 0.3275911
      %v1656 = vmul.f32 %v1400, 0.3275911
      %v1657 = vmul.f32 %v1401, 0.3275911
      %v1658 = vmul.f32 %v1402, 0.3275911
      %v1659 = vmul.f32 %v1403, 0.3275911
      %v1660 = vmul.f32 %v1404, 0.3275911
      %v1661 = vmul.f32 %v1405, 0.3275911
      %v1662 = vmul.f32 %v1406, 0.3275911
      %v1663 = vmul.f32 %v1407, 0.3275911
      %v1664 = vmul.f32 %v1408, 0.3275911
      %v1665 = vmul.f32 %v1409, 0.3275911
      %v1666 = vmul.f32 %v1410, 0.3275911
      %v1667 = vmul.f32 %v1411, 0.3275911
      %v1668 = vmul.f32 %v1412, 0.3275911
      %v1669 = vmul.f32 %v1413, 0.3275911
      %v1670 = vmul.f32 %v1414, 0.3275911
      %v1671 = vmul.f32 %v1415, 0.3275911
      %v1672 = vmul.f32 %v1416, 0.3275911
      %v1673 = vmul.f32 %v1417, 0.3275911
      %v1674 = vmul.f32 %v1418, 0.3275911
      %v1675 = vmul.f32 %v1419, 0.3275911
      %v1676 = vmul.f32 %v1420, 0.3275911
      %v1677 = vmul.f32 %v1421, 0.3275911
      %v1678 = vmul.f32 %v1422, 0.3275911
      %v1679 = vmul.f32 %v1423, 0.3275911
      %v1680 = vmul.f32 %v1424, 0.3275911
      %v1681 = vmul.f32 %v1425, 0.3275911
      %v1682 = vmul.f32 %v1426, 0.3275911
      %v1683 = vmul.f32 %v1427, 0.3275911
      %v1684 = vmul.f32 %v1428, 0.3275911
      %v1685 = vmul.f32 %v1429, 0.3275911
      %v1686 = vmul.f32 %v1430, 0.3275911
      %v1687 = vmul.f32 %v1431, 0.3275911
      %v1688 = vmul.f32 %v1432, 0.3275911
      %v1689 = vmul.f32 %v1433, 0.3275911
      %v1690 = vmul.f32 %v1434, 0.3275911
      %v1691 = vmul.f32 %v1435, 0.3275911
      %v1692 = vmul.f32 %v1436, 0.3275911
      %v1693 = vmul.f32 %v1437, 0.3275911
      %v1694 = vmul.f32 %v1438, 0.3275911
      %v1695 = vmul.f32 %v1439, 0.3275911
      %v1696 = vmul.f32 %v1440, 0.3275911
      %v1697 = vmul.f32 %v1441, 0.3275911
      %v1698 = vmul.f32 %v1442, 0.3275911
      %v1699 = vmul.f32 %v1443, 0.3275911
      %v1700 = vmul.f32 %v1444, 0.3275911
      %v1701 = vmul.f32 %v1445, 0.3275911
      %v1702 = vmul.f32 %v1446, 0.3275911
      %v1703 = vmul.f32 %v1447, 0.3275911
      %v1704 = vmul.f32 %v1448, 0.3275911
      %v1705 = vmul.f32 %v1449, 0.3275911
      %v1706 = vmul.f32 %v1450, 0.3275911
      %v1707 = vmul.f32 %v1451, 0.3275911
      %v1708 = vmul.f32 %v1452, 0.3275911
      %v1709 = vmul.f32 %v1453, 0.3275911
      %v1710 = vmul.f32 %v1454, 0.3275911
      %v1711 = vmul.f32 %v1455, 0.3275911
      %v1712 = vmul.f32 %v1456, 0.3275911
      %v1713 = vmul.f32 %v1457, 0.3275911
      %v1714 = vmul.f32 %v1458, 0.3275911
      %v1715 = vmul.f32 %v1459, 0.3275911
      %v1716 = vmul.f32 %v1460, 0.3275911
      %v1717 = vmul.f32 %v1461, 0.3275911
      %v1718 = vmul.f32 %v1462, 0.3275911
      %v1719 = vmul.f32 %v1463, 0.3275911
      %v1720 = vmul.f32 %v1464, 0.3275911
      %v1721 = vmul.f32 %v1465, 0.3275911
      %v1722 = vmul.f32 %v1466, 0.3275911
      %v1723 = vmul.f32 %v1467, 0.3275911
      %v1724 = vmul.f32 %v1468, 0.3275911
      %v1725 = vmul.f32 %v1469, 0.3275911
      %v1726 = vadd.f32 %v1470, 1.0
      %v1727 = vadd.f32 %v1471, 1.0
      %v1728 = vadd.f32 %v1472, 1.0
      %v1729 = vadd.f32 %v1473, 1.0
      %v1730 = vadd.f32 %v1474, 1.0
      %v1731 = vadd.f32 %v1475, 1.0
      %v1732 = vadd.f32 %v1476, 1.0
      %v1733 = vadd.f32 %v1477, 1.0
      %v1734 = vadd.f32 %v1478, 1.0
      %v1735 = vadd.f32 %v1479, 1.0
      %v1736 = vadd.f32 %v1480, 1.0
      %v1737 = vadd.f32 %v1481, 1.0
      %v1738 = vadd.f32 %v1482, 1.0
      %v1739 = vadd.f32 %v1483, 1.0
      %v1740 = vadd.f32 %v1484, 1.0
      %v1741 = vadd.f32 %v1485, 1.0
      %v1742 = vadd.f32 %v1486, 1.0
      %v1743 = vadd.f32 %v1487, 1.0
      %v1744 = vadd.f32 %v1488, 1.0
      %v1745 = vadd.f32 %v1489, 1.0
      %v1746 = vadd.f32 %v1490, 1.0
      %v1747 = vadd.f32 %v1491, 1.0
      %v1748 = vadd.f32 %v1492, 1.0
      %v1749 = vadd.f32 %v1493, 1.0
      %v1750 = vadd.f32 %v1494, 1.0
      %v1751 = vadd.f32 %v1495, 1.0
      %v1752 = vadd.f32 %v1496, 1.0
      %v1753 = vadd.f32 %v1497, 1.0
      %v1754 = vadd.f32 %v1498, 1.0
      %v1755 = vadd.f32 %v1499, 1.0
      %v1756 = vadd.f32 %v1500, 1.0
      %v1757 = vadd.f32 %v1501, 1.0
      %v1758 = vadd.f32 %v1502, 1.0
      %v1759 = vadd.f32 %v1503, 1.0
      %v1760 = vadd.f32 %v1504, 1.0
      %v1761 = vadd.f32 %v1505, 1.0
      %v1762 = vadd.f32 %v1506, 1.0
      %v1763 = vadd.f32 %v1507, 1.0
      %v1764 = vadd.f32 %v1508, 1.0
      %v1765 = vadd.f32 %v1509, 1.0
      %v1766 = vadd.f32 %v1510, 1.0
      %v1767 = vadd.f32 %v1511, 1.0
      %v1768 = vadd.f32 %v1512, 1.0
      %v1769 = vadd.f32 %v1513, 1.0
      %v1770 = vadd.f32 %v1514, 1.0
      %v1771 = vadd.f32 %v1515, 1.0
      %v1772 = vadd.f32 %v1516, 1.0
      %v1773 = vadd.f32 %v1517, 1.0
      %v1774 = vadd.f32 %v1518, 1.0
      %v1775 = vadd.f32 %v1519, 1.0
      %v1776 = vadd.f32 %v1520, 1.0
      %v1777 = vadd.f32 %v1521, 1.0
      %v1778 = vadd.f32 %v1522, 1.0
      %v1779 = vadd.f32 %v1523, 1.0
      %v1780 = vadd.f32 %v1524, 1.0
      %v1781 = vadd.f32 %v1525, 1.0
      %v1782 = vadd.f32 %v1526, 1.0
      %v1783 = vadd.f32 %v1527, 1.0
      %v1784 = vadd.f32 %v1528, 1.0
      %v1785 = vadd.f32 %v1529, 1.0
      %v1786 = vadd.f32 %v1530, 1.0
      %v1787 = vadd.f32 %v1531, 1.0
      %v1788 = vadd.f32 %v1532, 1.0
      %v1789 = vadd.f32 %v1533, 1.0
      %v1790 = vadd.f32 %v1534, 1.0
      %v1791 = vadd.f32 %v1535, 1.0
      %v1792 = vadd.f32 %v1536, 1.0
      %v1793 = vadd.f32 %v1537, 1.0
      %v1794 = vadd.f32 %v1538, 1.0
      %v1795 = vadd.f32 %v1539, 1.0
      %v1796 = vadd.f32 %v1540, 1.0
      %v1797 = vadd.f32 %v1541, 1.0
      %v1798 = vadd.f32 %v1542, 1.0
      %v1799 = vadd.f32 %v1543, 1.0
      %v1800 = vadd.f32 %v1544, 1.0
      %v1801 = vadd.f32 %v1545, 1.0
      %v1802 = vadd.f32 %v1546, 1.0
      %v1803 = vadd.f32 %v1547, 1.0
      %v1804 = vadd.f32 %v1548, 1.0
      %v1805 = vadd.f32 %v1549, 1.0
      %v1806 = vadd.f32 %v1550, 1.0
      %v1807 = vadd.f32 %v1551, 1.0
      %v1808 = vadd.f32 %v1552, 1.0
      %v1809 = vadd.f32 %v1553, 1.0
      %v1810 = vadd.f32 %v1554, 1.0
      %v1811 = vadd.f32 %v1555, 1.0
      %v1812 = vadd.f32 %v1556, 1.0
      %v1813 = vadd.f32 %v1557, 1.0
      %v1814 = vadd.f32 %v1558, 1.0
      %v1815 = vadd.f32 %v1559, 1.0
      %v1816 = vadd.f32 %v1560, 1.0
      %v1817 = vadd.f32 %v1561, 1.0
      %v1818 = vadd.f32 %v1562, 1.0
      %v1819 = vadd.f32 %v1563, 1.0
      %v1820 = vadd.f32 %v1564, 1.0
      %v1821 = vadd.f32 %v1565, 1.0
      %v1822 = vadd.f32 %v1566, 1.0
      %v1823 = vadd.f32 %v1567, 1.0
      %v1824 = vadd.f32 %v1568, 1.0
      %v1825 = vadd.f32 %v1569, 1.0
      %v1826 = vadd.f32 %v1570, 1.0
      %v1827 = vadd.f32 %v1571, 1.0
      %v1828 = vadd.f32 %v1572, 1.0
      %v1829 = vadd.f32 %v1573, 1.0
      %v1830 = vadd.f32 %v1574, 1.0
      %v1831 = vadd.f32 %v1575, 1.0
      %v1832 = vadd.f32 %v1576, 1.0
      %v1833 = vadd.f32 %v1577, 1.0
      %v1834 = vadd.f32 %v1578, 1.0
      %v1835 = vadd.f32 %v1579, 1.0
      %v1836 = vadd.f32 %v1580, 1.0
      %v1837 = vadd.f32 %v1581, 1.0
      %v1838 = vadd.f32 %v1582, 1.0
      %v1839 = vadd.f32 %v1583, 1.0
      %v1840 = vadd.f32 %v1584, 1.0
      %v1841 = vadd.f32 %v1585, 1.0
      %v1842 = vadd.f32 %v1586, 1.0
      %v1843 = vadd.f32 %v1587, 1.0
      %v1844 = vadd.f32 %v1588, 1.0
      %v1845 = vadd.f32 %v1589, 1.0
      %v1846 = vadd.f32 %v1590, 1.0
      %v1847 = vadd.f32 %v1591, 1.0
      %v1848 = vadd.f32 %v1592, 1.0
      %v1849 = vadd.f32 %v1593, 1.0
      %v1850 = vadd.f32 %v1594, 1.0
      %v1851 = vadd.f32 %v1595, 1.0
      %v1852 = vadd.f32 %v1596, 1.0
      %v1853 = vadd.f32 %v1597, 1.0
      %v1854 = vadd.f32 %v1598, 1.0
      %v1855 = vadd.f32 %v1599, 1.0
      %v1856 = vadd.f32 %v1600, 1.0
      %v1857 = vadd.f32 %v1601, 1.0
      %v1858 = vadd.f32 %v1602, 1.0
      %v1859 = vadd.f32 %v1603, 1.0
      %v1860 = vadd.f32 %v1604, 1.0
      %v1861 = vadd.f32 %v1605, 1.0
      %v1862 = vadd.f32 %v1606, 1.0
      %v1863 = vadd.f32 %v1607, 1.0
      %v1864 = vadd.f32 %v1608, 1.0
      %v1865 = vadd.f32 %v1609, 1.0
      %v1866 = vadd.f32 %v1610, 1.0
      %v1867 = vadd.f32 %v1611, 1.0
      %v1868 = vadd.f32 %v1612, 1.0
      %v1869 = vadd.f32 %v1613, 1.0
      %v1870 = vadd.f32 %v1614, 1.0
      %v1871 = vadd.f32 %v1615, 1.0
      %v1872 = vadd.f32 %v1616, 1.0
      %v1873 = vadd.f32 %v1617, 1.0
      %v1874 = vadd.f32 %v1618, 1.0
      %v1875 = vadd.f32 %v1619, 1.0
      %v1876 = vadd.f32 %v1620, 1.0
      %v1877 = vadd.f32 %v1621, 1.0
      %v1878 = vadd.f32 %v1622, 1.0
      %v1879 = vadd.f32 %v1623, 1.0
      %v1880 = vadd.f32 %v1624, 1.0
      %v1881 = vadd.f32 %v1625, 1.0
      %v1882 = vadd.f32 %v1626, 1.0
      %v1883 = vadd.f32 %v1627, 1.0
      %v1884 = vadd.f32 %v1628, 1.0
      %v1885 = vadd.f32 %v1629, 1.0
      %v1886 = vadd.f32 %v1630, 1.0
      %v1887 = vadd.f32 %v1631, 1.0
      %v1888 = vadd.f32 %v1632, 1.0
      %v1889 = vadd.f32 %v1633, 1.0
      %v1890 = vadd.f32 %v1634, 1.0
      %v1891 = vadd.f32 %v1635, 1.0
      %v1892 = vadd.f32 %v1636, 1.0
      %v1893 = vadd.f32 %v1637, 1.0
      %v1894 = vadd.f32 %v1638, 1.0
      %v1895 = vadd.f32 %v1639, 1.0
      %v1896 = vadd.f32 %v1640, 1.0
      %v1897 = vadd.f32 %v1641, 1.0
      %v1898 = vadd.f32 %v1642, 1.0
      %v1899 = vadd.f32 %v1643, 1.0
      %v1900 = vadd.f32 %v1644, 1.0
      %v1901 = vadd.f32 %v1645, 1.0
      %v1902 = vadd.f32 %v1646, 1.0
      %v1903 = vadd.f32 %v1647, 1.0
      %v1904 = vadd.f32 %v1648, 1.0
      %v1905 = vadd.f32 %v1649, 1.0
      %v1906 = vadd.f32 %v1650, 1.0
      %v1907 = vadd.f32 %v1651, 1.0
      %v1908 = vadd.f32 %v1652, 1.0
      %v1909 = vadd.f32 %v1653, 1.0
      %v1910 = vadd.f32 %v1654, 1.0
      %v1911 = vadd.f32 %v1655, 1.0
      %v1912 = vadd.f32 %v1656, 1.0
      %v1913 = vadd.f32 %v1657, 1.0
      %v1914 = vadd.f32 %v1658, 1.0
      %v1915 = vadd.f32 %v1659, 1.0
      %v1916 = vadd.f32 %v1660, 1.0
      %v1917 = vadd.f32 %v1661, 1.0
      %v1918 = vadd.f32 %v1662, 1.0
      %v1919 = vadd.f32 %v1663, 1.0
      %v1920 = vadd.f32 %v1664, 1.0
      %v1921 = vadd.f32 %v1665, 1.0
      %v1922 = vadd.f32 %v1666, 1.0
      %v1923 = vadd.f32 %v1667, 1.0
      %v1924 = vadd.f32 %v1668, 1.0
      %v1925 = vadd.f32 %v1669, 1.0
      %v1926 = vadd.f32 %v1670, 1.0
      %v1927 = vadd.f32 %v1671, 1.0
      %v1928 = vadd.f32 %v1672, 1.0
      %v1929 = vadd.f32 %v1673, 1.0
      %v1930 = vadd.f32 %v1674, 1.0
      %v1931 = vadd.f32 %v1675, 1.0
      %v1932 = vadd.f32 %v1676, 1.0
      %v1933 = vadd.f32 %v1677, 1.0
      %v1934 = vadd.f32 %v1678, 1.0
      %v1935 = vadd.f32 %v1679, 1.0
      %v1936 = vadd.f32 %v1680, 1.0
      %v1937 = vadd.f32 %v1681, 1.0
      %v1938 = vadd.f32 %v1682, 1.0
      %v1939 = vadd.f32 %v1683, 1.0
      %v1940 = vadd.f32 %v1684, 1.0
      %v1941 = vadd.f32 %v1685, 1.0
      %v1942 = vadd.f32 %v1686, 1.0
      %v1943 = vadd.f32 %v1687, 1.0
      %v1944 = vadd.f32 %v1688, 1.0
      %v1945 = vadd.f32 %v1689, 1.0
      %v1946 = vadd.f32 %v1690, 1.0
      %v1947 = vadd.f32 %v1691, 1.0
      %v1948 = vadd.f32 %v1692, 1.0
      %v1949 = vadd.f32 %v1693, 1.0
      %v1950 = vadd.f32 %v1694, 1.0
      %v1951 = vadd.f32 %v1695, 1.0
      %v1952 = vadd.f32 %v1696, 1.0
      %v1953 = vadd.f32 %v1697, 1.0
      %v1954 = vadd.f32 %v1698, 1.0
      %v1955 = vadd.f32 %v1699, 1.0
      %v1956 = vadd.f32 %v1700, 1.0
      %v1957 = vadd.f32 %v1701, 1.0
      %v1958 = vadd.f32 %v1702, 1.0
      %v1959 = vadd.f32 %v1703, 1.0
      %v1960 = vadd.f32 %v1704, 1.0
      %v1961 = vadd.f32 %v1705, 1.0
      %v1962 = vadd.f32 %v1706, 1.0
      %v1963 = vadd.f32 %v1707, 1.0
      %v1964 = vadd.f32 %v1708, 1.0
      %v1965 = vadd.f32 %v1709, 1.0
      %v1966 = vadd.f32 %v1710, 1.0
      %v1967 = vadd.f32 %v1711, 1.0
      %v1968 = vadd.f32 %v1712, 1.0
      %v1969 = vadd.f32 %v1713, 1.0
      %v1970 = vadd.f32 %v1714, 1.0
      %v1971 = vadd.f32 %v1715, 1.0
      %v1972 = vadd.f32 %v1716, 1.0
      %v1973 = vadd.f32 %v1717, 1.0
      %v1974 = vadd.f32 %v1718, 1.0
      %v1975 = vadd.f32 %v1719, 1.0
      %v1976 = vadd.f32 %v1720, 1.0
      %v1977 = vadd.f32 %v1721, 1.0
      %v1978 = vadd.f32 %v1722, 1.0
      %v1979 = vadd.f32 %v1723, 1.0
      %v1980 = vadd.f32 %v1724, 1.0
      %v1981 = vadd.f32 %v1725, 1.0
      %v1982 = vrcp.pop %v1726
      %v1983 = vrcp.pop %v1727
      %v1984 = vrcp.pop %v1728
      %v1985 = vrcp.pop %v1729
      %v1986 = vrcp.pop %v1730
      %v1987 = vrcp.pop %v1731
      %v1988 = vrcp.pop %v1732
      %v1989 = vrcp.pop %v1733
      %v1990 = vrcp.pop %v1734
      %v1991 = vrcp.pop %v1735
      %v1992 = vrcp.pop %v1736
      %v1993 = vrcp.pop %v1737
      %v1994 = vrcp.pop %v1738
      %v1995 = vrcp.pop %v1739
      %v1996 = vrcp.pop %v1740
      %v1997 = vrcp.pop %v1741
      %v1998 = vrcp.pop %v1742
      %v1999 = vrcp.pop %v1743
      %v2000 = vrcp.pop %v1744
      %v2001 = vrcp.pop %v1745
      %v2002 = vrcp.pop %v1746
      %v2003 = vrcp.pop %v1747
      %v2004 = vrcp.pop %v1748
      %v2005 = vrcp.pop %v1749
      %v2006 = vrcp.pop %v1750
      %v2007 = vrcp.pop %v1751
      %v2008 = vrcp.pop %v1752
      %v2009 = vrcp.pop %v1753
      %v2010 = vrcp.pop %v1754
      %v2011 = vrcp.pop %v1755
      %v2012 = vrcp.pop %v1756
      %v2013 = vrcp.pop %v1757
      %v2014 = vrcp.pop %v1758
      %v2015 = vrcp.pop %v1759
      %v2016 = vrcp.pop %v1760
      %v2017 = vrcp.pop %v1761
      %v2018 = vrcp.pop %v1762
      %v2019 = vrcp.pop %v1763
      %v2020 = vrcp.pop %v1764
      %v2021 = vrcp.pop %v1765
      %v2022 = vrcp.pop %v1766
      %v2023 = vrcp.pop %v1767
      %v2024 = vrcp.pop %v1768
      %v2025 = vrcp.pop %v1769
      %v2026 = vrcp.pop %v1770
      %v2027 = vrcp.pop %v1771
      %v2028 = vrcp.pop %v1772
      %v2029 = vrcp.pop %v1773
      %v2030 = vrcp.pop %v1774
      %v2031 = vrcp.pop %v1775
      %v2032 = vrcp.pop %v1776
      %v2033 = vrcp.pop %v1777
      %v2034 = vrcp.pop %v1778
      %v2035 = vrcp.pop %v1779
      %v2036 = vrcp.pop %v1780
      %v2037 = vrcp.pop %v1781
      %v2038 = vrcp.pop %v1782
      %v2039 = vrcp.pop %v1783
      %v2040 = vrcp.pop %v1784
      %v2041 = vrcp.pop %v1785
      %v2042 = vrcp.pop %v1786
      %v2043 = vrcp.pop %v1787
      %v2044 = vrcp.pop %v1788
      %v2045 = vrcp.pop %v1789
      %v2046 = vrcp.pop %v1790
      %v2047 = vrcp.pop %v1791
      %v2048 = vrcp.pop %v1792
      %v2049 = vrcp.pop %v1793
      %v2050 = vrcp.pop %v1794
      %v2051 = vrcp.pop %v1795
      %v2052 = vrcp.pop %v1796
      %v2053 = vrcp.pop %v1797
      %v2054 = vrcp.pop %v1798
      %v2055 = vrcp.pop %v1799
      %v2056 = vrcp.pop %v1800
      %v2057 = vrcp.pop %v1801
      %v2058 = vrcp.pop %v1802
      %v2059 = vrcp.pop %v1803
      %v2060 = vrcp.pop %v1804
      %v2061 = vrcp.pop %v1805
      %v2062 = vrcp.pop %v1806
      %v2063 = vrcp.pop %v1807
      %v2064 = vrcp.pop %v1808
      %v2065 = vrcp.pop %v1809
      %v2066 = vrcp.pop %v1810
      %v2067 = vrcp.pop %v1811
      %v2068 = vrcp.pop %v1812
      %v2069 = vrcp.pop %v1813
      %v2070 = vrcp.pop %v1814
      %v2071 = vrcp.pop %v1815
      %v2072 = vrcp.pop %v1816
      %v2073 = vrcp.pop %v1817
      %v2074 = vrcp.pop %v1818
      %v2075 = vrcp.pop %v1819
      %v2076 = vrcp.pop %v1820
      %v2077 = vrcp.pop %v1821
      %v2078 = vrcp.pop %v1822
      %v2079 = vrcp.pop %v1823
      %v2080 = vrcp.pop %v1824
      %v2081 = vrcp.pop %v1825
      %v2082 = vrcp.pop %v1826
      %v2083 = vrcp.pop %v1827
      %v2084 = vrcp.pop %v1828
      %v2085 = vrcp.pop %v1829
      %v2086 = vrcp.pop %v1830
      %v2087 = vrcp.pop %v1831
      %v2088 = vrcp.pop %v1832
      %v2089 = vrcp.pop %v1833
      %v2090 = vrcp.pop %v1834
      %v2091 = vrcp.pop %v1835
      %v2092 = vrcp.pop %v1836
      %v2093 = vrcp.pop %v1837
      %v2094 = vrcp.pop %v1838
      %v2095 = vrcp.pop %v1839
      %v2096 = vrcp.pop %v1840
      %v2097 = vrcp.pop %v1841
      %v2098 = vrcp.pop %v1842
      %v2099 = vrcp.pop %v1843
      %v2100 = vrcp.pop %v1844
      %v2101 = vrcp.pop %v1845
      %v2102 = vrcp.pop %v1846
      %v2103 = vrcp.pop %v1847
      %v2104 = vrcp.pop %v1848
      %v2105 = vrcp.pop %v1849
      %v2106 = vrcp.pop %v1850
      %v2107 = vrcp.pop %v1851
      %v2108 = vrcp.pop %v1852
      %v2109 = vrcp.pop %v1853
      %v2110 = vrcp.pop %v1854
      %v2111 = vrcp.pop %v1855
      %v2112 = vrcp.pop %v1856
      %v2113 = vrcp.pop %v1857
      %v2114 = vrcp.pop %v1858
      %v2115 = vrcp.pop %v1859
      %v2116 = vrcp.pop %v1860
      %v2117 = vrcp.pop %v1861
      %v2118 = vrcp.pop %v1862
      %v2119 = vrcp.pop %v1863
      %v2120 = vrcp.pop %v1864
      %v2121 = vrcp.pop %v1865
      %v2122 = vrcp.pop %v1866
      %v2123 = vrcp.pop %v1867
      %v2124 = vrcp.pop %v1868
      %v2125 = vrcp.pop %v1869
      %v2126 = vrcp.pop %v1870
      %v2127 = vrcp.pop %v1871
      %v2128 = vrcp.pop %v1872
      %v2129 = vrcp.pop %v1873
      %v2130 = vrcp.pop %v1874
      %v2131 = vrcp.pop %v1875
      %v2132 = vrcp.pop %v1876
      %v2133 = vrcp.pop %v1877
      %v2134 = vrcp.pop %v1878
      %v2135 = vrcp.pop %v1879
      %v2136 = vrcp.pop %v1880
      %v2137 = vrcp.pop %v1881
      %v2138 = vrcp.pop %v1882
      %v2139 = vrcp.pop %v1883
      %v2140 = vrcp.pop %v1884
      %v2141 = vrcp.pop %v1885
      %v2142 = vrcp.pop %v1886
      %v2143 = vrcp.pop %v1887
      %v2144 = vrcp.pop %v1888
      %v2145 = vrcp.pop %v1889
      %v2146 = vrcp.pop %v1890
      %v2147 = vrcp.pop %v1891
      %v2148 = vrcp.pop %v1892
      %v2149 = vrcp.pop %v1893
      %v2150 = vrcp.pop %v1894
      %v2151 = vrcp.pop %v1895
      %v2152 = vrcp.pop %v1896
      %v2153 = vrcp.pop %v1897
      %v2154 = vrcp.pop %v1898
      %v2155 = vrcp.pop %v1899
      %v2156 = vrcp.pop %v1900
      %v2157 = vrcp.pop %v1901
      %v2158 = vrcp.pop %v1902
      %v2159 = vrcp.pop %v1903
      %v2160 = vrcp.pop %v1904
      %v2161 = vrcp.pop %v1905
      %v2162 = vrcp.pop %v1906
      %v2163 = vrcp.pop %v1907
      %v2164 = vrcp.pop %v1908
      %v2165 = vrcp.pop %v1909
      %v2166 = vrcp.pop %v1910
      %v2167 = vrcp.pop %v1911
      %v2168 = vrcp.pop %v1912
      %v2169 = vrcp.pop %v1913
      %v2170 = vrcp.pop %v1914
      %v2171 = vrcp.pop %v1915
      %v2172 = vrcp.pop %v1916
      %v2173 = vrcp.pop %v1917
      %v2174 = vrcp.pop %v1918
      %v2175 = vrcp.pop %v1919
      %v2176 = vrcp.pop %v1920
      %v2177 = vrcp.pop %v1921
      %v2178 = vrcp.pop %v1922
      %v2179 = vrcp.pop %v1923
      %v2180 = vrcp.pop %v1924
      %v2181 = vrcp.pop %v1925
      %v2182 = vrcp.pop %v1926
      %v2183 = vrcp.pop %v1927
      %v2184 = vrcp.pop %v1928
      %v2185 = vrcp.pop %v1929
      %v2186 = vrcp.pop %v1930
      %v2187 = vrcp.pop %v1931
      %v2188 = vrcp.pop %v1932
      %v2189 = vrcp.pop %v1933
      %v2190 = vrcp.pop %v1934
      %v2191 = vrcp.pop %v1935
      %v2192 = vrcp.pop %v1936
      %v2193 = vrcp.pop %v1937
      %v2194 = vrcp.pop %v1938
      %v2195 = vrcp.pop %v1939
      %v2196 = vrcp.pop %v1940
      %v2197 = vrcp.pop %v1941
      %v2198 = vrcp.pop %v1942
      %v2199 = vrcp.pop %v1943
      %v2200 = vrcp.pop %v1944
      %v2201 = vrcp.pop %v1945
      %v2202 = vrcp.pop %v1946
      %v2203 = vrcp.pop %v1947
      %v2204 = vrcp.pop %v1948
      %v2205 = vrcp.pop %v1949
      %v2206 = vrcp.pop %v1950
      %v2207 = vrcp.pop %v1951
      %v2208 = vrcp.pop %v1952
      %v2209 = vrcp.pop %v1953
      %v2210 = vrcp.pop %v1954
      %v2211 = vrcp.pop %v1955
      %v2212 = vrcp.pop %v1956
      %v2213 = vrcp.pop %v1957
      %v2214 = vrcp.pop %v1958
      %v2215 = vrcp.pop %v1959
      %v2216 = vrcp.pop %v1960
      %v2217 = vrcp.pop %v1961
      %v2218 = vrcp.pop %v1962
      %v2219 = vrcp.pop %v1963
      %v2220 = vrcp.pop %v1964
      %v2221 = vrcp.pop %v1965
      %v2222 = vrcp.pop %v1966
      %v2223 = vrcp.pop %v1967
      %v2224 = vrcp.pop %v1968
      %v2225 = vrcp.pop %v1969
      %v2226 = vrcp.pop %v1970
      %v2227 = vrcp.pop %v1971
      %v2228 = vrcp.pop %v1972
      %v2229 = vrcp.pop %v1973
      %v2230 = vrcp.pop %v1974
      %v2231 = vrcp.pop %v1975
      %v2232 = vrcp.pop %v1976
      %v2233 = vrcp.pop %v1977
      %v2234 = vrcp.pop %v1978
      %v2235 = vrcp.pop %v1979
      %v2236 = vrcp.pop %v1980
      %v2237 = vrcp.pop %v1981
      %v2238 = vmul.f32 %v1982, 1.0614054
      %v2239 = vmul.f32 %v1983, 1.0614054
      %v2240 = vmul.f32 %v1984, 1.0614054
      %v2241 = vmul.f32 %v1985, 1.0614054
      %v2242 = vmul.f32 %v1986, 1.0614054
      %v2243 = vmul.f32 %v1987, 1.0614054
      %v2244 = vmul.f32 %v1988, 1.0614054
      %v2245 = vmul.f32 %v1989, 1.0614054
      %v2246 = vmul.f32 %v1990, 1.0614054
      %v2247 = vmul.f32 %v1991, 1.0614054
      %v2248 = vmul.f32 %v1992, 1.0614054
      %v2249 = vmul.f32 %v1993, 1.0614054
      %v2250 = vmul.f32 %v1994, 1.0614054
      %v2251 = vmul.f32 %v1995, 1.0614054
      %v2252 = vmul.f32 %v1996, 1.0614054
      %v2253 = vmul.f32 %v1997, 1.0614054
      %v2254 = vmul.f32 %v1998, 1.0614054
      %v2255 = vmul.f32 %v1999, 1.0614054
      %v2256 = vmul.f32 %v2000, 1.0614054
      %v2257 = vmul.f32 %v2001, 1.0614054
      %v2258 = vmul.f32 %v2002, 1.0614054
      %v2259 = vmul.f32 %v2003, 1.0614054
      %v2260 = vmul.f32 %v2004, 1.0614054
      %v2261 = vmul.f32 %v2005, 1.0614054
      %v2262 = vmul.f32 %v2006, 1.0614054
      %v2263 = vmul.f32 %v2007, 1.0614054
      %v2264 = vmul.f32 %v2008, 1.0614054
      %v2265 = vmul.f32 %v2009, 1.0614054
      %v2266 = vmul.f32 %v2010, 1.0614054
      %v2267 = vmul.f32 %v2011, 1.0614054
      %v2268 = vmul.f32 %v2012, 1.0614054
      %v2269 = vmul.f32 %v2013, 1.0614054
      %v2270 = vmul.f32 %v2014, 1.0614054
      %v2271 = vmul.f32 %v2015, 1.0614054
      %v2272 = vmul.f32 %v2016, 1.0614054
      %v2273 = vmul.f32 %v2017, 1.0614054
      %v2274 = vmul.f32 %v2018, 1.0614054
      %v2275 = vmul.f32 %v2019, 1.0614054
      %v2276 = vmul.f32 %v2020, 1.0614054
      %v2277 = vmul.f32 %v2021, 1.0614054
      %v2278 = vmul.f32 %v2022, 1.0614054
      %v2279 = vmul.f32 %v2023, 1.0614054
      %v2280 = vmul.f32 %v2024, 1.0614054
      %v2281 = vmul.f32 %v2025, 1.0614054
      %v2282 = vmul.f32 %v2026, 1.0614054
      %v2283 = vmul.f32 %v2027, 1.0614054
      %v2284 = vmul.f32 %v2028, 1.0614054
      %v2285 = vmul.f32 %v2029, 1.0614054
      %v2286 = vmul.f32 %v2030, 1.0614054
      %v2287 = vmul.f32 %v2031, 1.0614054
      %v2288 = vmul.f32 %v2032, 1.0614054
      %v2289 = vmul.f32 %v2033, 1.0614054
      %v2290 = vmul.f32 %v2034, 1.0614054
      %v2291 = vmul.f32 %v2035, 1.0614054
      %v2292 = vmul.f32 %v2036, 1.0614054
      %v2293 = vmul.f32 %v2037, 1.0614054
      %v2294 = vmul.f32 %v2038, 1.0614054
      %v2295 = vmul.f32 %v2039, 1.0614054
      %v2296 = vmul.f32 %v2040, 1.0614054
      %v2297 = vmul.f32 %v2041, 1.0614054
      %v2298 = vmul.f32 %v2042, 1.0614054
      %v2299 = vmul.f32 %v2043, 1.0614054
      %v2300 = vmul.f32 %v2044, 1.0614054
      %v2301 = vmul.f32 %v2045, 1.0614054
      %v2302 = vmul.f32 %v2046, 1.0614054
      %v2303 = vmul.f32 %v2047, 1.0614054
      %v2304 = vmul.f32 %v2048, 1.0614054
      %v2305 = vmul.f32 %v2049, 1.0614054
      %v2306 = vmul.f32 %v2050, 1.0614054
      %v2307 = vmul.f32 %v2051, 1.0614054
      %v2308 = vmul.f32 %v2052, 1.0614054
      %v2309 = vmul.f32 %v2053, 1.0614054
      %v2310 = vmul.f32 %v2054, 1.0614054
      %v2311 = vmul.f32 %v2055, 1.0614054
      %v2312 = vmul.f32 %v2056, 1.0614054
      %v2313 = vmul.f32 %v2057, 1.0614054
      %v2314 = vmul.f32 %v2058, 1.0614054
      %v2315 = vmul.f32 %v2059, 1.0614054
      %v2316 = vmul.f32 %v2060, 1.0614054
      %v2317 = vmul.f32 %v2061, 1.0614054
      %v2318 = vmul.f32 %v2062, 1.0614054
      %v2319 = vmul.f32 %v2063, 1.0614054
      %v2320 = vmul.f32 %v2064, 1.0614054
      %v2321 = vmul.f32 %v2065, 1.0614054
      %v2322 = vmul.f32 %v2066, 1.0614054
      %v2323 = vmul.f32 %v2067, 1.0614054
      %v2324 = vmul.f32 %v2068, 1.0614054
      %v2325 = vmul.f32 %v2069, 1.0614054
      %v2326 = vmul.f32 %v2070, 1.0614054
      %v2327 = vmul.f32 %v2071, 1.0614054
      %v2328 = vmul.f32 %v2072, 1.0614054
      %v2329 = vmul.f32 %v2073, 1.0614054
      %v2330 = vmul.f32 %v2074, 1.0614054
      %v2331 = vmul.f32 %v2075, 1.0614054
      %v2332 = vmul.f32 %v2076, 1.0614054
      %v2333 = vmul.f32 %v2077, 1.0614054
      %v2334 = vmul.f32 %v2078, 1.0614054
      %v2335 = vmul.f32 %v2079, 1.0614054
      %v2336 = vmul.f32 %v2080, 1.0614054
      %v2337 = vmul.f32 %v2081, 1.0614054
      %v2338 = vmul.f32 %v2082, 1.0614054
      %v2339 = vmul.f32 %v2083, 1.0614054
      %v2340 = vmul.f32 %v2084, 1.0614054
      %v2341 = vmul.f32 %v2085, 1.0614054
      %v2342 = vmul.f32 %v2086, 1.0614054
      %v2343 = vmul.f32 %v2087, 1.0614054
      %v2344 = vmul.f32 %v2088, 1.0614054
      %v2345 = vmul.f32 %v2089, 1.0614054
      %v2346 = vmul.f32 %v2090, 1.0614054
      %v2347 = vmul.f32 %v2091, 1.0614054
      %v2348 = vmul.f32 %v2092, 1.0614054
      %v2349 = vmul.f32 %v2093, 1.0614054
      %v2350 = vmul.f32 %v2094, 1.0614054
      %v2351 = vmul.f32 %v2095, 1.0614054
      %v2352 = vmul.f32 %v2096, 1.0614054
      %v2353 = vmul.f32 %v2097, 1.0614054
      %v2354 = vmul.f32 %v2098, 1.0614054
      %v2355 = vmul.f32 %v2099, 1.0614054
      %v2356 = vmul.f32 %v2100, 1.0614054
      %v2357 = vmul.f32 %v2101, 1.0614054
      %v2358 = vmul.f32 %v2102, 1.0614054
      %v2359 = vmul.f32 %v2103, 1.0614054
      %v2360 = vmul.f32 %v2104, 1.0614054
      %v2361 = vmul.f32 %v2105, 1.0614054
      %v2362 = vmul.f32 %v2106, 1.0614054
      %v2363 = vmul.f32 %v2107, 1.0614054
      %v2364 = vmul.f32 %v2108, 1.0614054
      %v2365 = vmul.f32 %v2109, 1.0614054
      %v2366 = vmul.f32 %v2110, 1.0614054
      %v2367 = vmul.f32 %v2111, 1.0614054
      %v2368 = vmul.f32 %v2112, 1.0614054
      %v2369 = vmul.f32 %v2113, 1.0614054
      %v2370 = vmul.f32 %v2114, 1.0614054
      %v2371 = vmul.f32 %v2115, 1.0614054
      %v2372 = vmul.f32 %v2116, 1.0614054
      %v2373 = vmul.f32 %v2117, 1.0614054
      %v2374 = vmul.f32 %v2118, 1.0614054
      %v2375 = vmul.f32 %v2119, 1.0614054
      %v2376 = vmul.f32 %v2120, 1.0614054
      %v2377 = vmul.f32 %v2121, 1.0614054
      %v2378 = vmul.f32 %v2122, 1.0614054
      %v2379 = vmul.f32 %v2123, 1.0614054
      %v2380 = vmul.f32 %v2124, 1.0614054
      %v2381 = vmul.f32 %v2125, 1.0614054
      %v2382 = vmul.f32 %v2126, 1.0614054
      %v2383 = vmul.f32 %v2127, 1.0614054
      %v2384 = vmul.f32 %v2128, 1.0614054
      %v2385 = vmul.f32 %v2129, 1.0614054
      %v2386 = vmul.f32 %v2130, 1.0614054
      %v2387 = vmul.f32 %v2131, 1.0614054
      %v2388 = vmul.f32 %v2132, 1.0614054
      %v2389 = vmul.f32 %v2133, 1.0614054
      %v2390 = vmul.f32 %v2134, 1.0614054
      %v2391 = vmul.f32 %v2135, 1.0614054
      %v2392 = vmul.f32 %v2136, 1.0614054
      %v2393 = vmul.f32 %v2137, 1.0614054
      %v2394 = vmul.f32 %v2138, 1.0614054
      %v2395 = vmul.f32 %v2139, 1.0614054
      %v2396 = vmul.f32 %v2140, 1.0614054
      %v2397 = vmul.f32 %v2141, 1.0614054
      %v2398 = vmul.f32 %v2142, 1.0614054
      %v2399 = vmul.f32 %v2143, 1.0614054
      %v2400 = vmul.f32 %v2144, 1.0614054
      %v2401 = vmul.f32 %v2145, 1.0614054
      %v2402 = vmul.f32 %v2146, 1.0614054
      %v2403 = vmul.f32 %v2147, 1.0614054
      %v2404 = vmul.f32 %v2148, 1.0614054
      %v2405 = vmul.f32 %v2149, 1.0614054
      %v2406 = vmul.f32 %v2150, 1.0614054
      %v2407 = vmul.f32 %v2151, 1.0614054
      %v2408 = vmul.f32 %v2152, 1.0614054
      %v2409 = vmul.f32 %v2153, 1.0614054
      %v2410 = vmul.f32 %v2154, 1.0614054
      %v2411 = vmul.f32 %v2155, 1.0614054
      %v2412 = vmul.f32 %v2156, 1.0614054
      %v2413 = vmul.f32 %v2157, 1.0614054
      %v2414 = vmul.f32 %v2158, 1.0614054
      %v2415 = vmul.f32 %v2159, 1.0614054
      %v2416 = vmul.f32 %v2160, 1.0614054
      %v2417 = vmul.f32 %v2161, 1.0614054
      %v2418 = vmul.f32 %v2162, 1.0614054
      %v2419 = vmul.f32 %v2163, 1.0614054
      %v2420 = vmul.f32 %v2164, 1.0614054
      %v2421 = vmul.f32 %v2165, 1.0614054
      %v2422 = vmul.f32 %v2166, 1.0614054
      %v2423 = vmul.f32 %v2167, 1.0614054
      %v2424 = vmul.f32 %v2168, 1.0614054
      %v2425 = vmul.f32 %v2169, 1.0614054
      %v2426 = vmul.f32 %v2170, 1.0614054
      %v2427 = vmul.f32 %v2171, 1.0614054
      %v2428 = vmul.f32 %v2172, 1.0614054
      %v2429 = vmul.f32 %v2173, 1.0614054
      %v2430 = vmul.f32 %v2174, 1.0614054
      %v2431 = vmul.f32 %v2175, 1.0614054
      %v2432 = vmul.f32 %v2176, 1.0614054
      %v2433 = vmul.f32 %v2177, 1.0614054
      %v2434 = vmul.f32 %v2178, 1.0614054
      %v2435 = vmul.f32 %v2179, 1.0614054
      %v2436 = vmul.f32 %v2180, 1.0614054
      %v2437 = vmul.f32 %v2181, 1.0614054
      %v2438 = vmul.f32 %v2182, 1.0614054
      %v2439 = vmul.f32 %v2183, 1.0614054
      %v2440 = vmul.f32 %v2184, 1.0614054
      %v2441 = vmul.f32 %v2185, 1.0614054
      %v2442 = vmul.f32 %v2186, 1.0614054
      %v2443 = vmul.f32 %v2187, 1.0614054
      %v2444 = vmul.f32 %v2188, 1.0614054
      %v2445 = vmul.f32 %v2189, 1.0614054
      %v2446 = vmul.f32 %v2190, 1.0614054
      %v2447 = vmul.f32 %v2191, 1.0614054
      %v2448 = vmul.f32 %v2192, 1.0614054
      %v2449 = vmul.f32 %v2193, 1.0614054
      %v2450 = vmul.f32 %v2194, 1.0614054
      %v2451 = vmul.f32 %v2195, 1.0614054
      %v2452 = vmul.f32 %v2196, 1.0614054
      %v2453 = vmul.f32 %v2197, 1.0614054
      %v2454 = vmul.f32 %v2198, 1.0614054
      %v2455 = vmul.f32 %v2199, 1.0614054
      %v2456 = vmul.f32 %v2200, 1.0614054
      %v2457 = vmul.f32 %v2201, 1.0614054
      %v2458 = vmul.f32 %v2202, 1.0614054
      %v2459 = vmul.f32 %v2203, 1.0614054
      %v2460 = vmul.f32 %v2204, 1.0614054
      %v2461 = vmul.f32 %v2205, 1.0614054
      %v2462 = vmul.f32 %v2206, 1.0614054
      %v2463 = vmul.f32 %v2207, 1.0614054
      %v2464 = vmul.f32 %v2208, 1.0614054
      %v2465 = vmul.f32 %v2209, 1.0614054
      %v2466 = vmul.f32 %v2210, 1.0614054
      %v2467 = vmul.f32 %v2211, 1.0614054
      %v2468 = vmul.f32 %v2212, 1.0614054
      %v2469 = vmul.f32 %v2213, 1.0614054
      %v2470 = vmul.f32 %v2214, 1.0614054
      %v2471 = vmul.f32 %v2215, 1.0614054
      %v2472 = vmul.f32 %v2216, 1.0614054
      %v2473 = vmul.f32 %v2217, 1.0614054
      %v2474 = vmul.f32 %v2218, 1.0614054
      %v2475 = vmul.f32 %v2219, 1.0614054
      %v2476 = vmul.f32 %v2220, 1.0614054
      %v2477 = vmul.f32 %v2221, 1.0614054
      %v2478 = vmul.f32 %v2222, 1.0614054
      %v2479 = vmul.f32 %v2223, 1.0614054
      %v2480 = vmul.f32 %v2224, 1.0614054
      %v2481 = vmul.f32 %v2225, 1.0614054
      %v2482 = vmul.f32 %v2226, 1.0614054
      %v2483 = vmul.f32 %v2227, 1.0614054
      %v2484 = vmul.f32 %v2228, 1.0614054
      %v2485 = vmul.f32 %v2229, 1.0614054
      %v2486 = vmul.f32 %v2230, 1.0614054
      %v2487 = vmul.f32 %v2231, 1.0614054
      %v2488 = vmul.f32 %v2232, 1.0614054
      %v2489 = vmul.f32 %v2233, 1.0614054
      %v2490 = vmul.f32 %v2234, 1.0614054
      %v2491 = vmul.f32 %v2235, 1.0614054
      %v2492 = vmul.f32 %v2236, 1.0614054
      %v2493 = vmul.f32 %v2237, 1.0614054
      %v2494 = vadd.f32 %v2238, -1.4531521
      %v2495 = vadd.f32 %v2239, -1.4531521
      %v2496 = vadd.f32 %v2240, -1.4531521
      %v2497 = vadd.f32 %v2241, -1.4531521
      %v2498 = vadd.f32 %v2242, -1.4531521
      %v2499 = vadd.f32 %v2243, -1.4531521
      %v2500 = vadd.f32 %v2244, -1.4531521
      %v2501 = vadd.f32 %v2245, -1.4531521
      %v2502 = vadd.f32 %v2246, -1.4531521
      %v2503 = vadd.f32 %v2247, -1.4531521
      %v2504 = vadd.f32 %v2248, -1.4531521
      %v2505 = vadd.f32 %v2249, -1.4531521
      %v2506 = vadd.f32 %v2250, -1.4531521
      %v2507 = vadd.f32 %v2251, -1.4531521
      %v2508 = vadd.f32 %v2252, -1.4531521
      %v2509 = vadd.f32 %v2253, -1.4531521
      %v2510 = vadd.f32 %v2254, -1.4531521
      %v2511 = vadd.f32 %v2255, -1.4531521
      %v2512 = vadd.f32 %v2256, -1.4531521
      %v2513 = vadd.f32 %v2257, -1.4531521
      %v2514 = vadd.f32 %v2258, -1.4531521
      %v2515 = vadd.f32 %v2259, -1.4531521
      %v2516 = vadd.f32 %v2260, -1.4531521
      %v2517 = vadd.f32 %v2261, -1.4531521
      %v2518 = vadd.f32 %v2262, -1.4531521
      %v2519 = vadd.f32 %v2263, -1.4531521
      %v2520 = vadd.f32 %v2264, -1.4531521
      %v2521 = vadd.f32 %v2265, -1.4531521
      %v2522 = vadd.f32 %v2266, -1.4531521
      %v2523 = vadd.f32 %v2267, -1.4531521
      %v2524 = vadd.f32 %v2268, -1.4531521
      %v2525 = vadd.f32 %v2269, -1.4531521
      %v2526 = vadd.f32 %v2270, -1.4531521
      %v2527 = vadd.f32 %v2271, -1.4531521
      %v2528 = vadd.f32 %v2272, -1.4531521
      %v2529 = vadd.f32 %v2273, -1.4531521
      %v2530 = vadd.f32 %v2274, -1.4531521
      %v2531 = vadd.f32 %v2275, -1.4531521
      %v2532 = vadd.f32 %v2276, -1.4531521
      %v2533 = vadd.f32 %v2277, -1.4531521
      %v2534 = vadd.f32 %v2278, -1.4531521
      %v2535 = vadd.f32 %v2279, -1.4531521
      %v2536 = vadd.f32 %v2280, -1.4531521
      %v2537 = vadd.f32 %v2281, -1.4531521
      %v2538 = vadd.f32 %v2282, -1.4531521
      %v2539 = vadd.f32 %v2283, -1.4531521
      %v2540 = vadd.f32 %v2284, -1.4531521
      %v2541 = vadd.f32 %v2285, -1.4531521
      %v2542 = vadd.f32 %v2286, -1.4531521
      %v2543 = vadd.f32 %v2287, -1.4531521
      %v2544 = vadd.f32 %v2288, -1.4531521
      %v2545 = vadd.f32 %v2289, -1.4531521
      %v2546 = vadd.f32 %v2290, -1.4531521
      %v2547 = vadd.f32 %v2291, -1.4531521
      %v2548 = vadd.f32 %v2292, -1.4531521
      %v2549 = vadd.f32 %v2293, -1.4531521
      %v2550 = vadd.f32 %v2294, -1.4531521
      %v2551 = vadd.f32 %v2295, -1.4531521
      %v2552 = vadd.f32 %v2296, -1.4531521
      %v2553 = vadd.f32 %v2297, -1.4531521
      %v2554 = vadd.f32 %v2298, -1.4531521
      %v2555 = vadd.f32 %v2299, -1.4531521
      %v2556 = vadd.f32 %v2300, -1.4531521
      %v2557 = vadd.f32 %v2301, -1.4531521
      %v2558 = vadd.f32 %v2302, -1.4531521
      %v2559 = vadd.f32 %v2303, -1.4531521
      %v2560 = vadd.f32 %v2304, -1.4531521
      %v2561 = vadd.f32 %v2305, -1.4531521
      %v2562 = vadd.f32 %v2306, -1.4531521
      %v2563 = vadd.f32 %v2307, -1.4531521
      %v2564 = vadd.f32 %v2308, -1.4531521
      %v2565 = vadd.f32 %v2309, -1.4531521
      %v2566 = vadd.f32 %v2310, -1.4531521
      %v2567 = vadd.f32 %v2311, -1.4531521
      %v2568 = vadd.f32 %v2312, -1.4531521
      %v2569 = vadd.f32 %v2313, -1.4531521
      %v2570 = vadd.f32 %v2314, -1.4531521
      %v2571 = vadd.f32 %v2315, -1.4531521
      %v2572 = vadd.f32 %v2316, -1.4531521
      %v2573 = vadd.f32 %v2317, -1.4531521
      %v2574 = vadd.f32 %v2318, -1.4531521
      %v2575 = vadd.f32 %v2319, -1.4531521
      %v2576 = vadd.f32 %v2320, -1.4531521
      %v2577 = vadd.f32 %v2321, -1.4531521
      %v2578 = vadd.f32 %v2322, -1.4531521
      %v2579 = vadd.f32 %v2323, -1.4531521
      %v2580 = vadd.f32 %v2324, -1.4531521
      %v2581 = vadd.f32 %v2325, -1.4531521
      %v2582 = vadd.f32 %v2326, -1.4531521
      %v2583 = vadd.f32 %v2327, -1.4531521
      %v2584 = vadd.f32 %v2328, -1.4531521
      %v2585 = vadd.f32 %v2329, -1.4531521
      %v2586 = vadd.f32 %v2330, -1.4531521
      %v2587 = vadd.f32 %v2331, -1.4531521
      %v2588 = vadd.f32 %v2332, -1.4531521
      %v2589 = vadd.f32 %v2333, -1.4531521
      %v2590 = vadd.f32 %v2334, -1.4531521
      %v2591 = vadd.f32 %v2335, -1.4531521
      %v2592 = vadd.f32 %v2336, -1.4531521
      %v2593 = vadd.f32 %v2337, -1.4531521
      %v2594 = vadd.f32 %v2338, -1.4531521
      %v2595 = vadd.f32 %v2339, -1.4531521
      %v2596 = vadd.f32 %v2340, -1.4531521
      %v2597 = vadd.f32 %v2341, -1.4531521
      %v2598 = vadd.f32 %v2342, -1.4531521
      %v2599 = vadd.f32 %v2343, -1.4531521
      %v2600 = vadd.f32 %v2344, -1.4531521
      %v2601 = vadd.f32 %v2345, -1.4531521
      %v2602 = vadd.f32 %v2346, -1.4531521
      %v2603 = vadd.f32 %v2347, -1.4531521
      %v2604 = vadd.f32 %v2348, -1.4531521
      %v2605 = vadd.f32 %v2349, -1.4531521
      %v2606 = vadd.f32 %v2350, -1.4531521
      %v2607 = vadd.f32 %v2351, -1.4531521
      %v2608 = vadd.f32 %v2352, -1.4531521
      %v2609 = vadd.f32 %v2353, -1.4531521
      %v2610 = vadd.f32 %v2354, -1.4531521
      %v2611 = vadd.f32 %v2355, -1.4531521
      %v2612 = vadd.f32 %v2356, -1.4531521
      %v2613 = vadd.f32 %v2357, -1.4531521
      %v2614 = vadd.f32 %v2358, -1.4531521
      %v2615 = vadd.f32 %v2359, -1.4531521
      %v2616 = vadd.f32 %v2360, -1.4531521
      %v2617 = vadd.f32 %v2361, -1.4531521
      %v2618 = vadd.f32 %v2362, -1.4531521
      %v2619 = vadd.f32 %v2363, -1.4531521
      %v2620 = vadd.f32 %v2364, -1.4531521
      %v2621 = vadd.f32 %v2365, -1.4531521
      %v2622 = vadd.f32 %v2366, -1.4531521
      %v2623 = vadd.f32 %v2367, -1.4531521
      %v2624 = vadd.f32 %v2368, -1.4531521
      %v2625 = vadd.f32 %v2369, -1.4531521
      %v2626 = vadd.f32 %v2370, -1.4531521
      %v2627 = vadd.f32 %v2371, -1.4531521
      %v2628 = vadd.f32 %v2372, -1.4531521
      %v2629 = vadd.f32 %v2373, -1.4531521
      %v2630 = vadd.f32 %v2374, -1.4531521
      %v2631 = vadd.f32 %v2375, -1.4531521
      %v2632 = vadd.f32 %v2376, -1.4531521
      %v2633 = vadd.f32 %v2377, -1.4531521
      %v2634 = vadd.f32 %v2378, -1.4531521
      %v2635 = vadd.f32 %v2379, -1.4531521
      %v2636 = vadd.f32 %v2380, -1.4531521
      %v2637 = vadd.f32 %v2381, -1.4531521
      %v2638 = vadd.f32 %v2382, -1.4531521
      %v2639 = vadd.f32 %v2383, -1.4531521
      %v2640 = vadd.f32 %v2384, -1.4531521
      %v2641 = vadd.f32 %v2385, -1.4531521
      %v2642 = vadd.f32 %v2386, -1.4531521
      %v2643 = vadd.f32 %v2387, -1.4531521
      %v2644 = vadd.f32 %v2388, -1.4531521
      %v2645 = vadd.f32 %v2389, -1.4531521
      %v2646 = vadd.f32 %v2390, -1.4531521
      %v2647 = vadd.f32 %v2391, -1.4531521
      %v2648 = vadd.f32 %v2392, -1.4531521
      %v2649 = vadd.f32 %v2393, -1.4531521
      %v2650 = vadd.f32 %v2394, -1.4531521
      %v2651 = vadd.f32 %v2395, -1.4531521
      %v2652 = vadd.f32 %v2396, -1.4531521
      %v2653 = vadd.f32 %v2397, -1.4531521
      %v2654 = vadd.f32 %v2398, -1.4531521
      %v2655 = vadd.f32 %v2399, -1.4531521
      %v2656 = vadd.f32 %v2400, -1.4531521
      %v2657 = vadd.f32 %v2401, -1.4531521
      %v2658 = vadd.f32 %v2402, -1.4531521
      %v2659 = vadd.f32 %v2403, -1.4531521
      %v2660 = vadd.f32 %v2404, -1.4531521
      %v2661 = vadd.f32 %v2405, -1.4531521
      %v2662 = vadd.f32 %v2406, -1.4531521
      %v2663 = vadd.f32 %v2407, -1.4531521
      %v2664 = vadd.f32 %v2408, -1.4531521
      %v2665 = vadd.f32 %v2409, -1.4531521
      %v2666 = vadd.f32 %v2410, -1.4531521
      %v2667 = vadd.f32 %v2411, -1.4531521
      %v2668 = vadd.f32 %v2412, -1.4531521
      %v2669 = vadd.f32 %v2413, -1.4531521
      %v2670 = vadd.f32 %v2414, -1.4531521
      %v2671 = vadd.f32 %v2415, -1.4531521
      %v2672 = vadd.f32 %v2416, -1.4531521
      %v2673 = vadd.f32 %v2417, -1.4531521
      %v2674 = vadd.f32 %v2418, -1.4531521
      %v2675 = vadd.f32 %v2419, -1.4531521
      %v2676 = vadd.f32 %v2420, -1.4531521
      %v2677 = vadd.f32 %v2421, -1.4531521
      %v2678 = vadd.f32 %v2422, -1.4531521
      %v2679 = vadd.f32 %v2423, -1.4531521
      %v2680 = vadd.f32 %v2424, -1.4531521
      %v2681 = vadd.f32 %v2425, -1.4531521
      %v2682 = vadd.f32 %v2426, -1.4531521
      %v2683 = vadd.f32 %v2427, -1.4531521
      %v2684 = vadd.f32 %v2428, -1.4531521
      %v2685 = vadd.f32 %v2429, -1.4531521
      %v2686 = vadd.f32 %v2430, -1.4531521
      %v2687 = vadd.f32 %v2431, -1.4531521
      %v2688 = vadd.f32 %v2432, -1.4531521
      %v2689 = vadd.f32 %v2433, -1.4531521
      %v2690 = vadd.f32 %v2434, -1.4531521
      %v2691 = vadd.f32 %v2435, -1.4531521
      %v2692 = vadd.f32 %v2436, -1.4531521
      %v2693 = vadd.f32 %v2437, -1.4531521
      %v2694 = vadd.f32 %v2438, -1.4531521
      %v2695 = vadd.f32 %v2439, -1.4531521
      %v2696 = vadd.f32 %v2440, -1.4531521
      %v2697 = vadd.f32 %v2441, -1.4531521
      %v2698 = vadd.f32 %v2442, -1.4531521
      %v2699 = vadd.f32 %v2443, -1.4531521
      %v2700 = vadd.f32 %v2444, -1.4531521
      %v2701 = vadd.f32 %v2445, -1.4531521
      %v2702 = vadd.f32 %v2446, -1.4531521
      %v2703 = vadd.f32 %v2447, -1.4531521
      %v2704 = vadd.f32 %v2448, -1.4531521
      %v2705 = vadd.f32 %v2449, -1.4531521
      %v2706 = vadd.f32 %v2450, -1.4531521
      %v2707 = vadd.f32 %v2451, -1.4531521
      %v2708 = vadd.f32 %v2452, -1.4531521
      %v2709 = vadd.f32 %v2453, -1.4531521
      %v2710 = vadd.f32 %v2454, -1.4531521
      %v2711 = vadd.f32 %v2455, -1.4531521
      %v2712 = vadd.f32 %v2456, -1.4531521
      %v2713 = vadd.f32 %v2457, -1.4531521
      %v2714 = vadd.f32 %v2458, -1.4531521
      %v2715 = vadd.f32 %v2459, -1.4531521
      %v2716 = vadd.f32 %v2460, -1.4531521
      %v2717 = vadd.f32 %v2461, -1.4531521
      %v2718 = vadd.f32 %v2462, -1.4531521
      %v2719 = vadd.f32 %v2463, -1.4531521
      %v2720 = vadd.f32 %v2464, -1.4531521
      %v2721 = vadd.f32 %v2465, -1.4531521
      %v2722 = vadd.f32 %v2466, -1.4531521
      %v2723 = vadd.f32 %v2467, -1.4531521
      %v2724 = vadd.f32 %v2468, -1.4531521
      %v2725 = vadd.f32 %v2469, -1.4531521
      %v2726 = vadd.f32 %v2470, -1.4531521
      %v2727 = vadd.f32 %v2471, -1.4531521
      %v2728 = vadd.f32 %v2472, -1.4531521
      %v2729 = vadd.f32 %v2473, -1.4531521
      %v2730 = vadd.f32 %v2474, -1.4531521
      %v2731 = vadd.f32 %v2475, -1.4531521
      %v2732 = vadd.f32 %v2476, -1.4531521
      %v2733 = vadd.f32 %v2477, -1.4531521
      %v2734 = vadd.f32 %v2478, -1.4531521
      %v2735 = vadd.f32 %v2479, -1.4531521
      %v2736 = vadd.f32 %v2480, -1.4531521
      %v2737 = vadd.f32 %v2481, -1.4531521
      %v2738 = vadd.f32 %v2482, -1.4531521
      %v2739 = vadd.f32 %v2483, -1.4531521
      %v2740 = vadd.f32 %v2484, -1.4531521
      %v2741 = vadd.f32 %v2485, -1.4531521
      %v2742 = vadd.f32 %v2486, -1.4531521
      %v2743 = vadd.f32 %v2487, -1.4531521
      %v2744 = vadd.f32 %v2488, -1.4531521
      %v2745 = vadd.f32 %v2489, -1.4531521
      %v2746 = vadd.f32 %v2490, -1.4531521
      %v2747 = vadd.f32 %v2491, -1.4531521
      %v2748 = vadd.f32 %v2492, -1.4531521
      %v2749 = vadd.f32 %v2493, -1.4531521
      %v2750 = vmul.f32 %v1982, %v2494
      %v2751 = vmul.f32 %v1983, %v2495
      %v2752 = vmul.f32 %v1984, %v2496
      %v2753 = vmul.f32 %v1985, %v2497
      %v2754 = vmul.f32 %v1986, %v2498
      %v2755 = vmul.f32 %v1987, %v2499
      %v2756 = vmul.f32 %v1988, %v2500
      %v2757 = vmul.f32 %v1989, %v2501
      %v2758 = vmul.f32 %v1990, %v2502
      %v2759 = vmul.f32 %v1991, %v2503
      %v2760 = vmul.f32 %v1992, %v2504
      %v2761 = vmul.f32 %v1993, %v2505
      %v2762 = vmul.f32 %v1994, %v2506
      %v2763 = vmul.f32 %v1995, %v2507
      %v2764 = vmul.f32 %v1996, %v2508
      %v2765 = vmul.f32 %v1997, %v2509
      %v2766 = vmul.f32 %v1998, %v2510
      %v2767 = vmul.f32 %v1999, %v2511
      %v2768 = vmul.f32 %v2000, %v2512
      %v2769 = vmul.f32 %v2001, %v2513
      %v2770 = vmul.f32 %v2002, %v2514
      %v2771 = vmul.f32 %v2003, %v2515
      %v2772 = vmul.f32 %v2004, %v2516
      %v2773 = vmul.f32 %v2005, %v2517
      %v2774 = vmul.f32 %v2006, %v2518
      %v2775 = vmul.f32 %v2007, %v2519
      %v2776 = vmul.f32 %v2008, %v2520
      %v2777 = vmul.f32 %v2009, %v2521
      %v2778 = vmul.f32 %v2010, %v2522
      %v2779 = vmul.f32 %v2011, %v2523
      %v2780 = vmul.f32 %v2012, %v2524
      %v2781 = vmul.f32 %v2013, %v2525
      %v2782 = vmul.f32 %v2014, %v2526
      %v2783 = vmul.f32 %v2015, %v2527
      %v2784 = vmul.f32 %v2016, %v2528
      %v2785 = vmul.f32 %v2017, %v2529
      %v2786 = vmul.f32 %v2018, %v2530
      %v2787 = vmul.f32 %v2019, %v2531
      %v2788 = vmul.f32 %v2020, %v2532
      %v2789 = vmul.f32 %v2021, %v2533
      %v2790 = vmul.f32 %v2022, %v2534
      %v2791 = vmul.f32 %v2023, %v2535
      %v2792 = vmul.f32 %v2024, %v2536
      %v2793 = vmul.f32 %v2025, %v2537
      %v2794 = vmul.f32 %v2026, %v2538
      %v2795 = vmul.f32 %v2027, %v2539
      %v2796 = vmul.f32 %v2028, %v2540
      %v2797 = vmul.f32 %v2029, %v2541
      %v2798 = vmul.f32 %v2030, %v2542
      %v2799 = vmul.f32 %v2031, %v2543
      %v2800 = vmul.f32 %v2032, %v2544
      %v2801 = vmul.f32 %v2033, %v2545
      %v2802 = vmul.f32 %v2034, %v2546
      %v2803 = vmul.f32 %v2035, %v2547
      %v2804 = vmul.f32 %v2036, %v2548
      %v2805 = vmul.f32 %v2037, %v2549
      %v2806 = vmul.f32 %v2038, %v2550
      %v2807 = vmul.f32 %v2039, %v2551
      %v2808 = vmul.f32 %v2040, %v2552
      %v2809 = vmul.f32 %v2041, %v2553
      %v2810 = vmul.f32 %v2042, %v2554
      %v2811 = vmul.f32 %v2043, %v2555
      %v2812 = vmul.f32 %v2044, %v2556
      %v2813 = vmul.f32 %v2045, %v2557
      %v2814 = vmul.f32 %v2046, %v2558
      %v2815 = vmul.f32 %v2047, %v2559
      %v2816 = vmul.f32 %v2048, %v2560
      %v2817 = vmul.f32 %v2049, %v2561
      %v2818 = vmul.f32 %v2050, %v2562
      %v2819 = vmul.f32 %v2051, %v2563
      %v2820 = vmul.f32 %v2052, %v2564
      %v2821 = vmul.f32 %v2053, %v2565
      %v2822 = vmul.f32 %v2054, %v2566
      %v2823 = vmul.f32 %v2055, %v2567
      %v2824 = vmul.f32 %v2056, %v2568
      %v2825 = vmul.f32 %v2057, %v2569
      %v2826 = vmul.f32 %v2058, %v2570
      %v2827 = vmul.f32 %v2059, %v2571
      %v2828 = vmul.f32 %v2060, %v2572
      %v2829 = vmul.f32 %v2061, %v2573
      %v2830 = vmul.f32 %v2062, %v2574
      %v2831 = vmul.f32 %v2063, %v2575
      %v2832 = vmul.f32 %v2064, %v2576
      %v2833 = vmul.f32 %v2065, %v2577
      %v2834 = vmul.f32 %v2066, %v2578
      %v2835 = vmul.f32 %v2067, %v2579
      %v2836 = vmul.f32 %v2068, %v2580
      %v2837 = vmul.f32 %v2069, %v2581
      %v2838 = vmul.f32 %v2070, %v2582
      %v2839 = vmul.f32 %v2071, %v2583
      %v2840 = vmul.f32 %v2072, %v2584
      %v2841 = vmul.f32 %v2073, %v2585
      %v2842 = vmul.f32 %v2074, %v2586
      %v2843 = vmul.f32 %v2075, %v2587
      %v2844 = vmul.f32 %v2076, %v2588
      %v2845 = vmul.f32 %v2077, %v2589
      %v2846 = vmul.f32 %v2078, %v2590
      %v2847 = vmul.f32 %v2079, %v2591
      %v2848 = vmul.f32 %v2080, %v2592
      %v2849 = vmul.f32 %v2081, %v2593
      %v2850 = vmul.f32 %v2082, %v2594
      %v2851 = vmul.f32 %v2083, %v2595
      %v2852 = vmul.f32 %v2084, %v2596
      %v2853 = vmul.f32 %v2085, %v2597
      %v2854 = vmul.f32 %v2086, %v2598
      %v2855 = vmul.f32 %v2087, %v2599
      %v2856 = vmul.f32 %v2088, %v2600
      %v2857 = vmul.f32 %v2089, %v2601
      %v2858 = vmul.f32 %v2090, %v2602
      %v2859 = vmul.f32 %v2091, %v2603
      %v2860 = vmul.f32 %v2092, %v2604
      %v2861 = vmul.f32 %v2093, %v2605
      %v2862 = vmul.f32 %v2094, %v2606
      %v2863 = vmul.f32 %v2095, %v2607
      %v2864 = vmul.f32 %v2096, %v2608
      %v2865 = vmul.f32 %v2097, %v2609
      %v2866 = vmul.f32 %v2098, %v2610
      %v2867 = vmul.f32 %v2099, %v2611
      %v2868 = vmul.f32 %v2100, %v2612
      %v2869 = vmul.f32 %v2101, %v2613
      %v2870 = vmul.f32 %v2102, %v2614
      %v2871 = vmul.f32 %v2103, %v2615
      %v2872 = vmul.f32 %v2104, %v2616
      %v2873 = vmul.f32 %v2105, %v2617
      %v2874 = vmul.f32 %v2106, %v2618
      %v2875 = vmul.f32 %v2107, %v2619
      %v2876 = vmul.f32 %v2108, %v2620
      %v2877 = vmul.f32 %v2109, %v2621
      %v2878 = vmul.f32 %v2110, %v2622
      %v2879 = vmul.f32 %v2111, %v2623
      %v2880 = vmul.f32 %v2112, %v2624
      %v2881 = vmul.f32 %v2113, %v2625
      %v2882 = vmul.f32 %v2114, %v2626
      %v2883 = vmul.f32 %v2115, %v2627
      %v2884 = vmul.f32 %v2116, %v2628
      %v2885 = vmul.f32 %v2117, %v2629
      %v2886 = vmul.f32 %v2118, %v2630
      %v2887 = vmul.f32 %v2119, %v2631
      %v2888 = vmul.f32 %v2120, %v2632
      %v2889 = vmul.f32 %v2121, %v2633
      %v2890 = vmul.f32 %v2122, %v2634
      %v2891 = vmul.f32 %v2123, %v2635
      %v2892 = vmul.f32 %v2124, %v2636
      %v2893 = vmul.f32 %v2125, %v2637
      %v2894 = vmul.f32 %v2126, %v2638
      %v2895 = vmul.f32 %v2127, %v2639
      %v2896 = vmul.f32 %v2128, %v2640
      %v2897 = vmul.f32 %v2129, %v2641
      %v2898 = vmul.f32 %v2130, %v2642
      %v2899 = vmul.f32 %v2131, %v2643
      %v2900 = vmul.f32 %v2132, %v2644
      %v2901 = vmul.f32 %v2133, %v2645
      %v2902 = vmul.f32 %v2134, %v2646
      %v2903 = vmul.f32 %v2135, %v2647
      %v2904 = vmul.f32 %v2136, %v2648
      %v2905 = vmul.f32 %v2137, %v2649
      %v2906 = vmul.f32 %v2138, %v2650
      %v2907 = vmul.f32 %v2139, %v2651
      %v2908 = vmul.f32 %v2140, %v2652
      %v2909 = vmul.f32 %v2141, %v2653
      %v2910 = vmul.f32 %v2142, %v2654
      %v2911 = vmul.f32 %v2143, %v2655
      %v2912 = vmul.f32 %v2144, %v2656
      %v2913 = vmul.f32 %v2145, %v2657
      %v2914 = vmul.f32 %v2146, %v2658
      %v2915 = vmul.f32 %v2147, %v2659
      %v2916 = vmul.f32 %v2148, %v2660
      %v2917 = vmul.f32 %v2149, %v2661
      %v2918 = vmul.f32 %v2150, %v2662
      %v2919 = vmul.f32 %v2151, %v2663
      %v2920 = vmul.f32 %v2152, %v2664
      %v2921 = vmul.f32 %v2153, %v2665
      %v2922 = vmul.f32 %v2154, %v2666
      %v2923 = vmul.f32 %v2155, %v2667
      %v2924 = vmul.f32 %v2156, %v2668
      %v2925 = vmul.f32 %v2157, %v2669
      %v2926 = vmul.f32 %v2158, %v2670
      %v2927 = vmul.f32 %v2159, %v2671
      %v2928 = vmul.f32 %v2160, %v2672
      %v2929 = vmul.f32 %v2161, %v2673
      %v2930 = vmul.f32 %v2162, %v2674
      %v2931 = vmul.f32 %v2163, %v2675
      %v2932 = vmul.f32 %v2164, %v2676
      %v2933 = vmul.f32 %v2165, %v2677
      %v2934 = vmul.f32 %v2166, %v2678
      %v2935 = vmul.f32 %v2167, %v2679
      %v2936 = vmul.f32 %v2168, %v2680
      %v2937 = vmul.f32 %v2169, %v2681
      %v2938 = vmul.f32 %v2170, %v2682
      %v2939 = vmul.f32 %v2171, %v2683
      %v2940 = vmul.f32 %v2172, %v2684
      %v2941 = vmul.f32 %v2173, %v2685
      %v2942 = vmul.f32 %v2174, %v2686
      %v2943 = vmul.f32 %v2175, %v2687
      %v2944 = vmul.f32 %v2176, %v2688
      %v2945 = vmul.f32 %v2177, %v2689
      %v2946 = vmul.f32 %v2178, %v2690
      %v2947 = vmul.f32 %v2179, %v2691
      %v2948 = vmul.f32 %v2180, %v2692
      %v2949 = vmul.f32 %v2181, %v2693
      %v2950 = vmul.f32 %v2182, %v2694
      %v2951 = vmul.f32 %v2183, %v2695
      %v2952 = vmul.f32 %v2184, %v2696
      %v2953 = vmul.f32 %v2185, %v2697
      %v2954 = vmul.f32 %v2186, %v2698
      %v2955 = vmul.f32 %v2187, %v2699
      %v2956 = vmul.f32 %v2188, %v2700
      %v2957 = vmul.f32 %v2189, %v2701
      %v2958 = vmul.f32 %v2190, %v2702
      %v2959 = vmul.f32 %v2191, %v2703
      %v2960 = vmul.f32 %v2192, %v2704
      %v2961 = vmul.f32 %v2193, %v2705
      %v2962 = vmul.f32 %v2194, %v2706
      %v2963 = vmul.f32 %v2195, %v2707
      %v2964 = vmul.f32 %v2196, %v2708
      %v2965 = vmul.f32 %v2197, %v2709
      %v2966 = vmul.f32 %v2198, %v2710
      %v2967 = vmul.f32 %v2199, %v2711
      %v2968 = vmul.f32 %v2200, %v2712
      %v2969 = vmul.f32 %v2201, %v2713
      %v2970 = vmul.f32 %v2202, %v2714
      %v2971 = vmul.f32 %v2203, %v2715
      %v2972 = vmul.f32 %v2204, %v2716
      %v2973 = vmul.f32 %v2205, %v2717
      %v2974 = vmul.f32 %v2206, %v2718
      %v2975 = vmul.f32 %v2207, %v2719
      %v2976 = vmul.f32 %v2208, %v2720
      %v2977 = vmul.f32 %v2209, %v2721
      %v2978 = vmul.f32 %v2210, %v2722
      %v2979 = vmul.f32 %v2211, %v2723
      %v2980 = vmul.f32 %v2212, %v2724
      %v2981 = vmul.f32 %v2213, %v2725
      %v2982 = vmul.f32 %v2214, %v2726
      %v2983 = vmul.f32 %v2215, %v2727
      %v2984 = vmul.f32 %v2216, %v2728
      %v2985 = vmul.f32 %v2217, %v2729
      %v2986 = vmul.f32 %v2218, %v2730
      %v2987 = vmul.f32 %v2219, %v2731
      %v2988 = vmul.f32 %v2220, %v2732
      %v2989 = vmul.f32 %v2221, %v2733
      %v2990 = vmul.f32 %v2222, %v2734
      %v2991 = vmul.f32 %v2223, %v2735
      %v2992 = vmul.f32 %v2224, %v2736
      %v2993 = vmul.f32 %v2225, %v2737
      %v2994 = vmul.f32 %v2226, %v2738
      %v2995 = vmul.f32 %v2227, %v2739
      %v2996 = vmul.f32 %v2228, %v2740
      %v2997 = vmul.f32 %v2229, %v2741
      %v2998 = vmul.f32 %v2230, %v2742
      %v2999 = vmul.f32 %v2231, %v2743
      %v3000 = vmul.f32 %v2232, %v2744
      %v3001 = vmul.f32 %v2233, %v2745
      %v3002 = vmul.f32 %v2234, %v2746
      %v3003 = vmul.f32 %v2235, %v2747
      %v3004 = vmul.f32 %v2236, %v2748
      %v3005 = vmul.f32 %v2237, %v2749
      %v3006 = vadd.f32 %v2750, 1.4214138
      %v3007 = vadd.f32 %v2751, 1.4214138
      %v3008 = vadd.f32 %v2752, 1.4214138
      %v3009 = vadd.f32 %v2753, 1.4214138
      %v3010 = vadd.f32 %v2754, 1.4214138
      %v3011 = vadd.f32 %v2755, 1.4214138
      %v3012 = vadd.f32 %v2756, 1.4214138
      %v3013 = vadd.f32 %v2757, 1.4214138
      %v3014 = vadd.f32 %v2758, 1.4214138
      %v3015 = vadd.f32 %v2759, 1.4214138
      %v3016 = vadd.f32 %v2760, 1.4214138
      %v3017 = vadd.f32 %v2761, 1.4214138
      %v3018 = vadd.f32 %v2762, 1.4214138
      %v3019 = vadd.f32 %v2763, 1.4214138
      %v3020 = vadd.f32 %v2764, 1.4214138
      %v3021 = vadd.f32 %v2765, 1.4214138
      %v3022 = vadd.f32 %v2766, 1.4214138
      %v3023 = vadd.f32 %v2767, 1.4214138
      %v3024 = vadd.f32 %v2768, 1.4214138
      %v3025 = vadd.f32 %v2769, 1.4214138
      %v3026 = vadd.f32 %v2770, 1.4214138
      %v3027 = vadd.f32 %v2771, 1.4214138
      %v3028 = vadd.f32 %v2772, 1.4214138
      %v3029 = vadd.f32 %v2773, 1.4214138
      %v3030 = vadd.f32 %v2774, 1.4214138
      %v3031 = vadd.f32 %v2775, 1.4214138
      %v3032 = vadd.f32 %v2776, 1.4214138
      %v3033 = vadd.f32 %v2777, 1.4214138
      %v3034 = vadd.f32 %v2778, 1.4214138
      %v3035 = vadd.f32 %v2779, 1.4214138
      %v3036 = vadd.f32 %v2780, 1.4214138
      %v3037 = vadd.f32 %v2781, 1.4214138
      %v3038 = vadd.f32 %v2782, 1.4214138
      %v3039 = vadd.f32 %v2783, 1.4214138
      %v3040 = vadd.f32 %v2784, 1.4214138
      %v3041 = vadd.f32 %v2785, 1.4214138
      %v3042 = vadd.f32 %v2786, 1.4214138
      %v3043 = vadd.f32 %v2787, 1.4214138
      %v3044 = vadd.f32 %v2788, 1.4214138
      %v3045 = vadd.f32 %v2789, 1.4214138
      %v3046 = vadd.f32 %v2790, 1.4214138
      %v3047 = vadd.f32 %v2791, 1.4214138
      %v3048 = vadd.f32 %v2792, 1.4214138
      %v3049 = vadd.f32 %v2793, 1.4214138
      %v3050 = vadd.f32 %v2794, 1.4214138
      %v3051 = vadd.f32 %v2795, 1.4214138
      %v3052 = vadd.f32 %v2796, 1.4214138
      %v3053 = vadd.f32 %v2797, 1.4214138
      %v3054 = vadd.f32 %v2798, 1.4214138
      %v3055 = vadd.f32 %v2799, 1.4214138
      %v3056 = vadd.f32 %v2800, 1.4214138
      %v3057 = vadd.f32 %v2801, 1.4214138
      %v3058 = vadd.f32 %v2802, 1.4214138
      %v3059 = vadd.f32 %v2803, 1.4214138
      %v3060 = vadd.f32 %v2804, 1.4214138
      %v3061 = vadd.f32 %v2805, 1.4214138
      %v3062 = vadd.f32 %v2806, 1.4214138
      %v3063 = vadd.f32 %v2807, 1.4214138
      %v3064 = vadd.f32 %v2808, 1.4214138
      %v3065 = vadd.f32 %v2809, 1.4214138
      %v3066 = vadd.f32 %v2810, 1.4214138
      %v3067 = vadd.f32 %v2811, 1.4214138
      %v3068 = vadd.f32 %v2812, 1.4214138
      %v3069 = vadd.f32 %v2813, 1.4214138
      %v3070 = vadd.f32 %v2814, 1.4214138
      %v3071 = vadd.f32 %v2815, 1.4214138
      %v3072 = vadd.f32 %v2816, 1.4214138
      %v3073 = vadd.f32 %v2817, 1.4214138
      %v3074 = vadd.f32 %v2818, 1.4214138
      %v3075 = vadd.f32 %v2819, 1.4214138
      %v3076 = vadd.f32 %v2820, 1.4214138
      %v3077 = vadd.f32 %v2821, 1.4214138
      %v3078 = vadd.f32 %v2822, 1.4214138
      %v3079 = vadd.f32 %v2823, 1.4214138
      %v3080 = vadd.f32 %v2824, 1.4214138
      %v3081 = vadd.f32 %v2825, 1.4214138
      %v3082 = vadd.f32 %v2826, 1.4214138
      %v3083 = vadd.f32 %v2827, 1.4214138
      %v3084 = vadd.f32 %v2828, 1.4214138
      %v3085 = vadd.f32 %v2829, 1.4214138
      %v3086 = vadd.f32 %v2830, 1.4214138
      %v3087 = vadd.f32 %v2831, 1.4214138
      %v3088 = vadd.f32 %v2832, 1.4214138
      %v3089 = vadd.f32 %v2833, 1.4214138
      %v3090 = vadd.f32 %v2834, 1.4214138
      %v3091 = vadd.f32 %v2835, 1.4214138
      %v3092 = vadd.f32 %v2836, 1.4214138
      %v3093 = vadd.f32 %v2837, 1.4214138
      %v3094 = vadd.f32 %v2838, 1.4214138
      %v3095 = vadd.f32 %v2839, 1.4214138
      %v3096 = vadd.f32 %v2840, 1.4214138
      %v3097 = vadd.f32 %v2841, 1.4214138
      %v3098 = vadd.f32 %v2842, 1.4214138
      %v3099 = vadd.f32 %v2843, 1.4214138
      %v3100 = vadd.f32 %v2844, 1.4214138
      %v3101 = vadd.f32 %v2845, 1.4214138
      %v3102 = vadd.f32 %v2846, 1.4214138
      %v3103 = vadd.f32 %v2847, 1.4214138
      %v3104 = vadd.f32 %v2848, 1.4214138
      %v3105 = vadd.f32 %v2849, 1.4214138
      %v3106 = vadd.f32 %v2850, 1.4214138
      %v3107 = vadd.f32 %v2851, 1.4214138
      %v3108 = vadd.f32 %v2852, 1.4214138
      %v3109 = vadd.f32 %v2853, 1.4214138
      %v3110 = vadd.f32 %v2854, 1.4214138
      %v3111 = vadd.f32 %v2855, 1.4214138
      %v3112 = vadd.f32 %v2856, 1.4214138
      %v3113 = vadd.f32 %v2857, 1.4214138
      %v3114 = vadd.f32 %v2858, 1.4214138
      %v3115 = vadd.f32 %v2859, 1.4214138
      %v3116 = vadd.f32 %v2860, 1.4214138
      %v3117 = vadd.f32 %v2861, 1.4214138
      %v3118 = vadd.f32 %v2862, 1.4214138
      %v3119 = vadd.f32 %v2863, 1.4214138
      %v3120 = vadd.f32 %v2864, 1.4214138
      %v3121 = vadd.f32 %v2865, 1.4214138
      %v3122 = vadd.f32 %v2866, 1.4214138
      %v3123 = vadd.f32 %v2867, 1.4214138
      %v3124 = vadd.f32 %v2868, 1.4214138
      %v3125 = vadd.f32 %v2869, 1.4214138
      %v3126 = vadd.f32 %v2870, 1.4214138
      %v3127 = vadd.f32 %v2871, 1.4214138
      %v3128 = vadd.f32 %v2872, 1.4214138
      %v3129 = vadd.f32 %v2873, 1.4214138
      %v3130 = vadd.f32 %v2874, 1.4214138
      %v3131 = vadd.f32 %v2875, 1.4214138
      %v3132 = vadd.f32 %v2876, 1.4214138
      %v3133 = vadd.f32 %v2877, 1.4214138
      %v3134 = vadd.f32 %v2878, 1.4214138
      %v3135 = vadd.f32 %v2879, 1.4214138
      %v3136 = vadd.f32 %v2880, 1.4214138
      %v3137 = vadd.f32 %v2881, 1.4214138
      %v3138 = vadd.f32 %v2882, 1.4214138
      %v3139 = vadd.f32 %v2883, 1.4214138
      %v3140 = vadd.f32 %v2884, 1.4214138
      %v3141 = vadd.f32 %v2885, 1.4214138
      %v3142 = vadd.f32 %v2886, 1.4214138
      %v3143 = vadd.f32 %v2887, 1.4214138
      %v3144 = vadd.f32 %v2888, 1.4214138
      %v3145 = vadd.f32 %v2889, 1.4214138
      %v3146 = vadd.f32 %v2890, 1.4214138
      %v3147 = vadd.f32 %v2891, 1.4214138
      %v3148 = vadd.f32 %v2892, 1.4214138
      %v3149 = vadd.f32 %v2893, 1.4214138
      %v3150 = vadd.f32 %v2894, 1.4214138
      %v3151 = vadd.f32 %v2895, 1.4214138
      %v3152 = vadd.f32 %v2896, 1.4214138
      %v3153 = vadd.f32 %v2897, 1.4214138
      %v3154 = vadd.f32 %v2898, 1.4214138
      %v3155 = vadd.f32 %v2899, 1.4214138
      %v3156 = vadd.f32 %v2900, 1.4214138
      %v3157 = vadd.f32 %v2901, 1.4214138
      %v3158 = vadd.f32 %v2902, 1.4214138
      %v3159 = vadd.f32 %v2903, 1.4214138
      %v3160 = vadd.f32 %v2904, 1.4214138
      %v3161 = vadd.f32 %v2905, 1.4214138
      %v3162 = vadd.f32 %v2906, 1.4214138
      %v3163 = vadd.f32 %v2907, 1.4214138
      %v3164 = vadd.f32 %v2908, 1.4214138
      %v3165 = vadd.f32 %v2909, 1.4214138
      %v3166 = vadd.f32 %v2910, 1.4214138
      %v3167 = vadd.f32 %v2911, 1.4214138
      %v3168 = vadd.f32 %v2912, 1.4214138
      %v3169 = vadd.f32 %v2913, 1.4214138
      %v3170 = vadd.f32 %v2914, 1.4214138
      %v3171 = vadd.f32 %v2915, 1.4214138
      %v3172 = vadd.f32 %v2916, 1.4214138
      %v3173 = vadd.f32 %v2917, 1.4214138
      %v3174 = vadd.f32 %v2918, 1.4214138
      %v3175 = vadd.f32 %v2919, 1.4214138
      %v3176 = vadd.f32 %v2920, 1.4214138
      %v3177 = vadd.f32 %v2921, 1.4214138
      %v3178 = vadd.f32 %v2922, 1.4214138
      %v3179 = vadd.f32 %v2923, 1.4214138
      %v3180 = vadd.f32 %v2924, 1.4214138
      %v3181 = vadd.f32 %v2925, 1.4214138
      %v3182 = vadd.f32 %v2926, 1.4214138
      %v3183 = vadd.f32 %v2927, 1.4214138
      %v3184 = vadd.f32 %v2928, 1.4214138
      %v3185 = vadd.f32 %v2929, 1.4214138
      %v3186 = vadd.f32 %v2930, 1.4214138
      %v3187 = vadd.f32 %v2931, 1.4214138
      %v3188 = vadd.f32 %v2932, 1.4214138
      %v3189 = vadd.f32 %v2933, 1.4214138
      %v3190 = vadd.f32 %v2934, 1.4214138
      %v3191 = vadd.f32 %v2935, 1.4214138
      %v3192 = vadd.f32 %v2936, 1.4214138
      %v3193 = vadd.f32 %v2937, 1.4214138
      %v3194 = vadd.f32 %v2938, 1.4214138
      %v3195 = vadd.f32 %v2939, 1.4214138
      %v3196 = vadd.f32 %v2940, 1.4214138
      %v3197 = vadd.f32 %v2941, 1.4214138
      %v3198 = vadd.f32 %v2942, 1.4214138
      %v3199 = vadd.f32 %v2943, 1.4214138
      %v3200 = vadd.f32 %v2944, 1.4214138
      %v3201 = vadd.f32 %v2945, 1.4214138
      %v3202 = vadd.f32 %v2946, 1.4214138
      %v3203 = vadd.f32 %v2947, 1.4214138
      %v3204 = vadd.f32 %v2948, 1.4214138
      %v3205 = vadd.f32 %v2949, 1.4214138
      %v3206 = vadd.f32 %v2950, 1.4214138
      %v3207 = vadd.f32 %v2951, 1.4214138
      %v3208 = vadd.f32 %v2952, 1.4214138
      %v3209 = vadd.f32 %v2953, 1.4214138
      %v3210 = vadd.f32 %v2954, 1.4214138
      %v3211 = vadd.f32 %v2955, 1.4214138
      %v3212 = vadd.f32 %v2956, 1.4214138
      %v3213 = vadd.f32 %v2957, 1.4214138
      %v3214 = vadd.f32 %v2958, 1.4214138
      %v3215 = vadd.f32 %v2959, 1.4214138
      %v3216 = vadd.f32 %v2960, 1.4214138
      %v3217 = vadd.f32 %v2961, 1.4214138
      %v3218 = vadd.f32 %v2962, 1.4214138
      %v3219 = vadd.f32 %v2963, 1.4214138
      %v3220 = vadd.f32 %v2964, 1.4214138
      %v3221 = vadd.f32 %v2965, 1.4214138
      %v3222 = vadd.f32 %v2966, 1.4214138
      %v3223 = vadd.f32 %v2967, 1.4214138
      %v3224 = vadd.f32 %v2968, 1.4214138
      %v3225 = vadd.f32 %v2969, 1.4214138
      %v3226 = vadd.f32 %v2970, 1.4214138
      %v3227 = vadd.f32 %v2971, 1.4214138
      %v3228 = vadd.f32 %v2972, 1.4214138
      %v3229 = vadd.f32 %v2973, 1.4214138
      %v3230 = vadd.f32 %v2974, 1.4214138
      %v3231 = vadd.f32 %v2975, 1.4214138
      %v3232 = vadd.f32 %v2976, 1.4214138
      %v3233 = vadd.f32 %v2977, 1.4214138
      %v3234 = vadd.f32 %v2978, 1.4214138
      %v3235 = vadd.f32 %v2979, 1.4214138
      %v3236 = vadd.f32 %v2980, 1.4214138
      %v3237 = vadd.f32 %v2981, 1.4214138
      %v3238 = vadd.f32 %v2982, 1.4214138
      %v3239 = vadd.f32 %v2983, 1.4214138
      %v3240 = vadd.f32 %v2984, 1.4214138
      %v3241 = vadd.f32 %v2985, 1.4214138
      %v3242 = vadd.f32 %v2986, 1.4214138
      %v3243 = vadd.f32 %v2987, 1.4214138
      %v3244 = vadd.f32 %v2988, 1.4214138
      %v3245 = vadd.f32 %v2989, 1.4214138
      %v3246 = vadd.f32 %v2990, 1.4214138
      %v3247 = vadd.f32 %v2991, 1.4214138
      %v3248 = vadd.f32 %v2992, 1.4214138
      %v3249 = vadd.f32 %v2993, 1.4214138
      %v3250 = vadd.f32 %v2994, 1.4214138
      %v3251 = vadd.f32 %v2995, 1.4214138
      %v3252 = vadd.f32 %v2996, 1.4214138
      %v3253 = vadd.f32 %v2997, 1.4214138
      %v3254 = vadd.f32 %v2998, 1.4214138
      %v3255 = vadd.f32 %v2999, 1.4214138
      %v3256 = vadd.f32 %v3000, 1.4214138
      %v3257 = vadd.f32 %v3001, 1.4214138
      %v3258 = vadd.f32 %v3002, 1.4214138
      %v3259 = vadd.f32 %v3003, 1.4214138
      %v3260 = vadd.f32 %v3004, 1.4214138
      %v3261 = vadd.f32 %v3005, 1.4214138
      %v3262 = vmul.f32 %v1982, %v3006
      %v3263 = vmul.f32 %v1983, %v3007
      %v3264 = vmul.f32 %v1984, %v3008
      %v3265 = vmul.f32 %v1985, %v3009
      %v3266 = vmul.f32 %v1986, %v3010
      %v3267 = vmul.f32 %v1987, %v3011
      %v3268 = vmul.f32 %v1988, %v3012
      %v3269 = vmul.f32 %v1989, %v3013
      %v3270 = vmul.f32 %v1990, %v3014
      %v3271 = vmul.f32 %v1991, %v3015
      %v3272 = vmul.f32 %v1992, %v3016
      %v3273 = vmul.f32 %v1993, %v3017
      %v3274 = vmul.f32 %v1994, %v3018
      %v3275 = vmul.f32 %v1995, %v3019
      %v3276 = vmul.f32 %v1996, %v3020
      %v3277 = vmul.f32 %v1997, %v3021
      %v3278 = vmul.f32 %v1998, %v3022
      %v3279 = vmul.f32 %v1999, %v3023
      %v3280 = vmul.f32 %v2000, %v3024
      %v3281 = vmul.f32 %v2001, %v3025
      %v3282 = vmul.f32 %v2002, %v3026
      %v3283 = vmul.f32 %v2003, %v3027
      %v3284 = vmul.f32 %v2004, %v3028
      %v3285 = vmul.f32 %v2005, %v3029
      %v3286 = vmul.f32 %v2006, %v3030
      %v3287 = vmul.f32 %v2007, %v3031
      %v3288 = vmul.f32 %v2008, %v3032
      %v3289 = vmul.f32 %v2009, %v3033
      %v3290 = vmul.f32 %v2010, %v3034
      %v3291 = vmul.f32 %v2011, %v3035
      %v3292 = vmul.f32 %v2012, %v3036
      %v3293 = vmul.f32 %v2013, %v3037
      %v3294 = vmul.f32 %v2014, %v3038
      %v3295 = vmul.f32 %v2015, %v3039
      %v3296 = vmul.f32 %v2016, %v3040
      %v3297 = vmul.f32 %v2017, %v3041
      %v3298 = vmul.f32 %v2018, %v3042
      %v3299 = vmul.f32 %v2019, %v3043
      %v3300 = vmul.f32 %v2020, %v3044
      %v3301 = vmul.f32 %v2021, %v3045
      %v3302 = vmul.f32 %v2022, %v3046
      %v3303 = vmul.f32 %v2023, %v3047
      %v3304 = vmul.f32 %v2024, %v3048
      %v3305 = vmul.f32 %v2025, %v3049
      %v3306 = vmul.f32 %v2026, %v3050
      %v3307 = vmul.f32 %v2027, %v3051
      %v3308 = vmul.f32 %v2028, %v3052
      %v3309 = vmul.f32 %v2029, %v3053
      %v3310 = vmul.f32 %v2030, %v3054
      %v3311 = vmul.f32 %v2031, %v3055
      %v3312 = vmul.f32 %v2032, %v3056
      %v3313 = vmul.f32 %v2033, %v3057
      %v3314 = vmul.f32 %v2034, %v3058
      %v3315 = vmul.f32 %v2035, %v3059
      %v3316 = vmul.f32 %v2036, %v3060
      %v3317 = vmul.f32 %v2037, %v3061
      %v3318 = vmul.f32 %v2038, %v3062
      %v3319 = vmul.f32 %v2039, %v3063
      %v3320 = vmul.f32 %v2040, %v3064
      %v3321 = vmul.f32 %v2041, %v3065
      %v3322 = vmul.f32 %v2042, %v3066
      %v3323 = vmul.f32 %v2043, %v3067
      %v3324 = vmul.f32 %v2044, %v3068
      %v3325 = vmul.f32 %v2045, %v3069
      %v3326 = vmul.f32 %v2046, %v3070
      %v3327 = vmul.f32 %v2047, %v3071
      %v3328 = vmul.f32 %v2048, %v3072
      %v3329 = vmul.f32 %v2049, %v3073
      %v3330 = vmul.f32 %v2050, %v3074
      %v3331 = vmul.f32 %v2051, %v3075
      %v3332 = vmul.f32 %v2052, %v3076
      %v3333 = vmul.f32 %v2053, %v3077
      %v3334 = vmul.f32 %v2054, %v3078
      %v3335 = vmul.f32 %v2055, %v3079
      %v3336 = vmul.f32 %v2056, %v3080
      %v3337 = vmul.f32 %v2057, %v3081
      %v3338 = vmul.f32 %v2058, %v3082
      %v3339 = vmul.f32 %v2059, %v3083
      %v3340 = vmul.f32 %v2060, %v3084
      %v3341 = vmul.f32 %v2061, %v3085
      %v3342 = vmul.f32 %v2062, %v3086
      %v3343 = vmul.f32 %v2063, %v3087
      %v3344 = vmul.f32 %v2064, %v3088
      %v3345 = vmul.f32 %v2065, %v3089
      %v3346 = vmul.f32 %v2066, %v3090
      %v3347 = vmul.f32 %v2067, %v3091
      %v3348 = vmul.f32 %v2068, %v3092
      %v3349 = vmul.f32 %v2069, %v3093
      %v3350 = vmul.f32 %v2070, %v3094
      %v3351 = vmul.f32 %v2071, %v3095
      %v3352 = vmul.f32 %v2072, %v3096
      %v3353 = vmul.f32 %v2073, %v3097
      %v3354 = vmul.f32 %v2074, %v3098
      %v3355 = vmul.f32 %v2075, %v3099
      %v3356 = vmul.f32 %v2076, %v3100
      %v3357 = vmul.f32 %v2077, %v3101
      %v3358 = vmul.f32 %v2078, %v3102
      %v3359 = vmul.f32 %v2079, %v3103
      %v3360 = vmul.f32 %v2080, %v3104
      %v3361 = vmul.f32 %v2081, %v3105
      %v3362 = vmul.f32 %v2082, %v3106
      %v3363 = vmul.f32 %v2083, %v3107
      %v3364 = vmul.f32 %v2084, %v3108
      %v3365 = vmul.f32 %v2085, %v3109
      %v3366 = vmul.f32 %v2086, %v3110
      %v3367 = vmul.f32 %v2087, %v3111
      %v3368 = vmul.f32 %v2088, %v3112
      %v3369 = vmul.f32 %v2089, %v3113
      %v3370 = vmul.f32 %v2090, %v3114
      %v3371 = vmul.f32 %v2091, %v3115
      %v3372 = vmul.f32 %v2092, %v3116
      %v3373 = vmul.f32 %v2093, %v3117
      %v3374 = vmul.f32 %v2094, %v3118
      %v3375 = vmul.f32 %v2095, %v3119
      %v3376 = vmul.f32 %v2096, %v3120
      %v3377 = vmul.f32 %v2097, %v3121
      %v3378 = vmul.f32 %v2098, %v3122
      %v3379 = vmul.f32 %v2099, %v3123
      %v3380 = vmul.f32 %v2100, %v3124
      %v3381 = vmul.f32 %v2101, %v3125
      %v3382 = vmul.f32 %v2102, %v3126
      %v3383 = vmul.f32 %v2103, %v3127
      %v3384 = vmul.f32 %v2104, %v3128
      %v3385 = vmul.f32 %v2105, %v3129
      %v3386 = vmul.f32 %v2106, %v3130
      %v3387 = vmul.f32 %v2107, %v3131
      %v3388 = vmul.f32 %v2108, %v3132
      %v3389 = vmul.f32 %v2109, %v3133
      %v3390 = vmul.f32 %v2110, %v3134
      %v3391 = vmul.f32 %v2111, %v3135
      %v3392 = vmul.f32 %v2112, %v3136
      %v3393 = vmul.f32 %v2113, %v3137
      %v3394 = vmul.f32 %v2114, %v3138
      %v3395 = vmul.f32 %v2115, %v3139
      %v3396 = vmul.f32 %v2116, %v3140
      %v3397 = vmul.f32 %v2117, %v3141
      %v3398 = vmul.f32 %v2118, %v3142
      %v3399 = vmul.f32 %v2119, %v3143
      %v3400 = vmul.f32 %v2120, %v3144
      %v3401 = vmul.f32 %v2121, %v3145
      %v3402 = vmul.f32 %v2122, %v3146
      %v3403 = vmul.f32 %v2123, %v3147
      %v3404 = vmul.f32 %v2124, %v3148
      %v3405 = vmul.f32 %v2125, %v3149
      %v3406 = vmul.f32 %v2126, %v3150
      %v3407 = vmul.f32 %v2127, %v3151
      %v3408 = vmul.f32 %v2128, %v3152
      %v3409 = vmul.f32 %v2129, %v3153
      %v3410 = vmul.f32 %v2130, %v3154
      %v3411 = vmul.f32 %v2131, %v3155
      %v3412 = vmul.f32 %v2132, %v3156
      %v3413 = vmul.f32 %v2133, %v3157
      %v3414 = vmul.f32 %v2134, %v3158
      %v3415 = vmul.f32 %v2135, %v3159
      %v3416 = vmul.f32 %v2136, %v3160
      %v3417 = vmul.f32 %v2137, %v3161
      %v3418 = vmul.f32 %v2138, %v3162
      %v3419 = vmul.f32 %v2139, %v3163
      %v3420 = vmul.f32 %v2140, %v3164
      %v3421 = vmul.f32 %v2141, %v3165
      %v3422 = vmul.f32 %v2142, %v3166
      %v3423 = vmul.f32 %v2143, %v3167
      %v3424 = vmul.f32 %v2144, %v3168
      %v3425 = vmul.f32 %v2145, %v3169
      %v3426 = vmul.f32 %v2146, %v3170
      %v3427 = vmul.f32 %v2147, %v3171
      %v3428 = vmul.f32 %v2148, %v3172
      %v3429 = vmul.f32 %v2149, %v3173
      %v3430 = vmul.f32 %v2150, %v3174
      %v3431 = vmul.f32 %v2151, %v3175
      %v3432 = vmul.f32 %v2152, %v3176
      %v3433 = vmul.f32 %v2153, %v3177
      %v3434 = vmul.f32 %v2154, %v3178
      %v3435 = vmul.f32 %v2155, %v3179
      %v3436 = vmul.f32 %v2156, %v3180
      %v3437 = vmul.f32 %v2157, %v3181
      %v3438 = vmul.f32 %v2158, %v3182
      %v3439 = vmul.f32 %v2159, %v3183
      %v3440 = vmul.f32 %v2160, %v3184
      %v3441 = vmul.f32 %v2161, %v3185
      %v3442 = vmul.f32 %v2162, %v3186
      %v3443 = vmul.f32 %v2163, %v3187
      %v3444 = vmul.f32 %v2164, %v3188
      %v3445 = vmul.f32 %v2165, %v3189
      %v3446 = vmul.f32 %v2166, %v3190
      %v3447 = vmul.f32 %v2167, %v3191
      %v3448 = vmul.f32 %v2168, %v3192
      %v3449 = vmul.f32 %v2169, %v3193
      %v3450 = vmul.f32 %v2170, %v3194
      %v3451 = vmul.f32 %v2171, %v3195
      %v3452 = vmul.f32 %v2172, %v3196
      %v3453 = vmul.f32 %v2173, %v3197
      %v3454 = vmul.f32 %v2174, %v3198
      %v3455 = vmul.f32 %v2175, %v3199
      %v3456 = vmul.f32 %v2176, %v3200
      %v3457 = vmul.f32 %v2177, %v3201
      %v3458 = vmul.f32 %v2178, %v3202
      %v3459 = vmul.f32 %v2179, %v3203
      %v3460 = vmul.f32 %v2180, %v3204
      %v3461 = vmul.f32 %v2181, %v3205
      %v3462 = vmul.f32 %v2182, %v3206
      %v3463 = vmul.f32 %v2183, %v3207
      %v3464 = vmul.f32 %v2184, %v3208
      %v3465 = vmul.f32 %v2185, %v3209
      %v3466 = vmul.f32 %v2186, %v3210
      %v3467 = vmul.f32 %v2187, %v3211
      %v3468 = vmul.f32 %v2188, %v3212
      %v3469 = vmul.f32 %v2189, %v3213
      %v3470 = vmul.f32 %v2190, %v3214
      %v3471 = vmul.f32 %v2191, %v3215
      %v3472 = vmul.f32 %v2192, %v3216
      %v3473 = vmul.f32 %v2193, %v3217
      %v3474 = vmul.f32 %v2194, %v3218
      %v3475 = vmul.f32 %v2195, %v3219
      %v3476 = vmul.f32 %v2196, %v3220
      %v3477 = vmul.f32 %v2197, %v3221
      %v3478 = vmul.f32 %v2198, %v3222
      %v3479 = vmul.f32 %v2199, %v3223
      %v3480 = vmul.f32 %v2200, %v3224
      %v3481 = vmul.f32 %v2201, %v3225
      %v3482 = vmul.f32 %v2202, %v3226
      %v3483 = vmul.f32 %v2203, %v3227
      %v3484 = vmul.f32 %v2204, %v3228
      %v3485 = vmul.f32 %v2205, %v3229
      %v3486 = vmul.f32 %v2206, %v3230
      %v3487 = vmul.f32 %v2207, %v3231
      %v3488 = vmul.f32 %v2208, %v3232
      %v3489 = vmul.f32 %v2209, %v3233
      %v3490 = vmul.f32 %v2210, %v3234
      %v3491 = vmul.f32 %v2211, %v3235
      %v3492 = vmul.f32 %v2212, %v3236
      %v3493 = vmul.f32 %v2213, %v3237
      %v3494 = vmul.f32 %v2214, %v3238
      %v3495 = vmul.f32 %v2215, %v3239
      %v3496 = vmul.f32 %v2216, %v3240
      %v3497 = vmul.f32 %v2217, %v3241
      %v3498 = vmul.f32 %v2218, %v3242
      %v3499 = vmul.f32 %v2219, %v3243
      %v3500 = vmul.f32 %v2220, %v3244
      %v3501 = vmul.f32 %v2221, %v3245
      %v3502 = vmul.f32 %v2222, %v3246
      %v3503 = vmul.f32 %v2223, %v3247
      %v3504 = vmul.f32 %v2224, %v3248
      %v3505 = vmul.f32 %v2225, %v3249
      %v3506 = vmul.f32 %v2226, %v3250
      %v3507 = vmul.f32 %v2227, %v3251
      %v3508 = vmul.f32 %v2228, %v3252
      %v3509 = vmul.f32 %v2229, %v3253
      %v3510 = vmul.f32 %v2230, %v3254
      %v3511 = vmul.f32 %v2231, %v3255
      %v3512 = vmul.f32 %v2232, %v3256
      %v3513 = vmul.f32 %v2233, %v3257
      %v3514 = vmul.f32 %v2234, %v3258
      %v3515 = vmul.f32 %v2235, %v3259
      %v3516 = vmul.f32 %v2236, %v3260
      %v3517 = vmul.f32 %v2237, %v3261
      %v3518 = vadd.f32 %v3262, -0.28449672
      %v3519 = vadd.f32 %v3263, -0.28449672
      %v3520 = vadd.f32 %v3264, -0.28449672
      %v3521 = vadd.f32 %v3265, -0.28449672
      %v3522 = vadd.f32 %v3266, -0.28449672
      %v3523 = vadd.f32 %v3267, -0.28449672
      %v3524 = vadd.f32 %v3268, -0.28449672
      %v3525 = vadd.f32 %v3269, -0.28449672
      %v3526 = vadd.f32 %v3270, -0.28449672
      %v3527 = vadd.f32 %v3271, -0.28449672
      %v3528 = vadd.f32 %v3272, -0.28449672
      %v3529 = vadd.f32 %v3273, -0.28449672
      %v3530 = vadd.f32 %v3274, -0.28449672
      %v3531 = vadd.f32 %v3275, -0.28449672
      %v3532 = vadd.f32 %v3276, -0.28449672
      %v3533 = vadd.f32 %v3277, -0.28449672
      %v3534 = vadd.f32 %v3278, -0.28449672
      %v3535 = vadd.f32 %v3279, -0.28449672
      %v3536 = vadd.f32 %v3280, -0.28449672
      %v3537 = vadd.f32 %v3281, -0.28449672
      %v3538 = vadd.f32 %v3282, -0.28449672
      %v3539 = vadd.f32 %v3283, -0.28449672
      %v3540 = vadd.f32 %v3284, -0.28449672
      %v3541 = vadd.f32 %v3285, -0.28449672
      %v3542 = vadd.f32 %v3286, -0.28449672
      %v3543 = vadd.f32 %v3287, -0.28449672
      %v3544 = vadd.f32 %v3288, -0.28449672
      %v3545 = vadd.f32 %v3289, -0.28449672
      %v3546 = vadd.f32 %v3290, -0.28449672
      %v3547 = vadd.f32 %v3291, -0.28449672
      %v3548 = vadd.f32 %v3292, -0.28449672
      %v3549 = vadd.f32 %v3293, -0.28449672
      %v3550 = vadd.f32 %v3294, -0.28449672
      %v3551 = vadd.f32 %v3295, -0.28449672
      %v3552 = vadd.f32 %v3296, -0.28449672
      %v3553 = vadd.f32 %v3297, -0.28449672
      %v3554 = vadd.f32 %v3298, -0.28449672
      %v3555 = vadd.f32 %v3299, -0.28449672
      %v3556 = vadd.f32 %v3300, -0.28449672
      %v3557 = vadd.f32 %v3301, -0.28449672
      %v3558 = vadd.f32 %v3302, -0.28449672
      %v3559 = vadd.f32 %v3303, -0.28449672
      %v3560 = vadd.f32 %v3304, -0.28449672
      %v3561 = vadd.f32 %v3305, -0.28449672
      %v3562 = vadd.f32 %v3306, -0.28449672
      %v3563 = vadd.f32 %v3307, -0.28449672
      %v3564 = vadd.f32 %v3308, -0.28449672
      %v3565 = vadd.f32 %v3309, -0.28449672
      %v3566 = vadd.f32 %v3310, -0.28449672
      %v3567 = vadd.f32 %v3311, -0.28449672
      %v3568 = vadd.f32 %v3312, -0.28449672
      %v3569 = vadd.f32 %v3313, -0.28449672
      %v3570 = vadd.f32 %v3314, -0.28449672
      %v3571 = vadd.f32 %v3315, -0.28449672
      %v3572 = vadd.f32 %v3316, -0.28449672
      %v3573 = vadd.f32 %v3317, -0.28449672
      %v3574 = vadd.f32 %v3318, -0.28449672
      %v3575 = vadd.f32 %v3319, -0.28449672
      %v3576 = vadd.f32 %v3320, -0.28449672
      %v3577 = vadd.f32 %v3321, -0.28449672
      %v3578 = vadd.f32 %v3322, -0.28449672
      %v3579 = vadd.f32 %v3323, -0.28449672
      %v3580 = vadd.f32 %v3324, -0.28449672
      %v3581 = vadd.f32 %v3325, -0.28449672
      %v3582 = vadd.f32 %v3326, -0.28449672
      %v3583 = vadd.f32 %v3327, -0.28449672
      %v3584 = vadd.f32 %v3328, -0.28449672
      %v3585 = vadd.f32 %v3329, -0.28449672
      %v3586 = vadd.f32 %v3330, -0.28449672
      %v3587 = vadd.f32 %v3331, -0.28449672
      %v3588 = vadd.f32 %v3332, -0.28449672
      %v3589 = vadd.f32 %v3333, -0.28449672
      %v3590 = vadd.f32 %v3334, -0.28449672
      %v3591 = vadd.f32 %v3335, -0.28449672
      %v3592 = vadd.f32 %v3336, -0.28449672
      %v3593 = vadd.f32 %v3337, -0.28449672
      %v3594 = vadd.f32 %v3338, -0.28449672
      %v3595 = vadd.f32 %v3339, -0.28449672
      %v3596 = vadd.f32 %v3340, -0.28449672
      %v3597 = vadd.f32 %v3341, -0.28449672
      %v3598 = vadd.f32 %v3342, -0.28449672
      %v3599 = vadd.f32 %v3343, -0.28449672
      %v3600 = vadd.f32 %v3344, -0.28449672
      %v3601 = vadd.f32 %v3345, -0.28449672
      %v3602 = vadd.f32 %v3346, -0.28449672
      %v3603 = vadd.f32 %v3347, -0.28449672
      %v3604 = vadd.f32 %v3348, -0.28449672
      %v3605 = vadd.f32 %v3349, -0.28449672
      %v3606 = vadd.f32 %v3350, -0.28449672
      %v3607 = vadd.f32 %v3351, -0.28449672
      %v3608 = vadd.f32 %v3352, -0.28449672
      %v3609 = vadd.f32 %v3353, -0.28449672
      %v3610 = vadd.f32 %v3354, -0.28449672
      %v3611 = vadd.f32 %v3355, -0.28449672
      %v3612 = vadd.f32 %v3356, -0.28449672
      %v3613 = vadd.f32 %v3357, -0.28449672
      %v3614 = vadd.f32 %v3358, -0.28449672
      %v3615 = vadd.f32 %v3359, -0.28449672
      %v3616 = vadd.f32 %v3360, -0.28449672
      %v3617 = vadd.f32 %v3361, -0.28449672
      %v3618 = vadd.f32 %v3362, -0.28449672
      %v3619 = vadd.f32 %v3363, -0.28449672
      %v3620 = vadd.f32 %v3364, -0.28449672
      %v3621 = vadd.f32 %v3365, -0.28449672
      %v3622 = vadd.f32 %v3366, -0.28449672
      %v3623 = vadd.f32 %v3367, -0.28449672
      %v3624 = vadd.f32 %v3368, -0.28449672
      %v3625 = vadd.f32 %v3369, -0.28449672
      %v3626 = vadd.f32 %v3370, -0.28449672
      %v3627 = vadd.f32 %v3371, -0.28449672
      %v3628 = vadd.f32 %v3372, -0.28449672
      %v3629 = vadd.f32 %v3373, -0.28449672
      %v3630 = vadd.f32 %v3374, -0.28449672
      %v3631 = vadd.f32 %v3375, -0.28449672
      %v3632 = vadd.f32 %v3376, -0.28449672
      %v3633 = vadd.f32 %v3377, -0.28449672
      %v3634 = vadd.f32 %v3378, -0.28449672
      %v3635 = vadd.f32 %v3379, -0.28449672
      %v3636 = vadd.f32 %v3380, -0.28449672
      %v3637 = vadd.f32 %v3381, -0.28449672
      %v3638 = vadd.f32 %v3382, -0.28449672
      %v3639 = vadd.f32 %v3383, -0.28449672
      %v3640 = vadd.f32 %v3384, -0.28449672
      %v3641 = vadd.f32 %v3385, -0.28449672
      %v3642 = vadd.f32 %v3386, -0.28449672
      %v3643 = vadd.f32 %v3387, -0.28449672
      %v3644 = vadd.f32 %v3388, -0.28449672
      %v3645 = vadd.f32 %v3389, -0.28449672
      %v3646 = vadd.f32 %v3390, -0.28449672
      %v3647 = vadd.f32 %v3391, -0.28449672
      %v3648 = vadd.f32 %v3392, -0.28449672
      %v3649 = vadd.f32 %v3393, -0.28449672
      %v3650 = vadd.f32 %v3394, -0.28449672
      %v3651 = vadd.f32 %v3395, -0.28449672
      %v3652 = vadd.f32 %v3396, -0.28449672
      %v3653 = vadd.f32 %v3397, -0.28449672
      %v3654 = vadd.f32 %v3398, -0.28449672
      %v3655 = vadd.f32 %v3399, -0.28449672
      %v3656 = vadd.f32 %v3400, -0.28449672
      %v3657 = vadd.f32 %v3401, -0.28449672
      %v3658 = vadd.f32 %v3402, -0.28449672
      %v3659 = vadd.f32 %v3403, -0.28449672
      %v3660 = vadd.f32 %v3404, -0.28449672
      %v3661 = vadd.f32 %v3405, -0.28449672
      %v3662 = vadd.f32 %v3406, -0.28449672
      %v3663 = vadd.f32 %v3407, -0.28449672
      %v3664 = vadd.f32 %v3408, -0.28449672
      %v3665 = vadd.f32 %v3409, -0.28449672
      %v3666 = vadd.f32 %v3410, -0.28449672
      %v3667 = vadd.f32 %v3411, -0.28449672
      %v3668 = vadd.f32 %v3412, -0.28449672
      %v3669 = vadd.f32 %v3413, -0.28449672
      %v3670 = vadd.f32 %v3414, -0.28449672
      %v3671 = vadd.f32 %v3415, -0.28449672
      %v3672 = vadd.f32 %v3416, -0.28449672
      %v3673 = vadd.f32 %v3417, -0.28449672
      %v3674 = vadd.f32 %v3418, -0.28449672
      %v3675 = vadd.f32 %v3419, -0.28449672
      %v3676 = vadd.f32 %v3420, -0.28449672
      %v3677 = vadd.f32 %v3421, -0.28449672
      %v3678 = vadd.f32 %v3422, -0.28449672
      %v3679 = vadd.f32 %v3423, -0.28449672
      %v3680 = vadd.f32 %v3424, -0.28449672
      %v3681 = vadd.f32 %v3425, -0.28449672
      %v3682 = vadd.f32 %v3426, -0.28449672
      %v3683 = vadd.f32 %v3427, -0.28449672
      %v3684 = vadd.f32 %v3428, -0.28449672
      %v3685 = vadd.f32 %v3429, -0.28449672
      %v3686 = vadd.f32 %v3430, -0.28449672
      %v3687 = vadd.f32 %v3431, -0.28449672
      %v3688 = vadd.f32 %v3432, -0.28449672
      %v3689 = vadd.f32 %v3433, -0.28449672
      %v3690 = vadd.f32 %v3434, -0.28449672
      %v3691 = vadd.f32 %v3435, -0.28449672
      %v3692 = vadd.f32 %v3436, -0.28449672
      %v3693 = vadd.f32 %v3437, -0.28449672
      %v3694 = vadd.f32 %v3438, -0.28449672
      %v3695 = vadd.f32 %v3439, -0.28449672
      %v3696 = vadd.f32 %v3440, -0.28449672
      %v3697 = vadd.f32 %v3441, -0.28449672
      %v3698 = vadd.f32 %v3442, -0.28449672
      %v3699 = vadd.f32 %v3443, -0.28449672
      %v3700 = vadd.f32 %v3444, -0.28449672
      %v3701 = vadd.f32 %v3445, -0.28449672
      %v3702 = vadd.f32 %v3446, -0.28449672
      %v3703 = vadd.f32 %v3447, -0.28449672
      %v3704 = vadd.f32 %v3448, -0.28449672
      %v3705 = vadd.f32 %v3449, -0.28449672
      %v3706 = vadd.f32 %v3450, -0.28449672
      %v3707 = vadd.f32 %v3451, -0.28449672
      %v3708 = vadd.f32 %v3452, -0.28449672
      %v3709 = vadd.f32 %v3453, -0.28449672
      %v3710 = vadd.f32 %v3454, -0.28449672
      %v3711 = vadd.f32 %v3455, -0.28449672
      %v3712 = vadd.f32 %v3456, -0.28449672
      %v3713 = vadd.f32 %v3457, -0.28449672
      %v3714 = vadd.f32 %v3458, -0.28449672
      %v3715 = vadd.f32 %v3459, -0.28449672
      %v3716 = vadd.f32 %v3460, -0.28449672
      %v3717 = vadd.f32 %v3461, -0.28449672
      %v3718 = vadd.f32 %v3462, -0.28449672
      %v3719 = vadd.f32 %v3463, -0.28449672
      %v3720 = vadd.f32 %v3464, -0.28449672
      %v3721 = vadd.f32 %v3465, -0.28449672
      %v3722 = vadd.f32 %v3466, -0.28449672
      %v3723 = vadd.f32 %v3467, -0.28449672
      %v3724 = vadd.f32 %v3468, -0.28449672
      %v3725 = vadd.f32 %v3469, -0.28449672
      %v3726 = vadd.f32 %v3470, -0.28449672
      %v3727 = vadd.f32 %v3471, -0.28449672
      %v3728 = vadd.f32 %v3472, -0.28449672
      %v3729 = vadd.f32 %v3473, -0.28449672
      %v3730 = vadd.f32 %v3474, -0.28449672
      %v3731 = vadd.f32 %v3475, -0.28449672
      %v3732 = vadd.f32 %v3476, -0.28449672
      %v3733 = vadd.f32 %v3477, -0.28449672
      %v3734 = vadd.f32 %v3478, -0.28449672
      %v3735 = vadd.f32 %v3479, -0.28449672
      %v3736 = vadd.f32 %v3480, -0.28449672
      %v3737 = vadd.f32 %v3481, -0.28449672
      %v3738 = vadd.f32 %v3482, -0.28449672
      %v3739 = vadd.f32 %v3483, -0.28449672
      %v3740 = vadd.f32 %v3484, -0.28449672
      %v3741 = vadd.f32 %v3485, -0.28449672
      %v3742 = vadd.f32 %v3486, -0.28449672
      %v3743 = vadd.f32 %v3487, -0.28449672
      %v3744 = vadd.f32 %v3488, -0.28449672
      %v3745 = vadd.f32 %v3489, -0.28449672
      %v3746 = vadd.f32 %v3490, -0.28449672
      %v3747 = vadd.f32 %v3491, -0.28449672
      %v3748 = vadd.f32 %v3492, -0.28449672
      %v3749 = vadd.f32 %v3493, -0.28449672
      %v3750 = vadd.f32 %v3494, -0.28449672
      %v3751 = vadd.f32 %v3495, -0.28449672
      %v3752 = vadd.f32 %v3496, -0.28449672
      %v3753 = vadd.f32 %v3497, -0.28449672
      %v3754 = vadd.f32 %v3498, -0.28449672
      %v3755 = vadd.f32 %v3499, -0.28449672
      %v3756 = vadd.f32 %v3500, -0.28449672
      %v3757 = vadd.f32 %v3501, -0.28449672
      %v3758 = vadd.f32 %v3502, -0.28449672
      %v3759 = vadd.f32 %v3503, -0.28449672
      %v3760 = vadd.f32 %v3504, -0.28449672
      %v3761 = vadd.f32 %v3505, -0.28449672
      %v3762 = vadd.f32 %v3506, -0.28449672
      %v3763 = vadd.f32 %v3507, -0.28449672
      %v3764 = vadd.f32 %v3508, -0.28449672
      %v3765 = vadd.f32 %v3509, -0.28449672
      %v3766 = vadd.f32 %v3510, -0.28449672
      %v3767 = vadd.f32 %v3511, -0.28449672
      %v3768 = vadd.f32 %v3512, -0.28449672
      %v3769 = vadd.f32 %v3513, -0.28449672
      %v3770 = vadd.f32 %v3514, -0.28449672
      %v3771 = vadd.f32 %v3515, -0.28449672
      %v3772 = vadd.f32 %v3516, -0.28449672
      %v3773 = vadd.f32 %v3517, -0.28449672
      %v3774 = vmul.f32 %v1982, %v3518
      %v3775 = vmul.f32 %v1983, %v3519
      %v3776 = vmul.f32 %v1984, %v3520
      %v3777 = vmul.f32 %v1985, %v3521
      %v3778 = vmul.f32 %v1986, %v3522
      %v3779 = vmul.f32 %v1987, %v3523
      %v3780 = vmul.f32 %v1988, %v3524
      %v3781 = vmul.f32 %v1989, %v3525
      %v3782 = vmul.f32 %v1990, %v3526
      %v3783 = vmul.f32 %v1991, %v3527
      %v3784 = vmul.f32 %v1992, %v3528
      %v3785 = vmul.f32 %v1993, %v3529
      %v3786 = vmul.f32 %v1994, %v3530
      %v3787 = vmul.f32 %v1995, %v3531
      %v3788 = vmul.f32 %v1996, %v3532
      %v3789 = vmul.f32 %v1997, %v3533
      %v3790 = vmul.f32 %v1998, %v3534
      %v3791 = vmul.f32 %v1999, %v3535
      %v3792 = vmul.f32 %v2000, %v3536
      %v3793 = vmul.f32 %v2001, %v3537
      %v3794 = vmul.f32 %v2002, %v3538
      %v3795 = vmul.f32 %v2003, %v3539
      %v3796 = vmul.f32 %v2004, %v3540
      %v3797 = vmul.f32 %v2005, %v3541
      %v3798 = vmul.f32 %v2006, %v3542
      %v3799 = vmul.f32 %v2007, %v3543
      %v3800 = vmul.f32 %v2008, %v3544
      %v3801 = vmul.f32 %v2009, %v3545
      %v3802 = vmul.f32 %v2010, %v3546
      %v3803 = vmul.f32 %v2011, %v3547
      %v3804 = vmul.f32 %v2012, %v3548
      %v3805 = vmul.f32 %v2013, %v3549
      %v3806 = vmul.f32 %v2014, %v3550
      %v3807 = vmul.f32 %v2015, %v3551
      %v3808 = vmul.f32 %v2016, %v3552
      %v3809 = vmul.f32 %v2017, %v3553
      %v3810 = vmul.f32 %v2018, %v3554
      %v3811 = vmul.f32 %v2019, %v3555
      %v3812 = vmul.f32 %v2020, %v3556
      %v3813 = vmul.f32 %v2021, %v3557
      %v3814 = vmul.f32 %v2022, %v3558
      %v3815 = vmul.f32 %v2023, %v3559
      %v3816 = vmul.f32 %v2024, %v3560
      %v3817 = vmul.f32 %v2025, %v3561
      %v3818 = vmul.f32 %v2026, %v3562
      %v3819 = vmul.f32 %v2027, %v3563
      %v3820 = vmul.f32 %v2028, %v3564
      %v3821 = vmul.f32 %v2029, %v3565
      %v3822 = vmul.f32 %v2030, %v3566
      %v3823 = vmul.f32 %v2031, %v3567
      %v3824 = vmul.f32 %v2032, %v3568
      %v3825 = vmul.f32 %v2033, %v3569
      %v3826 = vmul.f32 %v2034, %v3570
      %v3827 = vmul.f32 %v2035, %v3571
      %v3828 = vmul.f32 %v2036, %v3572
      %v3829 = vmul.f32 %v2037, %v3573
      %v3830 = vmul.f32 %v2038, %v3574
      %v3831 = vmul.f32 %v2039, %v3575
      %v3832 = vmul.f32 %v2040, %v3576
      %v3833 = vmul.f32 %v2041, %v3577
      %v3834 = vmul.f32 %v2042, %v3578
      %v3835 = vmul.f32 %v2043, %v3579
      %v3836 = vmul.f32 %v2044, %v3580
      %v3837 = vmul.f32 %v2045, %v3581
      %v3838 = vmul.f32 %v2046, %v3582
      %v3839 = vmul.f32 %v2047, %v3583
      %v3840 = vmul.f32 %v2048, %v3584
      %v3841 = vmul.f32 %v2049, %v3585
      %v3842 = vmul.f32 %v2050, %v3586
      %v3843 = vmul.f32 %v2051, %v3587
      %v3844 = vmul.f32 %v2052, %v3588
      %v3845 = vmul.f32 %v2053, %v3589
      %v3846 = vmul.f32 %v2054, %v3590
      %v3847 = vmul.f32 %v2055, %v3591
      %v3848 = vmul.f32 %v2056, %v3592
      %v3849 = vmul.f32 %v2057, %v3593
      %v3850 = vmul.f32 %v2058, %v3594
      %v3851 = vmul.f32 %v2059, %v3595
      %v3852 = vmul.f32 %v2060, %v3596
      %v3853 = vmul.f32 %v2061, %v3597
      %v3854 = vmul.f32 %v2062, %v3598
      %v3855 = vmul.f32 %v2063, %v3599
      %v3856 = vmul.f32 %v2064, %v3600
      %v3857 = vmul.f32 %v2065, %v3601
      %v3858 = vmul.f32 %v2066, %v3602
      %v3859 = vmul.f32 %v2067, %v3603
      %v3860 = vmul.f32 %v2068, %v3604
      %v3861 = vmul.f32 %v2069, %v3605
      %v3862 = vmul.f32 %v2070, %v3606
      %v3863 = vmul.f32 %v2071, %v3607
      %v3864 = vmul.f32 %v2072, %v3608
      %v3865 = vmul.f32 %v2073, %v3609
      %v3866 = vmul.f32 %v2074, %v3610
      %v3867 = vmul.f32 %v2075, %v3611
      %v3868 = vmul.f32 %v2076, %v3612
      %v3869 = vmul.f32 %v2077, %v3613
      %v3870 = vmul.f32 %v2078, %v3614
      %v3871 = vmul.f32 %v2079, %v3615
      %v3872 = vmul.f32 %v2080, %v3616
      %v3873 = vmul.f32 %v2081, %v3617
      %v3874 = vmul.f32 %v2082, %v3618
      %v3875 = vmul.f32 %v2083, %v3619
      %v3876 = vmul.f32 %v2084, %v3620
      %v3877 = vmul.f32 %v2085, %v3621
      %v3878 = vmul.f32 %v2086, %v3622
      %v3879 = vmul.f32 %v2087, %v3623
      %v3880 = vmul.f32 %v2088, %v3624
      %v3881 = vmul.f32 %v2089, %v3625
      %v3882 = vmul.f32 %v2090, %v3626
      %v3883 = vmul.f32 %v2091, %v3627
      %v3884 = vmul.f32 %v2092, %v3628
      %v3885 = vmul.f32 %v2093, %v3629
      %v3886 = vmul.f32 %v2094, %v3630
      %v3887 = vmul.f32 %v2095, %v3631
      %v3888 = vmul.f32 %v2096, %v3632
      %v3889 = vmul.f32 %v2097, %v3633
      %v3890 = vmul.f32 %v2098, %v3634
      %v3891 = vmul.f32 %v2099, %v3635
      %v3892 = vmul.f32 %v2100, %v3636
      %v3893 = vmul.f32 %v2101, %v3637
      %v3894 = vmul.f32 %v2102, %v3638
      %v3895 = vmul.f32 %v2103, %v3639
      %v3896 = vmul.f32 %v2104, %v3640
      %v3897 = vmul.f32 %v2105, %v3641
      %v3898 = vmul.f32 %v2106, %v3642
      %v3899 = vmul.f32 %v2107, %v3643
      %v3900 = vmul.f32 %v2108, %v3644
      %v3901 = vmul.f32 %v2109, %v3645
      %v3902 = vmul.f32 %v2110, %v3646
      %v3903 = vmul.f32 %v2111, %v3647
      %v3904 = vmul.f32 %v2112, %v3648
      %v3905 = vmul.f32 %v2113, %v3649
      %v3906 = vmul.f32 %v2114, %v3650
      %v3907 = vmul.f32 %v2115, %v3651
      %v3908 = vmul.f32 %v2116, %v3652
      %v3909 = vmul.f32 %v2117, %v3653
      %v3910 = vmul.f32 %v2118, %v3654
      %v3911 = vmul.f32 %v2119, %v3655
      %v3912 = vmul.f32 %v2120, %v3656
      %v3913 = vmul.f32 %v2121, %v3657
      %v3914 = vmul.f32 %v2122, %v3658
      %v3915 = vmul.f32 %v2123, %v3659
      %v3916 = vmul.f32 %v2124, %v3660
      %v3917 = vmul.f32 %v2125, %v3661
      %v3918 = vmul.f32 %v2126, %v3662
      %v3919 = vmul.f32 %v2127, %v3663
      %v3920 = vmul.f32 %v2128, %v3664
      %v3921 = vmul.f32 %v2129, %v3665
      %v3922 = vmul.f32 %v2130, %v3666
      %v3923 = vmul.f32 %v2131, %v3667
      %v3924 = vmul.f32 %v2132, %v3668
      %v3925 = vmul.f32 %v2133, %v3669
      %v3926 = vmul.f32 %v2134, %v3670
      %v3927 = vmul.f32 %v2135, %v3671
      %v3928 = vmul.f32 %v2136, %v3672
      %v3929 = vmul.f32 %v2137, %v3673
      %v3930 = vmul.f32 %v2138, %v3674
      %v3931 = vmul.f32 %v2139, %v3675
      %v3932 = vmul.f32 %v2140, %v3676
      %v3933 = vmul.f32 %v2141, %v3677
      %v3934 = vmul.f32 %v2142, %v3678
      %v3935 = vmul.f32 %v2143, %v3679
      %v3936 = vmul.f32 %v2144, %v3680
      %v3937 = vmul.f32 %v2145, %v3681
      %v3938 = vmul.f32 %v2146, %v3682
      %v3939 = vmul.f32 %v2147, %v3683
      %v3940 = vmul.f32 %v2148, %v3684
      %v3941 = vmul.f32 %v2149, %v3685
      %v3942 = vmul.f32 %v2150, %v3686
      %v3943 = vmul.f32 %v2151, %v3687
      %v3944 = vmul.f32 %v2152, %v3688
      %v3945 = vmul.f32 %v2153, %v3689
      %v3946 = vmul.f32 %v2154, %v3690
      %v3947 = vmul.f32 %v2155, %v3691
      %v3948 = vmul.f32 %v2156, %v3692
      %v3949 = vmul.f32 %v2157, %v3693
      %v3950 = vmul.f32 %v2158, %v3694
      %v3951 = vmul.f32 %v2159, %v3695
      %v3952 = vmul.f32 %v2160, %v3696
      %v3953 = vmul.f32 %v2161, %v3697
      %v3954 = vmul.f32 %v2162, %v3698
      %v3955 = vmul.f32 %v2163, %v3699
      %v3956 = vmul.f32 %v2164, %v3700
      %v3957 = vmul.f32 %v2165, %v3701
      %v3958 = vmul.f32 %v2166, %v3702
      %v3959 = vmul.f32 %v2167, %v3703
      %v3960 = vmul.f32 %v2168, %v3704
      %v3961 = vmul.f32 %v2169, %v3705
      %v3962 = vmul.f32 %v2170, %v3706
      %v3963 = vmul.f32 %v2171, %v3707
      %v3964 = vmul.f32 %v2172, %v3708
      %v3965 = vmul.f32 %v2173, %v3709
      %v3966 = vmul.f32 %v2174, %v3710
      %v3967 = vmul.f32 %v2175, %v3711
      %v3968 = vmul.f32 %v2176, %v3712
      %v3969 = vmul.f32 %v2177, %v3713
      %v3970 = vmul.f32 %v2178, %v3714
      %v3971 = vmul.f32 %v2179, %v3715
      %v3972 = vmul.f32 %v2180, %v3716
      %v3973 = vmul.f32 %v2181, %v3717
      %v3974 = vmul.f32 %v2182, %v3718
      %v3975 = vmul.f32 %v2183, %v3719
      %v3976 = vmul.f32 %v2184, %v3720
      %v3977 = vmul.f32 %v2185, %v3721
      %v3978 = vmul.f32 %v2186, %v3722
      %v3979 = vmul.f32 %v2187, %v3723
      %v3980 = vmul.f32 %v2188, %v3724
      %v3981 = vmul.f32 %v2189, %v3725
      %v3982 = vmul.f32 %v2190, %v3726
      %v3983 = vmul.f32 %v2191, %v3727
      %v3984 = vmul.f32 %v2192, %v3728
      %v3985 = vmul.f32 %v2193, %v3729
      %v3986 = vmul.f32 %v2194, %v3730
      %v3987 = vmul.f32 %v2195, %v3731
      %v3988 = vmul.f32 %v2196, %v3732
      %v3989 = vmul.f32 %v2197, %v3733
      %v3990 = vmul.f32 %v2198, %v3734
      %v3991 = vmul.f32 %v2199, %v3735
      %v3992 = vmul.f32 %v2200, %v3736
      %v3993 = vmul.f32 %v2201, %v3737
      %v3994 = vmul.f32 %v2202, %v3738
      %v3995 = vmul.f32 %v2203, %v3739
      %v3996 = vmul.f32 %v2204, %v3740
      %v3997 = vmul.f32 %v2205, %v3741
      %v3998 = vmul.f32 %v2206, %v3742
      %v3999 = vmul.f32 %v2207, %v3743
      %v4000 = vmul.f32 %v2208, %v3744
      %v4001 = vmul.f32 %v2209, %v3745
      %v4002 = vmul.f32 %v2210, %v3746
      %v4003 = vmul.f32 %v2211, %v3747
      %v4004 = vmul.f32 %v2212, %v3748
      %v4005 = vmul.f32 %v2213, %v3749
      %v4006 = vmul.f32 %v2214, %v3750
      %v4007 = vmul.f32 %v2215, %v3751
      %v4008 = vmul.f32 %v2216, %v3752
      %v4009 = vmul.f32 %v2217, %v3753
      %v4010 = vmul.f32 %v2218, %v3754
      %v4011 = vmul.f32 %v2219, %v3755
      %v4012 = vmul.f32 %v2220, %v3756
      %v4013 = vmul.f32 %v2221, %v3757
      %v4014 = vmul.f32 %v2222, %v3758
      %v4015 = vmul.f32 %v2223, %v3759
      %v4016 = vmul.f32 %v2224, %v3760
      %v4017 = vmul.f32 %v2225, %v3761
      %v4018 = vmul.f32 %v2226, %v3762
      %v4019 = vmul.f32 %v2227, %v3763
      %v4020 = vmul.f32 %v2228, %v3764
      %v4021 = vmul.f32 %v2229, %v3765
      %v4022 = vmul.f32 %v2230, %v3766
      %v4023 = vmul.f32 %v2231, %v3767
      %v4024 = vmul.f32 %v2232, %v3768
      %v4025 = vmul.f32 %v2233, %v3769
      %v4026 = vmul.f32 %v2234, %v3770
      %v4027 = vmul.f32 %v2235, %v3771
      %v4028 = vmul.f32 %v2236, %v3772
      %v4029 = vmul.f32 %v2237, %v3773
      %v4030 = vadd.f32 %v3774, 0.2548296
      %v4031 = vadd.f32 %v3775, 0.2548296
      %v4032 = vadd.f32 %v3776, 0.2548296
      %v4033 = vadd.f32 %v3777, 0.2548296
      %v4034 = vadd.f32 %v3778, 0.2548296
      %v4035 = vadd.f32 %v3779, 0.2548296
      %v4036 = vadd.f32 %v3780, 0.2548296
      %v4037 = vadd.f32 %v3781, 0.2548296
      %v4038 = vadd.f32 %v3782, 0.2548296
      %v4039 = vadd.f32 %v3783, 0.2548296
      %v4040 = vadd.f32 %v3784, 0.2548296
      %v4041 = vadd.f32 %v3785, 0.2548296
      %v4042 = vadd.f32 %v3786, 0.2548296
      %v4043 = vadd.f32 %v3787, 0.2548296
      %v4044 = vadd.f32 %v3788, 0.2548296
      %v4045 = vadd.f32 %v3789, 0.2548296
      %v4046 = vadd.f32 %v3790, 0.2548296
      %v4047 = vadd.f32 %v3791, 0.2548296
      %v4048 = vadd.f32 %v3792, 0.2548296
      %v4049 = vadd.f32 %v3793, 0.2548296
      %v4050 = vadd.f32 %v3794, 0.2548296
      %v4051 = vadd.f32 %v3795, 0.2548296
      %v4052 = vadd.f32 %v3796, 0.2548296
      %v4053 = vadd.f32 %v3797, 0.2548296
      %v4054 = vadd.f32 %v3798, 0.2548296
      %v4055 = vadd.f32 %v3799, 0.2548296
      %v4056 = vadd.f32 %v3800, 0.2548296
      %v4057 = vadd.f32 %v3801, 0.2548296
      %v4058 = vadd.f32 %v3802, 0.2548296
      %v4059 = vadd.f32 %v3803, 0.2548296
      %v4060 = vadd.f32 %v3804, 0.2548296
      %v4061 = vadd.f32 %v3805, 0.2548296
      %v4062 = vadd.f32 %v3806, 0.2548296
      %v4063 = vadd.f32 %v3807, 0.2548296
      %v4064 = vadd.f32 %v3808, 0.2548296
      %v4065 = vadd.f32 %v3809, 0.2548296
      %v4066 = vadd.f32 %v3810, 0.2548296
      %v4067 = vadd.f32 %v3811, 0.2548296
      %v4068 = vadd.f32 %v3812, 0.2548296
      %v4069 = vadd.f32 %v3813, 0.2548296
      %v4070 = vadd.f32 %v3814, 0.2548296
      %v4071 = vadd.f32 %v3815, 0.2548296
      %v4072 = vadd.f32 %v3816, 0.2548296
      %v4073 = vadd.f32 %v3817, 0.2548296
      %v4074 = vadd.f32 %v3818, 0.2548296
      %v4075 = vadd.f32 %v3819, 0.2548296
      %v4076 = vadd.f32 %v3820, 0.2548296
      %v4077 = vadd.f32 %v3821, 0.2548296
      %v4078 = vadd.f32 %v3822, 0.2548296
      %v4079 = vadd.f32 %v3823, 0.2548296
      %v4080 = vadd.f32 %v3824, 0.2548296
      %v4081 = vadd.f32 %v3825, 0.2548296
      %v4082 = vadd.f32 %v3826, 0.2548296
      %v4083 = vadd.f32 %v3827, 0.2548296
      %v4084 = vadd.f32 %v3828, 0.2548296
      %v4085 = vadd.f32 %v3829, 0.2548296
      %v4086 = vadd.f32 %v3830, 0.2548296
      %v4087 = vadd.f32 %v3831, 0.2548296
      %v4088 = vadd.f32 %v3832, 0.2548296
      %v4089 = vadd.f32 %v3833, 0.2548296
      %v4090 = vadd.f32 %v3834, 0.2548296
      %v4091 = vadd.f32 %v3835, 0.2548296
      %v4092 = vadd.f32 %v3836, 0.2548296
      %v4093 = vadd.f32 %v3837, 0.2548296
      %v4094 = vadd.f32 %v3838, 0.2548296
      %v4095 = vadd.f32 %v3839, 0.2548296
      %v4096 = vadd.f32 %v3840, 0.2548296
      %v4097 = vadd.f32 %v3841, 0.2548296
      %v4098 = vadd.f32 %v3842, 0.2548296
      %v4099 = vadd.f32 %v3843, 0.2548296
      %v4100 = vadd.f32 %v3844, 0.2548296
      %v4101 = vadd.f32 %v3845, 0.2548296
      %v4102 = vadd.f32 %v3846, 0.2548296
      %v4103 = vadd.f32 %v3847, 0.2548296
      %v4104 = vadd.f32 %v3848, 0.2548296
      %v4105 = vadd.f32 %v3849, 0.2548296
      %v4106 = vadd.f32 %v3850, 0.2548296
      %v4107 = vadd.f32 %v3851, 0.2548296
      %v4108 = vadd.f32 %v3852, 0.2548296
      %v4109 = vadd.f32 %v3853, 0.2548296
      %v4110 = vadd.f32 %v3854, 0.2548296
      %v4111 = vadd.f32 %v3855, 0.2548296
      %v4112 = vadd.f32 %v3856, 0.2548296
      %v4113 = vadd.f32 %v3857, 0.2548296
      %v4114 = vadd.f32 %v3858, 0.2548296
      %v4115 = vadd.f32 %v3859, 0.2548296
      %v4116 = vadd.f32 %v3860, 0.2548296
      %v4117 = vadd.f32 %v3861, 0.2548296
      %v4118 = vadd.f32 %v3862, 0.2548296
      %v4119 = vadd.f32 %v3863, 0.2548296
      %v4120 = vadd.f32 %v3864, 0.2548296
      %v4121 = vadd.f32 %v3865, 0.2548296
      %v4122 = vadd.f32 %v3866, 0.2548296
      %v4123 = vadd.f32 %v3867, 0.2548296
      %v4124 = vadd.f32 %v3868, 0.2548296
      %v4125 = vadd.f32 %v3869, 0.2548296
      %v4126 = vadd.f32 %v3870, 0.2548296
      %v4127 = vadd.f32 %v3871, 0.2548296
      %v4128 = vadd.f32 %v3872, 0.2548296
      %v4129 = vadd.f32 %v3873, 0.2548296
      %v4130 = vadd.f32 %v3874, 0.2548296
      %v4131 = vadd.f32 %v3875, 0.2548296
      %v4132 = vadd.f32 %v3876, 0.2548296
      %v4133 = vadd.f32 %v3877, 0.2548296
      %v4134 = vadd.f32 %v3878, 0.2548296
      %v4135 = vadd.f32 %v3879, 0.2548296
      %v4136 = vadd.f32 %v3880, 0.2548296
      %v4137 = vadd.f32 %v3881, 0.2548296
      %v4138 = vadd.f32 %v3882, 0.2548296
      %v4139 = vadd.f32 %v3883, 0.2548296
      %v4140 = vadd.f32 %v3884, 0.2548296
      %v4141 = vadd.f32 %v3885, 0.2548296
      %v4142 = vadd.f32 %v3886, 0.2548296
      %v4143 = vadd.f32 %v3887, 0.2548296
      %v4144 = vadd.f32 %v3888, 0.2548296
      %v4145 = vadd.f32 %v3889, 0.2548296
      %v4146 = vadd.f32 %v3890, 0.2548296
      %v4147 = vadd.f32 %v3891, 0.2548296
      %v4148 = vadd.f32 %v3892, 0.2548296
      %v4149 = vadd.f32 %v3893, 0.2548296
      %v4150 = vadd.f32 %v3894, 0.2548296
      %v4151 = vadd.f32 %v3895, 0.2548296
      %v4152 = vadd.f32 %v3896, 0.2548296
      %v4153 = vadd.f32 %v3897, 0.2548296
      %v4154 = vadd.f32 %v3898, 0.2548296
      %v4155 = vadd.f32 %v3899, 0.2548296
      %v4156 = vadd.f32 %v3900, 0.2548296
      %v4157 = vadd.f32 %v3901, 0.2548296
      %v4158 = vadd.f32 %v3902, 0.2548296
      %v4159 = vadd.f32 %v3903, 0.2548296
      %v4160 = vadd.f32 %v3904, 0.2548296
      %v4161 = vadd.f32 %v3905, 0.2548296
      %v4162 = vadd.f32 %v3906, 0.2548296
      %v4163 = vadd.f32 %v3907, 0.2548296
      %v4164 = vadd.f32 %v3908, 0.2548296
      %v4165 = vadd.f32 %v3909, 0.2548296
      %v4166 = vadd.f32 %v3910, 0.2548296
      %v4167 = vadd.f32 %v3911, 0.2548296
      %v4168 = vadd.f32 %v3912, 0.2548296
      %v4169 = vadd.f32 %v3913, 0.2548296
      %v4170 = vadd.f32 %v3914, 0.2548296
      %v4171 = vadd.f32 %v3915, 0.2548296
      %v4172 = vadd.f32 %v3916, 0.2548296
      %v4173 = vadd.f32 %v3917, 0.2548296
      %v4174 = vadd.f32 %v3918, 0.2548296
      %v4175 = vadd.f32 %v3919, 0.2548296
      %v4176 = vadd.f32 %v3920, 0.2548296
      %v4177 = vadd.f32 %v3921, 0.2548296
      %v4178 = vadd.f32 %v3922, 0.2548296
      %v4179 = vadd.f32 %v3923, 0.2548296
      %v4180 = vadd.f32 %v3924, 0.2548296
      %v4181 = vadd.f32 %v3925, 0.2548296
      %v4182 = vadd.f32 %v3926, 0.2548296
      %v4183 = vadd.f32 %v3927, 0.2548296
      %v4184 = vadd.f32 %v3928, 0.2548296
      %v4185 = vadd.f32 %v3929, 0.2548296
      %v4186 = vadd.f32 %v3930, 0.2548296
      %v4187 = vadd.f32 %v3931, 0.2548296
      %v4188 = vadd.f32 %v3932, 0.2548296
      %v4189 = vadd.f32 %v3933, 0.2548296
      %v4190 = vadd.f32 %v3934, 0.2548296
      %v4191 = vadd.f32 %v3935, 0.2548296
      %v4192 = vadd.f32 %v3936, 0.2548296
      %v4193 = vadd.f32 %v3937, 0.2548296
      %v4194 = vadd.f32 %v3938, 0.2548296
      %v4195 = vadd.f32 %v3939, 0.2548296
      %v4196 = vadd.f32 %v3940, 0.2548296
      %v4197 = vadd.f32 %v3941, 0.2548296
      %v4198 = vadd.f32 %v3942, 0.2548296
      %v4199 = vadd.f32 %v3943, 0.2548296
      %v4200 = vadd.f32 %v3944, 0.2548296
      %v4201 = vadd.f32 %v3945, 0.2548296
      %v4202 = vadd.f32 %v3946, 0.2548296
      %v4203 = vadd.f32 %v3947, 0.2548296
      %v4204 = vadd.f32 %v3948, 0.2548296
      %v4205 = vadd.f32 %v3949, 0.2548296
      %v4206 = vadd.f32 %v3950, 0.2548296
      %v4207 = vadd.f32 %v3951, 0.2548296
      %v4208 = vadd.f32 %v3952, 0.2548296
      %v4209 = vadd.f32 %v3953, 0.2548296
      %v4210 = vadd.f32 %v3954, 0.2548296
      %v4211 = vadd.f32 %v3955, 0.2548296
      %v4212 = vadd.f32 %v3956, 0.2548296
      %v4213 = vadd.f32 %v3957, 0.2548296
      %v4214 = vadd.f32 %v3958, 0.2548296
      %v4215 = vadd.f32 %v3959, 0.2548296
      %v4216 = vadd.f32 %v3960, 0.2548296
      %v4217 = vadd.f32 %v3961, 0.2548296
      %v4218 = vadd.f32 %v3962, 0.2548296
      %v4219 = vadd.f32 %v3963, 0.2548296
      %v4220 = vadd.f32 %v3964, 0.2548296
      %v4221 = vadd.f32 %v3965, 0.2548296
      %v4222 = vadd.f32 %v3966, 0.2548296
      %v4223 = vadd.f32 %v3967, 0.2548296
      %v4224 = vadd.f32 %v3968, 0.2548296
      %v4225 = vadd.f32 %v3969, 0.2548296
      %v4226 = vadd.f32 %v3970, 0.2548296
      %v4227 = vadd.f32 %v3971, 0.2548296
      %v4228 = vadd.f32 %v3972, 0.2548296
      %v4229 = vadd.f32 %v3973, 0.2548296
      %v4230 = vadd.f32 %v3974, 0.2548296
      %v4231 = vadd.f32 %v3975, 0.2548296
      %v4232 = vadd.f32 %v3976, 0.2548296
      %v4233 = vadd.f32 %v3977, 0.2548296
      %v4234 = vadd.f32 %v3978, 0.2548296
      %v4235 = vadd.f32 %v3979, 0.2548296
      %v4236 = vadd.f32 %v3980, 0.2548296
      %v4237 = vadd.f32 %v3981, 0.2548296
      %v4238 = vadd.f32 %v3982, 0.2548296
      %v4239 = vadd.f32 %v3983, 0.2548296
      %v4240 = vadd.f32 %v3984, 0.2548296
      %v4241 = vadd.f32 %v3985, 0.2548296
      %v4242 = vadd.f32 %v3986, 0.2548296
      %v4243 = vadd.f32 %v3987, 0.2548296
      %v4244 = vadd.f32 %v3988, 0.2548296
      %v4245 = vadd.f32 %v3989, 0.2548296
      %v4246 = vadd.f32 %v3990, 0.2548296
      %v4247 = vadd.f32 %v3991, 0.2548296
      %v4248 = vadd.f32 %v3992, 0.2548296
      %v4249 = vadd.f32 %v3993, 0.2548296
      %v4250 = vadd.f32 %v3994, 0.2548296
      %v4251 = vadd.f32 %v3995, 0.2548296
      %v4252 = vadd.f32 %v3996, 0.2548296
      %v4253 = vadd.f32 %v3997, 0.2548296
      %v4254 = vadd.f32 %v3998, 0.2548296
      %v4255 = vadd.f32 %v3999, 0.2548296
      %v4256 = vadd.f32 %v4000, 0.2548296
      %v4257 = vadd.f32 %v4001, 0.2548296
      %v4258 = vadd.f32 %v4002, 0.2548296
      %v4259 = vadd.f32 %v4003, 0.2548296
      %v4260 = vadd.f32 %v4004, 0.2548296
      %v4261 = vadd.f32 %v4005, 0.2548296
      %v4262 = vadd.f32 %v4006, 0.2548296
      %v4263 = vadd.f32 %v4007, 0.2548296
      %v4264 = vadd.f32 %v4008, 0.2548296
      %v4265 = vadd.f32 %v4009, 0.2548296
      %v4266 = vadd.f32 %v4010, 0.2548296
      %v4267 = vadd.f32 %v4011, 0.2548296
      %v4268 = vadd.f32 %v4012, 0.2548296
      %v4269 = vadd.f32 %v4013, 0.2548296
      %v4270 = vadd.f32 %v4014, 0.2548296
      %v4271 = vadd.f32 %v4015, 0.2548296
      %v4272 = vadd.f32 %v4016, 0.2548296
      %v4273 = vadd.f32 %v4017, 0.2548296
      %v4274 = vadd.f32 %v4018, 0.2548296
      %v4275 = vadd.f32 %v4019, 0.2548296
      %v4276 = vadd.f32 %v4020, 0.2548296
      %v4277 = vadd.f32 %v4021, 0.2548296
      %v4278 = vadd.f32 %v4022, 0.2548296
      %v4279 = vadd.f32 %v4023, 0.2548296
      %v4280 = vadd.f32 %v4024, 0.2548296
      %v4281 = vadd.f32 %v4025, 0.2548296
      %v4282 = vadd.f32 %v4026, 0.2548296
      %v4283 = vadd.f32 %v4027, 0.2548296
      %v4284 = vadd.f32 %v4028, 0.2548296
      %v4285 = vadd.f32 %v4029, 0.2548296
      %v4286 = vmul.f32 %v1982, %v4030
      %v4287 = vmul.f32 %v1983, %v4031
      %v4288 = vmul.f32 %v1984, %v4032
      %v4289 = vmul.f32 %v1985, %v4033
      %v4290 = vmul.f32 %v1986, %v4034
      %v4291 = vmul.f32 %v1987, %v4035
      %v4292 = vmul.f32 %v1988, %v4036
      %v4293 = vmul.f32 %v1989, %v4037
      %v4294 = vmul.f32 %v1990, %v4038
      %v4295 = vmul.f32 %v1991, %v4039
      %v4296 = vmul.f32 %v1992, %v4040
      %v4297 = vmul.f32 %v1993, %v4041
      %v4298 = vmul.f32 %v1994, %v4042
      %v4299 = vmul.f32 %v1995, %v4043
      %v4300 = vmul.f32 %v1996, %v4044
      %v4301 = vmul.f32 %v1997, %v4045
      %v4302 = vmul.f32 %v1998, %v4046
      %v4303 = vmul.f32 %v1999, %v4047
      %v4304 = vmul.f32 %v2000, %v4048
      %v4305 = vmul.f32 %v2001, %v4049
      %v4306 = vmul.f32 %v2002, %v4050
      %v4307 = vmul.f32 %v2003, %v4051
      %v4308 = vmul.f32 %v2004, %v4052
      %v4309 = vmul.f32 %v2005, %v4053
      %v4310 = vmul.f32 %v2006, %v4054
      %v4311 = vmul.f32 %v2007, %v4055
      %v4312 = vmul.f32 %v2008, %v4056
      %v4313 = vmul.f32 %v2009, %v4057
      %v4314 = vmul.f32 %v2010, %v4058
      %v4315 = vmul.f32 %v2011, %v4059
      %v4316 = vmul.f32 %v2012, %v4060
      %v4317 = vmul.f32 %v2013, %v4061
      %v4318 = vmul.f32 %v2014, %v4062
      %v4319 = vmul.f32 %v2015, %v4063
      %v4320 = vmul.f32 %v2016, %v4064
      %v4321 = vmul.f32 %v2017, %v4065
      %v4322 = vmul.f32 %v2018, %v4066
      %v4323 = vmul.f32 %v2019, %v4067
      %v4324 = vmul.f32 %v2020, %v4068
      %v4325 = vmul.f32 %v2021, %v4069
      %v4326 = vmul.f32 %v2022, %v4070
      %v4327 = vmul.f32 %v2023, %v4071
      %v4328 = vmul.f32 %v2024, %v4072
      %v4329 = vmul.f32 %v2025, %v4073
      %v4330 = vmul.f32 %v2026, %v4074
      %v4331 = vmul.f32 %v2027, %v4075
      %v4332 = vmul.f32 %v2028, %v4076
      %v4333 = vmul.f32 %v2029, %v4077
      %v4334 = vmul.f32 %v2030, %v4078
      %v4335 = vmul.f32 %v2031, %v4079
      %v4336 = vmul.f32 %v2032, %v4080
      %v4337 = vmul.f32 %v2033, %v4081
      %v4338 = vmul.f32 %v2034, %v4082
      %v4339 = vmul.f32 %v2035, %v4083
      %v4340 = vmul.f32 %v2036, %v4084
      %v4341 = vmul.f32 %v2037, %v4085
      %v4342 = vmul.f32 %v2038, %v4086
      %v4343 = vmul.f32 %v2039, %v4087
      %v4344 = vmul.f32 %v2040, %v4088
      %v4345 = vmul.f32 %v2041, %v4089
      %v4346 = vmul.f32 %v2042, %v4090
      %v4347 = vmul.f32 %v2043, %v4091
      %v4348 = vmul.f32 %v2044, %v4092
      %v4349 = vmul.f32 %v2045, %v4093
      %v4350 = vmul.f32 %v2046, %v4094
      %v4351 = vmul.f32 %v2047, %v4095
      %v4352 = vmul.f32 %v2048, %v4096
      %v4353 = vmul.f32 %v2049, %v4097
      %v4354 = vmul.f32 %v2050, %v4098
      %v4355 = vmul.f32 %v2051, %v4099
      %v4356 = vmul.f32 %v2052, %v4100
      %v4357 = vmul.f32 %v2053, %v4101
      %v4358 = vmul.f32 %v2054, %v4102
      %v4359 = vmul.f32 %v2055, %v4103
      %v4360 = vmul.f32 %v2056, %v4104
      %v4361 = vmul.f32 %v2057, %v4105
      %v4362 = vmul.f32 %v2058, %v4106
      %v4363 = vmul.f32 %v2059, %v4107
      %v4364 = vmul.f32 %v2060, %v4108
      %v4365 = vmul.f32 %v2061, %v4109
      %v4366 = vmul.f32 %v2062, %v4110
      %v4367 = vmul.f32 %v2063, %v4111
      %v4368 = vmul.f32 %v2064, %v4112
      %v4369 = vmul.f32 %v2065, %v4113
      %v4370 = vmul.f32 %v2066, %v4114
      %v4371 = vmul.f32 %v2067, %v4115
      %v4372 = vmul.f32 %v2068, %v4116
      %v4373 = vmul.f32 %v2069, %v4117
      %v4374 = vmul.f32 %v2070, %v4118
      %v4375 = vmul.f32 %v2071, %v4119
      %v4376 = vmul.f32 %v2072, %v4120
      %v4377 = vmul.f32 %v2073, %v4121
      %v4378 = vmul.f32 %v2074, %v4122
      %v4379 = vmul.f32 %v2075, %v4123
      %v4380 = vmul.f32 %v2076, %v4124
      %v4381 = vmul.f32 %v2077, %v4125
      %v4382 = vmul.f32 %v2078, %v4126
      %v4383 = vmul.f32 %v2079, %v4127
      %v4384 = vmul.f32 %v2080, %v4128
      %v4385 = vmul.f32 %v2081, %v4129
      %v4386 = vmul.f32 %v2082, %v4130
      %v4387 = vmul.f32 %v2083, %v4131
      %v4388 = vmul.f32 %v2084, %v4132
      %v4389 = vmul.f32 %v2085, %v4133
      %v4390 = vmul.f32 %v2086, %v4134
      %v4391 = vmul.f32 %v2087, %v4135
      %v4392 = vmul.f32 %v2088, %v4136
      %v4393 = vmul.f32 %v2089, %v4137
      %v4394 = vmul.f32 %v2090, %v4138
      %v4395 = vmul.f32 %v2091, %v4139
      %v4396 = vmul.f32 %v2092, %v4140
      %v4397 = vmul.f32 %v2093, %v4141
      %v4398 = vmul.f32 %v2094, %v4142
      %v4399 = vmul.f32 %v2095, %v4143
      %v4400 = vmul.f32 %v2096, %v4144
      %v4401 = vmul.f32 %v2097, %v4145
      %v4402 = vmul.f32 %v2098, %v4146
      %v4403 = vmul.f32 %v2099, %v4147
      %v4404 = vmul.f32 %v2100, %v4148
      %v4405 = vmul.f32 %v2101, %v4149
      %v4406 = vmul.f32 %v2102, %v4150
      %v4407 = vmul.f32 %v2103, %v4151
      %v4408 = vmul.f32 %v2104, %v4152
      %v4409 = vmul.f32 %v2105, %v4153
      %v4410 = vmul.f32 %v2106, %v4154
      %v4411 = vmul.f32 %v2107, %v4155
      %v4412 = vmul.f32 %v2108, %v4156
      %v4413 = vmul.f32 %v2109, %v4157
      %v4414 = vmul.f32 %v2110, %v4158
      %v4415 = vmul.f32 %v2111, %v4159
      %v4416 = vmul.f32 %v2112, %v4160
      %v4417 = vmul.f32 %v2113, %v4161
      %v4418 = vmul.f32 %v2114, %v4162
      %v4419 = vmul.f32 %v2115, %v4163
      %v4420 = vmul.f32 %v2116, %v4164
      %v4421 = vmul.f32 %v2117, %v4165
      %v4422 = vmul.f32 %v2118, %v4166
      %v4423 = vmul.f32 %v2119, %v4167
      %v4424 = vmul.f32 %v2120, %v4168
      %v4425 = vmul.f32 %v2121, %v4169
      %v4426 = vmul.f32 %v2122, %v4170
      %v4427 = vmul.f32 %v2123, %v4171
      %v4428 = vmul.f32 %v2124, %v4172
      %v4429 = vmul.f32 %v2125, %v4173
      %v4430 = vmul.f32 %v2126, %v4174
      %v4431 = vmul.f32 %v2127, %v4175
      %v4432 = vmul.f32 %v2128, %v4176
      %v4433 = vmul.f32 %v2129, %v4177
      %v4434 = vmul.f32 %v2130, %v4178
      %v4435 = vmul.f32 %v2131, %v4179
      %v4436 = vmul.f32 %v2132, %v4180
      %v4437 = vmul.f32 %v2133, %v4181
      %v4438 = vmul.f32 %v2134, %v4182
      %v4439 = vmul.f32 %v2135, %v4183
      %v4440 = vmul.f32 %v2136, %v4184
      %v4441 = vmul.f32 %v2137, %v4185
      %v4442 = vmul.f32 %v2138, %v4186
      %v4443 = vmul.f32 %v2139, %v4187
      %v4444 = vmul.f32 %v2140, %v4188
      %v4445 = vmul.f32 %v2141, %v4189
      %v4446 = vmul.f32 %v2142, %v4190
      %v4447 = vmul.f32 %v2143, %v4191
      %v4448 = vmul.f32 %v2144, %v4192
      %v4449 = vmul.f32 %v2145, %v4193
      %v4450 = vmul.f32 %v2146, %v4194
      %v4451 = vmul.f32 %v2147, %v4195
      %v4452 = vmul.f32 %v2148, %v4196
      %v4453 = vmul.f32 %v2149, %v4197
      %v4454 = vmul.f32 %v2150, %v4198
      %v4455 = vmul.f32 %v2151, %v4199
      %v4456 = vmul.f32 %v2152, %v4200
      %v4457 = vmul.f32 %v2153, %v4201
      %v4458 = vmul.f32 %v2154, %v4202
      %v4459 = vmul.f32 %v2155, %v4203
      %v4460 = vmul.f32 %v2156, %v4204
      %v4461 = vmul.f32 %v2157, %v4205
      %v4462 = vmul.f32 %v2158, %v4206
      %v4463 = vmul.f32 %v2159, %v4207
      %v4464 = vmul.f32 %v2160, %v4208
      %v4465 = vmul.f32 %v2161, %v4209
      %v4466 = vmul.f32 %v2162, %v4210
      %v4467 = vmul.f32 %v2163, %v4211
      %v4468 = vmul.f32 %v2164, %v4212
      %v4469 = vmul.f32 %v2165, %v4213
      %v4470 = vmul.f32 %v2166, %v4214
      %v4471 = vmul.f32 %v2167, %v4215
      %v4472 = vmul.f32 %v2168, %v4216
      %v4473 = vmul.f32 %v2169, %v4217
      %v4474 = vmul.f32 %v2170, %v4218
      %v4475 = vmul.f32 %v2171, %v4219
      %v4476 = vmul.f32 %v2172, %v4220
      %v4477 = vmul.f32 %v2173, %v4221
      %v4478 = vmul.f32 %v2174, %v4222
      %v4479 = vmul.f32 %v2175, %v4223
      %v4480 = vmul.f32 %v2176, %v4224
      %v4481 = vmul.f32 %v2177, %v4225
      %v4482 = vmul.f32 %v2178, %v4226
      %v4483 = vmul.f32 %v2179, %v4227
      %v4484 = vmul.f32 %v2180, %v4228
      %v4485 = vmul.f32 %v2181, %v4229
      %v4486 = vmul.f32 %v2182, %v4230
      %v4487 = vmul.f32 %v2183, %v4231
      %v4488 = vmul.f32 %v2184, %v4232
      %v4489 = vmul.f32 %v2185, %v4233
      %v4490 = vmul.f32 %v2186, %v4234
      %v4491 = vmul.f32 %v2187, %v4235
      %v4492 = vmul.f32 %v2188, %v4236
      %v4493 = vmul.f32 %v2189, %v4237
      %v4494 = vmul.f32 %v2190, %v4238
      %v4495 = vmul.f32 %v2191, %v4239
      %v4496 = vmul.f32 %v2192, %v4240
      %v4497 = vmul.f32 %v2193, %v4241
      %v4498 = vmul.f32 %v2194, %v4242
      %v4499 = vmul.f32 %v2195, %v4243
      %v4500 = vmul.f32 %v2196, %v4244
      %v4501 = vmul.f32 %v2197, %v4245
      %v4502 = vmul.f32 %v2198, %v4246
      %v4503 = vmul.f32 %v2199, %v4247
      %v4504 = vmul.f32 %v2200, %v4248
      %v4505 = vmul.f32 %v2201, %v4249
      %v4506 = vmul.f32 %v2202, %v4250
      %v4507 = vmul.f32 %v2203, %v4251
      %v4508 = vmul.f32 %v2204, %v4252
      %v4509 = vmul.f32 %v2205, %v4253
      %v4510 = vmul.f32 %v2206, %v4254
      %v4511 = vmul.f32 %v2207, %v4255
      %v4512 = vmul.f32 %v2208, %v4256
      %v4513 = vmul.f32 %v2209, %v4257
      %v4514 = vmul.f32 %v2210, %v4258
      %v4515 = vmul.f32 %v2211, %v4259
      %v4516 = vmul.f32 %v2212, %v4260
      %v4517 = vmul.f32 %v2213, %v4261
      %v4518 = vmul.f32 %v2214, %v4262
      %v4519 = vmul.f32 %v2215, %v4263
      %v4520 = vmul.f32 %v2216, %v4264
      %v4521 = vmul.f32 %v2217, %v4265
      %v4522 = vmul.f32 %v2218, %v4266
      %v4523 = vmul.f32 %v2219, %v4267
      %v4524 = vmul.f32 %v2220, %v4268
      %v4525 = vmul.f32 %v2221, %v4269
      %v4526 = vmul.f32 %v2222, %v4270
      %v4527 = vmul.f32 %v2223, %v4271
      %v4528 = vmul.f32 %v2224, %v4272
      %v4529 = vmul.f32 %v2225, %v4273
      %v4530 = vmul.f32 %v2226, %v4274
      %v4531 = vmul.f32 %v2227, %v4275
      %v4532 = vmul.f32 %v2228, %v4276
      %v4533 = vmul.f32 %v2229, %v4277
      %v4534 = vmul.f32 %v2230, %v4278
      %v4535 = vmul.f32 %v2231, %v4279
      %v4536 = vmul.f32 %v2232, %v4280
      %v4537 = vmul.f32 %v2233, %v4281
      %v4538 = vmul.f32 %v2234, %v4282
      %v4539 = vmul.f32 %v2235, %v4283
      %v4540 = vmul.f32 %v2236, %v4284
      %v4541 = vmul.f32 %v2237, %v4285
      %v4542 = vsub.f32 0.0, %v1214
      %v4543 = vsub.f32 0.0, %v1215
      %v4544 = vsub.f32 0.0, %v1216
      %v4545 = vsub.f32 0.0, %v1217
      %v4546 = vsub.f32 0.0, %v1218
      %v4547 = vsub.f32 0.0, %v1219
      %v4548 = vsub.f32 0.0, %v1220
      %v4549 = vsub.f32 0.0, %v1221
      %v4550 = vsub.f32 0.0, %v1222
      %v4551 = vsub.f32 0.0, %v1223
      %v4552 = vsub.f32 0.0, %v1224
      %v4553 = vsub.f32 0.0, %v1225
      %v4554 = vsub.f32 0.0, %v1226
      %v4555 = vsub.f32 0.0, %v1227
      %v4556 = vsub.f32 0.0, %v1228
      %v4557 = vsub.f32 0.0, %v1229
      %v4558 = vsub.f32 0.0, %v1230
      %v4559 = vsub.f32 0.0, %v1231
      %v4560 = vsub.f32 0.0, %v1232
      %v4561 = vsub.f32 0.0, %v1233
      %v4562 = vsub.f32 0.0, %v1234
      %v4563 = vsub.f32 0.0, %v1235
      %v4564 = vsub.f32 0.0, %v1236
      %v4565 = vsub.f32 0.0, %v1237
      %v4566 = vsub.f32 0.0, %v1238
      %v4567 = vsub.f32 0.0, %v1239
      %v4568 = vsub.f32 0.0, %v1240
      %v4569 = vsub.f32 0.0, %v1241
      %v4570 = vsub.f32 0.0, %v1242
      %v4571 = vsub.f32 0.0, %v1243
      %v4572 = vsub.f32 0.0, %v1244
      %v4573 = vsub.f32 0.0, %v1245
      %v4574 = vsub.f32 0.0, %v1246
      %v4575 = vsub.f32 0.0, %v1247
      %v4576 = vsub.f32 0.0, %v1248
      %v4577 = vsub.f32 0.0, %v1249
      %v4578 = vsub.f32 0.0, %v1250
      %v4579 = vsub.f32 0.0, %v1251
      %v4580 = vsub.f32 0.0, %v1252
      %v4581 = vsub.f32 0.0, %v1253
      %v4582 = vsub.f32 0.0, %v1254
      %v4583 = vsub.f32 0.0, %v1255
      %v4584 = vsub.f32 0.0, %v1256
      %v4585 = vsub.f32 0.0, %v1257
      %v4586 = vsub.f32 0.0, %v1258
      %v4587 = vsub.f32 0.0, %v1259
      %v4588 = vsub.f32 0.0, %v1260
      %v4589 = vsub.f32 0.0, %v1261
      %v4590 = vsub.f32 0.0, %v1262
      %v4591 = vsub.f32 0.0, %v1263
      %v4592 = vsub.f32 0.0, %v1264
      %v4593 = vsub.f32 0.0, %v1265
      %v4594 = vsub.f32 0.0, %v1266
      %v4595 = vsub.f32 0.0, %v1267
      %v4596 = vsub.f32 0.0, %v1268
      %v4597 = vsub.f32 0.0, %v1269
      %v4598 = vsub.f32 0.0, %v1270
      %v4599 = vsub.f32 0.0, %v1271
      %v4600 = vsub.f32 0.0, %v1272
      %v4601 = vsub.f32 0.0, %v1273
      %v4602 = vsub.f32 0.0, %v1274
      %v4603 = vsub.f32 0.0, %v1275
      %v4604 = vsub.f32 0.0, %v1276
      %v4605 = vsub.f32 0.0, %v1277
      %v4606 = vsub.f32 0.0, %v1278
      %v4607 = vsub.f32 0.0, %v1279
      %v4608 = vsub.f32 0.0, %v1280
      %v4609 = vsub.f32 0.0, %v1281
      %v4610 = vsub.f32 0.0, %v1282
      %v4611 = vsub.f32 0.0, %v1283
      %v4612 = vsub.f32 0.0, %v1284
      %v4613 = vsub.f32 0.0, %v1285
      %v4614 = vsub.f32 0.0, %v1286
      %v4615 = vsub.f32 0.0, %v1287
      %v4616 = vsub.f32 0.0, %v1288
      %v4617 = vsub.f32 0.0, %v1289
      %v4618 = vsub.f32 0.0, %v1290
      %v4619 = vsub.f32 0.0, %v1291
      %v4620 = vsub.f32 0.0, %v1292
      %v4621 = vsub.f32 0.0, %v1293
      %v4622 = vsub.f32 0.0, %v1294
      %v4623 = vsub.f32 0.0, %v1295
      %v4624 = vsub.f32 0.0, %v1296
      %v4625 = vsub.f32 0.0, %v1297
      %v4626 = vsub.f32 0.0, %v1298
      %v4627 = vsub.f32 0.0, %v1299
      %v4628 = vsub.f32 0.0, %v1300
      %v4629 = vsub.f32 0.0, %v1301
      %v4630 = vsub.f32 0.0, %v1302
      %v4631 = vsub.f32 0.0, %v1303
      %v4632 = vsub.f32 0.0, %v1304
      %v4633 = vsub.f32 0.0, %v1305
      %v4634 = vsub.f32 0.0, %v1306
      %v4635 = vsub.f32 0.0, %v1307
      %v4636 = vsub.f32 0.0, %v1308
      %v4637 = vsub.f32 0.0, %v1309
      %v4638 = vsub.f32 0.0, %v1310
      %v4639 = vsub.f32 0.0, %v1311
      %v4640 = vsub.f32 0.0, %v1312
      %v4641 = vsub.f32 0.0, %v1313
      %v4642 = vsub.f32 0.0, %v1314
      %v4643 = vsub.f32 0.0, %v1315
      %v4644 = vsub.f32 0.0, %v1316
      %v4645 = vsub.f32 0.0, %v1317
      %v4646 = vsub.f32 0.0, %v1318
      %v4647 = vsub.f32 0.0, %v1319
      %v4648 = vsub.f32 0.0, %v1320
      %v4649 = vsub.f32 0.0, %v1321
      %v4650 = vsub.f32 0.0, %v1322
      %v4651 = vsub.f32 0.0, %v1323
      %v4652 = vsub.f32 0.0, %v1324
      %v4653 = vsub.f32 0.0, %v1325
      %v4654 = vsub.f32 0.0, %v1326
      %v4655 = vsub.f32 0.0, %v1327
      %v4656 = vsub.f32 0.0, %v1328
      %v4657 = vsub.f32 0.0, %v1329
      %v4658 = vsub.f32 0.0, %v1330
      %v4659 = vsub.f32 0.0, %v1331
      %v4660 = vsub.f32 0.0, %v1332
      %v4661 = vsub.f32 0.0, %v1333
      %v4662 = vsub.f32 0.0, %v1334
      %v4663 = vsub.f32 0.0, %v1335
      %v4664 = vsub.f32 0.0, %v1336
      %v4665 = vsub.f32 0.0, %v1337
      %v4666 = vsub.f32 0.0, %v1338
      %v4667 = vsub.f32 0.0, %v1339
      %v4668 = vsub.f32 0.0, %v1340
      %v4669 = vsub.f32 0.0, %v1341
      %v4670 = vsub.f32 0.0, %v1342
      %v4671 = vsub.f32 0.0, %v1343
      %v4672 = vsub.f32 0.0, %v1344
      %v4673 = vsub.f32 0.0, %v1345
      %v4674 = vsub.f32 0.0, %v1346
      %v4675 = vsub.f32 0.0, %v1347
      %v4676 = vsub.f32 0.0, %v1348
      %v4677 = vsub.f32 0.0, %v1349
      %v4678 = vsub.f32 0.0, %v1350
      %v4679 = vsub.f32 0.0, %v1351
      %v4680 = vsub.f32 0.0, %v1352
      %v4681 = vsub.f32 0.0, %v1353
      %v4682 = vsub.f32 0.0, %v1354
      %v4683 = vsub.f32 0.0, %v1355
      %v4684 = vsub.f32 0.0, %v1356
      %v4685 = vsub.f32 0.0, %v1357
      %v4686 = vsub.f32 0.0, %v1358
      %v4687 = vsub.f32 0.0, %v1359
      %v4688 = vsub.f32 0.0, %v1360
      %v4689 = vsub.f32 0.0, %v1361
      %v4690 = vsub.f32 0.0, %v1362
      %v4691 = vsub.f32 0.0, %v1363
      %v4692 = vsub.f32 0.0, %v1364
      %v4693 = vsub.f32 0.0, %v1365
      %v4694 = vsub.f32 0.0, %v1366
      %v4695 = vsub.f32 0.0, %v1367
      %v4696 = vsub.f32 0.0, %v1368
      %v4697 = vsub.f32 0.0, %v1369
      %v4698 = vsub.f32 0.0, %v1370
      %v4699 = vsub.f32 0.0, %v1371
      %v4700 = vsub.f32 0.0, %v1372
      %v4701 = vsub.f32 0.0, %v1373
      %v4702 = vsub.f32 0.0, %v1374
      %v4703 = vsub.f32 0.0, %v1375
      %v4704 = vsub.f32 0.0, %v1376
      %v4705 = vsub.f32 0.0, %v1377
      %v4706 = vsub.f32 0.0, %v1378
      %v4707 = vsub.f32 0.0, %v1379
      %v4708 = vsub.f32 0.0, %v1380
      %v4709 = vsub.f32 0.0, %v1381
      %v4710 = vsub.f32 0.0, %v1382
      %v4711 = vsub.f32 0.0, %v1383
      %v4712 = vsub.f32 0.0, %v1384
      %v4713 = vsub.f32 0.0, %v1385
      %v4714 = vsub.f32 0.0, %v1386
      %v4715 = vsub.f32 0.0, %v1387
      %v4716 = vsub.f32 0.0, %v1388
      %v4717 = vsub.f32 0.0, %v1389
      %v4718 = vsub.f32 0.0, %v1390
      %v4719 = vsub.f32 0.0, %v1391
      %v4720 = vsub.f32 0.0, %v1392
      %v4721 = vsub.f32 0.0, %v1393
      %v4722 = vsub.f32 0.0, %v1394
      %v4723 = vsub.f32 0.0, %v1395
      %v4724 = vsub.f32 0.0, %v1396
      %v4725 = vsub.f32 0.0, %v1397
      %v4726 = vsub.f32 0.0, %v1398
      %v4727 = vsub.f32 0.0, %v1399
      %v4728 = vsub.f32 0.0, %v1400
      %v4729 = vsub.f32 0.0, %v1401
      %v4730 = vsub.f32 0.0, %v1402
      %v4731 = vsub.f32 0.0, %v1403
      %v4732 = vsub.f32 0.0, %v1404
      %v4733 = vsub.f32 0.0, %v1405
      %v4734 = vsub.f32 0.0, %v1406
      %v4735 = vsub.f32 0.0, %v1407
      %v4736 = vsub.f32 0.0, %v1408
      %v4737 = vsub.f32 0.0, %v1409
      %v4738 = vsub.f32 0.0, %v1410
      %v4739 = vsub.f32 0.0, %v1411
      %v4740 = vsub.f32 0.0, %v1412
      %v4741 = vsub.f32 0.0, %v1413
      %v4742 = vsub.f32 0.0, %v1414
      %v4743 = vsub.f32 0.0, %v1415
      %v4744 = vsub.f32 0.0, %v1416
      %v4745 = vsub.f32 0.0, %v1417
      %v4746 = vsub.f32 0.0, %v1418
      %v4747 = vsub.f32 0.0, %v1419
      %v4748 = vsub.f32 0.0, %v1420
      %v4749 = vsub.f32 0.0, %v1421
      %v4750 = vsub.f32 0.0, %v1422
      %v4751 = vsub.f32 0.0, %v1423
      %v4752 = vsub.f32 0.0, %v1424
      %v4753 = vsub.f32 0.0, %v1425
      %v4754 = vsub.f32 0.0, %v1426
      %v4755 = vsub.f32 0.0, %v1427
      %v4756 = vsub.f32 0.0, %v1428
      %v4757 = vsub.f32 0.0, %v1429
      %v4758 = vsub.f32 0.0, %v1430
      %v4759 = vsub.f32 0.0, %v1431
      %v4760 = vsub.f32 0.0, %v1432
      %v4761 = vsub.f32 0.0, %v1433
      %v4762 = vsub.f32 0.0, %v1434
      %v4763 = vsub.f32 0.0, %v1435
      %v4764 = vsub.f32 0.0, %v1436
      %v4765 = vsub.f32 0.0, %v1437
      %v4766 = vsub.f32 0.0, %v1438
      %v4767 = vsub.f32 0.0, %v1439
      %v4768 = vsub.f32 0.0, %v1440
      %v4769 = vsub.f32 0.0, %v1441
      %v4770 = vsub.f32 0.0, %v1442
      %v4771 = vsub.f32 0.0, %v1443
      %v4772 = vsub.f32 0.0, %v1444
      %v4773 = vsub.f32 0.0, %v1445
      %v4774 = vsub.f32 0.0, %v1446
      %v4775 = vsub.f32 0.0, %v1447
      %v4776 = vsub.f32 0.0, %v1448
      %v4777 = vsub.f32 0.0, %v1449
      %v4778 = vsub.f32 0.0, %v1450
      %v4779 = vsub.f32 0.0, %v1451
      %v4780 = vsub.f32 0.0, %v1452
      %v4781 = vsub.f32 0.0, %v1453
      %v4782 = vsub.f32 0.0, %v1454
      %v4783 = vsub.f32 0.0, %v1455
      %v4784 = vsub.f32 0.0, %v1456
      %v4785 = vsub.f32 0.0, %v1457
      %v4786 = vsub.f32 0.0, %v1458
      %v4787 = vsub.f32 0.0, %v1459
      %v4788 = vsub.f32 0.0, %v1460
      %v4789 = vsub.f32 0.0, %v1461
      %v4790 = vsub.f32 0.0, %v1462
      %v4791 = vsub.f32 0.0, %v1463
      %v4792 = vsub.f32 0.0, %v1464
      %v4793 = vsub.f32 0.0, %v1465
      %v4794 = vsub.f32 0.0, %v1466
      %v4795 = vsub.f32 0.0, %v1467
      %v4796 = vsub.f32 0.0, %v1468
      %v4797 = vsub.f32 0.0, %v1469
      %v4798 = vmul.f32 %v4542, %v1214
      %v4799 = vmul.f32 %v4543, %v1215
      %v4800 = vmul.f32 %v4544, %v1216
      %v4801 = vmul.f32 %v4545, %v1217
      %v4802 = vmul.f32 %v4546, %v1218
      %v4803 = vmul.f32 %v4547, %v1219
      %v4804 = vmul.f32 %v4548, %v1220
      %v4805 = vmul.f32 %v4549, %v1221
      %v4806 = vmul.f32 %v4550, %v1222
      %v4807 = vmul.f32 %v4551, %v1223
      %v4808 = vmul.f32 %v4552, %v1224
      %v4809 = vmul.f32 %v4553, %v1225
      %v4810 = vmul.f32 %v4554, %v1226
      %v4811 = vmul.f32 %v4555, %v1227
      %v4812 = vmul.f32 %v4556, %v1228
      %v4813 = vmul.f32 %v4557, %v1229
      %v4814 = vmul.f32 %v4558, %v1230
      %v4815 = vmul.f32 %v4559, %v1231
      %v4816 = vmul.f32 %v4560, %v1232
      %v4817 = vmul.f32 %v4561, %v1233
      %v4818 = vmul.f32 %v4562, %v1234
      %v4819 = vmul.f32 %v4563, %v1235
      %v4820 = vmul.f32 %v4564, %v1236
      %v4821 = vmul.f32 %v4565, %v1237
      %v4822 = vmul.f32 %v4566, %v1238
      %v4823 = vmul.f32 %v4567, %v1239
      %v4824 = vmul.f32 %v4568, %v1240
      %v4825 = vmul.f32 %v4569, %v1241
      %v4826 = vmul.f32 %v4570, %v1242
      %v4827 = vmul.f32 %v4571, %v1243
      %v4828 = vmul.f32 %v4572, %v1244
      %v4829 = vmul.f32 %v4573, %v1245
      %v4830 = vmul.f32 %v4574, %v1246
      %v4831 = vmul.f32 %v4575, %v1247
      %v4832 = vmul.f32 %v4576, %v1248
      %v4833 = vmul.f32 %v4577, %v1249
      %v4834 = vmul.f32 %v4578, %v1250
      %v4835 = vmul.f32 %v4579, %v1251
      %v4836 = vmul.f32 %v4580, %v1252
      %v4837 = vmul.f32 %v4581, %v1253
      %v4838 = vmul.f32 %v4582, %v1254
      %v4839 = vmul.f32 %v4583, %v1255
      %v4840 = vmul.f32 %v4584, %v1256
      %v4841 = vmul.f32 %v4585, %v1257
      %v4842 = vmul.f32 %v4586, %v1258
      %v4843 = vmul.f32 %v4587, %v1259
      %v4844 = vmul.f32 %v4588, %v1260
      %v4845 = vmul.f32 %v4589, %v1261
      %v4846 = vmul.f32 %v4590, %v1262
      %v4847 = vmul.f32 %v4591, %v1263
      %v4848 = vmul.f32 %v4592, %v1264
      %v4849 = vmul.f32 %v4593, %v1265
      %v4850 = vmul.f32 %v4594, %v1266
      %v4851 = vmul.f32 %v4595, %v1267
      %v4852 = vmul.f32 %v4596, %v1268
      %v4853 = vmul.f32 %v4597, %v1269
      %v4854 = vmul.f32 %v4598, %v1270
      %v4855 = vmul.f32 %v4599, %v1271
      %v4856 = vmul.f32 %v4600, %v1272
      %v4857 = vmul.f32 %v4601, %v1273
      %v4858 = vmul.f32 %v4602, %v1274
      %v4859 = vmul.f32 %v4603, %v1275
      %v4860 = vmul.f32 %v4604, %v1276
      %v4861 = vmul.f32 %v4605, %v1277
      %v4862 = vmul.f32 %v4606, %v1278
      %v4863 = vmul.f32 %v4607, %v1279
      %v4864 = vmul.f32 %v4608, %v1280
      %v4865 = vmul.f32 %v4609, %v1281
      %v4866 = vmul.f32 %v4610, %v1282
      %v4867 = vmul.f32 %v4611, %v1283
      %v4868 = vmul.f32 %v4612, %v1284
      %v4869 = vmul.f32 %v4613, %v1285
      %v4870 = vmul.f32 %v4614, %v1286
      %v4871 = vmul.f32 %v4615, %v1287
      %v4872 = vmul.f32 %v4616, %v1288
      %v4873 = vmul.f32 %v4617, %v1289
      %v4874 = vmul.f32 %v4618, %v1290
      %v4875 = vmul.f32 %v4619, %v1291
      %v4876 = vmul.f32 %v4620, %v1292
      %v4877 = vmul.f32 %v4621, %v1293
      %v4878 = vmul.f32 %v4622, %v1294
      %v4879 = vmul.f32 %v4623, %v1295
      %v4880 = vmul.f32 %v4624, %v1296
      %v4881 = vmul.f32 %v4625, %v1297
      %v4882 = vmul.f32 %v4626, %v1298
      %v4883 = vmul.f32 %v4627, %v1299
      %v4884 = vmul.f32 %v4628, %v1300
      %v4885 = vmul.f32 %v4629, %v1301
      %v4886 = vmul.f32 %v4630, %v1302
      %v4887 = vmul.f32 %v4631, %v1303
      %v4888 = vmul.f32 %v4632, %v1304
      %v4889 = vmul.f32 %v4633, %v1305
      %v4890 = vmul.f32 %v4634, %v1306
      %v4891 = vmul.f32 %v4635, %v1307
      %v4892 = vmul.f32 %v4636, %v1308
      %v4893 = vmul.f32 %v4637, %v1309
      %v4894 = vmul.f32 %v4638, %v1310
      %v4895 = vmul.f32 %v4639, %v1311
      %v4896 = vmul.f32 %v4640, %v1312
      %v4897 = vmul.f32 %v4641, %v1313
      %v4898 = vmul.f32 %v4642, %v1314
      %v4899 = vmul.f32 %v4643, %v1315
      %v4900 = vmul.f32 %v4644, %v1316
      %v4901 = vmul.f32 %v4645, %v1317
      %v4902 = vmul.f32 %v4646, %v1318
      %v4903 = vmul.f32 %v4647, %v1319
      %v4904 = vmul.f32 %v4648, %v1320
      %v4905 = vmul.f32 %v4649, %v1321
      %v4906 = vmul.f32 %v4650, %v1322
      %v4907 = vmul.f32 %v4651, %v1323
      %v4908 = vmul.f32 %v4652, %v1324
      %v4909 = vmul.f32 %v4653, %v1325
      %v4910 = vmul.f32 %v4654, %v1326
      %v4911 = vmul.f32 %v4655, %v1327
      %v4912 = vmul.f32 %v4656, %v1328
      %v4913 = vmul.f32 %v4657, %v1329
      %v4914 = vmul.f32 %v4658, %v1330
      %v4915 = vmul.f32 %v4659, %v1331
      %v4916 = vmul.f32 %v4660, %v1332
      %v4917 = vmul.f32 %v4661, %v1333
      %v4918 = vmul.f32 %v4662, %v1334
      %v4919 = vmul.f32 %v4663, %v1335
      %v4920 = vmul.f32 %v4664, %v1336
      %v4921 = vmul.f32 %v4665, %v1337
      %v4922 = vmul.f32 %v4666, %v1338
      %v4923 = vmul.f32 %v4667, %v1339
      %v4924 = vmul.f32 %v4668, %v1340
      %v4925 = vmul.f32 %v4669, %v1341
      %v4926 = vmul.f32 %v4670, %v1342
      %v4927 = vmul.f32 %v4671, %v1343
      %v4928 = vmul.f32 %v4672, %v1344
      %v4929 = vmul.f32 %v4673, %v1345
      %v4930 = vmul.f32 %v4674, %v1346
      %v4931 = vmul.f32 %v4675, %v1347
      %v4932 = vmul.f32 %v4676, %v1348
      %v4933 = vmul.f32 %v4677, %v1349
      %v4934 = vmul.f32 %v4678, %v1350
      %v4935 = vmul.f32 %v4679, %v1351
      %v4936 = vmul.f32 %v4680, %v1352
      %v4937 = vmul.f32 %v4681, %v1353
      %v4938 = vmul.f32 %v4682, %v1354
      %v4939 = vmul.f32 %v4683, %v1355
      %v4940 = vmul.f32 %v4684, %v1356
      %v4941 = vmul.f32 %v4685, %v1357
      %v4942 = vmul.f32 %v4686, %v1358
      %v4943 = vmul.f32 %v4687, %v1359
      %v4944 = vmul.f32 %v4688, %v1360
      %v4945 = vmul.f32 %v4689, %v1361
      %v4946 = vmul.f32 %v4690, %v1362
      %v4947 = vmul.f32 %v4691, %v1363
      %v4948 = vmul.f32 %v4692, %v1364
      %v4949 = vmul.f32 %v4693, %v1365
      %v4950 = vmul.f32 %v4694, %v1366
      %v4951 = vmul.f32 %v4695, %v1367
      %v4952 = vmul.f32 %v4696, %v1368
      %v4953 = vmul.f32 %v4697, %v1369
      %v4954 = vmul.f32 %v4698, %v1370
      %v4955 = vmul.f32 %v4699, %v1371
      %v4956 = vmul.f32 %v4700, %v1372
      %v4957 = vmul.f32 %v4701, %v1373
      %v4958 = vmul.f32 %v4702, %v1374
      %v4959 = vmul.f32 %v4703, %v1375
      %v4960 = vmul.f32 %v4704, %v1376
      %v4961 = vmul.f32 %v4705, %v1377
      %v4962 = vmul.f32 %v4706, %v1378
      %v4963 = vmul.f32 %v4707, %v1379
      %v4964 = vmul.f32 %v4708, %v1380
      %v4965 = vmul.f32 %v4709, %v1381
      %v4966 = vmul.f32 %v4710, %v1382
      %v4967 = vmul.f32 %v4711, %v1383
      %v4968 = vmul.f32 %v4712, %v1384
      %v4969 = vmul.f32 %v4713, %v1385
      %v4970 = vmul.f32 %v4714, %v1386
      %v4971 = vmul.f32 %v4715, %v1387
      %v4972 = vmul.f32 %v4716, %v1388
      %v4973 = vmul.f32 %v4717, %v1389
      %v4974 = vmul.f32 %v4718, %v1390
      %v4975 = vmul.f32 %v4719, %v1391
      %v4976 = vmul.f32 %v4720, %v1392
      %v4977 = vmul.f32 %v4721, %v1393
      %v4978 = vmul.f32 %v4722, %v1394
      %v4979 = vmul.f32 %v4723, %v1395
      %v4980 = vmul.f32 %v4724, %v1396
      %v4981 = vmul.f32 %v4725, %v1397
      %v4982 = vmul.f32 %v4726, %v1398
      %v4983 = vmul.f32 %v4727, %v1399
      %v4984 = vmul.f32 %v4728, %v1400
      %v4985 = vmul.f32 %v4729, %v1401
      %v4986 = vmul.f32 %v4730, %v1402
      %v4987 = vmul.f32 %v4731, %v1403
      %v4988 = vmul.f32 %v4732, %v1404
      %v4989 = vmul.f32 %v4733, %v1405
      %v4990 = vmul.f32 %v4734, %v1406
      %v4991 = vmul.f32 %v4735, %v1407
      %v4992 = vmul.f32 %v4736, %v1408
      %v4993 = vmul.f32 %v4737, %v1409
      %v4994 = vmul.f32 %v4738, %v1410
      %v4995 = vmul.f32 %v4739, %v1411
      %v4996 = vmul.f32 %v4740, %v1412
      %v4997 = vmul.f32 %v4741, %v1413
      %v4998 = vmul.f32 %v4742, %v1414
      %v4999 = vmul.f32 %v4743, %v1415
      %v5000 = vmul.f32 %v4744, %v1416
      %v5001 = vmul.f32 %v4745, %v1417
      %v5002 = vmul.f32 %v4746, %v1418
      %v5003 = vmul.f32 %v4747, %v1419
      %v5004 = vmul.f32 %v4748, %v1420
      %v5005 = vmul.f32 %v4749, %v1421
      %v5006 = vmul.f32 %v4750, %v1422
      %v5007 = vmul.f32 %v4751, %v1423
      %v5008 = vmul.f32 %v4752, %v1424
      %v5009 = vmul.f32 %v4753, %v1425
      %v5010 = vmul.f32 %v4754, %v1426
      %v5011 = vmul.f32 %v4755, %v1427
      %v5012 = vmul.f32 %v4756, %v1428
      %v5013 = vmul.f32 %v4757, %v1429
      %v5014 = vmul.f32 %v4758, %v1430
      %v5015 = vmul.f32 %v4759, %v1431
      %v5016 = vmul.f32 %v4760, %v1432
      %v5017 = vmul.f32 %v4761, %v1433
      %v5018 = vmul.f32 %v4762, %v1434
      %v5019 = vmul.f32 %v4763, %v1435
      %v5020 = vmul.f32 %v4764, %v1436
      %v5021 = vmul.f32 %v4765, %v1437
      %v5022 = vmul.f32 %v4766, %v1438
      %v5023 = vmul.f32 %v4767, %v1439
      %v5024 = vmul.f32 %v4768, %v1440
      %v5025 = vmul.f32 %v4769, %v1441
      %v5026 = vmul.f32 %v4770, %v1442
      %v5027 = vmul.f32 %v4771, %v1443
      %v5028 = vmul.f32 %v4772, %v1444
      %v5029 = vmul.f32 %v4773, %v1445
      %v5030 = vmul.f32 %v4774, %v1446
      %v5031 = vmul.f32 %v4775, %v1447
      %v5032 = vmul.f32 %v4776, %v1448
      %v5033 = vmul.f32 %v4777, %v1449
      %v5034 = vmul.f32 %v4778, %v1450
      %v5035 = vmul.f32 %v4779, %v1451
      %v5036 = vmul.f32 %v4780, %v1452
      %v5037 = vmul.f32 %v4781, %v1453
      %v5038 = vmul.f32 %v4782, %v1454
      %v5039 = vmul.f32 %v4783, %v1455
      %v5040 = vmul.f32 %v4784, %v1456
      %v5041 = vmul.f32 %v4785, %v1457
      %v5042 = vmul.f32 %v4786, %v1458
      %v5043 = vmul.f32 %v4787, %v1459
      %v5044 = vmul.f32 %v4788, %v1460
      %v5045 = vmul.f32 %v4789, %v1461
      %v5046 = vmul.f32 %v4790, %v1462
      %v5047 = vmul.f32 %v4791, %v1463
      %v5048 = vmul.f32 %v4792, %v1464
      %v5049 = vmul.f32 %v4793, %v1465
      %v5050 = vmul.f32 %v4794, %v1466
      %v5051 = vmul.f32 %v4795, %v1467
      %v5052 = vmul.f32 %v4796, %v1468
      %v5053 = vmul.f32 %v4797, %v1469
      %v5054 = vmul.f32 %v4798, 1.442695
      %v5055 = vpow.pop %v5054
      %v5056 = vmul.f32 %v4799, 1.442695
      %v5057 = vpow.pop %v5056
      %v5058 = vmul.f32 %v4800, 1.442695
      %v5059 = vpow.pop %v5058
      %v5060 = vmul.f32 %v4801, 1.442695
      %v5061 = vpow.pop %v5060
      %v5062 = vmul.f32 %v4802, 1.442695
      %v5063 = vpow.pop %v5062
      %v5064 = vmul.f32 %v4803, 1.442695
      %v5065 = vpow.pop %v5064
      %v5066 = vmul.f32 %v4804, 1.442695
      %v5067 = vpow.pop %v5066
      %v5068 = vmul.f32 %v4805, 1.442695
      %v5069 = vpow.pop %v5068
      %v5070 = vmul.f32 %v4806, 1.442695
      %v5071 = vpow.pop %v5070
      %v5072 = vmul.f32 %v4807, 1.442695
      %v5073 = vpow.pop %v5072
      %v5074 = vmul.f32 %v4808, 1.442695
      %v5075 = vpow.pop %v5074
      %v5076 = vmul.f32 %v4809, 1.442695
      %v5077 = vpow.pop %v5076
      %v5078 = vmul.f32 %v4810, 1.442695
      %v5079 = vpow.pop %v5078
      %v5080 = vmul.f32 %v4811, 1.442695
      %v5081 = vpow.pop %v5080
      %v5082 = vmul.f32 %v4812, 1.442695
      %v5083 = vpow.pop %v5082
      %v5084 = vmul.f32 %v4813, 1.442695
      %v5085 = vpow.pop %v5084
      %v5086 = vmul.f32 %v4814, 1.442695
      %v5087 = vpow.pop %v5086
      %v5088 = vmul.f32 %v4815, 1.442695
      %v5089 = vpow.pop %v5088
      %v5090 = vmul.f32 %v4816, 1.442695
      %v5091 = vpow.pop %v5090
      %v5092 = vmul.f32 %v4817, 1.442695
      %v5093 = vpow.pop %v5092
      %v5094 = vmul.f32 %v4818, 1.442695
      %v5095 = vpow.pop %v5094
      %v5096 = vmul.f32 %v4819, 1.442695
      %v5097 = vpow.pop %v5096
      %v5098 = vmul.f32 %v4820, 1.442695
      %v5099 = vpow.pop %v5098
      %v5100 = vmul.f32 %v4821, 1.442695
      %v5101 = vpow.pop %v5100
      %v5102 = vmul.f32 %v4822, 1.442695
      %v5103 = vpow.pop %v5102
      %v5104 = vmul.f32 %v4823, 1.442695
      %v5105 = vpow.pop %v5104
      %v5106 = vmul.f32 %v4824, 1.442695
      %v5107 = vpow.pop %v5106
      %v5108 = vmul.f32 %v4825, 1.442695
      %v5109 = vpow.pop %v5108
      %v5110 = vmul.f32 %v4826, 1.442695
      %v5111 = vpow.pop %v5110
      %v5112 = vmul.f32 %v4827, 1.442695
      %v5113 = vpow.pop %v5112
      %v5114 = vmul.f32 %v4828, 1.442695
      %v5115 = vpow.pop %v5114
      %v5116 = vmul.f32 %v4829, 1.442695
      %v5117 = vpow.pop %v5116
      %v5118 = vmul.f32 %v4830, 1.442695
      %v5119 = vpow.pop %v5118
      %v5120 = vmul.f32 %v4831, 1.442695
      %v5121 = vpow.pop %v5120
      %v5122 = vmul.f32 %v4832, 1.442695
      %v5123 = vpow.pop %v5122
      %v5124 = vmul.f32 %v4833, 1.442695
      %v5125 = vpow.pop %v5124
      %v5126 = vmul.f32 %v4834, 1.442695
      %v5127 = vpow.pop %v5126
      %v5128 = vmul.f32 %v4835, 1.442695
      %v5129 = vpow.pop %v5128
      %v5130 = vmul.f32 %v4836, 1.442695
      %v5131 = vpow.pop %v5130
      %v5132 = vmul.f32 %v4837, 1.442695
      %v5133 = vpow.pop %v5132
      %v5134 = vmul.f32 %v4838, 1.442695
      %v5135 = vpow.pop %v5134
      %v5136 = vmul.f32 %v4839, 1.442695
      %v5137 = vpow.pop %v5136
      %v5138 = vmul.f32 %v4840, 1.442695
      %v5139 = vpow.pop %v5138
      %v5140 = vmul.f32 %v4841, 1.442695
      %v5141 = vpow.pop %v5140
      %v5142 = vmul.f32 %v4842, 1.442695
      %v5143 = vpow.pop %v5142
      %v5144 = vmul.f32 %v4843, 1.442695
      %v5145 = vpow.pop %v5144
      %v5146 = vmul.f32 %v4844, 1.442695
      %v5147 = vpow.pop %v5146
      %v5148 = vmul.f32 %v4845, 1.442695
      %v5149 = vpow.pop %v5148
      %v5150 = vmul.f32 %v4846, 1.442695
      %v5151 = vpow.pop %v5150
      %v5152 = vmul.f32 %v4847, 1.442695
      %v5153 = vpow.pop %v5152
      %v5154 = vmul.f32 %v4848, 1.442695
      %v5155 = vpow.pop %v5154
      %v5156 = vmul.f32 %v4849, 1.442695
      %v5157 = vpow.pop %v5156
      %v5158 = vmul.f32 %v4850, 1.442695
      %v5159 = vpow.pop %v5158
      %v5160 = vmul.f32 %v4851, 1.442695
      %v5161 = vpow.pop %v5160
      %v5162 = vmul.f32 %v4852, 1.442695
      %v5163 = vpow.pop %v5162
      %v5164 = vmul.f32 %v4853, 1.442695
      %v5165 = vpow.pop %v5164
      %v5166 = vmul.f32 %v4854, 1.442695
      %v5167 = vpow.pop %v5166
      %v5168 = vmul.f32 %v4855, 1.442695
      %v5169 = vpow.pop %v5168
      %v5170 = vmul.f32 %v4856, 1.442695
      %v5171 = vpow.pop %v5170
      %v5172 = vmul.f32 %v4857, 1.442695
      %v5173 = vpow.pop %v5172
      %v5174 = vmul.f32 %v4858, 1.442695
      %v5175 = vpow.pop %v5174
      %v5176 = vmul.f32 %v4859, 1.442695
      %v5177 = vpow.pop %v5176
      %v5178 = vmul.f32 %v4860, 1.442695
      %v5179 = vpow.pop %v5178
      %v5180 = vmul.f32 %v4861, 1.442695
      %v5181 = vpow.pop %v5180
      %v5182 = vmul.f32 %v4862, 1.442695
      %v5183 = vpow.pop %v5182
      %v5184 = vmul.f32 %v4863, 1.442695
      %v5185 = vpow.pop %v5184
      %v5186 = vmul.f32 %v4864, 1.442695
      %v5187 = vpow.pop %v5186
      %v5188 = vmul.f32 %v4865, 1.442695
      %v5189 = vpow.pop %v5188
      %v5190 = vmul.f32 %v4866, 1.442695
      %v5191 = vpow.pop %v5190
      %v5192 = vmul.f32 %v4867, 1.442695
      %v5193 = vpow.pop %v5192
      %v5194 = vmul.f32 %v4868, 1.442695
      %v5195 = vpow.pop %v5194
      %v5196 = vmul.f32 %v4869, 1.442695
      %v5197 = vpow.pop %v5196
      %v5198 = vmul.f32 %v4870, 1.442695
      %v5199 = vpow.pop %v5198
      %v5200 = vmul.f32 %v4871, 1.442695
      %v5201 = vpow.pop %v5200
      %v5202 = vmul.f32 %v4872, 1.442695
      %v5203 = vpow.pop %v5202
      %v5204 = vmul.f32 %v4873, 1.442695
      %v5205 = vpow.pop %v5204
      %v5206 = vmul.f32 %v4874, 1.442695
      %v5207 = vpow.pop %v5206
      %v5208 = vmul.f32 %v4875, 1.442695
      %v5209 = vpow.pop %v5208
      %v5210 = vmul.f32 %v4876, 1.442695
      %v5211 = vpow.pop %v5210
      %v5212 = vmul.f32 %v4877, 1.442695
      %v5213 = vpow.pop %v5212
      %v5214 = vmul.f32 %v4878, 1.442695
      %v5215 = vpow.pop %v5214
      %v5216 = vmul.f32 %v4879, 1.442695
      %v5217 = vpow.pop %v5216
      %v5218 = vmul.f32 %v4880, 1.442695
      %v5219 = vpow.pop %v5218
      %v5220 = vmul.f32 %v4881, 1.442695
      %v5221 = vpow.pop %v5220
      %v5222 = vmul.f32 %v4882, 1.442695
      %v5223 = vpow.pop %v5222
      %v5224 = vmul.f32 %v4883, 1.442695
      %v5225 = vpow.pop %v5224
      %v5226 = vmul.f32 %v4884, 1.442695
      %v5227 = vpow.pop %v5226
      %v5228 = vmul.f32 %v4885, 1.442695
      %v5229 = vpow.pop %v5228
      %v5230 = vmul.f32 %v4886, 1.442695
      %v5231 = vpow.pop %v5230
      %v5232 = vmul.f32 %v4887, 1.442695
      %v5233 = vpow.pop %v5232
      %v5234 = vmul.f32 %v4888, 1.442695
      %v5235 = vpow.pop %v5234
      %v5236 = vmul.f32 %v4889, 1.442695
      %v5237 = vpow.pop %v5236
      %v5238 = vmul.f32 %v4890, 1.442695
      %v5239 = vpow.pop %v5238
      %v5240 = vmul.f32 %v4891, 1.442695
      %v5241 = vpow.pop %v5240
      %v5242 = vmul.f32 %v4892, 1.442695
      %v5243 = vpow.pop %v5242
      %v5244 = vmul.f32 %v4893, 1.442695
      %v5245 = vpow.pop %v5244
      %v5246 = vmul.f32 %v4894, 1.442695
      %v5247 = vpow.pop %v5246
      %v5248 = vmul.f32 %v4895, 1.442695
      %v5249 = vpow.pop %v5248
      %v5250 = vmul.f32 %v4896, 1.442695
      %v5251 = vpow.pop %v5250
      %v5252 = vmul.f32 %v4897, 1.442695
      %v5253 = vpow.pop %v5252
      %v5254 = vmul.f32 %v4898, 1.442695
      %v5255 = vpow.pop %v5254
      %v5256 = vmul.f32 %v4899, 1.442695
      %v5257 = vpow.pop %v5256
      %v5258 = vmul.f32 %v4900, 1.442695
      %v5259 = vpow.pop %v5258
      %v5260 = vmul.f32 %v4901, 1.442695
      %v5261 = vpow.pop %v5260
      %v5262 = vmul.f32 %v4902, 1.442695
      %v5263 = vpow.pop %v5262
      %v5264 = vmul.f32 %v4903, 1.442695
      %v5265 = vpow.pop %v5264
      %v5266 = vmul.f32 %v4904, 1.442695
      %v5267 = vpow.pop %v5266
      %v5268 = vmul.f32 %v4905, 1.442695
      %v5269 = vpow.pop %v5268
      %v5270 = vmul.f32 %v4906, 1.442695
      %v5271 = vpow.pop %v5270
      %v5272 = vmul.f32 %v4907, 1.442695
      %v5273 = vpow.pop %v5272
      %v5274 = vmul.f32 %v4908, 1.442695
      %v5275 = vpow.pop %v5274
      %v5276 = vmul.f32 %v4909, 1.442695
      %v5277 = vpow.pop %v5276
      %v5278 = vmul.f32 %v4910, 1.442695
      %v5279 = vpow.pop %v5278
      %v5280 = vmul.f32 %v4911, 1.442695
      %v5281 = vpow.pop %v5280
      %v5282 = vmul.f32 %v4912, 1.442695
      %v5283 = vpow.pop %v5282
      %v5284 = vmul.f32 %v4913, 1.442695
      %v5285 = vpow.pop %v5284
      %v5286 = vmul.f32 %v4914, 1.442695
      %v5287 = vpow.pop %v5286
      %v5288 = vmul.f32 %v4915, 1.442695
      %v5289 = vpow.pop %v5288
      %v5290 = vmul.f32 %v4916, 1.442695
      %v5291 = vpow.pop %v5290
      %v5292 = vmul.f32 %v4917, 1.442695
      %v5293 = vpow.pop %v5292
      %v5294 = vmul.f32 %v4918, 1.442695
      %v5295 = vpow.pop %v5294
      %v5296 = vmul.f32 %v4919, 1.442695
      %v5297 = vpow.pop %v5296
      %v5298 = vmul.f32 %v4920, 1.442695
      %v5299 = vpow.pop %v5298
      %v5300 = vmul.f32 %v4921, 1.442695
      %v5301 = vpow.pop %v5300
      %v5302 = vmul.f32 %v4922, 1.442695
      %v5303 = vpow.pop %v5302
      %v5304 = vmul.f32 %v4923, 1.442695
      %v5305 = vpow.pop %v5304
      %v5306 = vmul.f32 %v4924, 1.442695
      %v5307 = vpow.pop %v5306
      %v5308 = vmul.f32 %v4925, 1.442695
      %v5309 = vpow.pop %v5308
      %v5310 = vmul.f32 %v4926, 1.442695
      %v5311 = vpow.pop %v5310
      %v5312 = vmul.f32 %v4927, 1.442695
      %v5313 = vpow.pop %v5312
      %v5314 = vmul.f32 %v4928, 1.442695
      %v5315 = vpow.pop %v5314
      %v5316 = vmul.f32 %v4929, 1.442695
      %v5317 = vpow.pop %v5316
      %v5318 = vmul.f32 %v4930, 1.442695
      %v5319 = vpow.pop %v5318
      %v5320 = vmul.f32 %v4931, 1.442695
      %v5321 = vpow.pop %v5320
      %v5322 = vmul.f32 %v4932, 1.442695
      %v5323 = vpow.pop %v5322
      %v5324 = vmul.f32 %v4933, 1.442695
      %v5325 = vpow.pop %v5324
      %v5326 = vmul.f32 %v4934, 1.442695
      %v5327 = vpow.pop %v5326
      %v5328 = vmul.f32 %v4935, 1.442695
      %v5329 = vpow.pop %v5328
      %v5330 = vmul.f32 %v4936, 1.442695
      %v5331 = vpow.pop %v5330
      %v5332 = vmul.f32 %v4937, 1.442695
      %v5333 = vpow.pop %v5332
      %v5334 = vmul.f32 %v4938, 1.442695
      %v5335 = vpow.pop %v5334
      %v5336 = vmul.f32 %v4939, 1.442695
      %v5337 = vpow.pop %v5336
      %v5338 = vmul.f32 %v4940, 1.442695
      %v5339 = vpow.pop %v5338
      %v5340 = vmul.f32 %v4941, 1.442695
      %v5341 = vpow.pop %v5340
      %v5342 = vmul.f32 %v4942, 1.442695
      %v5343 = vpow.pop %v5342
      %v5344 = vmul.f32 %v4943, 1.442695
      %v5345 = vpow.pop %v5344
      %v5346 = vmul.f32 %v4944, 1.442695
      %v5347 = vpow.pop %v5346
      %v5348 = vmul.f32 %v4945, 1.442695
      %v5349 = vpow.pop %v5348
      %v5350 = vmul.f32 %v4946, 1.442695
      %v5351 = vpow.pop %v5350
      %v5352 = vmul.f32 %v4947, 1.442695
      %v5353 = vpow.pop %v5352
      %v5354 = vmul.f32 %v4948, 1.442695
      %v5355 = vpow.pop %v5354
      %v5356 = vmul.f32 %v4949, 1.442695
      %v5357 = vpow.pop %v5356
      %v5358 = vmul.f32 %v4950, 1.442695
      %v5359 = vpow.pop %v5358
      %v5360 = vmul.f32 %v4951, 1.442695
      %v5361 = vpow.pop %v5360
      %v5362 = vmul.f32 %v4952, 1.442695
      %v5363 = vpow.pop %v5362
      %v5364 = vmul.f32 %v4953, 1.442695
      %v5365 = vpow.pop %v5364
      %v5366 = vmul.f32 %v4954, 1.442695
      %v5367 = vpow.pop %v5366
      %v5368 = vmul.f32 %v4955, 1.442695
      %v5369 = vpow.pop %v5368
      %v5370 = vmul.f32 %v4956, 1.442695
      %v5371 = vpow.pop %v5370
      %v5372 = vmul.f32 %v4957, 1.442695
      %v5373 = vpow.pop %v5372
      %v5374 = vmul.f32 %v4958, 1.442695
      %v5375 = vpow.pop %v5374
      %v5376 = vmul.f32 %v4959, 1.442695
      %v5377 = vpow.pop %v5376
      %v5378 = vmul.f32 %v4960, 1.442695
      %v5379 = vpow.pop %v5378
      %v5380 = vmul.f32 %v4961, 1.442695
      %v5381 = vpow.pop %v5380
      %v5382 = vmul.f32 %v4962, 1.442695
      %v5383 = vpow.pop %v5382
      %v5384 = vmul.f32 %v4963, 1.442695
      %v5385 = vpow.pop %v5384
      %v5386 = vmul.f32 %v4964, 1.442695
      %v5387 = vpow.pop %v5386
      %v5388 = vmul.f32 %v4965, 1.442695
      %v5389 = vpow.pop %v5388
      %v5390 = vmul.f32 %v4966, 1.442695
      %v5391 = vpow.pop %v5390
      %v5392 = vmul.f32 %v4967, 1.442695
      %v5393 = vpow.pop %v5392
      %v5394 = vmul.f32 %v4968, 1.442695
      %v5395 = vpow.pop %v5394
      %v5396 = vmul.f32 %v4969, 1.442695
      %v5397 = vpow.pop %v5396
      %v5398 = vmul.f32 %v4970, 1.442695
      %v5399 = vpow.pop %v5398
      %v5400 = vmul.f32 %v4971, 1.442695
      %v5401 = vpow.pop %v5400
      %v5402 = vmul.f32 %v4972, 1.442695
      %v5403 = vpow.pop %v5402
      %v5404 = vmul.f32 %v4973, 1.442695
      %v5405 = vpow.pop %v5404
      %v5406 = vmul.f32 %v4974, 1.442695
      %v5407 = vpow.pop %v5406
      %v5408 = vmul.f32 %v4975, 1.442695
      %v5409 = vpow.pop %v5408
      %v5410 = vmul.f32 %v4976, 1.442695
      %v5411 = vpow.pop %v5410
      %v5412 = vmul.f32 %v4977, 1.442695
      %v5413 = vpow.pop %v5412
      %v5414 = vmul.f32 %v4978, 1.442695
      %v5415 = vpow.pop %v5414
      %v5416 = vmul.f32 %v4979, 1.442695
      %v5417 = vpow.pop %v5416
      %v5418 = vmul.f32 %v4980, 1.442695
      %v5419 = vpow.pop %v5418
      %v5420 = vmul.f32 %v4981, 1.442695
      %v5421 = vpow.pop %v5420
      %v5422 = vmul.f32 %v4982, 1.442695
      %v5423 = vpow.pop %v5422
      %v5424 = vmul.f32 %v4983, 1.442695
      %v5425 = vpow.pop %v5424
      %v5426 = vmul.f32 %v4984, 1.442695
      %v5427 = vpow.pop %v5426
      %v5428 = vmul.f32 %v4985, 1.442695
      %v5429 = vpow.pop %v5428
      %v5430 = vmul.f32 %v4986, 1.442695
      %v5431 = vpow.pop %v5430
      %v5432 = vmul.f32 %v4987, 1.442695
      %v5433 = vpow.pop %v5432
      %v5434 = vmul.f32 %v4988, 1.442695
      %v5435 = vpow.pop %v5434
      %v5436 = vmul.f32 %v4989, 1.442695
      %v5437 = vpow.pop %v5436
      %v5438 = vmul.f32 %v4990, 1.442695
      %v5439 = vpow.pop %v5438
      %v5440 = vmul.f32 %v4991, 1.442695
      %v5441 = vpow.pop %v5440
      %v5442 = vmul.f32 %v4992, 1.442695
      %v5443 = vpow.pop %v5442
      %v5444 = vmul.f32 %v4993, 1.442695
      %v5445 = vpow.pop %v5444
      %v5446 = vmul.f32 %v4994, 1.442695
      %v5447 = vpow.pop %v5446
      %v5448 = vmul.f32 %v4995, 1.442695
      %v5449 = vpow.pop %v5448
      %v5450 = vmul.f32 %v4996, 1.442695
      %v5451 = vpow.pop %v5450
      %v5452 = vmul.f32 %v4997, 1.442695
      %v5453 = vpow.pop %v5452
      %v5454 = vmul.f32 %v4998, 1.442695
      %v5455 = vpow.pop %v5454
      %v5456 = vmul.f32 %v4999, 1.442695
      %v5457 = vpow.pop %v5456
      %v5458 = vmul.f32 %v5000, 1.442695
      %v5459 = vpow.pop %v5458
      %v5460 = vmul.f32 %v5001, 1.442695
      %v5461 = vpow.pop %v5460
      %v5462 = vmul.f32 %v5002, 1.442695
      %v5463 = vpow.pop %v5462
      %v5464 = vmul.f32 %v5003, 1.442695
      %v5465 = vpow.pop %v5464
      %v5466 = vmul.f32 %v5004, 1.442695
      %v5467 = vpow.pop %v5466
      %v5468 = vmul.f32 %v5005, 1.442695
      %v5469 = vpow.pop %v5468
      %v5470 = vmul.f32 %v5006, 1.442695
      %v5471 = vpow.pop %v5470
      %v5472 = vmul.f32 %v5007, 1.442695
      %v5473 = vpow.pop %v5472
      %v5474 = vmul.f32 %v5008, 1.442695
      %v5475 = vpow.pop %v5474
      %v5476 = vmul.f32 %v5009, 1.442695
      %v5477 = vpow.pop %v5476
      %v5478 = vmul.f32 %v5010, 1.442695
      %v5479 = vpow.pop %v5478
      %v5480 = vmul.f32 %v5011, 1.442695
      %v5481 = vpow.pop %v5480
      %v5482 = vmul.f32 %v5012, 1.442695
      %v5483 = vpow.pop %v5482
      %v5484 = vmul.f32 %v5013, 1.442695
      %v5485 = vpow.pop %v5484
      %v5486 = vmul.f32 %v5014, 1.442695
      %v5487 = vpow.pop %v5486
      %v5488 = vmul.f32 %v5015, 1.442695
      %v5489 = vpow.pop %v5488
      %v5490 = vmul.f32 %v5016, 1.442695
      %v5491 = vpow.pop %v5490
      %v5492 = vmul.f32 %v5017, 1.442695
      %v5493 = vpow.pop %v5492
      %v5494 = vmul.f32 %v5018, 1.442695
      %v5495 = vpow.pop %v5494
      %v5496 = vmul.f32 %v5019, 1.442695
      %v5497 = vpow.pop %v5496
      %v5498 = vmul.f32 %v5020, 1.442695
      %v5499 = vpow.pop %v5498
      %v5500 = vmul.f32 %v5021, 1.442695
      %v5501 = vpow.pop %v5500
      %v5502 = vmul.f32 %v5022, 1.442695
      %v5503 = vpow.pop %v5502
      %v5504 = vmul.f32 %v5023, 1.442695
      %v5505 = vpow.pop %v5504
      %v5506 = vmul.f32 %v5024, 1.442695
      %v5507 = vpow.pop %v5506
      %v5508 = vmul.f32 %v5025, 1.442695
      %v5509 = vpow.pop %v5508
      %v5510 = vmul.f32 %v5026, 1.442695
      %v5511 = vpow.pop %v5510
      %v5512 = vmul.f32 %v5027, 1.442695
      %v5513 = vpow.pop %v5512
      %v5514 = vmul.f32 %v5028, 1.442695
      %v5515 = vpow.pop %v5514
      %v5516 = vmul.f32 %v5029, 1.442695
      %v5517 = vpow.pop %v5516
      %v5518 = vmul.f32 %v5030, 1.442695
      %v5519 = vpow.pop %v5518
      %v5520 = vmul.f32 %v5031, 1.442695
      %v5521 = vpow.pop %v5520
      %v5522 = vmul.f32 %v5032, 1.442695
      %v5523 = vpow.pop %v5522
      %v5524 = vmul.f32 %v5033, 1.442695
      %v5525 = vpow.pop %v5524
      %v5526 = vmul.f32 %v5034, 1.442695
      %v5527 = vpow.pop %v5526
      %v5528 = vmul.f32 %v5035, 1.442695
      %v5529 = vpow.pop %v5528
      %v5530 = vmul.f32 %v5036, 1.442695
      %v5531 = vpow.pop %v5530
      %v5532 = vmul.f32 %v5037, 1.442695
      %v5533 = vpow.pop %v5532
      %v5534 = vmul.f32 %v5038, 1.442695
      %v5535 = vpow.pop %v5534
      %v5536 = vmul.f32 %v5039, 1.442695
      %v5537 = vpow.pop %v5536
      %v5538 = vmul.f32 %v5040, 1.442695
      %v5539 = vpow.pop %v5538
      %v5540 = vmul.f32 %v5041, 1.442695
      %v5541 = vpow.pop %v5540
      %v5542 = vmul.f32 %v5042, 1.442695
      %v5543 = vpow.pop %v5542
      %v5544 = vmul.f32 %v5043, 1.442695
      %v5545 = vpow.pop %v5544
      %v5546 = vmul.f32 %v5044, 1.442695
      %v5547 = vpow.pop %v5546
      %v5548 = vmul.f32 %v5045, 1.442695
      %v5549 = vpow.pop %v5548
      %v5550 = vmul.f32 %v5046, 1.442695
      %v5551 = vpow.pop %v5550
      %v5552 = vmul.f32 %v5047, 1.442695
      %v5553 = vpow.pop %v5552
      %v5554 = vmul.f32 %v5048, 1.442695
      %v5555 = vpow.pop %v5554
      %v5556 = vmul.f32 %v5049, 1.442695
      %v5557 = vpow.pop %v5556
      %v5558 = vmul.f32 %v5050, 1.442695
      %v5559 = vpow.pop %v5558
      %v5560 = vmul.f32 %v5051, 1.442695
      %v5561 = vpow.pop %v5560
      %v5562 = vmul.f32 %v5052, 1.442695
      %v5563 = vpow.pop %v5562
      %v5564 = vmul.f32 %v5053, 1.442695
      %v5565 = vpow.pop %v5564
      %v5566 = vmul.f32 %v4286, %v5055
      %v5567 = vmul.f32 %v4287, %v5057
      %v5568 = vmul.f32 %v4288, %v5059
      %v5569 = vmul.f32 %v4289, %v5061
      %v5570 = vmul.f32 %v4290, %v5063
      %v5571 = vmul.f32 %v4291, %v5065
      %v5572 = vmul.f32 %v4292, %v5067
      %v5573 = vmul.f32 %v4293, %v5069
      %v5574 = vmul.f32 %v4294, %v5071
      %v5575 = vmul.f32 %v4295, %v5073
      %v5576 = vmul.f32 %v4296, %v5075
      %v5577 = vmul.f32 %v4297, %v5077
      %v5578 = vmul.f32 %v4298, %v5079
      %v5579 = vmul.f32 %v4299, %v5081
      %v5580 = vmul.f32 %v4300, %v5083
      %v5581 = vmul.f32 %v4301, %v5085
      %v5582 = vmul.f32 %v4302, %v5087
      %v5583 = vmul.f32 %v4303, %v5089
      %v5584 = vmul.f32 %v4304, %v5091
      %v5585 = vmul.f32 %v4305, %v5093
      %v5586 = vmul.f32 %v4306, %v5095
      %v5587 = vmul.f32 %v4307, %v5097
      %v5588 = vmul.f32 %v4308, %v5099
      %v5589 = vmul.f32 %v4309, %v5101
      %v5590 = vmul.f32 %v4310, %v5103
      %v5591 = vmul.f32 %v4311, %v5105
      %v5592 = vmul.f32 %v4312, %v5107
      %v5593 = vmul.f32 %v4313, %v5109
      %v5594 = vmul.f32 %v4314, %v5111
      %v5595 = vmul.f32 %v4315, %v5113
      %v5596 = vmul.f32 %v4316, %v5115
      %v5597 = vmul.f32 %v4317, %v5117
      %v5598 = vmul.f32 %v4318, %v5119
      %v5599 = vmul.f32 %v4319, %v5121
      %v5600 = vmul.f32 %v4320, %v5123
      %v5601 = vmul.f32 %v4321, %v5125
      %v5602 = vmul.f32 %v4322, %v5127
      %v5603 = vmul.f32 %v4323, %v5129
      %v5604 = vmul.f32 %v4324, %v5131
      %v5605 = vmul.f32 %v4325, %v5133
      %v5606 = vmul.f32 %v4326, %v5135
      %v5607 = vmul.f32 %v4327, %v5137
      %v5608 = vmul.f32 %v4328, %v5139
      %v5609 = vmul.f32 %v4329, %v5141
      %v5610 = vmul.f32 %v4330, %v5143
      %v5611 = vmul.f32 %v4331, %v5145
      %v5612 = vmul.f32 %v4332, %v5147
      %v5613 = vmul.f32 %v4333, %v5149
      %v5614 = vmul.f32 %v4334, %v5151
      %v5615 = vmul.f32 %v4335, %v5153
      %v5616 = vmul.f32 %v4336, %v5155
      %v5617 = vmul.f32 %v4337, %v5157
      %v5618 = vmul.f32 %v4338, %v5159
      %v5619 = vmul.f32 %v4339, %v5161
      %v5620 = vmul.f32 %v4340, %v5163
      %v5621 = vmul.f32 %v4341, %v5165
      %v5622 = vmul.f32 %v4342, %v5167
      %v5623 = vmul.f32 %v4343, %v5169
      %v5624 = vmul.f32 %v4344, %v5171
      %v5625 = vmul.f32 %v4345, %v5173
      %v5626 = vmul.f32 %v4346, %v5175
      %v5627 = vmul.f32 %v4347, %v5177
      %v5628 = vmul.f32 %v4348, %v5179
      %v5629 = vmul.f32 %v4349, %v5181
      %v5630 = vmul.f32 %v4350, %v5183
      %v5631 = vmul.f32 %v4351, %v5185
      %v5632 = vmul.f32 %v4352, %v5187
      %v5633 = vmul.f32 %v4353, %v5189
      %v5634 = vmul.f32 %v4354, %v5191
      %v5635 = vmul.f32 %v4355, %v5193
      %v5636 = vmul.f32 %v4356, %v5195
      %v5637 = vmul.f32 %v4357, %v5197
      %v5638 = vmul.f32 %v4358, %v5199
      %v5639 = vmul.f32 %v4359, %v5201
      %v5640 = vmul.f32 %v4360, %v5203
      %v5641 = vmul.f32 %v4361, %v5205
      %v5642 = vmul.f32 %v4362, %v5207
      %v5643 = vmul.f32 %v4363, %v5209
      %v5644 = vmul.f32 %v4364, %v5211
      %v5645 = vmul.f32 %v4365, %v5213
      %v5646 = vmul.f32 %v4366, %v5215
      %v5647 = vmul.f32 %v4367, %v5217
      %v5648 = vmul.f32 %v4368, %v5219
      %v5649 = vmul.f32 %v4369, %v5221
      %v5650 = vmul.f32 %v4370, %v5223
      %v5651 = vmul.f32 %v4371, %v5225
      %v5652 = vmul.f32 %v4372, %v5227
      %v5653 = vmul.f32 %v4373, %v5229
      %v5654 = vmul.f32 %v4374, %v5231
      %v5655 = vmul.f32 %v4375, %v5233
      %v5656 = vmul.f32 %v4376, %v5235
      %v5657 = vmul.f32 %v4377, %v5237
      %v5658 = vmul.f32 %v4378, %v5239
      %v5659 = vmul.f32 %v4379, %v5241
      %v5660 = vmul.f32 %v4380, %v5243
      %v5661 = vmul.f32 %v4381, %v5245
      %v5662 = vmul.f32 %v4382, %v5247
      %v5663 = vmul.f32 %v4383, %v5249
      %v5664 = vmul.f32 %v4384, %v5251
      %v5665 = vmul.f32 %v4385, %v5253
      %v5666 = vmul.f32 %v4386, %v5255
      %v5667 = vmul.f32 %v4387, %v5257
      %v5668 = vmul.f32 %v4388, %v5259
      %v5669 = vmul.f32 %v4389, %v5261
      %v5670 = vmul.f32 %v4390, %v5263
      %v5671 = vmul.f32 %v4391, %v5265
      %v5672 = vmul.f32 %v4392, %v5267
      %v5673 = vmul.f32 %v4393, %v5269
      %v5674 = vmul.f32 %v4394, %v5271
      %v5675 = vmul.f32 %v4395, %v5273
      %v5676 = vmul.f32 %v4396, %v5275
      %v5677 = vmul.f32 %v4397, %v5277
      %v5678 = vmul.f32 %v4398, %v5279
      %v5679 = vmul.f32 %v4399, %v5281
      %v5680 = vmul.f32 %v4400, %v5283
      %v5681 = vmul.f32 %v4401, %v5285
      %v5682 = vmul.f32 %v4402, %v5287
      %v5683 = vmul.f32 %v4403, %v5289
      %v5684 = vmul.f32 %v4404, %v5291
      %v5685 = vmul.f32 %v4405, %v5293
      %v5686 = vmul.f32 %v4406, %v5295
      %v5687 = vmul.f32 %v4407, %v5297
      %v5688 = vmul.f32 %v4408, %v5299
      %v5689 = vmul.f32 %v4409, %v5301
      %v5690 = vmul.f32 %v4410, %v5303
      %v5691 = vmul.f32 %v4411, %v5305
      %v5692 = vmul.f32 %v4412, %v5307
      %v5693 = vmul.f32 %v4413, %v5309
      %v5694 = vmul.f32 %v4414, %v5311
      %v5695 = vmul.f32 %v4415, %v5313
      %v5696 = vmul.f32 %v4416, %v5315
      %v5697 = vmul.f32 %v4417, %v5317
      %v5698 = vmul.f32 %v4418, %v5319
      %v5699 = vmul.f32 %v4419, %v5321
      %v5700 = vmul.f32 %v4420, %v5323
      %v5701 = vmul.f32 %v4421, %v5325
      %v5702 = vmul.f32 %v4422, %v5327
      %v5703 = vmul.f32 %v4423, %v5329
      %v5704 = vmul.f32 %v4424, %v5331
      %v5705 = vmul.f32 %v4425, %v5333
      %v5706 = vmul.f32 %v4426, %v5335
      %v5707 = vmul.f32 %v4427, %v5337
      %v5708 = vmul.f32 %v4428, %v5339
      %v5709 = vmul.f32 %v4429, %v5341
      %v5710 = vmul.f32 %v4430, %v5343
      %v5711 = vmul.f32 %v4431, %v5345
      %v5712 = vmul.f32 %v4432, %v5347
      %v5713 = vmul.f32 %v4433, %v5349
      %v5714 = vmul.f32 %v4434, %v5351
      %v5715 = vmul.f32 %v4435, %v5353
      %v5716 = vmul.f32 %v4436, %v5355
      %v5717 = vmul.f32 %v4437, %v5357
      %v5718 = vmul.f32 %v4438, %v5359
      %v5719 = vmul.f32 %v4439, %v5361
      %v5720 = vmul.f32 %v4440, %v5363
      %v5721 = vmul.f32 %v4441, %v5365
      %v5722 = vmul.f32 %v4442, %v5367
      %v5723 = vmul.f32 %v4443, %v5369
      %v5724 = vmul.f32 %v4444, %v5371
      %v5725 = vmul.f32 %v4445, %v5373
      %v5726 = vmul.f32 %v4446, %v5375
      %v5727 = vmul.f32 %v4447, %v5377
      %v5728 = vmul.f32 %v4448, %v5379
      %v5729 = vmul.f32 %v4449, %v5381
      %v5730 = vmul.f32 %v4450, %v5383
      %v5731 = vmul.f32 %v4451, %v5385
      %v5732 = vmul.f32 %v4452, %v5387
      %v5733 = vmul.f32 %v4453, %v5389
      %v5734 = vmul.f32 %v4454, %v5391
      %v5735 = vmul.f32 %v4455, %v5393
      %v5736 = vmul.f32 %v4456, %v5395
      %v5737 = vmul.f32 %v4457, %v5397
      %v5738 = vmul.f32 %v4458, %v5399
      %v5739 = vmul.f32 %v4459, %v5401
      %v5740 = vmul.f32 %v4460, %v5403
      %v5741 = vmul.f32 %v4461, %v5405
      %v5742 = vmul.f32 %v4462, %v5407
      %v5743 = vmul.f32 %v4463, %v5409
      %v5744 = vmul.f32 %v4464, %v5411
      %v5745 = vmul.f32 %v4465, %v5413
      %v5746 = vmul.f32 %v4466, %v5415
      %v5747 = vmul.f32 %v4467, %v5417
      %v5748 = vmul.f32 %v4468, %v5419
      %v5749 = vmul.f32 %v4469, %v5421
      %v5750 = vmul.f32 %v4470, %v5423
      %v5751 = vmul.f32 %v4471, %v5425
      %v5752 = vmul.f32 %v4472, %v5427
      %v5753 = vmul.f32 %v4473, %v5429
      %v5754 = vmul.f32 %v4474, %v5431
      %v5755 = vmul.f32 %v4475, %v5433
      %v5756 = vmul.f32 %v4476, %v5435
      %v5757 = vmul.f32 %v4477, %v5437
      %v5758 = vmul.f32 %v4478, %v5439
      %v5759 = vmul.f32 %v4479, %v5441
      %v5760 = vmul.f32 %v4480, %v5443
      %v5761 = vmul.f32 %v4481, %v5445
      %v5762 = vmul.f32 %v4482, %v5447
      %v5763 = vmul.f32 %v4483, %v5449
      %v5764 = vmul.f32 %v4484, %v5451
      %v5765 = vmul.f32 %v4485, %v5453
      %v5766 = vmul.f32 %v4486, %v5455
      %v5767 = vmul.f32 %v4487, %v5457
      %v5768 = vmul.f32 %v4488, %v5459
      %v5769 = vmul.f32 %v4489, %v5461
      %v5770 = vmul.f32 %v4490, %v5463
      %v5771 = vmul.f32 %v4491, %v5465
      %v5772 = vmul.f32 %v4492, %v5467
      %v5773 = vmul.f32 %v4493, %v5469
      %v5774 = vmul.f32 %v4494, %v5471
      %v5775 = vmul.f32 %v4495, %v5473
      %v5776 = vmul.f32 %v4496, %v5475
      %v5777 = vmul.f32 %v4497, %v5477
      %v5778 = vmul.f32 %v4498, %v5479
      %v5779 = vmul.f32 %v4499, %v5481
      %v5780 = vmul.f32 %v4500, %v5483
      %v5781 = vmul.f32 %v4501, %v5485
      %v5782 = vmul.f32 %v4502, %v5487
      %v5783 = vmul.f32 %v4503, %v5489
      %v5784 = vmul.f32 %v4504, %v5491
      %v5785 = vmul.f32 %v4505, %v5493
      %v5786 = vmul.f32 %v4506, %v5495
      %v5787 = vmul.f32 %v4507, %v5497
      %v5788 = vmul.f32 %v4508, %v5499
      %v5789 = vmul.f32 %v4509, %v5501
      %v5790 = vmul.f32 %v4510, %v5503
      %v5791 = vmul.f32 %v4511, %v5505
      %v5792 = vmul.f32 %v4512, %v5507
      %v5793 = vmul.f32 %v4513, %v5509
      %v5794 = vmul.f32 %v4514, %v5511
      %v5795 = vmul.f32 %v4515, %v5513
      %v5796 = vmul.f32 %v4516, %v5515
      %v5797 = vmul.f32 %v4517, %v5517
      %v5798 = vmul.f32 %v4518, %v5519
      %v5799 = vmul.f32 %v4519, %v5521
      %v5800 = vmul.f32 %v4520, %v5523
      %v5801 = vmul.f32 %v4521, %v5525
      %v5802 = vmul.f32 %v4522, %v5527
      %v5803 = vmul.f32 %v4523, %v5529
      %v5804 = vmul.f32 %v4524, %v5531
      %v5805 = vmul.f32 %v4525, %v5533
      %v5806 = vmul.f32 %v4526, %v5535
      %v5807 = vmul.f32 %v4527, %v5537
      %v5808 = vmul.f32 %v4528, %v5539
      %v5809 = vmul.f32 %v4529, %v5541
      %v5810 = vmul.f32 %v4530, %v5543
      %v5811 = vmul.f32 %v4531, %v5545
      %v5812 = vmul.f32 %v4532, %v5547
      %v5813 = vmul.f32 %v4533, %v5549
      %v5814 = vmul.f32 %v4534, %v5551
      %v5815 = vmul.f32 %v4535, %v5553
      %v5816 = vmul.f32 %v4536, %v5555
      %v5817 = vmul.f32 %v4537, %v5557
      %v5818 = vmul.f32 %v4538, %v5559
      %v5819 = vmul.f32 %v4539, %v5561
      %v5820 = vmul.f32 %v4540, %v5563
      %v5821 = vmul.f32 %v4541, %v5565
      %v5822 = vsub.f32 1.0, %v5566
      %v5823 = vsub.f32 1.0, %v5567
      %v5824 = vsub.f32 1.0, %v5568
      %v5825 = vsub.f32 1.0, %v5569
      %v5826 = vsub.f32 1.0, %v5570
      %v5827 = vsub.f32 1.0, %v5571
      %v5828 = vsub.f32 1.0, %v5572
      %v5829 = vsub.f32 1.0, %v5573
      %v5830 = vsub.f32 1.0, %v5574
      %v5831 = vsub.f32 1.0, %v5575
      %v5832 = vsub.f32 1.0, %v5576
      %v5833 = vsub.f32 1.0, %v5577
      %v5834 = vsub.f32 1.0, %v5578
      %v5835 = vsub.f32 1.0, %v5579
      %v5836 = vsub.f32 1.0, %v5580
      %v5837 = vsub.f32 1.0, %v5581
      %v5838 = vsub.f32 1.0, %v5582
      %v5839 = vsub.f32 1.0, %v5583
      %v5840 = vsub.f32 1.0, %v5584
      %v5841 = vsub.f32 1.0, %v5585
      %v5842 = vsub.f32 1.0, %v5586
      %v5843 = vsub.f32 1.0, %v5587
      %v5844 = vsub.f32 1.0, %v5588
      %v5845 = vsub.f32 1.0, %v5589
      %v5846 = vsub.f32 1.0, %v5590
      %v5847 = vsub.f32 1.0, %v5591
      %v5848 = vsub.f32 1.0, %v5592
      %v5849 = vsub.f32 1.0, %v5593
      %v5850 = vsub.f32 1.0, %v5594
      %v5851 = vsub.f32 1.0, %v5595
      %v5852 = vsub.f32 1.0, %v5596
      %v5853 = vsub.f32 1.0, %v5597
      %v5854 = vsub.f32 1.0, %v5598
      %v5855 = vsub.f32 1.0, %v5599
      %v5856 = vsub.f32 1.0, %v5600
      %v5857 = vsub.f32 1.0, %v5601
      %v5858 = vsub.f32 1.0, %v5602
      %v5859 = vsub.f32 1.0, %v5603
      %v5860 = vsub.f32 1.0, %v5604
      %v5861 = vsub.f32 1.0, %v5605
      %v5862 = vsub.f32 1.0, %v5606
      %v5863 = vsub.f32 1.0, %v5607
      %v5864 = vsub.f32 1.0, %v5608
      %v5865 = vsub.f32 1.0, %v5609
      %v5866 = vsub.f32 1.0, %v5610
      %v5867 = vsub.f32 1.0, %v5611
      %v5868 = vsub.f32 1.0, %v5612
      %v5869 = vsub.f32 1.0, %v5613
      %v5870 = vsub.f32 1.0, %v5614
      %v5871 = vsub.f32 1.0, %v5615
      %v5872 = vsub.f32 1.0, %v5616
      %v5873 = vsub.f32 1.0, %v5617
      %v5874 = vsub.f32 1.0, %v5618
      %v5875 = vsub.f32 1.0, %v5619
      %v5876 = vsub.f32 1.0, %v5620
      %v5877 = vsub.f32 1.0, %v5621
      %v5878 = vsub.f32 1.0, %v5622
      %v5879 = vsub.f32 1.0, %v5623
      %v5880 = vsub.f32 1.0, %v5624
      %v5881 = vsub.f32 1.0, %v5625
      %v5882 = vsub.f32 1.0, %v5626
      %v5883 = vsub.f32 1.0, %v5627
      %v5884 = vsub.f32 1.0, %v5628
      %v5885 = vsub.f32 1.0, %v5629
      %v5886 = vsub.f32 1.0, %v5630
      %v5887 = vsub.f32 1.0, %v5631
      %v5888 = vsub.f32 1.0, %v5632
      %v5889 = vsub.f32 1.0, %v5633
      %v5890 = vsub.f32 1.0, %v5634
      %v5891 = vsub.f32 1.0, %v5635
      %v5892 = vsub.f32 1.0, %v5636
      %v5893 = vsub.f32 1.0, %v5637
      %v5894 = vsub.f32 1.0, %v5638
      %v5895 = vsub.f32 1.0, %v5639
      %v5896 = vsub.f32 1.0, %v5640
      %v5897 = vsub.f32 1.0, %v5641
      %v5898 = vsub.f32 1.0, %v5642
      %v5899 = vsub.f32 1.0, %v5643
      %v5900 = vsub.f32 1.0, %v5644
      %v5901 = vsub.f32 1.0, %v5645
      %v5902 = vsub.f32 1.0, %v5646
      %v5903 = vsub.f32 1.0, %v5647
      %v5904 = vsub.f32 1.0, %v5648
      %v5905 = vsub.f32 1.0, %v5649
      %v5906 = vsub.f32 1.0, %v5650
      %v5907 = vsub.f32 1.0, %v5651
      %v5908 = vsub.f32 1.0, %v5652
      %v5909 = vsub.f32 1.0, %v5653
      %v5910 = vsub.f32 1.0, %v5654
      %v5911 = vsub.f32 1.0, %v5655
      %v5912 = vsub.f32 1.0, %v5656
      %v5913 = vsub.f32 1.0, %v5657
      %v5914 = vsub.f32 1.0, %v5658
      %v5915 = vsub.f32 1.0, %v5659
      %v5916 = vsub.f32 1.0, %v5660
      %v5917 = vsub.f32 1.0, %v5661
      %v5918 = vsub.f32 1.0, %v5662
      %v5919 = vsub.f32 1.0, %v5663
      %v5920 = vsub.f32 1.0, %v5664
      %v5921 = vsub.f32 1.0, %v5665
      %v5922 = vsub.f32 1.0, %v5666
      %v5923 = vsub.f32 1.0, %v5667
      %v5924 = vsub.f32 1.0, %v5668
      %v5925 = vsub.f32 1.0, %v5669
      %v5926 = vsub.f32 1.0, %v5670
      %v5927 = vsub.f32 1.0, %v5671
      %v5928 = vsub.f32 1.0, %v5672
      %v5929 = vsub.f32 1.0, %v5673
      %v5930 = vsub.f32 1.0, %v5674
      %v5931 = vsub.f32 1.0, %v5675
      %v5932 = vsub.f32 1.0, %v5676
      %v5933 = vsub.f32 1.0, %v5677
      %v5934 = vsub.f32 1.0, %v5678
      %v5935 = vsub.f32 1.0, %v5679
      %v5936 = vsub.f32 1.0, %v5680
      %v5937 = vsub.f32 1.0, %v5681
      %v5938 = vsub.f32 1.0, %v5682
      %v5939 = vsub.f32 1.0, %v5683
      %v5940 = vsub.f32 1.0, %v5684
      %v5941 = vsub.f32 1.0, %v5685
      %v5942 = vsub.f32 1.0, %v5686
      %v5943 = vsub.f32 1.0, %v5687
      %v5944 = vsub.f32 1.0, %v5688
      %v5945 = vsub.f32 1.0, %v5689
      %v5946 = vsub.f32 1.0, %v5690
      %v5947 = vsub.f32 1.0, %v5691
      %v5948 = vsub.f32 1.0, %v5692
      %v5949 = vsub.f32 1.0, %v5693
      %v5950 = vsub.f32 1.0, %v5694
      %v5951 = vsub.f32 1.0, %v5695
      %v5952 = vsub.f32 1.0, %v5696
      %v5953 = vsub.f32 1.0, %v5697
      %v5954 = vsub.f32 1.0, %v5698
      %v5955 = vsub.f32 1.0, %v5699
      %v5956 = vsub.f32 1.0, %v5700
      %v5957 = vsub.f32 1.0, %v5701
      %v5958 = vsub.f32 1.0, %v5702
      %v5959 = vsub.f32 1.0, %v5703
      %v5960 = vsub.f32 1.0, %v5704
      %v5961 = vsub.f32 1.0, %v5705
      %v5962 = vsub.f32 1.0, %v5706
      %v5963 = vsub.f32 1.0, %v5707
      %v5964 = vsub.f32 1.0, %v5708
      %v5965 = vsub.f32 1.0, %v5709
      %v5966 = vsub.f32 1.0, %v5710
      %v5967 = vsub.f32 1.0, %v5711
      %v5968 = vsub.f32 1.0, %v5712
      %v5969 = vsub.f32 1.0, %v5713
      %v5970 = vsub.f32 1.0, %v5714
      %v5971 = vsub.f32 1.0, %v5715
      %v5972 = vsub.f32 1.0, %v5716
      %v5973 = vsub.f32 1.0, %v5717
      %v5974 = vsub.f32 1.0, %v5718
      %v5975 = vsub.f32 1.0, %v5719
      %v5976 = vsub.f32 1.0, %v5720
      %v5977 = vsub.f32 1.0, %v5721
      %v5978 = vsub.f32 1.0, %v5722
      %v5979 = vsub.f32 1.0, %v5723
      %v5980 = vsub.f32 1.0, %v5724
      %v5981 = vsub.f32 1.0, %v5725
      %v5982 = vsub.f32 1.0, %v5726
      %v5983 = vsub.f32 1.0, %v5727
      %v5984 = vsub.f32 1.0, %v5728
      %v5985 = vsub.f32 1.0, %v5729
      %v5986 = vsub.f32 1.0, %v5730
      %v5987 = vsub.f32 1.0, %v5731
      %v5988 = vsub.f32 1.0, %v5732
      %v5989 = vsub.f32 1.0, %v5733
      %v5990 = vsub.f32 1.0, %v5734
      %v5991 = vsub.f32 1.0, %v5735
      %v5992 = vsub.f32 1.0, %v5736
      %v5993 = vsub.f32 1.0, %v5737
      %v5994 = vsub.f32 1.0, %v5738
      %v5995 = vsub.f32 1.0, %v5739
      %v5996 = vsub.f32 1.0, %v5740
      %v5997 = vsub.f32 1.0, %v5741
      %v5998 = vsub.f32 1.0, %v5742
      %v5999 = vsub.f32 1.0, %v5743
      %v6000 = vsub.f32 1.0, %v5744
      %v6001 = vsub.f32 1.0, %v5745
      %v6002 = vsub.f32 1.0, %v5746
      %v6003 = vsub.f32 1.0, %v5747
      %v6004 = vsub.f32 1.0, %v5748
      %v6005 = vsub.f32 1.0, %v5749
      %v6006 = vsub.f32 1.0, %v5750
      %v6007 = vsub.f32 1.0, %v5751
      %v6008 = vsub.f32 1.0, %v5752
      %v6009 = vsub.f32 1.0, %v5753
      %v6010 = vsub.f32 1.0, %v5754
      %v6011 = vsub.f32 1.0, %v5755
      %v6012 = vsub.f32 1.0, %v5756
      %v6013 = vsub.f32 1.0, %v5757
      %v6014 = vsub.f32 1.0, %v5758
      %v6015 = vsub.f32 1.0, %v5759
      %v6016 = vsub.f32 1.0, %v5760
      %v6017 = vsub.f32 1.0, %v5761
      %v6018 = vsub.f32 1.0, %v5762
      %v6019 = vsub.f32 1.0, %v5763
      %v6020 = vsub.f32 1.0, %v5764
      %v6021 = vsub.f32 1.0, %v5765
      %v6022 = vsub.f32 1.0, %v5766
      %v6023 = vsub.f32 1.0, %v5767
      %v6024 = vsub.f32 1.0, %v5768
      %v6025 = vsub.f32 1.0, %v5769
      %v6026 = vsub.f32 1.0, %v5770
      %v6027 = vsub.f32 1.0, %v5771
      %v6028 = vsub.f32 1.0, %v5772
      %v6029 = vsub.f32 1.0, %v5773
      %v6030 = vsub.f32 1.0, %v5774
      %v6031 = vsub.f32 1.0, %v5775
      %v6032 = vsub.f32 1.0, %v5776
      %v6033 = vsub.f32 1.0, %v5777
      %v6034 = vsub.f32 1.0, %v5778
      %v6035 = vsub.f32 1.0, %v5779
      %v6036 = vsub.f32 1.0, %v5780
      %v6037 = vsub.f32 1.0, %v5781
      %v6038 = vsub.f32 1.0, %v5782
      %v6039 = vsub.f32 1.0, %v5783
      %v6040 = vsub.f32 1.0, %v5784
      %v6041 = vsub.f32 1.0, %v5785
      %v6042 = vsub.f32 1.0, %v5786
      %v6043 = vsub.f32 1.0, %v5787
      %v6044 = vsub.f32 1.0, %v5788
      %v6045 = vsub.f32 1.0, %v5789
      %v6046 = vsub.f32 1.0, %v5790
      %v6047 = vsub.f32 1.0, %v5791
      %v6048 = vsub.f32 1.0, %v5792
      %v6049 = vsub.f32 1.0, %v5793
      %v6050 = vsub.f32 1.0, %v5794
      %v6051 = vsub.f32 1.0, %v5795
      %v6052 = vsub.f32 1.0, %v5796
      %v6053 = vsub.f32 1.0, %v5797
      %v6054 = vsub.f32 1.0, %v5798
      %v6055 = vsub.f32 1.0, %v5799
      %v6056 = vsub.f32 1.0, %v5800
      %v6057 = vsub.f32 1.0, %v5801
      %v6058 = vsub.f32 1.0, %v5802
      %v6059 = vsub.f32 1.0, %v5803
      %v6060 = vsub.f32 1.0, %v5804
      %v6061 = vsub.f32 1.0, %v5805
      %v6062 = vsub.f32 1.0, %v5806
      %v6063 = vsub.f32 1.0, %v5807
      %v6064 = vsub.f32 1.0, %v5808
      %v6065 = vsub.f32 1.0, %v5809
      %v6066 = vsub.f32 1.0, %v5810
      %v6067 = vsub.f32 1.0, %v5811
      %v6068 = vsub.f32 1.0, %v5812
      %v6069 = vsub.f32 1.0, %v5813
      %v6070 = vsub.f32 1.0, %v5814
      %v6071 = vsub.f32 1.0, %v5815
      %v6072 = vsub.f32 1.0, %v5816
      %v6073 = vsub.f32 1.0, %v5817
      %v6074 = vsub.f32 1.0, %v5818
      %v6075 = vsub.f32 1.0, %v5819
      %v6076 = vsub.f32 1.0, %v5820
      %v6077 = vsub.f32 1.0, %v5821
      %vm6078 = vcmp.lt.f32.partialorder %v958, 0.0
      %vm6079 = vcmp.lt.f32.partialorder %v959, 0.0
      %vm6080 = vcmp.lt.f32.partialorder %v960, 0.0
      %vm6081 = vcmp.lt.f32.partialorder %v961, 0.0
      %vm6082 = vcmp.lt.f32.partialorder %v962, 0.0
      %vm6083 = vcmp.lt.f32.partialorder %v963, 0.0
      %vm6084 = vcmp.lt.f32.partialorder %v964, 0.0
      %vm6085 = vcmp.lt.f32.partialorder %v965, 0.0
      %vm6086 = vcmp.lt.f32.partialorder %v966, 0.0
      %vm6087 = vcmp.lt.f32.partialorder %v967, 0.0
      %vm6088 = vcmp.lt.f32.partialorder %v968, 0.0
      %vm6089 = vcmp.lt.f32.partialorder %v969, 0.0
      %vm6090 = vcmp.lt.f32.partialorder %v970, 0.0
      %vm6091 = vcmp.lt.f32.partialorder %v971, 0.0
      %vm6092 = vcmp.lt.f32.partialorder %v972, 0.0
      %vm6093 = vcmp.lt.f32.partialorder %v973, 0.0
      %vm6094 = vcmp.lt.f32.partialorder %v974, 0.0
      %vm6095 = vcmp.lt.f32.partialorder %v975, 0.0
      %vm6096 = vcmp.lt.f32.partialorder %v976, 0.0
      %vm6097 = vcmp.lt.f32.partialorder %v977, 0.0
      %vm6098 = vcmp.lt.f32.partialorder %v978, 0.0
      %vm6099 = vcmp.lt.f32.partialorder %v979, 0.0
      %vm6100 = vcmp.lt.f32.partialorder %v980, 0.0
      %vm6101 = vcmp.lt.f32.partialorder %v981, 0.0
      %vm6102 = vcmp.lt.f32.partialorder %v982, 0.0
      %vm6103 = vcmp.lt.f32.partialorder %v983, 0.0
      %vm6104 = vcmp.lt.f32.partialorder %v984, 0.0
      %vm6105 = vcmp.lt.f32.partialorder %v985, 0.0
      %vm6106 = vcmp.lt.f32.partialorder %v986, 0.0
      %vm6107 = vcmp.lt.f32.partialorder %v987, 0.0
      %vm6108 = vcmp.lt.f32.partialorder %v988, 0.0
      %vm6109 = vcmp.lt.f32.partialorder %v989, 0.0
      %vm6110 = vcmp.lt.f32.partialorder %v990, 0.0
      %vm6111 = vcmp.lt.f32.partialorder %v991, 0.0
      %vm6112 = vcmp.lt.f32.partialorder %v992, 0.0
      %vm6113 = vcmp.lt.f32.partialorder %v993, 0.0
      %vm6114 = vcmp.lt.f32.partialorder %v994, 0.0
      %vm6115 = vcmp.lt.f32.partialorder %v995, 0.0
      %vm6116 = vcmp.lt.f32.partialorder %v996, 0.0
      %vm6117 = vcmp.lt.f32.partialorder %v997, 0.0
      %vm6118 = vcmp.lt.f32.partialorder %v998, 0.0
      %vm6119 = vcmp.lt.f32.partialorder %v999, 0.0
      %vm6120 = vcmp.lt.f32.partialorder %v1000, 0.0
      %vm6121 = vcmp.lt.f32.partialorder %v1001, 0.0
      %vm6122 = vcmp.lt.f32.partialorder %v1002, 0.0
      %vm6123 = vcmp.lt.f32.partialorder %v1003, 0.0
      %vm6124 = vcmp.lt.f32.partialorder %v1004, 0.0
      %vm6125 = vcmp.lt.f32.partialorder %v1005, 0.0
      %vm6126 = vcmp.lt.f32.partialorder %v1006, 0.0
      %vm6127 = vcmp.lt.f32.partialorder %v1007, 0.0
      %vm6128 = vcmp.lt.f32.partialorder %v1008, 0.0
      %vm6129 = vcmp.lt.f32.partialorder %v1009, 0.0
      %vm6130 = vcmp.lt.f32.partialorder %v1010, 0.0
      %vm6131 = vcmp.lt.f32.partialorder %v1011, 0.0
      %vm6132 = vcmp.lt.f32.partialorder %v1012, 0.0
      %vm6133 = vcmp.lt.f32.partialorder %v1013, 0.0
      %vm6134 = vcmp.lt.f32.partialorder %v1014, 0.0
      %vm6135 = vcmp.lt.f32.partialorder %v1015, 0.0
      %vm6136 = vcmp.lt.f32.partialorder %v1016, 0.0
      %vm6137 = vcmp.lt.f32.partialorder %v1017, 0.0
      %vm6138 = vcmp.lt.f32.partialorder %v1018, 0.0
      %vm6139 = vcmp.lt.f32.partialorder %v1019, 0.0
      %vm6140 = vcmp.lt.f32.partialorder %v1020, 0.0
      %vm6141 = vcmp.lt.f32.partialorder %v1021, 0.0
      %vm6142 = vcmp.lt.f32.partialorder %v1022, 0.0
      %vm6143 = vcmp.lt.f32.partialorder %v1023, 0.0
      %vm6144 = vcmp.lt.f32.partialorder %v1024, 0.0
      %vm6145 = vcmp.lt.f32.partialorder %v1025, 0.0
      %vm6146 = vcmp.lt.f32.partialorder %v1026, 0.0
      %vm6147 = vcmp.lt.f32.partialorder %v1027, 0.0
      %vm6148 = vcmp.lt.f32.partialorder %v1028, 0.0
      %vm6149 = vcmp.lt.f32.partialorder %v1029, 0.0
      %vm6150 = vcmp.lt.f32.partialorder %v1030, 0.0
      %vm6151 = vcmp.lt.f32.partialorder %v1031, 0.0
      %vm6152 = vcmp.lt.f32.partialorder %v1032, 0.0
      %vm6153 = vcmp.lt.f32.partialorder %v1033, 0.0
      %vm6154 = vcmp.lt.f32.partialorder %v1034, 0.0
      %vm6155 = vcmp.lt.f32.partialorder %v1035, 0.0
      %vm6156 = vcmp.lt.f32.partialorder %v1036, 0.0
      %vm6157 = vcmp.lt.f32.partialorder %v1037, 0.0
      %vm6158 = vcmp.lt.f32.partialorder %v1038, 0.0
      %vm6159 = vcmp.lt.f32.partialorder %v1039, 0.0
      %vm6160 = vcmp.lt.f32.partialorder %v1040, 0.0
      %vm6161 = vcmp.lt.f32.partialorder %v1041, 0.0
      %vm6162 = vcmp.lt.f32.partialorder %v1042, 0.0
      %vm6163 = vcmp.lt.f32.partialorder %v1043, 0.0
      %vm6164 = vcmp.lt.f32.partialorder %v1044, 0.0
      %vm6165 = vcmp.lt.f32.partialorder %v1045, 0.0
      %vm6166 = vcmp.lt.f32.partialorder %v1046, 0.0
      %vm6167 = vcmp.lt.f32.partialorder %v1047, 0.0
      %vm6168 = vcmp.lt.f32.partialorder %v1048, 0.0
      %vm6169 = vcmp.lt.f32.partialorder %v1049, 0.0
      %vm6170 = vcmp.lt.f32.partialorder %v1050, 0.0
      %vm6171 = vcmp.lt.f32.partialorder %v1051, 0.0
      %vm6172 = vcmp.lt.f32.partialorder %v1052, 0.0
      %vm6173 = vcmp.lt.f32.partialorder %v1053, 0.0
      %vm6174 = vcmp.lt.f32.partialorder %v1054, 0.0
      %vm6175 = vcmp.lt.f32.partialorder %v1055, 0.0
      %vm6176 = vcmp.lt.f32.partialorder %v1056, 0.0
      %vm6177 = vcmp.lt.f32.partialorder %v1057, 0.0
      %vm6178 = vcmp.lt.f32.partialorder %v1058, 0.0
      %vm6179 = vcmp.lt.f32.partialorder %v1059, 0.0
      %vm6180 = vcmp.lt.f32.partialorder %v1060, 0.0
      %vm6181 = vcmp.lt.f32.partialorder %v1061, 0.0
      %vm6182 = vcmp.lt.f32.partialorder %v1062, 0.0
      %vm6183 = vcmp.lt.f32.partialorder %v1063, 0.0
      %vm6184 = vcmp.lt.f32.partialorder %v1064, 0.0
      %vm6185 = vcmp.lt.f32.partialorder %v1065, 0.0
      %vm6186 = vcmp.lt.f32.partialorder %v1066, 0.0
      %vm6187 = vcmp.lt.f32.partialorder %v1067, 0.0
      %vm6188 = vcmp.lt.f32.partialorder %v1068, 0.0
      %vm6189 = vcmp.lt.f32.partialorder %v1069, 0.0
      %vm6190 = vcmp.lt.f32.partialorder %v1070, 0.0
      %vm6191 = vcmp.lt.f32.partialorder %v1071, 0.0
      %vm6192 = vcmp.lt.f32.partialorder %v1072, 0.0
      %vm6193 = vcmp.lt.f32.partialorder %v1073, 0.0
      %vm6194 = vcmp.lt.f32.partialorder %v1074, 0.0
      %vm6195 = vcmp.lt.f32.partialorder %v1075, 0.0
      %vm6196 = vcmp.lt.f32.partialorder %v1076, 0.0
      %vm6197 = vcmp.lt.f32.partialorder %v1077, 0.0
      %vm6198 = vcmp.lt.f32.partialorder %v1078, 0.0
      %vm6199 = vcmp.lt.f32.partialorder %v1079, 0.0
      %vm6200 = vcmp.lt.f32.partialorder %v1080, 0.0
      %vm6201 = vcmp.lt.f32.partialorder %v1081, 0.0
      %vm6202 = vcmp.lt.f32.partialorder %v1082, 0.0
      %vm6203 = vcmp.lt.f32.partialorder %v1083, 0.0
      %vm6204 = vcmp.lt.f32.partialorder %v1084, 0.0
      %vm6205 = vcmp.lt.f32.partialorder %v1085, 0.0
      %vm6206 = vcmp.lt.f32.partialorder %v1086, 0.0
      %vm6207 = vcmp.lt.f32.partialorder %v1087, 0.0
      %vm6208 = vcmp.lt.f32.partialorder %v1088, 0.0
      %vm6209 = vcmp.lt.f32.partialorder %v1089, 0.0
      %vm6210 = vcmp.lt.f32.partialorder %v1090, 0.0
      %vm6211 = vcmp.lt.f32.partialorder %v1091, 0.0
      %vm6212 = vcmp.lt.f32.partialorder %v1092, 0.0
      %vm6213 = vcmp.lt.f32.partialorder %v1093, 0.0
      %vm6214 = vcmp.lt.f32.partialorder %v1094, 0.0
      %vm6215 = vcmp.lt.f32.partialorder %v1095, 0.0
      %vm6216 = vcmp.lt.f32.partialorder %v1096, 0.0
      %vm6217 = vcmp.lt.f32.partialorder %v1097, 0.0
      %vm6218 = vcmp.lt.f32.partialorder %v1098, 0.0
      %vm6219 = vcmp.lt.f32.partialorder %v1099, 0.0
      %vm6220 = vcmp.lt.f32.partialorder %v1100, 0.0
      %vm6221 = vcmp.lt.f32.partialorder %v1101, 0.0
      %vm6222 = vcmp.lt.f32.partialorder %v1102, 0.0
      %vm6223 = vcmp.lt.f32.partialorder %v1103, 0.0
      %vm6224 = vcmp.lt.f32.partialorder %v1104, 0.0
      %vm6225 = vcmp.lt.f32.partialorder %v1105, 0.0
      %vm6226 = vcmp.lt.f32.partialorder %v1106, 0.0
      %vm6227 = vcmp.lt.f32.partialorder %v1107, 0.0
      %vm6228 = vcmp.lt.f32.partialorder %v1108, 0.0
      %vm6229 = vcmp.lt.f32.partialorder %v1109, 0.0
      %vm6230 = vcmp.lt.f32.partialorder %v1110, 0.0
      %vm6231 = vcmp.lt.f32.partialorder %v1111, 0.0
      %vm6232 = vcmp.lt.f32.partialorder %v1112, 0.0
      %vm6233 = vcmp.lt.f32.partialorder %v1113, 0.0
      %vm6234 = vcmp.lt.f32.partialorder %v1114, 0.0
      %vm6235 = vcmp.lt.f32.partialorder %v1115, 0.0
      %vm6236 = vcmp.lt.f32.partialorder %v1116, 0.0
      %vm6237 = vcmp.lt.f32.partialorder %v1117, 0.0
      %vm6238 = vcmp.lt.f32.partialorder %v1118, 0.0
      %vm6239 = vcmp.lt.f32.partialorder %v1119, 0.0
      %vm6240 = vcmp.lt.f32.partialorder %v1120, 0.0
      %vm6241 = vcmp.lt.f32.partialorder %v1121, 0.0
      %vm6242 = vcmp.lt.f32.partialorder %v1122, 0.0
      %vm6243 = vcmp.lt.f32.partialorder %v1123, 0.0
      %vm6244 = vcmp.lt.f32.partialorder %v1124, 0.0
      %vm6245 = vcmp.lt.f32.partialorder %v1125, 0.0
      %vm6246 = vcmp.lt.f32.partialorder %v1126, 0.0
      %vm6247 = vcmp.lt.f32.partialorder %v1127, 0.0
      %vm6248 = vcmp.lt.f32.partialorder %v1128, 0.0
      %vm6249 = vcmp.lt.f32.partialorder %v1129, 0.0
      %vm6250 = vcmp.lt.f32.partialorder %v1130, 0.0
      %vm6251 = vcmp.lt.f32.partialorder %v1131, 0.0
      %vm6252 = vcmp.lt.f32.partialorder %v1132, 0.0
      %vm6253 = vcmp.lt.f32.partialorder %v1133, 0.0
      %vm6254 = vcmp.lt.f32.partialorder %v1134, 0.0
      %vm6255 = vcmp.lt.f32.partialorder %v1135, 0.0
      %vm6256 = vcmp.lt.f32.partialorder %v1136, 0.0
      %vm6257 = vcmp.lt.f32.partialorder %v1137, 0.0
      %vm6258 = vcmp.lt.f32.partialorder %v1138, 0.0
      %vm6259 = vcmp.lt.f32.partialorder %v1139, 0.0
      %vm6260 = vcmp.lt.f32.partialorder %v1140, 0.0
      %vm6261 = vcmp.lt.f32.partialorder %v1141, 0.0
      %vm6262 = vcmp.lt.f32.partialorder %v1142, 0.0
      %vm6263 = vcmp.lt.f32.partialorder %v1143, 0.0
      %vm6264 = vcmp.lt.f32.partialorder %v1144, 0.0
      %vm6265 = vcmp.lt.f32.partialorder %v1145, 0.0
      %vm6266 = vcmp.lt.f32.partialorder %v1146, 0.0
      %vm6267 = vcmp.lt.f32.partialorder %v1147, 0.0
      %vm6268 = vcmp.lt.f32.partialorder %v1148, 0.0
      %vm6269 = vcmp.lt.f32.partialorder %v1149, 0.0
      %vm6270 = vcmp.lt.f32.partialorder %v1150, 0.0
      %vm6271 = vcmp.lt.f32.partialorder %v1151, 0.0
      %vm6272 = vcmp.lt.f32.partialorder %v1152, 0.0
      %vm6273 = vcmp.lt.f32.partialorder %v1153, 0.0
      %vm6274 = vcmp.lt.f32.partialorder %v1154, 0.0
      %vm6275 = vcmp.lt.f32.partialorder %v1155, 0.0
      %vm6276 = vcmp.lt.f32.partialorder %v1156, 0.0
      %vm6277 = vcmp.lt.f32.partialorder %v1157, 0.0
      %vm6278 = vcmp.lt.f32.partialorder %v1158, 0.0
      %vm6279 = vcmp.lt.f32.partialorder %v1159, 0.0
      %vm6280 = vcmp.lt.f32.partialorder %v1160, 0.0
      %vm6281 = vcmp.lt.f32.partialorder %v1161, 0.0
      %vm6282 = vcmp.lt.f32.partialorder %v1162, 0.0
      %vm6283 = vcmp.lt.f32.partialorder %v1163, 0.0
      %vm6284 = vcmp.lt.f32.partialorder %v1164, 0.0
      %vm6285 = vcmp.lt.f32.partialorder %v1165, 0.0
      %vm6286 = vcmp.lt.f32.partialorder %v1166, 0.0
      %vm6287 = vcmp.lt.f32.partialorder %v1167, 0.0
      %vm6288 = vcmp.lt.f32.partialorder %v1168, 0.0
      %vm6289 = vcmp.lt.f32.partialorder %v1169, 0.0
      %vm6290 = vcmp.lt.f32.partialorder %v1170, 0.0
      %vm6291 = vcmp.lt.f32.partialorder %v1171, 0.0
      %vm6292 = vcmp.lt.f32.partialorder %v1172, 0.0
      %vm6293 = vcmp.lt.f32.partialorder %v1173, 0.0
      %vm6294 = vcmp.lt.f32.partialorder %v1174, 0.0
      %vm6295 = vcmp.lt.f32.partialorder %v1175, 0.0
      %vm6296 = vcmp.lt.f32.partialorder %v1176, 0.0
      %vm6297 = vcmp.lt.f32.partialorder %v1177, 0.0
      %vm6298 = vcmp.lt.f32.partialorder %v1178, 0.0
      %vm6299 = vcmp.lt.f32.partialorder %v1179, 0.0
      %vm6300 = vcmp.lt.f32.partialorder %v1180, 0.0
      %vm6301 = vcmp.lt.f32.partialorder %v1181, 0.0
      %vm6302 = vcmp.lt.f32.partialorder %v1182, 0.0
      %vm6303 = vcmp.lt.f32.partialorder %v1183, 0.0
      %vm6304 = vcmp.lt.f32.partialorder %v1184, 0.0
      %vm6305 = vcmp.lt.f32.partialorder %v1185, 0.0
      %vm6306 = vcmp.lt.f32.partialorder %v1186, 0.0
      %vm6307 = vcmp.lt.f32.partialorder %v1187, 0.0
      %vm6308 = vcmp.lt.f32.partialorder %v1188, 0.0
      %vm6309 = vcmp.lt.f32.partialorder %v1189, 0.0
      %vm6310 = vcmp.lt.f32.partialorder %v1190, 0.0
      %vm6311 = vcmp.lt.f32.partialorder %v1191, 0.0
      %vm6312 = vcmp.lt.f32.partialorder %v1192, 0.0
      %vm6313 = vcmp.lt.f32.partialorder %v1193, 0.0
      %vm6314 = vcmp.lt.f32.partialorder %v1194, 0.0
      %vm6315 = vcmp.lt.f32.partialorder %v1195, 0.0
      %vm6316 = vcmp.lt.f32.partialorder %v1196, 0.0
      %vm6317 = vcmp.lt.f32.partialorder %v1197, 0.0
      %vm6318 = vcmp.lt.f32.partialorder %v1198, 0.0
      %vm6319 = vcmp.lt.f32.partialorder %v1199, 0.0
      %vm6320 = vcmp.lt.f32.partialorder %v1200, 0.0
      %vm6321 = vcmp.lt.f32.partialorder %v1201, 0.0
      %vm6322 = vcmp.lt.f32.partialorder %v1202, 0.0
      %vm6323 = vcmp.lt.f32.partialorder %v1203, 0.0
      %vm6324 = vcmp.lt.f32.partialorder %v1204, 0.0
      %vm6325 = vcmp.lt.f32.partialorder %v1205, 0.0
      %vm6326 = vcmp.lt.f32.partialorder %v1206, 0.0
      %vm6327 = vcmp.lt.f32.partialorder %v1207, 0.0
      %vm6328 = vcmp.lt.f32.partialorder %v1208, 0.0
      %vm6329 = vcmp.lt.f32.partialorder %v1209, 0.0
      %vm6330 = vcmp.lt.f32.partialorder %v1210, 0.0
      %vm6331 = vcmp.lt.f32.partialorder %v1211, 0.0
      %vm6332 = vcmp.lt.f32.partialorder %v1212, 0.0
      %vm6333 = vcmp.lt.f32.partialorder %v1213, 0.0
      %v6334 = vsub.f32 0.0, %v5822
      %v6335 = vsub.f32 0.0, %v5823
      %v6336 = vsub.f32 0.0, %v5824
      %v6337 = vsub.f32 0.0, %v5825
      %v6338 = vsub.f32 0.0, %v5826
      %v6339 = vsub.f32 0.0, %v5827
      %v6340 = vsub.f32 0.0, %v5828
      %v6341 = vsub.f32 0.0, %v5829
      %v6342 = vsub.f32 0.0, %v5830
      %v6343 = vsub.f32 0.0, %v5831
      %v6344 = vsub.f32 0.0, %v5832
      %v6345 = vsub.f32 0.0, %v5833
      %v6346 = vsub.f32 0.0, %v5834
      %v6347 = vsub.f32 0.0, %v5835
      %v6348 = vsub.f32 0.0, %v5836
      %v6349 = vsub.f32 0.0, %v5837
      %v6350 = vsub.f32 0.0, %v5838
      %v6351 = vsub.f32 0.0, %v5839
      %v6352 = vsub.f32 0.0, %v5840
      %v6353 = vsub.f32 0.0, %v5841
      %v6354 = vsub.f32 0.0, %v5842
      %v6355 = vsub.f32 0.0, %v5843
      %v6356 = vsub.f32 0.0, %v5844
      %v6357 = vsub.f32 0.0, %v5845
      %v6358 = vsub.f32 0.0, %v5846
      %v6359 = vsub.f32 0.0, %v5847
      %v6360 = vsub.f32 0.0, %v5848
      %v6361 = vsub.f32 0.0, %v5849
      %v6362 = vsub.f32 0.0, %v5850
      %v6363 = vsub.f32 0.0, %v5851
      %v6364 = vsub.f32 0.0, %v5852
      %v6365 = vsub.f32 0.0, %v5853
      %v6366 = vsub.f32 0.0, %v5854
      %v6367 = vsub.f32 0.0, %v5855
      %v6368 = vsub.f32 0.0, %v5856
      %v6369 = vsub.f32 0.0, %v5857
      %v6370 = vsub.f32 0.0, %v5858
      %v6371 = vsub.f32 0.0, %v5859
      %v6372 = vsub.f32 0.0, %v5860
      %v6373 = vsub.f32 0.0, %v5861
      %v6374 = vsub.f32 0.0, %v5862
      %v6375 = vsub.f32 0.0, %v5863
      %v6376 = vsub.f32 0.0, %v5864
      %v6377 = vsub.f32 0.0, %v5865
      %v6378 = vsub.f32 0.0, %v5866
      %v6379 = vsub.f32 0.0, %v5867
      %v6380 = vsub.f32 0.0, %v5868
      %v6381 = vsub.f32 0.0, %v5869
      %v6382 = vsub.f32 0.0, %v5870
      %v6383 = vsub.f32 0.0, %v5871
      %v6384 = vsub.f32 0.0, %v5872
      %v6385 = vsub.f32 0.0, %v5873
      %v6386 = vsub.f32 0.0, %v5874
      %v6387 = vsub.f32 0.0, %v5875
      %v6388 = vsub.f32 0.0, %v5876
      %v6389 = vsub.f32 0.0, %v5877
      %v6390 = vsub.f32 0.0, %v5878
      %v6391 = vsub.f32 0.0, %v5879
      %v6392 = vsub.f32 0.0, %v5880
      %v6393 = vsub.f32 0.0, %v5881
      %v6394 = vsub.f32 0.0, %v5882
      %v6395 = vsub.f32 0.0, %v5883
      %v6396 = vsub.f32 0.0, %v5884
      %v6397 = vsub.f32 0.0, %v5885
      %v6398 = vsub.f32 0.0, %v5886
      %v6399 = vsub.f32 0.0, %v5887
      %v6400 = vsub.f32 0.0, %v5888
      %v6401 = vsub.f32 0.0, %v5889
      %v6402 = vsub.f32 0.0, %v5890
      %v6403 = vsub.f32 0.0, %v5891
      %v6404 = vsub.f32 0.0, %v5892
      %v6405 = vsub.f32 0.0, %v5893
      %v6406 = vsub.f32 0.0, %v5894
      %v6407 = vsub.f32 0.0, %v5895
      %v6408 = vsub.f32 0.0, %v5896
      %v6409 = vsub.f32 0.0, %v5897
      %v6410 = vsub.f32 0.0, %v5898
      %v6411 = vsub.f32 0.0, %v5899
      %v6412 = vsub.f32 0.0, %v5900
      %v6413 = vsub.f32 0.0, %v5901
      %v6414 = vsub.f32 0.0, %v5902
      %v6415 = vsub.f32 0.0, %v5903
      %v6416 = vsub.f32 0.0, %v5904
      %v6417 = vsub.f32 0.0, %v5905
      %v6418 = vsub.f32 0.0, %v5906
      %v6419 = vsub.f32 0.0, %v5907
      %v6420 = vsub.f32 0.0, %v5908
      %v6421 = vsub.f32 0.0, %v5909
      %v6422 = vsub.f32 0.0, %v5910
      %v6423 = vsub.f32 0.0, %v5911
      %v6424 = vsub.f32 0.0, %v5912
      %v6425 = vsub.f32 0.0, %v5913
      %v6426 = vsub.f32 0.0, %v5914
      %v6427 = vsub.f32 0.0, %v5915
      %v6428 = vsub.f32 0.0, %v5916
      %v6429 = vsub.f32 0.0, %v5917
      %v6430 = vsub.f32 0.0, %v5918
      %v6431 = vsub.f32 0.0, %v5919
      %v6432 = vsub.f32 0.0, %v5920
      %v6433 = vsub.f32 0.0, %v5921
      %v6434 = vsub.f32 0.0, %v5922
      %v6435 = vsub.f32 0.0, %v5923
      %v6436 = vsub.f32 0.0, %v5924
      %v6437 = vsub.f32 0.0, %v5925
      %v6438 = vsub.f32 0.0, %v5926
      %v6439 = vsub.f32 0.0, %v5927
      %v6440 = vsub.f32 0.0, %v5928
      %v6441 = vsub.f32 0.0, %v5929
      %v6442 = vsub.f32 0.0, %v5930
      %v6443 = vsub.f32 0.0, %v5931
      %v6444 = vsub.f32 0.0, %v5932
      %v6445 = vsub.f32 0.0, %v5933
      %v6446 = vsub.f32 0.0, %v5934
      %v6447 = vsub.f32 0.0, %v5935
      %v6448 = vsub.f32 0.0, %v5936
      %v6449 = vsub.f32 0.0, %v5937
      %v6450 = vsub.f32 0.0, %v5938
      %v6451 = vsub.f32 0.0, %v5939
      %v6452 = vsub.f32 0.0, %v5940
      %v6453 = vsub.f32 0.0, %v5941
      %v6454 = vsub.f32 0.0, %v5942
      %v6455 = vsub.f32 0.0, %v5943
      %v6456 = vsub.f32 0.0, %v5944
      %v6457 = vsub.f32 0.0, %v5945
      %v6458 = vsub.f32 0.0, %v5946
      %v6459 = vsub.f32 0.0, %v5947
      %v6460 = vsub.f32 0.0, %v5948
      %v6461 = vsub.f32 0.0, %v5949
      %v6462 = vsub.f32 0.0, %v5950
      %v6463 = vsub.f32 0.0, %v5951
      %v6464 = vsub.f32 0.0, %v5952
      %v6465 = vsub.f32 0.0, %v5953
      %v6466 = vsub.f32 0.0, %v5954
      %v6467 = vsub.f32 0.0, %v5955
      %v6468 = vsub.f32 0.0, %v5956
      %v6469 = vsub.f32 0.0, %v5957
      %v6470 = vsub.f32 0.0, %v5958
      %v6471 = vsub.f32 0.0, %v5959
      %v6472 = vsub.f32 0.0, %v5960
      %v6473 = vsub.f32 0.0, %v5961
      %v6474 = vsub.f32 0.0, %v5962
      %v6475 = vsub.f32 0.0, %v5963
      %v6476 = vsub.f32 0.0, %v5964
      %v6477 = vsub.f32 0.0, %v5965
      %v6478 = vsub.f32 0.0, %v5966
      %v6479 = vsub.f32 0.0, %v5967
      %v6480 = vsub.f32 0.0, %v5968
      %v6481 = vsub.f32 0.0, %v5969
      %v6482 = vsub.f32 0.0, %v5970
      %v6483 = vsub.f32 0.0, %v5971
      %v6484 = vsub.f32 0.0, %v5972
      %v6485 = vsub.f32 0.0, %v5973
      %v6486 = vsub.f32 0.0, %v5974
      %v6487 = vsub.f32 0.0, %v5975
      %v6488 = vsub.f32 0.0, %v5976
      %v6489 = vsub.f32 0.0, %v5977
      %v6490 = vsub.f32 0.0, %v5978
      %v6491 = vsub.f32 0.0, %v5979
      %v6492 = vsub.f32 0.0, %v5980
      %v6493 = vsub.f32 0.0, %v5981
      %v6494 = vsub.f32 0.0, %v5982
      %v6495 = vsub.f32 0.0, %v5983
      %v6496 = vsub.f32 0.0, %v5984
      %v6497 = vsub.f32 0.0, %v5985
      %v6498 = vsub.f32 0.0, %v5986
      %v6499 = vsub.f32 0.0, %v5987
      %v6500 = vsub.f32 0.0, %v5988
      %v6501 = vsub.f32 0.0, %v5989
      %v6502 = vsub.f32 0.0, %v5990
      %v6503 = vsub.f32 0.0, %v5991
      %v6504 = vsub.f32 0.0, %v5992
      %v6505 = vsub.f32 0.0, %v5993
      %v6506 = vsub.f32 0.0, %v5994
      %v6507 = vsub.f32 0.0, %v5995
      %v6508 = vsub.f32 0.0, %v5996
      %v6509 = vsub.f32 0.0, %v5997
      %v6510 = vsub.f32 0.0, %v5998
      %v6511 = vsub.f32 0.0, %v5999
      %v6512 = vsub.f32 0.0, %v6000
      %v6513 = vsub.f32 0.0, %v6001
      %v6514 = vsub.f32 0.0, %v6002
      %v6515 = vsub.f32 0.0, %v6003
      %v6516 = vsub.f32 0.0, %v6004
      %v6517 = vsub.f32 0.0, %v6005
      %v6518 = vsub.f32 0.0, %v6006
      %v6519 = vsub.f32 0.0, %v6007
      %v6520 = vsub.f32 0.0, %v6008
      %v6521 = vsub.f32 0.0, %v6009
      %v6522 = vsub.f32 0.0, %v6010
      %v6523 = vsub.f32 0.0, %v6011
      %v6524 = vsub.f32 0.0, %v6012
      %v6525 = vsub.f32 0.0, %v6013
      %v6526 = vsub.f32 0.0, %v6014
      %v6527 = vsub.f32 0.0, %v6015
      %v6528 = vsub.f32 0.0, %v6016
      %v6529 = vsub.f32 0.0, %v6017
      %v6530 = vsub.f32 0.0, %v6018
      %v6531 = vsub.f32 0.0, %v6019
      %v6532 = vsub.f32 0.0, %v6020
      %v6533 = vsub.f32 0.0, %v6021
      %v6534 = vsub.f32 0.0, %v6022
      %v6535 = vsub.f32 0.0, %v6023
      %v6536 = vsub.f32 0.0, %v6024
      %v6537 = vsub.f32 0.0, %v6025
      %v6538 = vsub.f32 0.0, %v6026
      %v6539 = vsub.f32 0.0, %v6027
      %v6540 = vsub.f32 0.0, %v6028
      %v6541 = vsub.f32 0.0, %v6029
      %v6542 = vsub.f32 0.0, %v6030
      %v6543 = vsub.f32 0.0, %v6031
      %v6544 = vsub.f32 0.0, %v6032
      %v6545 = vsub.f32 0.0, %v6033
      %v6546 = vsub.f32 0.0, %v6034
      %v6547 = vsub.f32 0.0, %v6035
      %v6548 = vsub.f32 0.0, %v6036
      %v6549 = vsub.f32 0.0, %v6037
      %v6550 = vsub.f32 0.0, %v6038
      %v6551 = vsub.f32 0.0, %v6039
      %v6552 = vsub.f32 0.0, %v6040
      %v6553 = vsub.f32 0.0, %v6041
      %v6554 = vsub.f32 0.0, %v6042
      %v6555 = vsub.f32 0.0, %v6043
      %v6556 = vsub.f32 0.0, %v6044
      %v6557 = vsub.f32 0.0, %v6045
      %v6558 = vsub.f32 0.0, %v6046
      %v6559 = vsub.f32 0.0, %v6047
      %v6560 = vsub.f32 0.0, %v6048
      %v6561 = vsub.f32 0.0, %v6049
      %v6562 = vsub.f32 0.0, %v6050
      %v6563 = vsub.f32 0.0, %v6051
      %v6564 = vsub.f32 0.0, %v6052
      %v6565 = vsub.f32 0.0, %v6053
      %v6566 = vsub.f32 0.0, %v6054
      %v6567 = vsub.f32 0.0, %v6055
      %v6568 = vsub.f32 0.0, %v6056
      %v6569 = vsub.f32 0.0, %v6057
      %v6570 = vsub.f32 0.0, %v6058
      %v6571 = vsub.f32 0.0, %v6059
      %v6572 = vsub.f32 0.0, %v6060
      %v6573 = vsub.f32 0.0, %v6061
      %v6574 = vsub.f32 0.0, %v6062
      %v6575 = vsub.f32 0.0, %v6063
      %v6576 = vsub.f32 0.0, %v6064
      %v6577 = vsub.f32 0.0, %v6065
      %v6578 = vsub.f32 0.0, %v6066
      %v6579 = vsub.f32 0.0, %v6067
      %v6580 = vsub.f32 0.0, %v6068
      %v6581 = vsub.f32 0.0, %v6069
      %v6582 = vsub.f32 0.0, %v6070
      %v6583 = vsub.f32 0.0, %v6071
      %v6584 = vsub.f32 0.0, %v6072
      %v6585 = vsub.f32 0.0, %v6073
      %v6586 = vsub.f32 0.0, %v6074
      %v6587 = vsub.f32 0.0, %v6075
      %v6588 = vsub.f32 0.0, %v6076
      %v6589 = vsub.f32 0.0, %v6077
      %v6590 = vsel %vm6078, %v6334, %v5822
      %v6591 = vsel %vm6079, %v6335, %v5823
      %v6592 = vsel %vm6080, %v6336, %v5824
      %v6593 = vsel %vm6081, %v6337, %v5825
      %v6594 = vsel %vm6082, %v6338, %v5826
      %v6595 = vsel %vm6083, %v6339, %v5827
      %v6596 = vsel %vm6084, %v6340, %v5828
      %v6597 = vsel %vm6085, %v6341, %v5829
      %v6598 = vsel %vm6086, %v6342, %v5830
      %v6599 = vsel %vm6087, %v6343, %v5831
      %v6600 = vsel %vm6088, %v6344, %v5832
      %v6601 = vsel %vm6089, %v6345, %v5833
      %v6602 = vsel %vm6090, %v6346, %v5834
      %v6603 = vsel %vm6091, %v6347, %v5835
      %v6604 = vsel %vm6092, %v6348, %v5836
      %v6605 = vsel %vm6093, %v6349, %v5837
      %v6606 = vsel %vm6094, %v6350, %v5838
      %v6607 = vsel %vm6095, %v6351, %v5839
      %v6608 = vsel %vm6096, %v6352, %v5840
      %v6609 = vsel %vm6097, %v6353, %v5841
      %v6610 = vsel %vm6098, %v6354, %v5842
      %v6611 = vsel %vm6099, %v6355, %v5843
      %v6612 = vsel %vm6100, %v6356, %v5844
      %v6613 = vsel %vm6101, %v6357, %v5845
      %v6614 = vsel %vm6102, %v6358, %v5846
      %v6615 = vsel %vm6103, %v6359, %v5847
      %v6616 = vsel %vm6104, %v6360, %v5848
      %v6617 = vsel %vm6105, %v6361, %v5849
      %v6618 = vsel %vm6106, %v6362, %v5850
      %v6619 = vsel %vm6107, %v6363, %v5851
      %v6620 = vsel %vm6108, %v6364, %v5852
      %v6621 = vsel %vm6109, %v6365, %v5853
      %v6622 = vsel %vm6110, %v6366, %v5854
      %v6623 = vsel %vm6111, %v6367, %v5855
      %v6624 = vsel %vm6112, %v6368, %v5856
      %v6625 = vsel %vm6113, %v6369, %v5857
      %v6626 = vsel %vm6114, %v6370, %v5858
      %v6627 = vsel %vm6115, %v6371, %v5859
      %v6628 = vsel %vm6116, %v6372, %v5860
      %v6629 = vsel %vm6117, %v6373, %v5861
      %v6630 = vsel %vm6118, %v6374, %v5862
      %v6631 = vsel %vm6119, %v6375, %v5863
      %v6632 = vsel %vm6120, %v6376, %v5864
      %v6633 = vsel %vm6121, %v6377, %v5865
      %v6634 = vsel %vm6122, %v6378, %v5866
      %v6635 = vsel %vm6123, %v6379, %v5867
      %v6636 = vsel %vm6124, %v6380, %v5868
      %v6637 = vsel %vm6125, %v6381, %v5869
      %v6638 = vsel %vm6126, %v6382, %v5870
      %v6639 = vsel %vm6127, %v6383, %v5871
      %v6640 = vsel %vm6128, %v6384, %v5872
      %v6641 = vsel %vm6129, %v6385, %v5873
      %v6642 = vsel %vm6130, %v6386, %v5874
      %v6643 = vsel %vm6131, %v6387, %v5875
      %v6644 = vsel %vm6132, %v6388, %v5876
      %v6645 = vsel %vm6133, %v6389, %v5877
      %v6646 = vsel %vm6134, %v6390, %v5878
      %v6647 = vsel %vm6135, %v6391, %v5879
      %v6648 = vsel %vm6136, %v6392, %v5880
      %v6649 = vsel %vm6137, %v6393, %v5881
      %v6650 = vsel %vm6138, %v6394, %v5882
      %v6651 = vsel %vm6139, %v6395, %v5883
      %v6652 = vsel %vm6140, %v6396, %v5884
      %v6653 = vsel %vm6141, %v6397, %v5885
      %v6654 = vsel %vm6142, %v6398, %v5886
      %v6655 = vsel %vm6143, %v6399, %v5887
      %v6656 = vsel %vm6144, %v6400, %v5888
      %v6657 = vsel %vm6145, %v6401, %v5889
      %v6658 = vsel %vm6146, %v6402, %v5890
      %v6659 = vsel %vm6147, %v6403, %v5891
      %v6660 = vsel %vm6148, %v6404, %v5892
      %v6661 = vsel %vm6149, %v6405, %v5893
      %v6662 = vsel %vm6150, %v6406, %v5894
      %v6663 = vsel %vm6151, %v6407, %v5895
      %v6664 = vsel %vm6152, %v6408, %v5896
      %v6665 = vsel %vm6153, %v6409, %v5897
      %v6666 = vsel %vm6154, %v6410, %v5898
      %v6667 = vsel %vm6155, %v6411, %v5899
      %v6668 = vsel %vm6156, %v6412, %v5900
      %v6669 = vsel %vm6157, %v6413, %v5901
      %v6670 = vsel %vm6158, %v6414, %v5902
      %v6671 = vsel %vm6159, %v6415, %v5903
      %v6672 = vsel %vm6160, %v6416, %v5904
      %v6673 = vsel %vm6161, %v6417, %v5905
      %v6674 = vsel %vm6162, %v6418, %v5906
      %v6675 = vsel %vm6163, %v6419, %v5907
      %v6676 = vsel %vm6164, %v6420, %v5908
      %v6677 = vsel %vm6165, %v6421, %v5909
      %v6678 = vsel %vm6166, %v6422, %v5910
      %v6679 = vsel %vm6167, %v6423, %v5911
      %v6680 = vsel %vm6168, %v6424, %v5912
      %v6681 = vsel %vm6169, %v6425, %v5913
      %v6682 = vsel %vm6170, %v6426, %v5914
      %v6683 = vsel %vm6171, %v6427, %v5915
      %v6684 = vsel %vm6172, %v6428, %v5916
      %v6685 = vsel %vm6173, %v6429, %v5917
      %v6686 = vsel %vm6174, %v6430, %v5918
      %v6687 = vsel %vm6175, %v6431, %v5919
      %v6688 = vsel %vm6176, %v6432, %v5920
      %v6689 = vsel %vm6177, %v6433, %v5921
      %v6690 = vsel %vm6178, %v6434, %v5922
      %v6691 = vsel %vm6179, %v6435, %v5923
      %v6692 = vsel %vm6180, %v6436, %v5924
      %v6693 = vsel %vm6181, %v6437, %v5925
      %v6694 = vsel %vm6182, %v6438, %v5926
      %v6695 = vsel %vm6183, %v6439, %v5927
      %v6696 = vsel %vm6184, %v6440, %v5928
      %v6697 = vsel %vm6185, %v6441, %v5929
      %v6698 = vsel %vm6186, %v6442, %v5930
      %v6699 = vsel %vm6187, %v6443, %v5931
      %v6700 = vsel %vm6188, %v6444, %v5932
      %v6701 = vsel %vm6189, %v6445, %v5933
      %v6702 = vsel %vm6190, %v6446, %v5934
      %v6703 = vsel %vm6191, %v6447, %v5935
      %v6704 = vsel %vm6192, %v6448, %v5936
      %v6705 = vsel %vm6193, %v6449, %v5937
      %v6706 = vsel %vm6194, %v6450, %v5938
      %v6707 = vsel %vm6195, %v6451, %v5939
      %v6708 = vsel %vm6196, %v6452, %v5940
      %v6709 = vsel %vm6197, %v6453, %v5941
      %v6710 = vsel %vm6198, %v6454, %v5942
      %v6711 = vsel %vm6199, %v6455, %v5943
      %v6712 = vsel %vm6200, %v6456, %v5944
      %v6713 = vsel %vm6201, %v6457, %v5945
      %v6714 = vsel %vm6202, %v6458, %v5946
      %v6715 = vsel %vm6203, %v6459, %v5947
      %v6716 = vsel %vm6204, %v6460, %v5948
      %v6717 = vsel %vm6205, %v6461, %v5949
      %v6718 = vsel %vm6206, %v6462, %v5950
      %v6719 = vsel %vm6207, %v6463, %v5951
      %v6720 = vsel %vm6208, %v6464, %v5952
      %v6721 = vsel %vm6209, %v6465, %v5953
      %v6722 = vsel %vm6210, %v6466, %v5954
      %v6723 = vsel %vm6211, %v6467, %v5955
      %v6724 = vsel %vm6212, %v6468, %v5956
      %v6725 = vsel %vm6213, %v6469, %v5957
      %v6726 = vsel %vm6214, %v6470, %v5958
      %v6727 = vsel %vm6215, %v6471, %v5959
      %v6728 = vsel %vm6216, %v6472, %v5960
      %v6729 = vsel %vm6217, %v6473, %v5961
      %v6730 = vsel %vm6218, %v6474, %v5962
      %v6731 = vsel %vm6219, %v6475, %v5963
      %v6732 = vsel %vm6220, %v6476, %v5964
      %v6733 = vsel %vm6221, %v6477, %v5965
      %v6734 = vsel %vm6222, %v6478, %v5966
      %v6735 = vsel %vm6223, %v6479, %v5967
      %v6736 = vsel %vm6224, %v6480, %v5968
      %v6737 = vsel %vm6225, %v6481, %v5969
      %v6738 = vsel %vm6226, %v6482, %v5970
      %v6739 = vsel %vm6227, %v6483, %v5971
      %v6740 = vsel %vm6228, %v6484, %v5972
      %v6741 = vsel %vm6229, %v6485, %v5973
      %v6742 = vsel %vm6230, %v6486, %v5974
      %v6743 = vsel %vm6231, %v6487, %v5975
      %v6744 = vsel %vm6232, %v6488, %v5976
      %v6745 = vsel %vm6233, %v6489, %v5977
      %v6746 = vsel %vm6234, %v6490, %v5978
      %v6747 = vsel %vm6235, %v6491, %v5979
      %v6748 = vsel %vm6236, %v6492, %v5980
      %v6749 = vsel %vm6237, %v6493, %v5981
      %v6750 = vsel %vm6238, %v6494, %v5982
      %v6751 = vsel %vm6239, %v6495, %v5983
      %v6752 = vsel %vm6240, %v6496, %v5984
      %v6753 = vsel %vm6241, %v6497, %v5985
      %v6754 = vsel %vm6242, %v6498, %v5986
      %v6755 = vsel %vm6243, %v6499, %v5987
      %v6756 = vsel %vm6244, %v6500, %v5988
      %v6757 = vsel %vm6245, %v6501, %v5989
      %v6758 = vsel %vm6246, %v6502, %v5990
      %v6759 = vsel %vm6247, %v6503, %v5991
      %v6760 = vsel %vm6248, %v6504, %v5992
      %v6761 = vsel %vm6249, %v6505, %v5993
      %v6762 = vsel %vm6250, %v6506, %v5994
      %v6763 = vsel %vm6251, %v6507, %v5995
      %v6764 = vsel %vm6252, %v6508, %v5996
      %v6765 = vsel %vm6253, %v6509, %v5997
      %v6766 = vsel %vm6254, %v6510, %v5998
      %v6767 = vsel %vm6255, %v6511, %v5999
      %v6768 = vsel %vm6256, %v6512, %v6000
      %v6769 = vsel %vm6257, %v6513, %v6001
      %v6770 = vsel %vm6258, %v6514, %v6002
      %v6771 = vsel %vm6259, %v6515, %v6003
      %v6772 = vsel %vm6260, %v6516, %v6004
      %v6773 = vsel %vm6261, %v6517, %v6005
      %v6774 = vsel %vm6262, %v6518, %v6006
      %v6775 = vsel %vm6263, %v6519, %v6007
      %v6776 = vsel %vm6264, %v6520, %v6008
      %v6777 = vsel %vm6265, %v6521, %v6009
      %v6778 = vsel %vm6266, %v6522, %v6010
      %v6779 = vsel %vm6267, %v6523, %v6011
      %v6780 = vsel %vm6268, %v6524, %v6012
      %v6781 = vsel %vm6269, %v6525, %v6013
      %v6782 = vsel %vm6270, %v6526, %v6014
      %v6783 = vsel %vm6271, %v6527, %v6015
      %v6784 = vsel %vm6272, %v6528, %v6016
      %v6785 = vsel %vm6273, %v6529, %v6017
      %v6786 = vsel %vm6274, %v6530, %v6018
      %v6787 = vsel %vm6275, %v6531, %v6019
      %v6788 = vsel %vm6276, %v6532, %v6020
      %v6789 = vsel %vm6277, %v6533, %v6021
      %v6790 = vsel %vm6278, %v6534, %v6022
      %v6791 = vsel %vm6279, %v6535, %v6023
      %v6792 = vsel %vm6280, %v6536, %v6024
      %v6793 = vsel %vm6281, %v6537, %v6025
      %v6794 = vsel %vm6282, %v6538, %v6026
      %v6795 = vsel %vm6283, %v6539, %v6027
      %v6796 = vsel %vm6284, %v6540, %v6028
      %v6797 = vsel %vm6285, %v6541, %v6029
      %v6798 = vsel %vm6286, %v6542, %v6030
      %v6799 = vsel %vm6287, %v6543, %v6031
      %v6800 = vsel %vm6288, %v6544, %v6032
      %v6801 = vsel %vm6289, %v6545, %v6033
      %v6802 = vsel %vm6290, %v6546, %v6034
      %v6803 = vsel %vm6291, %v6547, %v6035
      %v6804 = vsel %vm6292, %v6548, %v6036
      %v6805 = vsel %vm6293, %v6549, %v6037
      %v6806 = vsel %vm6294, %v6550, %v6038
      %v6807 = vsel %vm6295, %v6551, %v6039
      %v6808 = vsel %vm6296, %v6552, %v6040
      %v6809 = vsel %vm6297, %v6553, %v6041
      %v6810 = vsel %vm6298, %v6554, %v6042
      %v6811 = vsel %vm6299, %v6555, %v6043
      %v6812 = vsel %vm6300, %v6556, %v6044
      %v6813 = vsel %vm6301, %v6557, %v6045
      %v6814 = vsel %vm6302, %v6558, %v6046
      %v6815 = vsel %vm6303, %v6559, %v6047
      %v6816 = vsel %vm6304, %v6560, %v6048
      %v6817 = vsel %vm6305, %v6561, %v6049
      %v6818 = vsel %vm6306, %v6562, %v6050
      %v6819 = vsel %vm6307, %v6563, %v6051
      %v6820 = vsel %vm6308, %v6564, %v6052
      %v6821 = vsel %vm6309, %v6565, %v6053
      %v6822 = vsel %vm6310, %v6566, %v6054
      %v6823 = vsel %vm6311, %v6567, %v6055
      %v6824 = vsel %vm6312, %v6568, %v6056
      %v6825 = vsel %vm6313, %v6569, %v6057
      %v6826 = vsel %vm6314, %v6570, %v6058
      %v6827 = vsel %vm6315, %v6571, %v6059
      %v6828 = vsel %vm6316, %v6572, %v6060
      %v6829 = vsel %vm6317, %v6573, %v6061
      %v6830 = vsel %vm6318, %v6574, %v6062
      %v6831 = vsel %vm6319, %v6575, %v6063
      %v6832 = vsel %vm6320, %v6576, %v6064
      %v6833 = vsel %vm6321, %v6577, %v6065
      %v6834 = vsel %vm6322, %v6578, %v6066
      %v6835 = vsel %vm6323, %v6579, %v6067
      %v6836 = vsel %vm6324, %v6580, %v6068
      %v6837 = vsel %vm6325, %v6581, %v6069
      %v6838 = vsel %vm6326, %v6582, %v6070
      %v6839 = vsel %vm6327, %v6583, %v6071
      %v6840 = vsel %vm6328, %v6584, %v6072
      %v6841 = vsel %vm6329, %v6585, %v6073
      %v6842 = vsel %vm6330, %v6586, %v6074
      %v6843 = vsel %vm6331, %v6587, %v6075
      %v6844 = vsel %vm6332, %v6588, %v6076
      %v6845 = vsel %vm6333, %v6589, %v6077
      %v6846 = vadd.f32 %v6590, 1.0
      %v6847 = vadd.f32 %v6591, 1.0
      %v6848 = vadd.f32 %v6592, 1.0
      %v6849 = vadd.f32 %v6593, 1.0
      %v6850 = vadd.f32 %v6594, 1.0
      %v6851 = vadd.f32 %v6595, 1.0
      %v6852 = vadd.f32 %v6596, 1.0
      %v6853 = vadd.f32 %v6597, 1.0
      %v6854 = vadd.f32 %v6598, 1.0
      %v6855 = vadd.f32 %v6599, 1.0
      %v6856 = vadd.f32 %v6600, 1.0
      %v6857 = vadd.f32 %v6601, 1.0
      %v6858 = vadd.f32 %v6602, 1.0
      %v6859 = vadd.f32 %v6603, 1.0
      %v6860 = vadd.f32 %v6604, 1.0
      %v6861 = vadd.f32 %v6605, 1.0
      %v6862 = vadd.f32 %v6606, 1.0
      %v6863 = vadd.f32 %v6607, 1.0
      %v6864 = vadd.f32 %v6608, 1.0
      %v6865 = vadd.f32 %v6609, 1.0
      %v6866 = vadd.f32 %v6610, 1.0
      %v6867 = vadd.f32 %v6611, 1.0
      %v6868 = vadd.f32 %v6612, 1.0
      %v6869 = vadd.f32 %v6613, 1.0
      %v6870 = vadd.f32 %v6614, 1.0
      %v6871 = vadd.f32 %v6615, 1.0
      %v6872 = vadd.f32 %v6616, 1.0
      %v6873 = vadd.f32 %v6617, 1.0
      %v6874 = vadd.f32 %v6618, 1.0
      %v6875 = vadd.f32 %v6619, 1.0
      %v6876 = vadd.f32 %v6620, 1.0
      %v6877 = vadd.f32 %v6621, 1.0
      %v6878 = vadd.f32 %v6622, 1.0
      %v6879 = vadd.f32 %v6623, 1.0
      %v6880 = vadd.f32 %v6624, 1.0
      %v6881 = vadd.f32 %v6625, 1.0
      %v6882 = vadd.f32 %v6626, 1.0
      %v6883 = vadd.f32 %v6627, 1.0
      %v6884 = vadd.f32 %v6628, 1.0
      %v6885 = vadd.f32 %v6629, 1.0
      %v6886 = vadd.f32 %v6630, 1.0
      %v6887 = vadd.f32 %v6631, 1.0
      %v6888 = vadd.f32 %v6632, 1.0
      %v6889 = vadd.f32 %v6633, 1.0
      %v6890 = vadd.f32 %v6634, 1.0
      %v6891 = vadd.f32 %v6635, 1.0
      %v6892 = vadd.f32 %v6636, 1.0
      %v6893 = vadd.f32 %v6637, 1.0
      %v6894 = vadd.f32 %v6638, 1.0
      %v6895 = vadd.f32 %v6639, 1.0
      %v6896 = vadd.f32 %v6640, 1.0
      %v6897 = vadd.f32 %v6641, 1.0
      %v6898 = vadd.f32 %v6642, 1.0
      %v6899 = vadd.f32 %v6643, 1.0
      %v6900 = vadd.f32 %v6644, 1.0
      %v6901 = vadd.f32 %v6645, 1.0
      %v6902 = vadd.f32 %v6646, 1.0
      %v6903 = vadd.f32 %v6647, 1.0
      %v6904 = vadd.f32 %v6648, 1.0
      %v6905 = vadd.f32 %v6649, 1.0
      %v6906 = vadd.f32 %v6650, 1.0
      %v6907 = vadd.f32 %v6651, 1.0
      %v6908 = vadd.f32 %v6652, 1.0
      %v6909 = vadd.f32 %v6653, 1.0
      %v6910 = vadd.f32 %v6654, 1.0
      %v6911 = vadd.f32 %v6655, 1.0
      %v6912 = vadd.f32 %v6656, 1.0
      %v6913 = vadd.f32 %v6657, 1.0
      %v6914 = vadd.f32 %v6658, 1.0
      %v6915 = vadd.f32 %v6659, 1.0
      %v6916 = vadd.f32 %v6660, 1.0
      %v6917 = vadd.f32 %v6661, 1.0
      %v6918 = vadd.f32 %v6662, 1.0
      %v6919 = vadd.f32 %v6663, 1.0
      %v6920 = vadd.f32 %v6664, 1.0
      %v6921 = vadd.f32 %v6665, 1.0
      %v6922 = vadd.f32 %v6666, 1.0
      %v6923 = vadd.f32 %v6667, 1.0
      %v6924 = vadd.f32 %v6668, 1.0
      %v6925 = vadd.f32 %v6669, 1.0
      %v6926 = vadd.f32 %v6670, 1.0
      %v6927 = vadd.f32 %v6671, 1.0
      %v6928 = vadd.f32 %v6672, 1.0
      %v6929 = vadd.f32 %v6673, 1.0
      %v6930 = vadd.f32 %v6674, 1.0
      %v6931 = vadd.f32 %v6675, 1.0
      %v6932 = vadd.f32 %v6676, 1.0
      %v6933 = vadd.f32 %v6677, 1.0
      %v6934 = vadd.f32 %v6678, 1.0
      %v6935 = vadd.f32 %v6679, 1.0
      %v6936 = vadd.f32 %v6680, 1.0
      %v6937 = vadd.f32 %v6681, 1.0
      %v6938 = vadd.f32 %v6682, 1.0
      %v6939 = vadd.f32 %v6683, 1.0
      %v6940 = vadd.f32 %v6684, 1.0
      %v6941 = vadd.f32 %v6685, 1.0
      %v6942 = vadd.f32 %v6686, 1.0
      %v6943 = vadd.f32 %v6687, 1.0
      %v6944 = vadd.f32 %v6688, 1.0
      %v6945 = vadd.f32 %v6689, 1.0
      %v6946 = vadd.f32 %v6690, 1.0
      %v6947 = vadd.f32 %v6691, 1.0
      %v6948 = vadd.f32 %v6692, 1.0
      %v6949 = vadd.f32 %v6693, 1.0
      %v6950 = vadd.f32 %v6694, 1.0
      %v6951 = vadd.f32 %v6695, 1.0
      %v6952 = vadd.f32 %v6696, 1.0
      %v6953 = vadd.f32 %v6697, 1.0
      %v6954 = vadd.f32 %v6698, 1.0
      %v6955 = vadd.f32 %v6699, 1.0
      %v6956 = vadd.f32 %v6700, 1.0
      %v6957 = vadd.f32 %v6701, 1.0
      %v6958 = vadd.f32 %v6702, 1.0
      %v6959 = vadd.f32 %v6703, 1.0
      %v6960 = vadd.f32 %v6704, 1.0
      %v6961 = vadd.f32 %v6705, 1.0
      %v6962 = vadd.f32 %v6706, 1.0
      %v6963 = vadd.f32 %v6707, 1.0
      %v6964 = vadd.f32 %v6708, 1.0
      %v6965 = vadd.f32 %v6709, 1.0
      %v6966 = vadd.f32 %v6710, 1.0
      %v6967 = vadd.f32 %v6711, 1.0
      %v6968 = vadd.f32 %v6712, 1.0
      %v6969 = vadd.f32 %v6713, 1.0
      %v6970 = vadd.f32 %v6714, 1.0
      %v6971 = vadd.f32 %v6715, 1.0
      %v6972 = vadd.f32 %v6716, 1.0
      %v6973 = vadd.f32 %v6717, 1.0
      %v6974 = vadd.f32 %v6718, 1.0
      %v6975 = vadd.f32 %v6719, 1.0
      %v6976 = vadd.f32 %v6720, 1.0
      %v6977 = vadd.f32 %v6721, 1.0
      %v6978 = vadd.f32 %v6722, 1.0
      %v6979 = vadd.f32 %v6723, 1.0
      %v6980 = vadd.f32 %v6724, 1.0
      %v6981 = vadd.f32 %v6725, 1.0
      %v6982 = vadd.f32 %v6726, 1.0
      %v6983 = vadd.f32 %v6727, 1.0
      %v6984 = vadd.f32 %v6728, 1.0
      %v6985 = vadd.f32 %v6729, 1.0
      %v6986 = vadd.f32 %v6730, 1.0
      %v6987 = vadd.f32 %v6731, 1.0
      %v6988 = vadd.f32 %v6732, 1.0
      %v6989 = vadd.f32 %v6733, 1.0
      %v6990 = vadd.f32 %v6734, 1.0
      %v6991 = vadd.f32 %v6735, 1.0
      %v6992 = vadd.f32 %v6736, 1.0
      %v6993 = vadd.f32 %v6737, 1.0
      %v6994 = vadd.f32 %v6738, 1.0
      %v6995 = vadd.f32 %v6739, 1.0
      %v6996 = vadd.f32 %v6740, 1.0
      %v6997 = vadd.f32 %v6741, 1.0
      %v6998 = vadd.f32 %v6742, 1.0
      %v6999 = vadd.f32 %v6743, 1.0
      %v7000 = vadd.f32 %v6744, 1.0
      %v7001 = vadd.f32 %v6745, 1.0
      %v7002 = vadd.f32 %v6746, 1.0
      %v7003 = vadd.f32 %v6747, 1.0
      %v7004 = vadd.f32 %v6748, 1.0
      %v7005 = vadd.f32 %v6749, 1.0
      %v7006 = vadd.f32 %v6750, 1.0
      %v7007 = vadd.f32 %v6751, 1.0
      %v7008 = vadd.f32 %v6752, 1.0
      %v7009 = vadd.f32 %v6753, 1.0
      %v7010 = vadd.f32 %v6754, 1.0
      %v7011 = vadd.f32 %v6755, 1.0
      %v7012 = vadd.f32 %v6756, 1.0
      %v7013 = vadd.f32 %v6757, 1.0
      %v7014 = vadd.f32 %v6758, 1.0
      %v7015 = vadd.f32 %v6759, 1.0
      %v7016 = vadd.f32 %v6760, 1.0
      %v7017 = vadd.f32 %v6761, 1.0
      %v7018 = vadd.f32 %v6762, 1.0
      %v7019 = vadd.f32 %v6763, 1.0
      %v7020 = vadd.f32 %v6764, 1.0
      %v7021 = vadd.f32 %v6765, 1.0
      %v7022 = vadd.f32 %v6766, 1.0
      %v7023 = vadd.f32 %v6767, 1.0
      %v7024 = vadd.f32 %v6768, 1.0
      %v7025 = vadd.f32 %v6769, 1.0
      %v7026 = vadd.f32 %v6770, 1.0
      %v7027 = vadd.f32 %v6771, 1.0
      %v7028 = vadd.f32 %v6772, 1.0
      %v7029 = vadd.f32 %v6773, 1.0
      %v7030 = vadd.f32 %v6774, 1.0
      %v7031 = vadd.f32 %v6775, 1.0
      %v7032 = vadd.f32 %v6776, 1.0
      %v7033 = vadd.f32 %v6777, 1.0
      %v7034 = vadd.f32 %v6778, 1.0
      %v7035 = vadd.f32 %v6779, 1.0
      %v7036 = vadd.f32 %v6780, 1.0
      %v7037 = vadd.f32 %v6781, 1.0
      %v7038 = vadd.f32 %v6782, 1.0
      %v7039 = vadd.f32 %v6783, 1.0
      %v7040 = vadd.f32 %v6784, 1.0
      %v7041 = vadd.f32 %v6785, 1.0
      %v7042 = vadd.f32 %v6786, 1.0
      %v7043 = vadd.f32 %v6787, 1.0
      %v7044 = vadd.f32 %v6788, 1.0
      %v7045 = vadd.f32 %v6789, 1.0
      %v7046 = vadd.f32 %v6790, 1.0
      %v7047 = vadd.f32 %v6791, 1.0
      %v7048 = vadd.f32 %v6792, 1.0
      %v7049 = vadd.f32 %v6793, 1.0
      %v7050 = vadd.f32 %v6794, 1.0
      %v7051 = vadd.f32 %v6795, 1.0
      %v7052 = vadd.f32 %v6796, 1.0
      %v7053 = vadd.f32 %v6797, 1.0
      %v7054 = vadd.f32 %v6798, 1.0
      %v7055 = vadd.f32 %v6799, 1.0
      %v7056 = vadd.f32 %v6800, 1.0
      %v7057 = vadd.f32 %v6801, 1.0
      %v7058 = vadd.f32 %v6802, 1.0
      %v7059 = vadd.f32 %v6803, 1.0
      %v7060 = vadd.f32 %v6804, 1.0
      %v7061 = vadd.f32 %v6805, 1.0
      %v7062 = vadd.f32 %v6806, 1.0
      %v7063 = vadd.f32 %v6807, 1.0
      %v7064 = vadd.f32 %v6808, 1.0
      %v7065 = vadd.f32 %v6809, 1.0
      %v7066 = vadd.f32 %v6810, 1.0
      %v7067 = vadd.f32 %v6811, 1.0
      %v7068 = vadd.f32 %v6812, 1.0
      %v7069 = vadd.f32 %v6813, 1.0
      %v7070 = vadd.f32 %v6814, 1.0
      %v7071 = vadd.f32 %v6815, 1.0
      %v7072 = vadd.f32 %v6816, 1.0
      %v7073 = vadd.f32 %v6817, 1.0
      %v7074 = vadd.f32 %v6818, 1.0
      %v7075 = vadd.f32 %v6819, 1.0
      %v7076 = vadd.f32 %v6820, 1.0
      %v7077 = vadd.f32 %v6821, 1.0
      %v7078 = vadd.f32 %v6822, 1.0
      %v7079 = vadd.f32 %v6823, 1.0
      %v7080 = vadd.f32 %v6824, 1.0
      %v7081 = vadd.f32 %v6825, 1.0
      %v7082 = vadd.f32 %v6826, 1.0
      %v7083 = vadd.f32 %v6827, 1.0
      %v7084 = vadd.f32 %v6828, 1.0
      %v7085 = vadd.f32 %v6829, 1.0
      %v7086 = vadd.f32 %v6830, 1.0
      %v7087 = vadd.f32 %v6831, 1.0
      %v7088 = vadd.f32 %v6832, 1.0
      %v7089 = vadd.f32 %v6833, 1.0
      %v7090 = vadd.f32 %v6834, 1.0
      %v7091 = vadd.f32 %v6835, 1.0
      %v7092 = vadd.f32 %v6836, 1.0
      %v7093 = vadd.f32 %v6837, 1.0
      %v7094 = vadd.f32 %v6838, 1.0
      %v7095 = vadd.f32 %v6839, 1.0
      %v7096 = vadd.f32 %v6840, 1.0
      %v7097 = vadd.f32 %v6841, 1.0
      %v7098 = vadd.f32 %v6842, 1.0
      %v7099 = vadd.f32 %v6843, 1.0
      %v7100 = vadd.f32 %v6844, 1.0
      %v7101 = vadd.f32 %v6845, 1.0
      %v7102 = vmul.f32 %v702, %v6846
      %v7103 = vmul.f32 %v703, %v6847
      %v7104 = vmul.f32 %v704, %v6848
      %v7105 = vmul.f32 %v705, %v6849
      %v7106 = vmul.f32 %v706, %v6850
      %v7107 = vmul.f32 %v707, %v6851
      %v7108 = vmul.f32 %v708, %v6852
      %v7109 = vmul.f32 %v709, %v6853
      %v7110 = vmul.f32 %v710, %v6854
      %v7111 = vmul.f32 %v711, %v6855
      %v7112 = vmul.f32 %v712, %v6856
      %v7113 = vmul.f32 %v713, %v6857
      %v7114 = vmul.f32 %v714, %v6858
      %v7115 = vmul.f32 %v715, %v6859
      %v7116 = vmul.f32 %v716, %v6860
      %v7117 = vmul.f32 %v717, %v6861
      %v7118 = vmul.f32 %v718, %v6862
      %v7119 = vmul.f32 %v719, %v6863
      %v7120 = vmul.f32 %v720, %v6864
      %v7121 = vmul.f32 %v721, %v6865
      %v7122 = vmul.f32 %v722, %v6866
      %v7123 = vmul.f32 %v723, %v6867
      %v7124 = vmul.f32 %v724, %v6868
      %v7125 = vmul.f32 %v725, %v6869
      %v7126 = vmul.f32 %v726, %v6870
      %v7127 = vmul.f32 %v727, %v6871
      %v7128 = vmul.f32 %v728, %v6872
      %v7129 = vmul.f32 %v729, %v6873
      %v7130 = vmul.f32 %v730, %v6874
      %v7131 = vmul.f32 %v731, %v6875
      %v7132 = vmul.f32 %v732, %v6876
      %v7133 = vmul.f32 %v733, %v6877
      %v7134 = vmul.f32 %v734, %v6878
      %v7135 = vmul.f32 %v735, %v6879
      %v7136 = vmul.f32 %v736, %v6880
      %v7137 = vmul.f32 %v737, %v6881
      %v7138 = vmul.f32 %v738, %v6882
      %v7139 = vmul.f32 %v739, %v6883
      %v7140 = vmul.f32 %v740, %v6884
      %v7141 = vmul.f32 %v741, %v6885
      %v7142 = vmul.f32 %v742, %v6886
      %v7143 = vmul.f32 %v743, %v6887
      %v7144 = vmul.f32 %v744, %v6888
      %v7145 = vmul.f32 %v745, %v6889
      %v7146 = vmul.f32 %v746, %v6890
      %v7147 = vmul.f32 %v747, %v6891
      %v7148 = vmul.f32 %v748, %v6892
      %v7149 = vmul.f32 %v749, %v6893
      %v7150 = vmul.f32 %v750, %v6894
      %v7151 = vmul.f32 %v751, %v6895
      %v7152 = vmul.f32 %v752, %v6896
      %v7153 = vmul.f32 %v753, %v6897
      %v7154 = vmul.f32 %v754, %v6898
      %v7155 = vmul.f32 %v755, %v6899
      %v7156 = vmul.f32 %v756, %v6900
      %v7157 = vmul.f32 %v757, %v6901
      %v7158 = vmul.f32 %v758, %v6902
      %v7159 = vmul.f32 %v759, %v6903
      %v7160 = vmul.f32 %v760, %v6904
      %v7161 = vmul.f32 %v761, %v6905
      %v7162 = vmul.f32 %v762, %v6906
      %v7163 = vmul.f32 %v763, %v6907
      %v7164 = vmul.f32 %v764, %v6908
      %v7165 = vmul.f32 %v765, %v6909
      %v7166 = vmul.f32 %v766, %v6910
      %v7167 = vmul.f32 %v767, %v6911
      %v7168 = vmul.f32 %v768, %v6912
      %v7169 = vmul.f32 %v769, %v6913
      %v7170 = vmul.f32 %v770, %v6914
      %v7171 = vmul.f32 %v771, %v6915
      %v7172 = vmul.f32 %v772, %v6916
      %v7173 = vmul.f32 %v773, %v6917
      %v7174 = vmul.f32 %v774, %v6918
      %v7175 = vmul.f32 %v775, %v6919
      %v7176 = vmul.f32 %v776, %v6920
      %v7177 = vmul.f32 %v777, %v6921
      %v7178 = vmul.f32 %v778, %v6922
      %v7179 = vmul.f32 %v779, %v6923
      %v7180 = vmul.f32 %v780, %v6924
      %v7181 = vmul.f32 %v781, %v6925
      %v7182 = vmul.f32 %v782, %v6926
      %v7183 = vmul.f32 %v783, %v6927
      %v7184 = vmul.f32 %v784, %v6928
      %v7185 = vmul.f32 %v785, %v6929
      %v7186 = vmul.f32 %v786, %v6930
      %v7187 = vmul.f32 %v787, %v6931
      %v7188 = vmul.f32 %v788, %v6932
      %v7189 = vmul.f32 %v789, %v6933
      %v7190 = vmul.f32 %v790, %v6934
      %v7191 = vmul.f32 %v791, %v6935
      %v7192 = vmul.f32 %v792, %v6936
      %v7193 = vmul.f32 %v793, %v6937
      %v7194 = vmul.f32 %v794, %v6938
      %v7195 = vmul.f32 %v795, %v6939
      %v7196 = vmul.f32 %v796, %v6940
      %v7197 = vmul.f32 %v797, %v6941
      %v7198 = vmul.f32 %v798, %v6942
      %v7199 = vmul.f32 %v799, %v6943
      %v7200 = vmul.f32 %v800, %v6944
      %v7201 = vmul.f32 %v801, %v6945
      %v7202 = vmul.f32 %v802, %v6946
      %v7203 = vmul.f32 %v803, %v6947
      %v7204 = vmul.f32 %v804, %v6948
      %v7205 = vmul.f32 %v805, %v6949
      %v7206 = vmul.f32 %v806, %v6950
      %v7207 = vmul.f32 %v807, %v6951
      %v7208 = vmul.f32 %v808, %v6952
      %v7209 = vmul.f32 %v809, %v6953
      %v7210 = vmul.f32 %v810, %v6954
      %v7211 = vmul.f32 %v811, %v6955
      %v7212 = vmul.f32 %v812, %v6956
      %v7213 = vmul.f32 %v813, %v6957
      %v7214 = vmul.f32 %v814, %v6958
      %v7215 = vmul.f32 %v815, %v6959
      %v7216 = vmul.f32 %v816, %v6960
      %v7217 = vmul.f32 %v817, %v6961
      %v7218 = vmul.f32 %v818, %v6962
      %v7219 = vmul.f32 %v819, %v6963
      %v7220 = vmul.f32 %v820, %v6964
      %v7221 = vmul.f32 %v821, %v6965
      %v7222 = vmul.f32 %v822, %v6966
      %v7223 = vmul.f32 %v823, %v6967
      %v7224 = vmul.f32 %v824, %v6968
      %v7225 = vmul.f32 %v825, %v6969
      %v7226 = vmul.f32 %v826, %v6970
      %v7227 = vmul.f32 %v827, %v6971
      %v7228 = vmul.f32 %v828, %v6972
      %v7229 = vmul.f32 %v829, %v6973
      %v7230 = vmul.f32 %v830, %v6974
      %v7231 = vmul.f32 %v831, %v6975
      %v7232 = vmul.f32 %v832, %v6976
      %v7233 = vmul.f32 %v833, %v6977
      %v7234 = vmul.f32 %v834, %v6978
      %v7235 = vmul.f32 %v835, %v6979
      %v7236 = vmul.f32 %v836, %v6980
      %v7237 = vmul.f32 %v837, %v6981
      %v7238 = vmul.f32 %v838, %v6982
      %v7239 = vmul.f32 %v839, %v6983
      %v7240 = vmul.f32 %v840, %v6984
      %v7241 = vmul.f32 %v841, %v6985
      %v7242 = vmul.f32 %v842, %v6986
      %v7243 = vmul.f32 %v843, %v6987
      %v7244 = vmul.f32 %v844, %v6988
      %v7245 = vmul.f32 %v845, %v6989
      %v7246 = vmul.f32 %v846, %v6990
      %v7247 = vmul.f32 %v847, %v6991
      %v7248 = vmul.f32 %v848, %v6992
      %v7249 = vmul.f32 %v849, %v6993
      %v7250 = vmul.f32 %v850, %v6994
      %v7251 = vmul.f32 %v851, %v6995
      %v7252 = vmul.f32 %v852, %v6996
      %v7253 = vmul.f32 %v853, %v6997
      %v7254 = vmul.f32 %v854, %v6998
      %v7255 = vmul.f32 %v855, %v6999
      %v7256 = vmul.f32 %v856, %v7000
      %v7257 = vmul.f32 %v857, %v7001
      %v7258 = vmul.f32 %v858, %v7002
      %v7259 = vmul.f32 %v859, %v7003
      %v7260 = vmul.f32 %v860, %v7004
      %v7261 = vmul.f32 %v861, %v7005
      %v7262 = vmul.f32 %v862, %v7006
      %v7263 = vmul.f32 %v863, %v7007
      %v7264 = vmul.f32 %v864, %v7008
      %v7265 = vmul.f32 %v865, %v7009
      %v7266 = vmul.f32 %v866, %v7010
      %v7267 = vmul.f32 %v867, %v7011
      %v7268 = vmul.f32 %v868, %v7012
      %v7269 = vmul.f32 %v869, %v7013
      %v7270 = vmul.f32 %v870, %v7014
      %v7271 = vmul.f32 %v871, %v7015
      %v7272 = vmul.f32 %v872, %v7016
      %v7273 = vmul.f32 %v873, %v7017
      %v7274 = vmul.f32 %v874, %v7018
      %v7275 = vmul.f32 %v875, %v7019
      %v7276 = vmul.f32 %v876, %v7020
      %v7277 = vmul.f32 %v877, %v7021
      %v7278 = vmul.f32 %v878, %v7022
      %v7279 = vmul.f32 %v879, %v7023
      %v7280 = vmul.f32 %v880, %v7024
      %v7281 = vmul.f32 %v881, %v7025
      %v7282 = vmul.f32 %v882, %v7026
      %v7283 = vmul.f32 %v883, %v7027
      %v7284 = vmul.f32 %v884, %v7028
      %v7285 = vmul.f32 %v885, %v7029
      %v7286 = vmul.f32 %v886, %v7030
      %v7287 = vmul.f32 %v887, %v7031
      %v7288 = vmul.f32 %v888, %v7032
      %v7289 = vmul.f32 %v889, %v7033
      %v7290 = vmul.f32 %v890, %v7034
      %v7291 = vmul.f32 %v891, %v7035
      %v7292 = vmul.f32 %v892, %v7036
      %v7293 = vmul.f32 %v893, %v7037
      %v7294 = vmul.f32 %v894, %v7038
      %v7295 = vmul.f32 %v895, %v7039
      %v7296 = vmul.f32 %v896, %v7040
      %v7297 = vmul.f32 %v897, %v7041
      %v7298 = vmul.f32 %v898, %v7042
      %v7299 = vmul.f32 %v899, %v7043
      %v7300 = vmul.f32 %v900, %v7044
      %v7301 = vmul.f32 %v901, %v7045
      %v7302 = vmul.f32 %v902, %v7046
      %v7303 = vmul.f32 %v903, %v7047
      %v7304 = vmul.f32 %v904, %v7048
      %v7305 = vmul.f32 %v905, %v7049
      %v7306 = vmul.f32 %v906, %v7050
      %v7307 = vmul.f32 %v907, %v7051
      %v7308 = vmul.f32 %v908, %v7052
      %v7309 = vmul.f32 %v909, %v7053
      %v7310 = vmul.f32 %v910, %v7054
      %v7311 = vmul.f32 %v911, %v7055
      %v7312 = vmul.f32 %v912, %v7056
      %v7313 = vmul.f32 %v913, %v7057
      %v7314 = vmul.f32 %v914, %v7058
      %v7315 = vmul.f32 %v915, %v7059
      %v7316 = vmul.f32 %v916, %v7060
      %v7317 = vmul.f32 %v917, %v7061
      %v7318 = vmul.f32 %v918, %v7062
      %v7319 = vmul.f32 %v919, %v7063
      %v7320 = vmul.f32 %v920, %v7064
      %v7321 = vmul.f32 %v921, %v7065
      %v7322 = vmul.f32 %v922, %v7066
      %v7323 = vmul.f32 %v923, %v7067
      %v7324 = vmul.f32 %v924, %v7068
      %v7325 = vmul.f32 %v925, %v7069
      %v7326 = vmul.f32 %v926, %v7070
      %v7327 = vmul.f32 %v927, %v7071
      %v7328 = vmul.f32 %v928, %v7072
      %v7329 = vmul.f32 %v929, %v7073
      %v7330 = vmul.f32 %v930, %v7074
      %v7331 = vmul.f32 %v931, %v7075
      %v7332 = vmul.f32 %v932, %v7076
      %v7333 = vmul.f32 %v933, %v7077
      %v7334 = vmul.f32 %v934, %v7078
      %v7335 = vmul.f32 %v935, %v7079
      %v7336 = vmul.f32 %v936, %v7080
      %v7337 = vmul.f32 %v937, %v7081
      %v7338 = vmul.f32 %v938, %v7082
      %v7339 = vmul.f32 %v939, %v7083
      %v7340 = vmul.f32 %v940, %v7084
      %v7341 = vmul.f32 %v941, %v7085
      %v7342 = vmul.f32 %v942, %v7086
      %v7343 = vmul.f32 %v943, %v7087
      %v7344 = vmul.f32 %v944, %v7088
      %v7345 = vmul.f32 %v945, %v7089
      %v7346 = vmul.f32 %v946, %v7090
      %v7347 = vmul.f32 %v947, %v7091
      %v7348 = vmul.f32 %v948, %v7092
      %v7349 = vmul.f32 %v949, %v7093
      %v7350 = vmul.f32 %v950, %v7094
      %v7351 = vmul.f32 %v951, %v7095
      %v7352 = vmul.f32 %v952, %v7096
      %v7353 = vmul.f32 %v953, %v7097
      %v7354 = vmul.f32 %v954, %v7098
      %v7355 = vmul.f32 %v955, %v7099
      %v7356 = vmul.f32 %v956, %v7100
      %v7357 = vmul.f32 %v957, %v7101
      %v7359 = vperm.slane %v372, 0
      %v7360 = vperm.slane %v372, 1
      %v7363 = vmul.f32 %v7102, %v7359
      %v7364 = vmul.f32 %v7103, %v7360
      %v7365 = vmul.f32 %v7104, %v7359
      %v7366 = vmul.f32 %v7105, %v7360
      %v7367 = vmul.f32 %v7106, %v7359
      %v7368 = vmul.f32 %v7107, %v7360
      %v7369 = vmul.f32 %v7108, %v7359
      %v7370 = vmul.f32 %v7109, %v7360
      %v7371 = vmul.f32 %v7110, %v7359
      %v7372 = vmul.f32 %v7111, %v7360
      %v7373 = vmul.f32 %v7112, %v7359
      %v7374 = vmul.f32 %v7113, %v7360
      %v7375 = vmul.f32 %v7114, %v7359
      %v7376 = vmul.f32 %v7115, %v7360
      %v7377 = vmul.f32 %v7116, %v7359
      %v7378 = vmul.f32 %v7117, %v7360
      %v7379 = vmul.f32 %v7118, %v7359
      %v7380 = vmul.f32 %v7119, %v7360
      %v7381 = vmul.f32 %v7120, %v7359
      %v7382 = vmul.f32 %v7121, %v7360
      %v7383 = vmul.f32 %v7122, %v7359
      %v7384 = vmul.f32 %v7123, %v7360
      %v7385 = vmul.f32 %v7124, %v7359
      %v7386 = vmul.f32 %v7125, %v7360
      %v7387 = vmul.f32 %v7126, %v7359
      %v7388 = vmul.f32 %v7127, %v7360
      %v7389 = vmul.f32 %v7128, %v7359
      %v7390 = vmul.f32 %v7129, %v7360
      %v7391 = vmul.f32 %v7130, %v7359
      %v7392 = vmul.f32 %v7131, %v7360
      %v7393 = vmul.f32 %v7132, %v7359
      %v7394 = vmul.f32 %v7133, %v7360
      %v7395 = vmul.f32 %v7134, %v7359
      %v7396 = vmul.f32 %v7135, %v7360
      %v7397 = vmul.f32 %v7136, %v7359
      %v7398 = vmul.f32 %v7137, %v7360
      %v7399 = vmul.f32 %v7138, %v7359
      %v7400 = vmul.f32 %v7139, %v7360
      %v7401 = vmul.f32 %v7140, %v7359
      %v7402 = vmul.f32 %v7141, %v7360
      %v7403 = vmul.f32 %v7142, %v7359
      %v7404 = vmul.f32 %v7143, %v7360
      %v7405 = vmul.f32 %v7144, %v7359
      %v7406 = vmul.f32 %v7145, %v7360
      %v7407 = vmul.f32 %v7146, %v7359
      %v7408 = vmul.f32 %v7147, %v7360
      %v7409 = vmul.f32 %v7148, %v7359
      %v7410 = vmul.f32 %v7149, %v7360
      %v7411 = vmul.f32 %v7150, %v7359
      %v7412 = vmul.f32 %v7151, %v7360
      %v7413 = vmul.f32 %v7152, %v7359
      %v7414 = vmul.f32 %v7153, %v7360
      %v7415 = vmul.f32 %v7154, %v7359
      %v7416 = vmul.f32 %v7155, %v7360
      %v7417 = vmul.f32 %v7156, %v7359
      %v7418 = vmul.f32 %v7157, %v7360
      %v7419 = vmul.f32 %v7158, %v7359
      %v7420 = vmul.f32 %v7159, %v7360
      %v7421 = vmul.f32 %v7160, %v7359
      %v7422 = vmul.f32 %v7161, %v7360
      %v7423 = vmul.f32 %v7162, %v7359
      %v7424 = vmul.f32 %v7163, %v7360
      %v7425 = vmul.f32 %v7164, %v7359
      %v7426 = vmul.f32 %v7165, %v7360
      %v7427 = vmul.f32 %v7166, %v7359
      %v7428 = vmul.f32 %v7167, %v7360
      %v7429 = vmul.f32 %v7168, %v7359
      %v7430 = vmul.f32 %v7169, %v7360
      %v7431 = vmul.f32 %v7170, %v7359
      %v7432 = vmul.f32 %v7171, %v7360
      %v7433 = vmul.f32 %v7172, %v7359
      %v7434 = vmul.f32 %v7173, %v7360
      %v7435 = vmul.f32 %v7174, %v7359
      %v7436 = vmul.f32 %v7175, %v7360
      %v7437 = vmul.f32 %v7176, %v7359
      %v7438 = vmul.f32 %v7177, %v7360
      %v7439 = vmul.f32 %v7178, %v7359
      %v7440 = vmul.f32 %v7179, %v7360
      %v7441 = vmul.f32 %v7180, %v7359
      %v7442 = vmul.f32 %v7181, %v7360
      %v7443 = vmul.f32 %v7182, %v7359
      %v7444 = vmul.f32 %v7183, %v7360
      %v7445 = vmul.f32 %v7184, %v7359
      %v7446 = vmul.f32 %v7185, %v7360
      %v7447 = vmul.f32 %v7186, %v7359
      %v7448 = vmul.f32 %v7187, %v7360
      %v7449 = vmul.f32 %v7188, %v7359
      %v7450 = vmul.f32 %v7189, %v7360
      %v7451 = vmul.f32 %v7190, %v7359
      %v7452 = vmul.f32 %v7191, %v7360
      %v7453 = vmul.f32 %v7192, %v7359
      %v7454 = vmul.f32 %v7193, %v7360
      %v7455 = vmul.f32 %v7194, %v7359
      %v7456 = vmul.f32 %v7195, %v7360
      %v7457 = vmul.f32 %v7196, %v7359
      %v7458 = vmul.f32 %v7197, %v7360
      %v7459 = vmul.f32 %v7198, %v7359
      %v7460 = vmul.f32 %v7199, %v7360
      %v7461 = vmul.f32 %v7200, %v7359
      %v7462 = vmul.f32 %v7201, %v7360
      %v7463 = vmul.f32 %v7202, %v7359
      %v7464 = vmul.f32 %v7203, %v7360
      %v7465 = vmul.f32 %v7204, %v7359
      %v7466 = vmul.f32 %v7205, %v7360
      %v7467 = vmul.f32 %v7206, %v7359
      %v7468 = vmul.f32 %v7207, %v7360
      %v7469 = vmul.f32 %v7208, %v7359
      %v7470 = vmul.f32 %v7209, %v7360
      %v7471 = vmul.f32 %v7210, %v7359
      %v7472 = vmul.f32 %v7211, %v7360
      %v7473 = vmul.f32 %v7212, %v7359
      %v7474 = vmul.f32 %v7213, %v7360
      %v7475 = vmul.f32 %v7214, %v7359
      %v7476 = vmul.f32 %v7215, %v7360
      %v7477 = vmul.f32 %v7216, %v7359
      %v7478 = vmul.f32 %v7217, %v7360
      %v7479 = vmul.f32 %v7218, %v7359
      %v7480 = vmul.f32 %v7219, %v7360
      %v7481 = vmul.f32 %v7220, %v7359
      %v7482 = vmul.f32 %v7221, %v7360
      %v7483 = vmul.f32 %v7222, %v7359
      %v7484 = vmul.f32 %v7223, %v7360
      %v7485 = vmul.f32 %v7224, %v7359
      %v7486 = vmul.f32 %v7225, %v7360
      %v7487 = vmul.f32 %v7226, %v7359
      %v7488 = vmul.f32 %v7227, %v7360
      %v7489 = vmul.f32 %v7228, %v7359
      %v7490 = vmul.f32 %v7229, %v7360
      %v7491 = vmul.f32 %v7230, %v7359
      %v7492 = vmul.f32 %v7231, %v7360
      %v7493 = vmul.f32 %v7232, %v7359
      %v7494 = vmul.f32 %v7233, %v7360
      %v7495 = vmul.f32 %v7234, %v7359
      %v7496 = vmul.f32 %v7235, %v7360
      %v7497 = vmul.f32 %v7236, %v7359
      %v7498 = vmul.f32 %v7237, %v7360
      %v7499 = vmul.f32 %v7238, %v7359
      %v7500 = vmul.f32 %v7239, %v7360
      %v7501 = vmul.f32 %v7240, %v7359
      %v7502 = vmul.f32 %v7241, %v7360
      %v7503 = vmul.f32 %v7242, %v7359
      %v7504 = vmul.f32 %v7243, %v7360
      %v7505 = vmul.f32 %v7244, %v7359
      %v7506 = vmul.f32 %v7245, %v7360
      %v7507 = vmul.f32 %v7246, %v7359
      %v7508 = vmul.f32 %v7247, %v7360
      %v7509 = vmul.f32 %v7248, %v7359
      %v7510 = vmul.f32 %v7249, %v7360
      %v7511 = vmul.f32 %v7250, %v7359
      %v7512 = vmul.f32 %v7251, %v7360
      %v7513 = vmul.f32 %v7252, %v7359
      %v7514 = vmul.f32 %v7253, %v7360
      %v7515 = vmul.f32 %v7254, %v7359
      %v7516 = vmul.f32 %v7255, %v7360
      %v7517 = vmul.f32 %v7256, %v7359
      %v7518 = vmul.f32 %v7257, %v7360
      %v7519 = vmul.f32 %v7258, %v7359
      %v7520 = vmul.f32 %v7259, %v7360
      %v7521 = vmul.f32 %v7260, %v7359
      %v7522 = vmul.f32 %v7261, %v7360
      %v7523 = vmul.f32 %v7262, %v7359
      %v7524 = vmul.f32 %v7263, %v7360
      %v7525 = vmul.f32 %v7264, %v7359
      %v7526 = vmul.f32 %v7265, %v7360
      %v7527 = vmul.f32 %v7266, %v7359
      %v7528 = vmul.f32 %v7267, %v7360
      %v7529 = vmul.f32 %v7268, %v7359
      %v7530 = vmul.f32 %v7269, %v7360
      %v7531 = vmul.f32 %v7270, %v7359
      %v7532 = vmul.f32 %v7271, %v7360
      %v7533 = vmul.f32 %v7272, %v7359
      %v7534 = vmul.f32 %v7273, %v7360
      %v7535 = vmul.f32 %v7274, %v7359
      %v7536 = vmul.f32 %v7275, %v7360
      %v7537 = vmul.f32 %v7276, %v7359
      %v7538 = vmul.f32 %v7277, %v7360
      %v7539 = vmul.f32 %v7278, %v7359
      %v7540 = vmul.f32 %v7279, %v7360
      %v7541 = vmul.f32 %v7280, %v7359
      %v7542 = vmul.f32 %v7281, %v7360
      %v7543 = vmul.f32 %v7282, %v7359
      %v7544 = vmul.f32 %v7283, %v7360
      %v7545 = vmul.f32 %v7284, %v7359
      %v7546 = vmul.f32 %v7285, %v7360
      %v7547 = vmul.f32 %v7286, %v7359
      %v7548 = vmul.f32 %v7287, %v7360
      %v7549 = vmul.f32 %v7288, %v7359
      %v7550 = vmul.f32 %v7289, %v7360
      %v7551 = vmul.f32 %v7290, %v7359
      %v7552 = vmul.f32 %v7291, %v7360
      %v7553 = vmul.f32 %v7292, %v7359
      %v7554 = vmul.f32 %v7293, %v7360
      %v7555 = vmul.f32 %v7294, %v7359
      %v7556 = vmul.f32 %v7295, %v7360
      %v7557 = vmul.f32 %v7296, %v7359
      %v7558 = vmul.f32 %v7297, %v7360
      %v7559 = vmul.f32 %v7298, %v7359
      %v7560 = vmul.f32 %v7299, %v7360
      %v7561 = vmul.f32 %v7300, %v7359
      %v7562 = vmul.f32 %v7301, %v7360
      %v7563 = vmul.f32 %v7302, %v7359
      %v7564 = vmul.f32 %v7303, %v7360
      %v7565 = vmul.f32 %v7304, %v7359
      %v7566 = vmul.f32 %v7305, %v7360
      %v7567 = vmul.f32 %v7306, %v7359
      %v7568 = vmul.f32 %v7307, %v7360
      %v7569 = vmul.f32 %v7308, %v7359
      %v7570 = vmul.f32 %v7309, %v7360
      %v7571 = vmul.f32 %v7310, %v7359
      %v7572 = vmul.f32 %v7311, %v7360
      %v7573 = vmul.f32 %v7312, %v7359
      %v7574 = vmul.f32 %v7313, %v7360
      %v7575 = vmul.f32 %v7314, %v7359
      %v7576 = vmul.f32 %v7315, %v7360
      %v7577 = vmul.f32 %v7316, %v7359
      %v7578 = vmul.f32 %v7317, %v7360
      %v7579 = vmul.f32 %v7318, %v7359
      %v7580 = vmul.f32 %v7319, %v7360
      %v7581 = vmul.f32 %v7320, %v7359
      %v7582 = vmul.f32 %v7321, %v7360
      %v7583 = vmul.f32 %v7322, %v7359
      %v7584 = vmul.f32 %v7323, %v7360
      %v7585 = vmul.f32 %v7324, %v7359
      %v7586 = vmul.f32 %v7325, %v7360
      %v7587 = vmul.f32 %v7326, %v7359
      %v7588 = vmul.f32 %v7327, %v7360
      %v7589 = vmul.f32 %v7328, %v7359
      %v7590 = vmul.f32 %v7329, %v7360
      %v7591 = vmul.f32 %v7330, %v7359
      %v7592 = vmul.f32 %v7331, %v7360
      %v7593 = vmul.f32 %v7332, %v7359
      %v7594 = vmul.f32 %v7333, %v7360
      %v7595 = vmul.f32 %v7334, %v7359
      %v7596 = vmul.f32 %v7335, %v7360
      %v7597 = vmul.f32 %v7336, %v7359
      %v7598 = vmul.f32 %v7337, %v7360
      %v7599 = vmul.f32 %v7338, %v7359
      %v7600 = vmul.f32 %v7339, %v7360
      %v7601 = vmul.f32 %v7340, %v7359
      %v7602 = vmul.f32 %v7341, %v7360
      %v7603 = vmul.f32 %v7342, %v7359
      %v7604 = vmul.f32 %v7343, %v7360
      %v7605 = vmul.f32 %v7344, %v7359
      %v7606 = vmul.f32 %v7345, %v7360
      %v7607 = vmul.f32 %v7346, %v7359
      %v7608 = vmul.f32 %v7347, %v7360
      %v7609 = vmul.f32 %v7348, %v7359
      %v7610 = vmul.f32 %v7349, %v7360
      %v7611 = vmul.f32 %v7350, %v7359
      %v7612 = vmul.f32 %v7351, %v7360
      %v7613 = vmul.f32 %v7352, %v7359
      %v7614 = vmul.f32 %v7353, %v7360
      %v7615 = vmul.f32 %v7354, %v7359
      %v7616 = vmul.f32 %v7355, %v7360
      %v7617 = vmul.f32 %v7356, %v7359
      %v7618 = vmul.f32 %v7357, %v7360
      %v7619 = vadd.f32 %v7363, %v7364
      %7620 = vadd.xlane.f32.xlu0 %v7619
      %v7621 = vpop.xlane.xlu0 %7620
      %v7622 = vadd.f32 %v7365, %v7366
      %7623 = vadd.xlane.f32.xlu0 %v7622
      %v7624 = vpop.xlane.xlu0 %7623
      %v7625 = vadd.f32 %v7367, %v7368
      %7626 = vadd.xlane.f32.xlu0 %v7625
      %v7627 = vpop.xlane.xlu0 %7626
      %v7628 = vadd.f32 %v7369, %v7370
      %7629 = vadd.xlane.f32.xlu0 %v7628
      %v7630 = vpop.xlane.xlu0 %7629
      %v7631 = vadd.f32 %v7371, %v7372
      %7632 = vadd.xlane.f32.xlu0 %v7631
      %v7633 = vpop.xlane.xlu0 %7632
      %v7634 = vadd.f32 %v7373, %v7374
      %7635 = vadd.xlane.f32.xlu0 %v7634
      %v7636 = vpop.xlane.xlu0 %7635
      %v7637 = vadd.f32 %v7375, %v7376
      %7638 = vadd.xlane.f32.xlu0 %v7637
      %v7639 = vpop.xlane.xlu0 %7638
      %v7640 = vadd.f32 %v7377, %v7378
      %7641 = vadd.xlane.f32.xlu0 %v7640
      %v7642 = vpop.xlane.xlu0 %7641
      %v7643 = vadd.f32 %v7379, %v7380
      %7644 = vadd.xlane.f32.xlu0 %v7643
      %v7645 = vpop.xlane.xlu0 %7644
      %v7646 = vadd.f32 %v7381, %v7382
      %7647 = vadd.xlane.f32.xlu0 %v7646
      %v7648 = vpop.xlane.xlu0 %7647
      %v7649 = vadd.f32 %v7383, %v7384
      %7650 = vadd.xlane.f32.xlu0 %v7649
      %v7651 = vpop.xlane.xlu0 %7650
      %v7652 = vadd.f32 %v7385, %v7386
      %7653 = vadd.xlane.f32.xlu0 %v7652
      %v7654 = vpop.xlane.xlu0 %7653
      %v7655 = vadd.f32 %v7387, %v7388
      %7656 = vadd.xlane.f32.xlu0 %v7655
      %v7657 = vpop.xlane.xlu0 %7656
      %v7658 = vadd.f32 %v7389, %v7390
      %7659 = vadd.xlane.f32.xlu0 %v7658
      %v7660 = vpop.xlane.xlu0 %7659
      %v7661 = vadd.f32 %v7391, %v7392
      %7662 = vadd.xlane.f32.xlu0 %v7661
      %v7663 = vpop.xlane.xlu0 %7662
      %v7664 = vadd.f32 %v7393, %v7394
      %7665 = vadd.xlane.f32.xlu0 %v7664
      %v7666 = vpop.xlane.xlu0 %7665
      %v7667 = vadd.f32 %v7395, %v7396
      %7668 = vadd.xlane.f32.xlu0 %v7667
      %v7669 = vpop.xlane.xlu0 %7668
      %v7670 = vadd.f32 %v7397, %v7398
      %7671 = vadd.xlane.f32.xlu0 %v7670
      %v7672 = vpop.xlane.xlu0 %7671
      %v7673 = vadd.f32 %v7399, %v7400
      %7674 = vadd.xlane.f32.xlu0 %v7673
      %v7675 = vpop.xlane.xlu0 %7674
      %v7676 = vadd.f32 %v7401, %v7402
      %7677 = vadd.xlane.f32.xlu0 %v7676
      %v7678 = vpop.xlane.xlu0 %7677
      %v7679 = vadd.f32 %v7403, %v7404
      %7680 = vadd.xlane.f32.xlu0 %v7679
      %v7681 = vpop.xlane.xlu0 %7680
      %v7682 = vadd.f32 %v7405, %v7406
      %7683 = vadd.xlane.f32.xlu0 %v7682
      %v7684 = vpop.xlane.xlu0 %7683
      %v7685 = vadd.f32 %v7407, %v7408
      %7686 = vadd.xlane.f32.xlu0 %v7685
      %v7687 = vpop.xlane.xlu0 %7686
      %v7688 = vadd.f32 %v7409, %v7410
      %7689 = vadd.xlane.f32.xlu0 %v7688
      %v7690 = vpop.xlane.xlu0 %7689
      %v7691 = vadd.f32 %v7411, %v7412
      %7692 = vadd.xlane.f32.xlu0 %v7691
      %v7693 = vpop.xlane.xlu0 %7692
      %v7694 = vadd.f32 %v7413, %v7414
      %7695 = vadd.xlane.f32.xlu0 %v7694
      %v7696 = vpop.xlane.xlu0 %7695
      %v7697 = vadd.f32 %v7415, %v7416
      %7698 = vadd.xlane.f32.xlu0 %v7697
      %v7699 = vpop.xlane.xlu0 %7698
      %v7700 = vadd.f32 %v7417, %v7418
      %7701 = vadd.xlane.f32.xlu0 %v7700
      %v7702 = vpop.xlane.xlu0 %7701
      %v7703 = vadd.f32 %v7419, %v7420
      %7704 = vadd.xlane.f32.xlu0 %v7703
      %v7705 = vpop.xlane.xlu0 %7704
      %v7706 = vadd.f32 %v7421, %v7422
      %7707 = vadd.xlane.f32.xlu0 %v7706
      %v7708 = vpop.xlane.xlu0 %7707
      %v7709 = vadd.f32 %v7423, %v7424
      %7710 = vadd.xlane.f32.xlu0 %v7709
      %v7711 = vpop.xlane.xlu0 %7710
      %v7712 = vadd.f32 %v7425, %v7426
      %7713 = vadd.xlane.f32.xlu0 %v7712
      %v7714 = vpop.xlane.xlu0 %7713
      %v7715 = vadd.f32 %v7427, %v7428
      %7716 = vadd.xlane.f32.xlu0 %v7715
      %v7717 = vpop.xlane.xlu0 %7716
      %v7718 = vadd.f32 %v7429, %v7430
      %7719 = vadd.xlane.f32.xlu0 %v7718
      %v7720 = vpop.xlane.xlu0 %7719
      %v7721 = vadd.f32 %v7431, %v7432
      %7722 = vadd.xlane.f32.xlu0 %v7721
      %v7723 = vpop.xlane.xlu0 %7722
      %v7724 = vadd.f32 %v7433, %v7434
      %7725 = vadd.xlane.f32.xlu0 %v7724
      %v7726 = vpop.xlane.xlu0 %7725
      %v7727 = vadd.f32 %v7435, %v7436
      %7728 = vadd.xlane.f32.xlu0 %v7727
      %v7729 = vpop.xlane.xlu0 %7728
      %v7730 = vadd.f32 %v7437, %v7438
      %7731 = vadd.xlane.f32.xlu0 %v7730
      %v7732 = vpop.xlane.xlu0 %7731
      %v7733 = vadd.f32 %v7439, %v7440
      %7734 = vadd.xlane.f32.xlu0 %v7733
      %v7735 = vpop.xlane.xlu0 %7734
      %v7736 = vadd.f32 %v7441, %v7442
      %7737 = vadd.xlane.f32.xlu0 %v7736
      %v7738 = vpop.xlane.xlu0 %7737
      %v7739 = vadd.f32 %v7443, %v7444
      %7740 = vadd.xlane.f32.xlu0 %v7739
      %v7741 = vpop.xlane.xlu0 %7740
      %v7742 = vadd.f32 %v7445, %v7446
      %7743 = vadd.xlane.f32.xlu0 %v7742
      %v7744 = vpop.xlane.xlu0 %7743
      %v7745 = vadd.f32 %v7447, %v7448
      %7746 = vadd.xlane.f32.xlu0 %v7745
      %v7747 = vpop.xlane.xlu0 %7746
      %v7748 = vadd.f32 %v7449, %v7450
      %7749 = vadd.xlane.f32.xlu0 %v7748
      %v7750 = vpop.xlane.xlu0 %7749
      %v7751 = vadd.f32 %v7451, %v7452
      %7752 = vadd.xlane.f32.xlu0 %v7751
      %v7753 = vpop.xlane.xlu0 %7752
      %v7754 = vadd.f32 %v7453, %v7454
      %7755 = vadd.xlane.f32.xlu0 %v7754
      %v7756 = vpop.xlane.xlu0 %7755
      %v7757 = vadd.f32 %v7455, %v7456
      %7758 = vadd.xlane.f32.xlu0 %v7757
      %v7759 = vpop.xlane.xlu0 %7758
      %v7760 = vadd.f32 %v7457, %v7458
      %7761 = vadd.xlane.f32.xlu0 %v7760
      %v7762 = vpop.xlane.xlu0 %7761
      %v7763 = vadd.f32 %v7459, %v7460
      %7764 = vadd.xlane.f32.xlu0 %v7763
      %v7765 = vpop.xlane.xlu0 %7764
      %v7766 = vadd.f32 %v7461, %v7462
      %7767 = vadd.xlane.f32.xlu0 %v7766
      %v7768 = vpop.xlane.xlu0 %7767
      %v7769 = vadd.f32 %v7463, %v7464
      %7770 = vadd.xlane.f32.xlu0 %v7769
      %v7771 = vpop.xlane.xlu0 %7770
      %v7772 = vadd.f32 %v7465, %v7466
      %7773 = vadd.xlane.f32.xlu0 %v7772
      %v7774 = vpop.xlane.xlu0 %7773
      %v7775 = vadd.f32 %v7467, %v7468
      %7776 = vadd.xlane.f32.xlu0 %v7775
      %v7777 = vpop.xlane.xlu0 %7776
      %v7778 = vadd.f32 %v7469, %v7470
      %7779 = vadd.xlane.f32.xlu0 %v7778
      %v7780 = vpop.xlane.xlu0 %7779
      %v7781 = vadd.f32 %v7471, %v7472
      %7782 = vadd.xlane.f32.xlu0 %v7781
      %v7783 = vpop.xlane.xlu0 %7782
      %v7784 = vadd.f32 %v7473, %v7474
      %7785 = vadd.xlane.f32.xlu0 %v7784
      %v7786 = vpop.xlane.xlu0 %7785
      %v7787 = vadd.f32 %v7475, %v7476
      %7788 = vadd.xlane.f32.xlu0 %v7787
      %v7789 = vpop.xlane.xlu0 %7788
      %v7790 = vadd.f32 %v7477, %v7478
      %7791 = vadd.xlane.f32.xlu0 %v7790
      %v7792 = vpop.xlane.xlu0 %7791
      %v7793 = vadd.f32 %v7479, %v7480
      %7794 = vadd.xlane.f32.xlu0 %v7793
      %v7795 = vpop.xlane.xlu0 %7794
      %v7796 = vadd.f32 %v7481, %v7482
      %7797 = vadd.xlane.f32.xlu0 %v7796
      %v7798 = vpop.xlane.xlu0 %7797
      %v7799 = vadd.f32 %v7483, %v7484
      %7800 = vadd.xlane.f32.xlu0 %v7799
      %v7801 = vpop.xlane.xlu0 %7800
      %v7802 = vadd.f32 %v7485, %v7486
      %7803 = vadd.xlane.f32.xlu0 %v7802
      %v7804 = vpop.xlane.xlu0 %7803
      %v7805 = vadd.f32 %v7487, %v7488
      %7806 = vadd.xlane.f32.xlu0 %v7805
      %v7807 = vpop.xlane.xlu0 %7806
      %v7808 = vadd.f32 %v7489, %v7490
      %7809 = vadd.xlane.f32.xlu0 %v7808
      %v7810 = vpop.xlane.xlu0 %7809
      %v7811 = vadd.f32 %v7491, %v7492
      %7812 = vadd.xlane.f32.xlu0 %v7811
      %v7813 = vpop.xlane.xlu0 %7812
      %v7814 = vadd.f32 %v7493, %v7494
      %7815 = vadd.xlane.f32.xlu0 %v7814
      %v7816 = vpop.xlane.xlu0 %7815
      %v7817 = vadd.f32 %v7495, %v7496
      %7818 = vadd.xlane.f32.xlu0 %v7817
      %v7819 = vpop.xlane.xlu0 %7818
      %v7820 = vadd.f32 %v7497, %v7498
      %7821 = vadd.xlane.f32.xlu0 %v7820
      %v7822 = vpop.xlane.xlu0 %7821
      %v7823 = vadd.f32 %v7499, %v7500
      %7824 = vadd.xlane.f32.xlu0 %v7823
      %v7825 = vpop.xlane.xlu0 %7824
      %v7826 = vadd.f32 %v7501, %v7502
      %7827 = vadd.xlane.f32.xlu0 %v7826
      %v7828 = vpop.xlane.xlu0 %7827
      %v7829 = vadd.f32 %v7503, %v7504
      %7830 = vadd.xlane.f32.xlu0 %v7829
      %v7831 = vpop.xlane.xlu0 %7830
      %v7832 = vadd.f32 %v7505, %v7506
      %7833 = vadd.xlane.f32.xlu0 %v7832
      %v7834 = vpop.xlane.xlu0 %7833
      %v7835 = vadd.f32 %v7507, %v7508
      %7836 = vadd.xlane.f32.xlu0 %v7835
      %v7837 = vpop.xlane.xlu0 %7836
      %v7838 = vadd.f32 %v7509, %v7510
      %7839 = vadd.xlane.f32.xlu0 %v7838
      %v7840 = vpop.xlane.xlu0 %7839
      %v7841 = vadd.f32 %v7511, %v7512
      %7842 = vadd.xlane.f32.xlu0 %v7841
      %v7843 = vpop.xlane.xlu0 %7842
      %v7844 = vadd.f32 %v7513, %v7514
      %7845 = vadd.xlane.f32.xlu0 %v7844
      %v7846 = vpop.xlane.xlu0 %7845
      %v7847 = vadd.f32 %v7515, %v7516
      %7848 = vadd.xlane.f32.xlu0 %v7847
      %v7849 = vpop.xlane.xlu0 %7848
      %v7850 = vadd.f32 %v7517, %v7518
      %7851 = vadd.xlane.f32.xlu0 %v7850
      %v7852 = vpop.xlane.xlu0 %7851
      %v7853 = vadd.f32 %v7519, %v7520
      %7854 = vadd.xlane.f32.xlu0 %v7853
      %v7855 = vpop.xlane.xlu0 %7854
      %v7856 = vadd.f32 %v7521, %v7522
      %7857 = vadd.xlane.f32.xlu0 %v7856
      %v7858 = vpop.xlane.xlu0 %7857
      %v7859 = vadd.f32 %v7523, %v7524
      %7860 = vadd.xlane.f32.xlu0 %v7859
      %v7861 = vpop.xlane.xlu0 %7860
      %v7862 = vadd.f32 %v7525, %v7526
      %7863 = vadd.xlane.f32.xlu0 %v7862
      %v7864 = vpop.xlane.xlu0 %7863
      %v7865 = vadd.f32 %v7527, %v7528
      %7866 = vadd.xlane.f32.xlu0 %v7865
      %v7867 = vpop.xlane.xlu0 %7866
      %v7868 = vadd.f32 %v7529, %v7530
      %7869 = vadd.xlane.f32.xlu0 %v7868
      %v7870 = vpop.xlane.xlu0 %7869
      %v7871 = vadd.f32 %v7531, %v7532
      %7872 = vadd.xlane.f32.xlu0 %v7871
      %v7873 = vpop.xlane.xlu0 %7872
      %v7874 = vadd.f32 %v7533, %v7534
      %7875 = vadd.xlane.f32.xlu0 %v7874
      %v7876 = vpop.xlane.xlu0 %7875
      %v7877 = vadd.f32 %v7535, %v7536
      %7878 = vadd.xlane.f32.xlu0 %v7877
      %v7879 = vpop.xlane.xlu0 %7878
      %v7880 = vadd.f32 %v7537, %v7538
      %7881 = vadd.xlane.f32.xlu0 %v7880
      %v7882 = vpop.xlane.xlu0 %7881
      %v7883 = vadd.f32 %v7539, %v7540
      %7884 = vadd.xlane.f32.xlu0 %v7883
      %v7885 = vpop.xlane.xlu0 %7884
      %v7886 = vadd.f32 %v7541, %v7542
      %7887 = vadd.xlane.f32.xlu0 %v7886
      %v7888 = vpop.xlane.xlu0 %7887
      %v7889 = vadd.f32 %v7543, %v7544
      %7890 = vadd.xlane.f32.xlu0 %v7889
      %v7891 = vpop.xlane.xlu0 %7890
      %v7892 = vadd.f32 %v7545, %v7546
      %7893 = vadd.xlane.f32.xlu0 %v7892
      %v7894 = vpop.xlane.xlu0 %7893
      %v7895 = vadd.f32 %v7547, %v7548
      %7896 = vadd.xlane.f32.xlu0 %v7895
      %v7897 = vpop.xlane.xlu0 %7896
      %v7898 = vadd.f32 %v7549, %v7550
      %7899 = vadd.xlane.f32.xlu0 %v7898
      %v7900 = vpop.xlane.xlu0 %7899
      %v7901 = vadd.f32 %v7551, %v7552
      %7902 = vadd.xlane.f32.xlu0 %v7901
      %v7903 = vpop.xlane.xlu0 %7902
      %v7904 = vadd.f32 %v7553, %v7554
      %7905 = vadd.xlane.f32.xlu0 %v7904
      %v7906 = vpop.xlane.xlu0 %7905
      %v7907 = vadd.f32 %v7555, %v7556
      %7908 = vadd.xlane.f32.xlu0 %v7907
      %v7909 = vpop.xlane.xlu0 %7908
      %v7910 = vadd.f32 %v7557, %v7558
      %7911 = vadd.xlane.f32.xlu0 %v7910
      %v7912 = vpop.xlane.xlu0 %7911
      %v7913 = vadd.f32 %v7559, %v7560
      %7914 = vadd.xlane.f32.xlu0 %v7913
      %v7915 = vpop.xlane.xlu0 %7914
      %v7916 = vadd.f32 %v7561, %v7562
      %7917 = vadd.xlane.f32.xlu0 %v7916
      %v7918 = vpop.xlane.xlu0 %7917
      %v7919 = vadd.f32 %v7563, %v7564
      %7920 = vadd.xlane.f32.xlu0 %v7919
      %v7921 = vpop.xlane.xlu0 %7920
      %v7922 = vadd.f32 %v7565, %v7566
      %7923 = vadd.xlane.f32.xlu0 %v7922
      %v7924 = vpop.xlane.xlu0 %7923
      %v7925 = vadd.f32 %v7567, %v7568
      %7926 = vadd.xlane.f32.xlu0 %v7925
      %v7927 = vpop.xlane.xlu0 %7926
      %v7928 = vadd.f32 %v7569, %v7570
      %7929 = vadd.xlane.f32.xlu0 %v7928
      %v7930 = vpop.xlane.xlu0 %7929
      %v7931 = vadd.f32 %v7571, %v7572
      %7932 = vadd.xlane.f32.xlu0 %v7931
      %v7933 = vpop.xlane.xlu0 %7932
      %v7934 = vadd.f32 %v7573, %v7574
      %7935 = vadd.xlane.f32.xlu0 %v7934
      %v7936 = vpop.xlane.xlu0 %7935
      %v7937 = vadd.f32 %v7575, %v7576
      %7938 = vadd.xlane.f32.xlu0 %v7937
      %v7939 = vpop.xlane.xlu0 %7938
      %v7940 = vadd.f32 %v7577, %v7578
      %7941 = vadd.xlane.f32.xlu0 %v7940
      %v7942 = vpop.xlane.xlu0 %7941
      %v7943 = vadd.f32 %v7579, %v7580
      %7944 = vadd.xlane.f32.xlu0 %v7943
      %v7945 = vpop.xlane.xlu0 %7944
      %v7946 = vadd.f32 %v7581, %v7582
      %7947 = vadd.xlane.f32.xlu0 %v7946
      %v7948 = vpop.xlane.xlu0 %7947
      %v7949 = vadd.f32 %v7583, %v7584
      %7950 = vadd.xlane.f32.xlu0 %v7949
      %v7951 = vpop.xlane.xlu0 %7950
      %v7952 = vadd.f32 %v7585, %v7586
      %7953 = vadd.xlane.f32.xlu0 %v7952
      %v7954 = vpop.xlane.xlu0 %7953
      %v7955 = vadd.f32 %v7587, %v7588
      %7956 = vadd.xlane.f32.xlu0 %v7955
      %v7957 = vpop.xlane.xlu0 %7956
      %v7958 = vadd.f32 %v7589, %v7590
      %7959 = vadd.xlane.f32.xlu0 %v7958
      %v7960 = vpop.xlane.xlu0 %7959
      %v7961 = vadd.f32 %v7591, %v7592
      %7962 = vadd.xlane.f32.xlu0 %v7961
      %v7963 = vpop.xlane.xlu0 %7962
      %v7964 = vadd.f32 %v7593, %v7594
      %7965 = vadd.xlane.f32.xlu0 %v7964
      %v7966 = vpop.xlane.xlu0 %7965
      %v7967 = vadd.f32 %v7595, %v7596
      %7968 = vadd.xlane.f32.xlu0 %v7967
      %v7969 = vpop.xlane.xlu0 %7968
      %v7970 = vadd.f32 %v7597, %v7598
      %7971 = vadd.xlane.f32.xlu0 %v7970
      %v7972 = vpop.xlane.xlu0 %7971
      %v7973 = vadd.f32 %v7599, %v7600
      %7974 = vadd.xlane.f32.xlu0 %v7973
      %v7975 = vpop.xlane.xlu0 %7974
      %v7976 = vadd.f32 %v7601, %v7602
      %7977 = vadd.xlane.f32.xlu0 %v7976
      %v7978 = vpop.xlane.xlu0 %7977
      %v7979 = vadd.f32 %v7603, %v7604
      %7980 = vadd.xlane.f32.xlu0 %v7979
      %v7981 = vpop.xlane.xlu0 %7980
      %v7982 = vadd.f32 %v7605, %v7606
      %7983 = vadd.xlane.f32.xlu0 %v7982
      %v7984 = vpop.xlane.xlu0 %7983
      %v7985 = vadd.f32 %v7607, %v7608
      %7986 = vadd.xlane.f32.xlu0 %v7985
      %v7987 = vpop.xlane.xlu0 %7986
      %v7988 = vadd.f32 %v7609, %v7610
      %7989 = vadd.xlane.f32.xlu0 %v7988
      %v7990 = vpop.xlane.xlu0 %7989
      %v7991 = vadd.f32 %v7611, %v7612
      %7992 = vadd.xlane.f32.xlu0 %v7991
      %v7993 = vpop.xlane.xlu0 %7992
      %v7994 = vadd.f32 %v7613, %v7614
      %7995 = vadd.xlane.f32.xlu0 %v7994
      %v7996 = vpop.xlane.xlu0 %7995
      %v7997 = vadd.f32 %v7615, %v7616
      %7998 = vadd.xlane.f32.xlu0 %v7997
      %v7999 = vpop.xlane.xlu0 %7998
      %v8000 = vadd.f32 %v7617, %v7618
      %8001 = vadd.xlane.f32.xlu0 %v8000
      %v8002 = vpop.xlane.xlu0 %8001
      %v8003 = vstv %s373
      %v8004 = vadd.f32 %v7621, %v8003
      %v8005 = vadd.f32 %v7624, %v8003
      %v8006 = vadd.f32 %v7627, %v8003
      %v8007 = vadd.f32 %v7630, %v8003
      %v8008 = vadd.f32 %v7633, %v8003
      %v8009 = vadd.f32 %v7636, %v8003
      %v8010 = vadd.f32 %v7639, %v8003
      %v8011 = vadd.f32 %v7642, %v8003
      %v8012 = vadd.f32 %v7645, %v8003
      %v8013 = vadd.f32 %v7648, %v8003
      %v8014 = vadd.f32 %v7651, %v8003
      %v8015 = vadd.f32 %v7654, %v8003
      %v8016 = vadd.f32 %v7657, %v8003
      %v8017 = vadd.f32 %v7660, %v8003
      %v8018 = vadd.f32 %v7663, %v8003
      %v8019 = vadd.f32 %v7666, %v8003
      %v8020 = vadd.f32 %v7669, %v8003
      %v8021 = vadd.f32 %v7672, %v8003
      %v8022 = vadd.f32 %v7675, %v8003
      %v8023 = vadd.f32 %v7678, %v8003
      %v8024 = vadd.f32 %v7681, %v8003
      %v8025 = vadd.f32 %v7684, %v8003
      %v8026 = vadd.f32 %v7687, %v8003
      %v8027 = vadd.f32 %v7690, %v8003
      %v8028 = vadd.f32 %v7693, %v8003
      %v8029 = vadd.f32 %v7696, %v8003
      %v8030 = vadd.f32 %v7699, %v8003
      %v8031 = vadd.f32 %v7702, %v8003
      %v8032 = vadd.f32 %v7705, %v8003
      %v8033 = vadd.f32 %v7708, %v8003
      %v8034 = vadd.f32 %v7711, %v8003
      %v8035 = vadd.f32 %v7714, %v8003
      %v8036 = vadd.f32 %v7717, %v8003
      %v8037 = vadd.f32 %v7720, %v8003
      %v8038 = vadd.f32 %v7723, %v8003
      %v8039 = vadd.f32 %v7726, %v8003
      %v8040 = vadd.f32 %v7729, %v8003
      %v8041 = vadd.f32 %v7732, %v8003
      %v8042 = vadd.f32 %v7735, %v8003
      %v8043 = vadd.f32 %v7738, %v8003
      %v8044 = vadd.f32 %v7741, %v8003
      %v8045 = vadd.f32 %v7744, %v8003
      %v8046 = vadd.f32 %v7747, %v8003
      %v8047 = vadd.f32 %v7750, %v8003
      %v8048 = vadd.f32 %v7753, %v8003
      %v8049 = vadd.f32 %v7756, %v8003
      %v8050 = vadd.f32 %v7759, %v8003
      %v8051 = vadd.f32 %v7762, %v8003
      %v8052 = vadd.f32 %v7765, %v8003
      %v8053 = vadd.f32 %v7768, %v8003
      %v8054 = vadd.f32 %v7771, %v8003
      %v8055 = vadd.f32 %v7774, %v8003
      %v8056 = vadd.f32 %v7777, %v8003
      %v8057 = vadd.f32 %v7780, %v8003
      %v8058 = vadd.f32 %v7783, %v8003
      %v8059 = vadd.f32 %v7786, %v8003
      %v8060 = vadd.f32 %v7789, %v8003
      %v8061 = vadd.f32 %v7792, %v8003
      %v8062 = vadd.f32 %v7795, %v8003
      %v8063 = vadd.f32 %v7798, %v8003
      %v8064 = vadd.f32 %v7801, %v8003
      %v8065 = vadd.f32 %v7804, %v8003
      %v8066 = vadd.f32 %v7807, %v8003
      %v8067 = vadd.f32 %v7810, %v8003
      %v8068 = vadd.f32 %v7813, %v8003
      %v8069 = vadd.f32 %v7816, %v8003
      %v8070 = vadd.f32 %v7819, %v8003
      %v8071 = vadd.f32 %v7822, %v8003
      %v8072 = vadd.f32 %v7825, %v8003
      %v8073 = vadd.f32 %v7828, %v8003
      %v8074 = vadd.f32 %v7831, %v8003
      %v8075 = vadd.f32 %v7834, %v8003
      %v8076 = vadd.f32 %v7837, %v8003
      %v8077 = vadd.f32 %v7840, %v8003
      %v8078 = vadd.f32 %v7843, %v8003
      %v8079 = vadd.f32 %v7846, %v8003
      %v8080 = vadd.f32 %v7849, %v8003
      %v8081 = vadd.f32 %v7852, %v8003
      %v8082 = vadd.f32 %v7855, %v8003
      %v8083 = vadd.f32 %v7858, %v8003
      %v8084 = vadd.f32 %v7861, %v8003
      %v8085 = vadd.f32 %v7864, %v8003
      %v8086 = vadd.f32 %v7867, %v8003
      %v8087 = vadd.f32 %v7870, %v8003
      %v8088 = vadd.f32 %v7873, %v8003
      %v8089 = vadd.f32 %v7876, %v8003
      %v8090 = vadd.f32 %v7879, %v8003
      %v8091 = vadd.f32 %v7882, %v8003
      %v8092 = vadd.f32 %v7885, %v8003
      %v8093 = vadd.f32 %v7888, %v8003
      %v8094 = vadd.f32 %v7891, %v8003
      %v8095 = vadd.f32 %v7894, %v8003
      %v8096 = vadd.f32 %v7897, %v8003
      %v8097 = vadd.f32 %v7900, %v8003
      %v8098 = vadd.f32 %v7903, %v8003
      %v8099 = vadd.f32 %v7906, %v8003
      %v8100 = vadd.f32 %v7909, %v8003
      %v8101 = vadd.f32 %v7912, %v8003
      %v8102 = vadd.f32 %v7915, %v8003
      %v8103 = vadd.f32 %v7918, %v8003
      %v8104 = vadd.f32 %v7921, %v8003
      %v8105 = vadd.f32 %v7924, %v8003
      %v8106 = vadd.f32 %v7927, %v8003
      %v8107 = vadd.f32 %v7930, %v8003
      %v8108 = vadd.f32 %v7933, %v8003
      %v8109 = vadd.f32 %v7936, %v8003
      %v8110 = vadd.f32 %v7939, %v8003
      %v8111 = vadd.f32 %v7942, %v8003
      %v8112 = vadd.f32 %v7945, %v8003
      %v8113 = vadd.f32 %v7948, %v8003
      %v8114 = vadd.f32 %v7951, %v8003
      %v8115 = vadd.f32 %v7954, %v8003
      %v8116 = vadd.f32 %v7957, %v8003
      %v8117 = vadd.f32 %v7960, %v8003
      %v8118 = vadd.f32 %v7963, %v8003
      %v8119 = vadd.f32 %v7966, %v8003
      %v8120 = vadd.f32 %v7969, %v8003
      %v8121 = vadd.f32 %v7972, %v8003
      %v8122 = vadd.f32 %v7975, %v8003
      %v8123 = vadd.f32 %v7978, %v8003
      %v8124 = vadd.f32 %v7981, %v8003
      %v8125 = vadd.f32 %v7984, %v8003
      %v8126 = vadd.f32 %v7987, %v8003
      %v8127 = vadd.f32 %v7990, %v8003
      %v8128 = vadd.f32 %v7993, %v8003
      %v8129 = vadd.f32 %v7996, %v8003
      %v8130 = vadd.f32 %v7999, %v8003
      %v8131 = vadd.f32 %v8002, %v8003
      %s8132 = sadd.s32 %s381, 0
      %v8133 = vstv %s8132
      %v8134 = vadd.s32 %v8133, %v380
      %vm8135 = vcmp.ge.s32.totalorder %v378, %v8134
      %vm8136 = vcmp.gt.f32.partialorder %v387, 0.0
      %v8137 = vsel %vm8136, 1, 0
      %8138 = vset.pattern.permute.xlu0 0
      %8139 = vperm.xlu0 %8138, %v8137
      %v8140 = vpop.permute.xlu0 %8139
      %vm8141 = vcmp.eq.s32.totalorder %v8140, 1
      %vm8142 = vmand %vm8135, %vm8141
      %v8271 = vperm.slane %v8004, %v376
      %v8272 = vadd.s32 %v376, 4294967288
      %v8273 = vperm.slane %v8005, %v8272
      %vm8274 = vcmask 130112
      %v8275 = vsel %vm8274, %v8273, %v8271
      %v8276 = vadd.s32 %v376, 4294967280
      %v8277 = vperm.slane %v8006, %v8276
      %vm8278 = vcmask 195712
      %v8279 = vsel %vm8278, %v8277, %v8275
      %v8280 = vadd.s32 %v376, 4294967272
      %v8281 = vperm.slane %v8007, %v8280
      %vm8282 = vcmask 261312
      %v8283 = vsel %vm8282, %v8281, %v8279
      %v8284 = vadd.s32 %v376, 4294967264
      %v8285 = vperm.slane %v8008, %v8284
      %vm8286 = vcmask 326912
      %v8287 = vsel %vm8286, %v8285, %v8283
      %v8288 = vadd.s32 %v376, 4294967256
      %v8289 = vperm.slane %v8009, %v8288
      %vm8290 = vcmask 392512
      %v8291 = vsel %vm8290, %v8289, %v8287
      %v8292 = vadd.s32 %v376, 4294967248
      %v8293 = vperm.slane %v8010, %v8292
      %vm8294 = vcmask 458112
      %v8295 = vsel %vm8294, %v8293, %v8291
      %v8296 = vadd.s32 %v376, 4294967240
      %v8297 = vperm.slane %v8011, %v8296
      %vm8298 = vcmask 523712
      %v8299 = vsel %vm8298, %v8297, %v8295
      %v8300 = vadd.s32 %v376, 4294967232
      %v8301 = vperm.slane %v8012, %v8300
      %vm8302 = vcmask 589312
      %v8303 = vsel %vm8302, %v8301, %v8299
      %v8304 = vadd.s32 %v376, 4294967224
      %v8305 = vperm.slane %v8013, %v8304
      %vm8306 = vcmask 654912
      %v8307 = vsel %vm8306, %v8305, %v8303
      %v8308 = vadd.s32 %v376, 4294967216
      %v8309 = vperm.slane %v8014, %v8308
      %vm8310 = vcmask 720512
      %v8311 = vsel %vm8310, %v8309, %v8307
      %v8312 = vadd.s32 %v376, 4294967208
      %v8313 = vperm.slane %v8015, %v8312
      %vm8314 = vcmask 786112
      %v8315 = vsel %vm8314, %v8313, %v8311
      %v8316 = vadd.s32 %v376, 4294967200
      %v8317 = vperm.slane %v8016, %v8316
      %vm8318 = vcmask 851712
      %v8319 = vsel %vm8318, %v8317, %v8315
      %v8320 = vadd.s32 %v376, 4294967192
      %v8321 = vperm.slane %v8017, %v8320
      %vm8322 = vcmask 917312
      %v8323 = vsel %vm8322, %v8321, %v8319
      %v8324 = vadd.s32 %v376, 4294967184
      %v8325 = vperm.slane %v8018, %v8324
      %vm8326 = vcmask 982912
      %v8327 = vsel %vm8326, %v8325, %v8323
      %v8328 = vadd.s32 %v376, 4294967176
      %v8329 = vperm.slane %v8019, %v8328
      %vm8330 = vcmask 1048512
      %v8331 = vsel %vm8330, %v8329, %v8327
      %v8332 = vperm.slane %v8020, %v376
      %v8333 = vperm.slane %v8021, %v8272
      %v8334 = vsel %vm8274, %v8333, %v8332
      %v8335 = vperm.slane %v8022, %v8276
      %v8336 = vsel %vm8278, %v8335, %v8334
      %v8337 = vperm.slane %v8023, %v8280
      %v8338 = vsel %vm8282, %v8337, %v8336
      %v8339 = vperm.slane %v8024, %v8284
      %v8340 = vsel %vm8286, %v8339, %v8338
      %v8341 = vperm.slane %v8025, %v8288
      %v8342 = vsel %vm8290, %v8341, %v8340
      %v8343 = vperm.slane %v8026, %v8292
      %v8344 = vsel %vm8294, %v8343, %v8342
      %v8345 = vperm.slane %v8027, %v8296
      %v8346 = vsel %vm8298, %v8345, %v8344
      %v8347 = vperm.slane %v8028, %v8300
      %v8348 = vsel %vm8302, %v8347, %v8346
      %v8349 = vperm.slane %v8029, %v8304
      %v8350 = vsel %vm8306, %v8349, %v8348
      %v8351 = vperm.slane %v8030, %v8308
      %v8352 = vsel %vm8310, %v8351, %v8350
      %v8353 = vperm.slane %v8031, %v8312
      %v8354 = vsel %vm8314, %v8353, %v8352
      %v8355 = vperm.slane %v8032, %v8316
      %v8356 = vsel %vm8318, %v8355, %v8354
      %v8357 = vperm.slane %v8033, %v8320
      %v8358 = vsel %vm8322, %v8357, %v8356
      %v8359 = vperm.slane %v8034, %v8324
      %v8360 = vsel %vm8326, %v8359, %v8358
      %v8361 = vperm.slane %v8035, %v8328
      %v8362 = vsel %vm8330, %v8361, %v8360
      %v8363 = vperm.slane %v8036, %v376
      %v8364 = vperm.slane %v8037, %v8272
      %v8365 = vsel %vm8274, %v8364, %v8363
      %v8366 = vperm.slane %v8038, %v8276
      %v8367 = vsel %vm8278, %v8366, %v8365
      %v8368 = vperm.slane %v8039, %v8280
      %v8369 = vsel %vm8282, %v8368, %v8367
      %v8370 = vperm.slane %v8040, %v8284
      %v8371 = vsel %vm8286, %v8370, %v8369
      %v8372 = vperm.slane %v8041, %v8288
      %v8373 = vsel %vm8290, %v8372, %v8371
      %v8374 = vperm.slane %v8042, %v8292
      %v8375 = vsel %vm8294, %v8374, %v8373
      %v8376 = vperm.slane %v8043, %v8296
      %v8377 = vsel %vm8298, %v8376, %v8375
      %v8378 = vperm.slane %v8044, %v8300
      %v8379 = vsel %vm8302, %v8378, %v8377
      %v8380 = vperm.slane %v8045, %v8304
      %v8381 = vsel %vm8306, %v8380, %v8379
      %v8382 = vperm.slane %v8046, %v8308
      %v8383 = vsel %vm8310, %v8382, %v8381
      %v8384 = vperm.slane %v8047, %v8312
      %v8385 = vsel %vm8314, %v8384, %v8383
      %v8386 = vperm.slane %v8048, %v8316
      %v8387 = vsel %vm8318, %v8386, %v8385
      %v8388 = vperm.slane %v8049, %v8320
      %v8389 = vsel %vm8322, %v8388, %v8387
      %v8390 = vperm.slane %v8050, %v8324
      %v8391 = vsel %vm8326, %v8390, %v8389
      %v8392 = vperm.slane %v8051, %v8328
      %v8393 = vsel %vm8330, %v8392, %v8391
      %v8394 = vperm.slane %v8052, %v376
      %v8395 = vperm.slane %v8053, %v8272
      %v8396 = vsel %vm8274, %v8395, %v8394
      %v8397 = vperm.slane %v8054, %v8276
      %v8398 = vsel %vm8278, %v8397, %v8396
      %v8399 = vperm.slane %v8055, %v8280
      %v8400 = vsel %vm8282, %v8399, %v8398
      %v8401 = vperm.slane %v8056, %v8284
      %v8402 = vsel %vm8286, %v8401, %v8400
      %v8403 = vperm.slane %v8057, %v8288
      %v8404 = vsel %vm8290, %v8403, %v8402
      %v8405 = vperm.slane %v8058, %v8292
      %v8406 = vsel %vm8294, %v8405, %v8404
      %v8407 = vperm.slane %v8059, %v8296
      %v8408 = vsel %vm8298, %v8407, %v8406
      %v8409 = vperm.slane %v8060, %v8300
      %v8410 = vsel %vm8302, %v8409, %v8408
      %v8411 = vperm.slane %v8061, %v8304
      %v8412 = vsel %vm8306, %v8411, %v8410
      %v8413 = vperm.slane %v8062, %v8308
      %v8414 = vsel %vm8310, %v8413, %v8412
      %v8415 = vperm.slane %v8063, %v8312
      %v8416 = vsel %vm8314, %v8415, %v8414
      %v8417 = vperm.slane %v8064, %v8316
      %v8418 = vsel %vm8318, %v8417, %v8416
      %v8419 = vperm.slane %v8065, %v8320
      %v8420 = vsel %vm8322, %v8419, %v8418
      %v8421 = vperm.slane %v8066, %v8324
      %v8422 = vsel %vm8326, %v8421, %v8420
      %v8423 = vperm.slane %v8067, %v8328
      %v8424 = vsel %vm8330, %v8423, %v8422
      %v8425 = vperm.slane %v8068, %v376
      %v8426 = vperm.slane %v8069, %v8272
      %v8427 = vsel %vm8274, %v8426, %v8425
      %v8428 = vperm.slane %v8070, %v8276
      %v8429 = vsel %vm8278, %v8428, %v8427
      %v8430 = vperm.slane %v8071, %v8280
      %v8431 = vsel %vm8282, %v8430, %v8429
      %v8432 = vperm.slane %v8072, %v8284
      %v8433 = vsel %vm8286, %v8432, %v8431
      %v8434 = vperm.slane %v8073, %v8288
      %v8435 = vsel %vm8290, %v8434, %v8433
      %v8436 = vperm.slane %v8074, %v8292
      %v8437 = vsel %vm8294, %v8436, %v8435
      %v8438 = vperm.slane %v8075, %v8296
      %v8439 = vsel %vm8298, %v8438, %v8437
      %v8440 = vperm.slane %v8076, %v8300
      %v8441 = vsel %vm8302, %v8440, %v8439
      %v8442 = vperm.slane %v8077, %v8304
      %v8443 = vsel %vm8306, %v8442, %v8441
      %v8444 = vperm.slane %v8078, %v8308
      %v8445 = vsel %vm8310, %v8444, %v8443
      %v8446 = vperm.slane %v8079, %v8312
      %v8447 = vsel %vm8314, %v8446, %v8445
      %v8448 = vperm.slane %v8080, %v8316
      %v8449 = vsel %vm8318, %v8448, %v8447
      %v8450 = vperm.slane %v8081, %v8320
      %v8451 = vsel %vm8322, %v8450, %v8449
      %v8452 = vperm.slane %v8082, %v8324
      %v8453 = vsel %vm8326, %v8452, %v8451
      %v8454 = vperm.slane %v8083, %v8328
      %v8455 = vsel %vm8330, %v8454, %v8453
      %v8456 = vperm.slane %v8084, %v376
      %v8457 = vperm.slane %v8085, %v8272
      %v8458 = vsel %vm8274, %v8457, %v8456
      %v8459 = vperm.slane %v8086, %v8276
      %v8460 = vsel %vm8278, %v8459, %v8458
      %v8461 = vperm.slane %v8087, %v8280
      %v8462 = vsel %vm8282, %v8461, %v8460
      %v8463 = vperm.slane %v8088, %v8284
      %v8464 = vsel %vm8286, %v8463, %v8462
      %v8465 = vperm.slane %v8089, %v8288
      %v8466 = vsel %vm8290, %v8465, %v8464
      %v8467 = vperm.slane %v8090, %v8292
      %v8468 = vsel %vm8294, %v8467, %v8466
      %v8469 = vperm.slane %v8091, %v8296
      %v8470 = vsel %vm8298, %v8469, %v8468
      %v8471 = vperm.slane %v8092, %v8300
      %v8472 = vsel %vm8302, %v8471, %v8470
      %v8473 = vperm.slane %v8093, %v8304
      %v8474 = vsel %vm8306, %v8473, %v8472
      %v8475 = vperm.slane %v8094, %v8308
      %v8476 = vsel %vm8310, %v8475, %v8474
      %v8477 = vperm.slane %v8095, %v8312
      %v8478 = vsel %vm8314, %v8477, %v8476
      %v8479 = vperm.slane %v8096, %v8316
      %v8480 = vsel %vm8318, %v8479, %v8478
      %v8481 = vperm.slane %v8097, %v8320
      %v8482 = vsel %vm8322, %v8481, %v8480
      %v8483 = vperm.slane %v8098, %v8324
      %v8484 = vsel %vm8326, %v8483, %v8482
      %v8485 = vperm.slane %v8099, %v8328
      %v8486 = vsel %vm8330, %v8485, %v8484
      %v8487 = vperm.slane %v8100, %v376
      %v8488 = vperm.slane %v8101, %v8272
      %v8489 = vsel %vm8274, %v8488, %v8487
      %v8490 = vperm.slane %v8102, %v8276
      %v8491 = vsel %vm8278, %v8490, %v8489
      %v8492 = vperm.slane %v8103, %v8280
      %v8493 = vsel %vm8282, %v8492, %v8491
      %v8494 = vperm.slane %v8104, %v8284
      %v8495 = vsel %vm8286, %v8494, %v8493
      %v8496 = vperm.slane %v8105, %v8288
      %v8497 = vsel %vm8290, %v8496, %v8495
      %v8498 = vperm.slane %v8106, %v8292
      %v8499 = vsel %vm8294, %v8498, %v8497
      %v8500 = vperm.slane %v8107, %v8296
      %v8501 = vsel %vm8298, %v8500, %v8499
      %v8502 = vperm.slane %v8108, %v8300
      %v8503 = vsel %vm8302, %v8502, %v8501
      %v8504 = vperm.slane %v8109, %v8304
      %v8505 = vsel %vm8306, %v8504, %v8503
      %v8506 = vperm.slane %v8110, %v8308
      %v8507 = vsel %vm8310, %v8506, %v8505
      %v8508 = vperm.slane %v8111, %v8312
      %v8509 = vsel %vm8314, %v8508, %v8507
      %v8510 = vperm.slane %v8112, %v8316
      %v8511 = vsel %vm8318, %v8510, %v8509
      %v8512 = vperm.slane %v8113, %v8320
      %v8513 = vsel %vm8322, %v8512, %v8511
      %v8514 = vperm.slane %v8114, %v8324
      %v8515 = vsel %vm8326, %v8514, %v8513
      %v8516 = vperm.slane %v8115, %v8328
      %v8517 = vsel %vm8330, %v8516, %v8515
      %v8518 = vperm.slane %v8116, %v376
      %v8519 = vperm.slane %v8117, %v8272
      %v8520 = vsel %vm8274, %v8519, %v8518
      %v8521 = vperm.slane %v8118, %v8276
      %v8522 = vsel %vm8278, %v8521, %v8520
      %v8523 = vperm.slane %v8119, %v8280
      %v8524 = vsel %vm8282, %v8523, %v8522
      %v8525 = vperm.slane %v8120, %v8284
      %v8526 = vsel %vm8286, %v8525, %v8524
      %v8527 = vperm.slane %v8121, %v8288
      %v8528 = vsel %vm8290, %v8527, %v8526
      %v8529 = vperm.slane %v8122, %v8292
      %v8530 = vsel %vm8294, %v8529, %v8528
      %v8531 = vperm.slane %v8123, %v8296
      %v8532 = vsel %vm8298, %v8531, %v8530
      %v8533 = vperm.slane %v8124, %v8300
      %v8534 = vsel %vm8302, %v8533, %v8532
      %v8535 = vperm.slane %v8125, %v8304
      %v8536 = vsel %vm8306, %v8535, %v8534
      %v8537 = vperm.slane %v8126, %v8308
      %v8538 = vsel %vm8310, %v8537, %v8536
      %v8539 = vperm.slane %v8127, %v8312
      %v8540 = vsel %vm8314, %v8539, %v8538
      %v8541 = vperm.slane %v8128, %v8316
      %v8542 = vsel %vm8318, %v8541, %v8540
      %v8543 = vperm.slane %v8129, %v8320
      %v8544 = vsel %vm8322, %v8543, %v8542
      %v8545 = vperm.slane %v8130, %v8324
      %v8546 = vsel %vm8326, %v8545, %v8544
      %v8547 = vperm.slane %v8131, %v8328
      %v8548 = vsel %vm8330, %v8547, %v8546
      %v8549 = vsel %vm393, %v8362, %v8331
      %v8550 = vsel %vm396, %v8393, %v8549
      %v8551 = vsel %vm399, %v8424, %v8550
      %v8552 = vsel %vm402, %v8455, %v8551
      %v8553 = vsel %vm405, %v8486, %v8552
      %v8554 = vsel %vm408, %v8517, %v8553
      %vm8555 = vcmask 1047559
      %v8556 = vsel %vm8555, %v8548, %v8554
      %v8558 = vsel %vm8142, %v8556, -1000.0
      %8559 = vst [vmem:[%s339] sm:$0xff] %v8558
      %p8560 = scmp.lt.s32.totalorder %s22, 1
      %s8561 = scalar_select %p8560, %s22, 1
      %p8562 = scmp.lt.s32.totalorder %s23, 0
      %s8563 = scalar_select %p8562, %s23, 0
      %p8564 = scmp.lt.s32.totalorder %s24, 0
      %s8565 = scalar_select %p8564, %s24, 0
      %s8566 = sadd.s32 %s8565, %s8563
      %s8567 = sadd.s32 %s8566, %s8561
      %s8568 = smul.addr %s8567, 8
      %s8569 = scalar_lea.vmem %s5, %s8568
      // Predicated region
      $region41: #{_forward_core.1} parent=39 // pred_check
        %p8570 = pneg %p184
      $region42: #{_forward_core.1} parent=39 // pred_check_branch
        %8572 = sbr.rel (%p8570) target = $region44
      $region43: #{_forward_core.1} parent=39 // pred_region
        _
      $region44: #{_forward_core.1} parent=39 // pred_fallthru
        _
    $region40: #{_forward_core.1} parent=5 // pred_fallthru
      _
    %p8573 = scmp.le.s32.totalorder 2, %s12
    // Predicated region
    $region45: #{_forward_core.1} parent=5 // pred_check
      %p8574 = pneg %p8573
    $region46: #{_forward_core.1} parent=5 // pred_check_branch
      %8576 = sbr.rel (%p8574) target = $region48
    $region47: #{_forward_core.1} parent=5 // pred_region
      %s8577 = ssub.s32 %s12, 2
      // Predicated region
      $region49: #{_forward_core.1} parent=47 // pred_check
        %p8578 = pneg %p190
      $region50: #{_forward_core.1} parent=47 // pred_check_branch
        %8580 = sbr.rel (%p8578) target = $region52
      $region51: #{_forward_core.1} parent=47 // pred_region
        %p8581 = scmp.lt.s32.totalorder %s25, 1
        %s8582 = scalar_select %p8581, %s25, 1
        %p8583 = scmp.lt.s32.totalorder %s26, 0
        %s8584 = scalar_select %p8583, %s26, 0
        %p8585 = scmp.lt.s32.totalorder %s27, 0
        %s8586 = scalar_select %p8585, %s27, 0
        %s8587 = sadd.s32 %s8586, %s8584
        %s8588 = sadd.s32 %s8587, %s8582
        %s8589 = smul.addr %s8588, 8
        %s8590 = scalar_lea.vmem %s5, %s8589
      $region52: #{_forward_core.1} parent=47 // pred_fallthru
        _
    $region48: #{_forward_core.1} parent=5 // pred_fallthru
      _
  $region6: #{_forward_core.1} parent=0 // loop_footer
    %s16 = sadd.s32 1, %s12
  $region7: #{_forward_core.1} parent=0 // loop_footer_branch
    %11 = sbr.rel target = $region3
  $region8: #{_forward_core.1} parent=0 // loop_exit
    _

</llo_original>
